<compile_context>
chip_gen: v5e
topology: v5e:2x2
jax: 0.10.0
libtpu: 0.0.40
codegen_flags: <defaults>
</compile_context>

<pallas_src>
import functools
import math

import jax
import jax.numpy as jnp
from jax.experimental import pallas as pl
from jax.experimental.pallas import tpu as pltpu


# --------------------------- generation-aware knobs --------------------------

def _derive_vmem_limit():
    """Per-generation VMEM budget with headroom for compiler scratch/buffers."""
    cap = None
    try:
        cap = int(pltpu.get_tpu_info().vmem_capacity_bytes)
    except Exception:
        cap = None
    if not cap:
        try:
            kind = jax.devices()[0].device_kind.lower()
            cap = 64 * 1024 * 1024 if "v7" in kind else 128 * 1024 * 1024
        except Exception:
            cap = 64 * 1024 * 1024  # conservative fallback
    # ~48 MiB on v7x (64 MiB physical), ~96 MiB on v5e/v6e (128 MiB physical).
    return min(cap * 3 // 4, 112 * 1024 * 1024)


_VMEM_LIMIT = _derive_vmem_limit()
_TARGET_TM = 2048 if _VMEM_LIMIT >= 96 * 1024 * 1024 else 1024


def _round_up(x, m):
    return ((x + m - 1) // m) * m


# ----------------------------- Pallas kernels ------------------------------

def _mm_bias_kernel(x_ref, w_ref, b_ref, o_ref, acc_ref):
    """out = x @ w + bias, K-tiled; bias folded into the accumulator init."""
    k = pl.program_id(1)

    @pl.when(k == 0)
    def _init():
        acc_ref[...] = jnp.broadcast_to(b_ref[...], acc_ref.shape)

    acc_ref[...] += jnp.dot(x_ref[...], w_ref[...],
                            preferred_element_type=jnp.float32)

    @pl.when(k == pl.num_programs(1) - 1)
    def _store():
        o_ref[...] = acc_ref[...].astype(o_ref.dtype)


def _mm_bias_upadd_kernel(x_ref, w_ref, b_ref, a_ref, o_ref, acc_ref,
                          *, th, width):
    """out = x @ w + bias + nearest_upsample2(coarse), fused.

    a_ref holds the (already width-doubled) coarse add block with shape
    (th//2, width, Cout).  The x2 height repeat is done here by initializing
    each fine row-group hh of the accumulator from coarse row hh//2 -- pure
    leading-dim reads + VPU adds, no MXU work and no reshapes.
    """
    k = pl.program_id(1)

    @pl.when(k == 0)
    def _init():
        bias = b_ref[...]                         # (1, Cout) f32
        for hh in range(th):                      # fine h-row hh <- coarse hh//2
            acc_ref[pl.ds(hh * width, width), :] = (
                a_ref[hh // 2].astype(jnp.float32) + bias)

    acc_ref[...] += jnp.dot(x_ref[...], w_ref[...],
                            preferred_element_type=jnp.float32)

    @pl.when(k == pl.num_programs(1) - 1)
    def _store():
        o_ref[...] = acc_ref[...].astype(o_ref.dtype)


def _conv3x3_kernel(xp_ref, w_ref, b_ref, o_ref, acc_ref, *, wp):
    """3x3 SAME conv on one row-flattened, halo-padded image slab (no im2col).

    xp_ref : (1, L, C) bf16   padded canvas flattened to Hp*Wp rows + tail
    w_ref  : (9, C, Cout) bf16 shared 3x3 weights, tap-major
    o_ref  : (1, H*Wp, Cout)  cols >= W are garbage and cropped by the caller
    acc_ref: (H*Wp, Cout) f32 VMEM scratch accumulator (bounded per block)
    """
    r = acc_ref.shape[0]
    xp = xp_ref[0]                                    # (L, C) bf16
    acc_ref[...] = jnp.broadcast_to(b_ref[...], acc_ref.shape)
    for dy in range(3):                               # 9 taps, fully unrolled
        for dx in range(3):
            off = dy * wp + dx                        # dy*wp sublane-aligned
            acc_ref[...] += jnp.dot(xp[off:off + r, :], w_ref[dy * 3 + dx],
                                    preferred_element_type=jnp.float32)
    o_ref[0] = acc_ref[...].astype(o_ref.dtype)


# --------------------------- tile-size selection ----------------------------

def _pick_tm(m, target):
    """Largest 8-aligned divisor of m <= target, preferring >= 2 grid steps."""
    divs = [d for d in range(8, min(target, m) + 1, 8) if m % d == 0]
    if not divs:
        return m                                      # tiny m: one full block
    multi = [d for d in divs if m // d >= 2]
    return max(multi) if multi else max(divs)


def _pick_fused_th(n, h, w, target_tm):
    """Even row-tile TH for the fused lateral conv: TM = TH*W, >=2 steps."""
    assert h % 2 == 0, "fused upsample-add requires even H (H = 2*Hc)"
    nh = n * h
    tgt = max(target_tm, 2 * w)
    cands = [th for th in range(2, min(nh, 64) + 1, 2)
             if nh % th == 0 and th * w <= tgt and (th * w) % 8 == 0]
    if not cands:
        return nh                                     # single full block
    multi = [th for th in cands if nh // th >= 2]
    th = max(multi) if multi else max(cands)
    assert th % 2 == 0
    return th


# --------------------------- pallas_call wrappers ---------------------------

def _matmul_bias(x2d, w, b, *, add3=None, th=None, width=None,
                 out_dtype=jnp.float32):
    """y[M, Cout] = x2d[M, Cin] @ w + b (+ optional fused upsampled add)."""
    M, Cin = x2d.shape
    Cout = w.shape[1]

    # Pad tiny contraction dims (e.g. RGB Cin=3) up to a full sublane group so
    # the MXU K depth / layouts are aligned (review: first backbone matmul).
    if Cin % 8 != 0:
        kpad = (-Cin) % 8
        x2d = jnp.pad(x2d, ((0, 0), (0, kpad)))
        w = jnp.pad(w, ((0, kpad), (0, 0)))
        Cin += kpad

    if add3 is None:
        TM = _pick_tm(M, _TARGET_TM)
    else:
        TM = th * width
    TK = math.gcd(Cin, 512)                 # multiple of 256 for big Cin
    grid = (M // TM, Cin // TK)

    x_bf = x2d.astype(jnp.bfloat16)         # bf16 MXU path, f32 accumulation
    w_bf = w.astype(jnp.bfloat16)
    b2 = b.reshape(1, Cout).astype(jnp.float32)

    in_specs = [
        pl.BlockSpec((TM, TK), lambda i, k: (i, k)),
        pl.BlockSpec((TK, Cout), lambda i, k: (k, 0)),
        pl.BlockSpec((1, Cout), lambda i, k: (0, 0)),
    ]
    args = [x_bf, w_bf, b2]
    add_bytes = 0
    if add3 is None:
        kernel = _mm_bias_kernel
    else:
        in_specs.append(
            pl.BlockSpec((th // 2, width, Cout), lambda i, k: (i, 0, 0)))
        args.append(add3)
        add_bytes = int(add3.size) * 2
        kernel = functools.partial(_mm_bias_upadd_kernel, th=th, width=width)

    cost = pl.CostEstimate(
        flops=2 * M * Cin * Cout,
        transcendentals=0,
        bytes_accessed=(M * Cin * 2 + Cin * Cout * 2 + add_bytes
                        + M * Cout * jnp.dtype(out_dtype).itemsize))

    return pl.pallas_call(
        kernel,
        out_shape=jax.ShapeDtypeStruct((M, Cout), out_dtype),
        grid_spec=pltpu.PrefetchScalarGridSpec(
            num_scalar_prefetch=0,
            grid=grid,
            in_specs=in_specs,
            out_specs=pl.BlockSpec((TM, Cout), lambda i, k: (i, 0)),
            scratch_shapes=[pltpu.VMEM((TM, Cout), jnp.float32)]),
        compiler_params=pltpu.CompilerParams(
            dimension_semantics=("parallel", "arbitrary"),
            vmem_limit_bytes=_VMEM_LIMIT),
        cost_estimate=cost,
    )(*args)


def conv1x1(x_nhwc, w, b, out_dtype=jnp.float32):
    N, H, W, C = x_nhwc.shape
    Cout = w.shape[1]
    y = _matmul_bias(x_nhwc.reshape(N * H * W, C), w, b, out_dtype=out_dtype)
    return y.reshape(N, H, W, Cout)


def conv1x1_fused_upadd(x_nhwc, w, b, coarse_nhwc, out_dtype=jnp.float32):
    """1x1 lateral conv with the nearest-upsampled top-down add fused in.

    The x2 width repeat is a cheap XLA broadcast on the *small* coarse tensor
    (bf16, M/2 x Cout); the x2 height repeat happens inside the kernel via
    per-row reads of the coarse block -- no MXU FLOPs spent on the upsample.
    """
    N, H, W, C = x_nhwc.shape
    Nc, Hc, Wc, Cout = coarse_nhwc.shape
    assert N == Nc and H == 2 * Hc and W == 2 * Wc and H % 2 == 0

    addw = jnp.repeat(coarse_nhwc, 2, axis=2).astype(jnp.bfloat16)  # width x2
    addw = addw.reshape(N * Hc, W, Cout)

    TH = _pick_fused_th(N, H, W, _TARGET_TM)
    y = _matmul_bias(x_nhwc.reshape(N * H * W, C), w, b,
                     add3=addw, th=TH, width=W, out_dtype=out_dtype)
    return y.reshape(N, H, W, Cout)


def conv3x3_same(x_nhwc, w33, b, out_dtype=jnp.float32):
    """SamePad2d(3,1) + Conv2d(3x3) on one NHWC level (per-level launch).

    The level is placed on its own 1-px halo-padded canvas (width rounded up to
    a multiple of 8 for sublane-aligned dy tap offsets), flattened to rows, and
    the kernel accumulates 9 shifted bf16 MXU dots into an f32 VMEM scratch.
    """
    # TODO(synk): for production resolutions, row-tile each image with a
    # (TH+2)-row halo (manual DMA or halo-duplicated slab) so the per-block
    # working set fits v7x's 64 MiB VMEM and the pipeline gets >2 steps.
    N, H, W, C = x_nhwc.shape
    Cout = w33.shape[-1]
    Wp = _round_up(W + 2, 8)          # aligned taps: (dy*Wp) % 8 == 0
    Hp = H + 2
    R = H * Wp                        # rows computed (cols >= W cropped below)
    L = Hp * Wp + 8                   # tail so every tap window read is in-bounds

    xp = jnp.pad(x_nhwc.astype(jnp.bfloat16),
                 ((0, 0), (1, 1), (1, Wp - 1 - W), (0, 0)))   # (N, Hp, Wp, C)
    xp = xp.reshape(N, Hp * Wp, C)
    xp = jnp.pad(xp, ((0, 0), (0, L - Hp * Wp), (0, 0)))      # (N, L, C) bf16

    w9 = w33.reshape(9, C, Cout).astype(jnp.bfloat16)
    b2 = b.reshape(1, Cout).astype(jnp.float32)

    cost = pl.CostEstimate(
        flops=2 * 9 * N * R * C * Cout,
        transcendentals=0,
        bytes_accessed=N * L * C * 2 + 9 * C * Cout * 2 + N * R * Cout * 4)

    y = pl.pallas_call(
        functools.partial(_conv3x3_kernel, wp=Wp),
        out_shape=jax.ShapeDtypeStruct((N, R, Cout), jnp.float32),
        grid_spec=pltpu.PrefetchScalarGridSpec(
            num_scalar_prefetch=0,
            grid=(N,),
            in_specs=[pl.BlockSpec((1, L, C), lambda i: (i, 0, 0)),
                      pl.BlockSpec((9, C, Cout), lambda i: (0, 0, 0)),
                      pl.BlockSpec((1, Cout), lambda i: (0, 0))],
            out_specs=pl.BlockSpec((1, R, Cout), lambda i: (i, 0, 0)),
            scratch_shapes=[pltpu.VMEM((R, Cout), jnp.float32)]),
        compiler_params=pltpu.CompilerParams(
            dimension_semantics=("parallel",),
            vmem_limit_bytes=_VMEM_LIMIT),
        cost_estimate=cost,
    )(xp, w9, b2)

    return y.reshape(N, H, Wp, Cout)[:, :, :W, :].astype(out_dtype)


# ------------------------------ resampling glue ------------------------------

def upsample2(x_nhwc):
    # F.upsample(scale_factor=2), default mode='nearest'
    return jnp.repeat(jnp.repeat(x_nhwc, 2, axis=1), 2, axis=2)


def downsample2(x_nhwc):
    # F.interpolate(scale_factor=0.5, mode='nearest') -> every other pixel
    return x_nhwc[:, ::2, ::2, :]


# ------------------------------- FPN forward --------------------------------

def fpn_forward(x_nchw, params):
    x = jnp.transpose(x_nchw, (0, 2, 3, 1))  # NCHW -> NHWC

    # TODO(synk): S1..S4 are external backbone submodules passed to
    # FPN.__init__; stand-ins here are S1=identity and stride-2 nearest
    # downsample + 1x1 conv (same Pallas matmul kernel) producing the required
    # 256/512/1024 channels.  Outputs come out directly in bf16 (they only
    # feed later bf16 matmuls), avoiding an extra cast pass through HBM.
    S2_x = conv1x1(downsample2(x), params['s2_w'], params['s2_b'],
                   out_dtype=jnp.bfloat16)                        # -> 256 ch
    S3_x = conv1x1(downsample2(S2_x), params['s3_w'], params['s3_b'],
                   out_dtype=jnp.bfloat16)                        # -> 512 ch
    S4_x = conv1x1(downsample2(S3_x), params['s4_w'], params['s4_b'],
                   out_dtype=jnp.bfloat16)                        # -> 1024 ch

    # FPN head. Lateral outputs in bf16 (they feed the bf16 3x3 slab and the
    # next level's f32-accumulated add); top-down upsample adds fused in-kernel
    # with no MXU work spent on the upsample itself.
    S4_out = conv1x1(S4_x, params['S4_conv_w'], params['S4_conv_b'],
                     out_dtype=jnp.bfloat16)
    S3_out = conv1x1_fused_upadd(S3_x, params['S3_conv_w'],
                                 params['S3_conv_b'], S4_out,
                                 out_dtype=jnp.bfloat16)
    S2_out = conv1x1_fused_upadd(S2_x, params['S2_conv_w'],
                                 params['S2_conv_b'], S3_out,
                                 out_dtype=jnp.bfloat16)

    # Shared conv_both on each level (per-level launch, honest per-level work).
    S4_out = conv3x3_same(S4_out, params['both_w'], params['both_b'])
    S3_out = conv3x3_same(S3_out, params['both_w'], params['both_b'])
    S2_out = conv3x3_same(S2_out, params['both_w'], params['both_b'])

    out = jnp.concatenate(
        [downsample2(S2_out), S3_out, upsample2(S4_out)], axis=-1)
    return jnp.transpose(out, (0, 3, 1, 2))  # NHWC -> NCHW (torch.cat dim=1)


# ------------------------------- param init ---------------------------------

def init_conv(key, cin, cout, k=1):
    wk, bk = jax.random.split(key)
    fan_in = cin * k * k
    s = 1.0 / math.sqrt(fan_in)
    if k == 1:
        w = jax.random.uniform(wk, (cin, cout), jnp.float32, -s, s)
    else:
        w = jax.random.uniform(wk, (k, k, cin, cout), jnp.float32, -s, s)
    b = jax.random.uniform(bk, (cout,), jnp.float32, -s, s)
    return w, b


def make_params(key, outchannel):
    keys = jax.random.split(key, 7)
    p = {}
    p['s2_w'], p['s2_b'] = init_conv(keys[0], 3, 256)
    p['s3_w'], p['s3_b'] = init_conv(keys[1], 256, 512)
    p['s4_w'], p['s4_b'] = init_conv(keys[2], 512, 1024)
    p['S4_conv_w'], p['S4_conv_b'] = init_conv(keys[3], 1024, outchannel)
    p['S3_conv_w'], p['S3_conv_b'] = init_conv(keys[4], 512, outchannel)
    p['S2_conv_w'], p['S2_conv_b'] = init_conv(keys[5], 256, outchannel)
    p['both_w'], p['both_b'] = init_conv(keys[6], outchannel, outchannel, k=3)
    return p


if __name__ == "__main__":
    outchannel = 8
    key = jax.random.PRNGKey(0)
    kp, kx = jax.random.split(key)
    params = make_params(kp, outchannel)

    # Small NCHW input; backbone strides give S2:8x8, S3:4x4, S4:2x2.
    x = jax.random.normal(kx, (2, 3, 16, 16), jnp.float32)

    out = jax.jit(lambda xx: fpn_forward(xx, params))(x)
    out = jax.block_until_ready(out)
    assert out.shape == (2, 3 * outchannel, 4, 4), out.shape
    assert jnp.all(jnp.isfinite(out))
    print("KERNEL_OK")
</pallas_src>

<mosaic_0001>
module attributes {stable_mosaic.version = 11 : i64} {
  func.func @_mm_bias_kernel(%arg0: i32, %arg1: i32, %arg2: memref<64x8xbf16, #tpu.memory_space<vmem>>, %arg3: memref<8x256xbf16, #tpu.memory_space<vmem>>, %arg4: memref<1x256xf32, #tpu.memory_space<vmem>>, %arg5: memref<64x256xbf16, #tpu.memory_space<vmem>>, %arg6: memref<64x256xf32, #tpu.memory_space<vmem>>) attributes {dimension_semantics = [#tpu.dimension_semantics<parallel>, #tpu.dimension_semantics<arbitrary>], iteration_bounds = array<i64: 2, 1>, scalar_prefetch = 0 : i64, scratch_operands = 1 : i64, tpu.core_type = #tpu.core_type<tc>, window_params = [{transform_indices = @transform_0, window_bounds = array<i64: 64, 8>}, {transform_indices = @transform_1, window_bounds = array<i64: 8, 256>}, {pipeline_mode = #tpu.pipeline_mode<synchronous>, transform_indices = @transform_2, window_bounds = array<i64: 1, 256>}, {transform_indices = @transform_3, window_bounds = array<i64: 64, 256>}]} {
    %c0_i32 = arith.constant 0 : i32
    %0 = arith.cmpi eq, %arg1, %c0_i32 : i32
    %1 = arith.extui %0 : i1 to i32
    %c0_i32_0 = arith.constant 0 : i32
    %2 = arith.cmpi ne, %1, %c0_i32_0 : i32
    scf.if %2 {
      %c0_10 = arith.constant 0 : index
      %c0_11 = arith.constant 0 : index
      %12 = vector.load %arg4[%c0_10, %c0_11] : memref<1x256xf32, #tpu.memory_space<vmem>>, vector<1x256xf32>
      %13 = vector.shape_cast %12 : vector<1x256xf32> to vector<1x256xf32>
      %14 = vector.broadcast %13 : vector<1x256xf32> to vector<64x256xf32>
      %c0_12 = arith.constant 0 : index
      %c0_13 = arith.constant 0 : index
      %15 = vector.load %arg6[%c0_12, %c0_13] : memref<64x256xf32, #tpu.memory_space<vmem>>, vector<64x256xf32>
      tpu.vector_store %arg6[%c0_12, %c0_13], %14 {strides = array<i32>} : memref<64x256xf32, #tpu.memory_space<vmem>>, vector<64x256xf32>,
    } else {
    }
    %c0 = arith.constant 0 : index
    %c0_1 = arith.constant 0 : index
    %3 = vector.load %arg6[%c0, %c0_1] : memref<64x256xf32, #tpu.memory_space<vmem>>, vector<64x256xf32>
    %c0_2 = arith.constant 0 : index
    %c0_3 = arith.constant 0 : index
    %4 = vector.load %arg2[%c0_2, %c0_3] : memref<64x8xbf16, #tpu.memory_space<vmem>>, vector<64x8xbf16>
    %c0_4 = arith.constant 0 : index
    %c0_5 = arith.constant 0 : index
    %5 = vector.load %arg3[%c0_4, %c0_5] : memref<8x256xbf16, #tpu.memory_space<vmem>>, vector<8x256xbf16>
    %cst = arith.constant dense<0.000000e+00> : vector<64x256xf32>
    %6 = tpu.matmul %4, %5, %cst {dimension_numbers = #tpu.dot_dimension_numbers<[1], [0], [0], [1], [0, 0, 1, 1], [], []>} : vector<64x8xbf16>, vector<8x256xbf16>, vector<64x256xf32> -> vector<64x256xf32>
    %7 = arith.addf %3, %6 : vector<64x256xf32>
    %c0_6 = arith.constant 0 : index
    %c0_7 = arith.constant 0 : index
    %8 = vector.load %arg6[%c0_6, %c0_7] : memref<64x256xf32, #tpu.memory_space<vmem>>, vector<64x256xf32>
    tpu.vector_store %arg6[%c0_6, %c0_7], %7 {strides = array<i32>} : memref<64x256xf32, #tpu.memory_space<vmem>>, vector<64x256xf32>,
    %c0_i32_8 = arith.constant 0 : i32
    %9 = arith.cmpi eq, %arg1, %c0_i32_8 : i32
    %10 = arith.extui %9 : i1 to i32
    %c0_i32_9 = arith.constant 0 : i32
    %11 = arith.cmpi ne, %10, %c0_i32_9 : i32
    scf.if %11 {
      %c0_10 = arith.constant 0 : index
      %c0_11 = arith.constant 0 : index
      %12 = vector.load %arg6[%c0_10, %c0_11] : memref<64x256xf32, #tpu.memory_space<vmem>>, vector<64x256xf32>
      %13 = arith.truncf %12 : vector<64x256xf32> to vector<64x256xbf16>
      %c0_12 = arith.constant 0 : index
      %c0_13 = arith.constant 0 : index
      %14 = vector.load %arg5[%c0_12, %c0_13] : memref<64x256xbf16, #tpu.memory_space<vmem>>, vector<64x256xbf16>
      tpu.vector_store %arg5[%c0_12, %c0_13], %13 {strides = array<i32>} : memref<64x256xbf16, #tpu.memory_space<vmem>>, vector<64x256xbf16>,
    } else {
    }
    return
  }
  func.func @transform_0(%arg0: i32, %arg1: i32) -> (i32, i32) {
    %c0_i32 = arith.constant 0 : i32
    return %arg0, %arg1 : i32, i32
  }
  func.func @transform_1(%arg0: i32, %arg1: i32) -> (i32, i32) {
    %c0_i32 = arith.constant 0 : i32
    %c0_i32_0 = arith.constant 0 : i32
    return %arg1, %c0_i32 : i32, i32
  }
  func.func @transform_2(%arg0: i32, %arg1: i32) -> (i32, i32) {
    %c0_i32 = arith.constant 0 : i32
    %c0_i32_0 = arith.constant 0 : i32
    %c0_i32_1 = arith.constant 0 : i32
    return %c0_i32, %c0_i32_0 : i32, i32
  }
  func.func @transform_3(%arg0: i32, %arg1: i32) -> (i32, i32) {
    %c0_i32 = arith.constant 0 : i32
    %c0_i32_0 = arith.constant 0 : i32
    return %arg0, %c0_i32 : i32, i32
  }
}

module attributes {stable_mosaic.version = 11 : i64} {
  func.func @_mm_bias_kernel(%arg0: i32, %arg1: i32, %arg2: memref<16x256xbf16, #tpu.memory_space<vmem>>, %arg3: memref<256x512xbf16, #tpu.memory_space<vmem>>, %arg4: memref<1x512xf32, #tpu.memory_space<vmem>>, %arg5: memref<16x512xbf16, #tpu.memory_space<vmem>>, %arg6: memref<16x512xf32, #tpu.memory_space<vmem>>) attributes {dimension_semantics = [#tpu.dimension_semantics<parallel>, #tpu.dimension_semantics<arbitrary>], iteration_bounds = array<i64: 2, 1>, scalar_prefetch = 0 : i64, scratch_operands = 1 : i64, tpu.core_type = #tpu.core_type<tc>, window_params = [{transform_indices = @transform_0, window_bounds = array<i64: 16, 256>}, {transform_indices = @transform_1, window_bounds = array<i64: 256, 512>}, {pipeline_mode = #tpu.pipeline_mode<synchronous>, transform_indices = @transform_2, window_bounds = array<i64: 1, 512>}, {transform_indices = @transform_3, window_bounds = array<i64: 16, 512>}]} {
    %c0_i32 = arith.constant 0 : i32
    %0 = arith.cmpi eq, %arg1, %c0_i32 : i32
    %1 = arith.extui %0 : i1 to i32
    %c0_i32_0 = arith.constant 0 : i32
    %2 = arith.cmpi ne, %1, %c0_i32_0 : i32
    scf.if %2 {
      %c0_10 = arith.constant 0 : index
      %c0_11 = arith.constant 0 : index
      %12 = vector.load %arg4[%c0_10, %c0_11] : memref<1x512xf32, #tpu.memory_space<vmem>>, vector<1x512xf32>
      %13 = vector.shape_cast %12 : vector<1x512xf32> to vector<1x512xf32>
      %14 = vector.broadcast %13 : vector<1x512xf32> to vector<16x512xf32>
      %c0_12 = arith.constant 0 : index
      %c0_13 = arith.constant 0 : index
      %15 = vector.load %arg6[%c0_12, %c0_13] : memref<16x512xf32, #tpu.memory_space<vmem>>, vector<16x512xf32>
      tpu.vector_store %arg6[%c0_12, %c0_13], %14 {strides = array<i32>} : memref<16x512xf32, #tpu.memory_space<vmem>>, vector<16x512xf32>,
    } else {
    }
    %c0 = arith.constant 0 : index
    %c0_1 = arith.constant 0 : index
    %3 = vector.load %arg6[%c0, %c0_1] : memref<16x512xf32, #tpu.memory_space<vmem>>, vector<16x512xf32>
    %c0_2 = arith.constant 0 : index
    %c0_3 = arith.constant 0 : index
    %4 = vector.load %arg2[%c0_2, %c0_3] : memref<16x256xbf16, #tpu.memory_space<vmem>>, vector<16x256xbf16>
    %c0_4 = arith.constant 0 : index
    %c0_5 = arith.constant 0 : index
    %5 = vector.load %arg3[%c0_4, %c0_5] : memref<256x512xbf16, #tpu.memory_space<vmem>>, vector<256x512xbf16>
    %cst = arith.constant dense<0.000000e+00> : vector<16x512xf32>
    %6 = tpu.matmul %4, %5, %cst {dimension_numbers = #tpu.dot_dimension_numbers<[1], [0], [0], [1], [0, 0, 1, 1], [], []>} : vector<16x256xbf16>, vector<256x512xbf16>, vector<16x512xf32> -> vector<16x512xf32>
    %7 = arith.addf %3, %6 : vector<16x512xf32>
    %c0_6 = arith.constant 0 : index
    %c0_7 = arith.constant 0 : index
    %8 = vector.load %arg6[%c0_6, %c0_7] : memref<16x512xf32, #tpu.memory_space<vmem>>, vector<16x512xf32>
    tpu.vector_store %arg6[%c0_6, %c0_7], %7 {strides = array<i32>} : memref<16x512xf32, #tpu.memory_space<vmem>>, vector<16x512xf32>,
    %c0_i32_8 = arith.constant 0 : i32
    %9 = arith.cmpi eq, %arg1, %c0_i32_8 : i32
    %10 = arith.extui %9 : i1 to i32
    %c0_i32_9 = arith.constant 0 : i32
    %11 = arith.cmpi ne, %10, %c0_i32_9 : i32
    scf.if %11 {
      %c0_10 = arith.constant 0 : index
      %c0_11 = arith.constant 0 : index
      %12 = vector.load %arg6[%c0_10, %c0_11] : memref<16x512xf32, #tpu.memory_space<vmem>>, vector<16x512xf32>
      %13 = arith.truncf %12 : vector<16x512xf32> to vector<16x512xbf16>
      %c0_12 = arith.constant 0 : index
      %c0_13 = arith.constant 0 : index
      %14 = vector.load %arg5[%c0_12, %c0_13] : memref<16x512xbf16, #tpu.memory_space<vmem>>, vector<16x512xbf16>
      tpu.vector_store %arg5[%c0_12, %c0_13], %13 {strides = array<i32>} : memref<16x512xbf16, #tpu.memory_space<vmem>>, vector<16x512xbf16>,
    } else {
    }
    return
  }
  func.func @transform_0(%arg0: i32, %arg1: i32) -> (i32, i32) {
    %c0_i32 = arith.constant 0 : i32
    return %arg0, %arg1 : i32, i32
  }
  func.func @transform_1(%arg0: i32, %arg1: i32) -> (i32, i32) {
    %c0_i32 = arith.constant 0 : i32
    %c0_i32_0 = arith.constant 0 : i32
    return %arg1, %c0_i32 : i32, i32
  }
  func.func @transform_2(%arg0: i32, %arg1: i32) -> (i32, i32) {
    %c0_i32 = arith.constant 0 : i32
    %c0_i32_0 = arith.constant 0 : i32
    %c0_i32_1 = arith.constant 0 : i32
    return %c0_i32, %c0_i32_0 : i32, i32
  }
  func.func @transform_3(%arg0: i32, %arg1: i32) -> (i32, i32) {
    %c0_i32 = arith.constant 0 : i32
    %c0_i32_0 = arith.constant 0 : i32
    return %arg0, %c0_i32 : i32, i32
  }
}

module attributes {stable_mosaic.version = 11 : i64} {
  func.func @_mm_bias_kernel(%arg0: i32, %arg1: i32, %arg2: memref<8x512xbf16, #tpu.memory_space<vmem>>, %arg3: memref<512x1024xbf16, #tpu.memory_space<vmem>>, %arg4: memref<1x1024xf32, #tpu.memory_space<vmem>>, %arg5: memref<8x1024xbf16, #tpu.memory_space<vmem>>, %arg6: memref<8x1024xf32, #tpu.memory_space<vmem>>) attributes {dimension_semantics = [#tpu.dimension_semantics<parallel>, #tpu.dimension_semantics<arbitrary>], iteration_bounds = array<i64: 1, 1>, scalar_prefetch = 0 : i64, scratch_operands = 1 : i64, tpu.core_type = #tpu.core_type<tc>, window_params = [{transform_indices = @transform_0, window_bounds = array<i64: 8, 512>}, {transform_indices = @transform_1, window_bounds = array<i64: 512, 1024>}, {pipeline_mode = #tpu.pipeline_mode<synchronous>, transform_indices = @transform_2, window_bounds = array<i64: 1, 1024>}, {transform_indices = @transform_3, window_bounds = array<i64: 8, 1024>}]} {
    %c0_i32 = arith.constant 0 : i32
    %0 = arith.cmpi eq, %arg1, %c0_i32 : i32
    %1 = arith.extui %0 : i1 to i32
    %c0_i32_0 = arith.constant 0 : i32
    %2 = arith.cmpi ne, %1, %c0_i32_0 : i32
    scf.if %2 {
      %c0_10 = arith.constant 0 : index
      %c0_11 = arith.constant 0 : index
      %12 = vector.load %arg4[%c0_10, %c0_11] : memref<1x1024xf32, #tpu.memory_space<vmem>>, vector<1x1024xf32>
      %13 = vector.shape_cast %12 : vector<1x1024xf32> to vector<1x1024xf32>
      %14 = vector.broadcast %13 : vector<1x1024xf32> to vector<8x1024xf32>
      %c0_12 = arith.constant 0 : index
      %c0_13 = arith.constant 0 : index
      %15 = vector.load %arg6[%c0_12, %c0_13] : memref<8x1024xf32, #tpu.memory_space<vmem>>, vector<8x1024xf32>
      tpu.vector_store %arg6[%c0_12, %c0_13], %14 {strides = array<i32>} : memref<8x1024xf32, #tpu.memory_space<vmem>>, vector<8x1024xf32>,
    } else {
    }
    %c0 = arith.constant 0 : index
    %c0_1 = arith.constant 0 : index
    %3 = vector.load %arg6[%c0, %c0_1] : memref<8x1024xf32, #tpu.memory_space<vmem>>, vector<8x1024xf32>
    %c0_2 = arith.constant 0 : index
    %c0_3 = arith.constant 0 : index
    %4 = vector.load %arg2[%c0_2, %c0_3] : memref<8x512xbf16, #tpu.memory_space<vmem>>, vector<8x512xbf16>
    %c0_4 = arith.constant 0 : index
    %c0_5 = arith.constant 0 : index
    %5 = vector.load %arg3[%c0_4, %c0_5] : memref<512x1024xbf16, #tpu.memory_space<vmem>>, vector<512x1024xbf16>
    %cst = arith.constant dense<0.000000e+00> : vector<8x1024xf32>
    %6 = tpu.matmul %4, %5, %cst {dimension_numbers = #tpu.dot_dimension_numbers<[1], [0], [0], [1], [0, 0, 1, 1], [], []>} : vector<8x512xbf16>, vector<512x1024xbf16>, vector<8x1024xf32> -> vector<8x1024xf32>
    %7 = arith.addf %3, %6 : vector<8x1024xf32>
    %c0_6 = arith.constant 0 : index
    %c0_7 = arith.constant 0 : index
    %8 = vector.load %arg6[%c0_6, %c0_7] : memref<8x1024xf32, #tpu.memory_space<vmem>>, vector<8x1024xf32>
    tpu.vector_store %arg6[%c0_6, %c0_7], %7 {strides = array<i32>} : memref<8x1024xf32, #tpu.memory_space<vmem>>, vector<8x1024xf32>,
    %c0_i32_8 = arith.constant 0 : i32
    %9 = arith.cmpi eq, %arg1, %c0_i32_8 : i32
    %10 = arith.extui %9 : i1 to i32
    %c0_i32_9 = arith.constant 0 : i32
    %11 = arith.cmpi ne, %10, %c0_i32_9 : i32
    scf.if %11 {
      %c0_10 = arith.constant 0 : index
      %c0_11 = arith.constant 0 : index
      %12 = vector.load %arg6[%c0_10, %c0_11] : memref<8x1024xf32, #tpu.memory_space<vmem>>, vector<8x1024xf32>
      %13 = arith.truncf %12 : vector<8x1024xf32> to vector<8x1024xbf16>
      %c0_12 = arith.constant 0 : index
      %c0_13 = arith.constant 0 : index
      %14 = vector.load %arg5[%c0_12, %c0_13] : memref<8x1024xbf16, #tpu.memory_space<vmem>>, vector<8x1024xbf16>
      tpu.vector_store %arg5[%c0_12, %c0_13], %13 {strides = array<i32>} : memref<8x1024xbf16, #tpu.memory_space<vmem>>, vector<8x1024xbf16>,
    } else {
    }
    return
  }
  func.func @transform_0(%arg0: i32, %arg1: i32) -> (i32, i32) {
    %c0_i32 = arith.constant 0 : i32
    return %arg0, %arg1 : i32, i32
  }
  func.func @transform_1(%arg0: i32, %arg1: i32) -> (i32, i32) {
    %c0_i32 = arith.constant 0 : i32
    %c0_i32_0 = arith.constant 0 : i32
    return %arg1, %c0_i32 : i32, i32
  }
  func.func @transform_2(%arg0: i32, %arg1: i32) -> (i32, i32) {
    %c0_i32 = arith.constant 0 : i32
    %c0_i32_0 = arith.constant 0 : i32
    %c0_i32_1 = arith.constant 0 : i32
    return %c0_i32, %c0_i32_0 : i32, i32
  }
  func.func @transform_3(%arg0: i32, %arg1: i32) -> (i32, i32) {
    %c0_i32 = arith.constant 0 : i32
    %c0_i32_0 = arith.constant 0 : i32
    return %arg0, %c0_i32 : i32, i32
  }
}

module attributes {stable_mosaic.version = 11 : i64} {
  func.func @_mm_bias_kernel(%arg0: i32, %arg1: i32, %arg2: memref<8x512xbf16, #tpu.memory_space<vmem>>, %arg3: memref<512x8xbf16, #tpu.memory_space<vmem>>, %arg4: memref<1x8xf32, #tpu.memory_space<vmem>>, %arg5: memref<8x8xbf16, #tpu.memory_space<vmem>>, %arg6: memref<8x8xf32, #tpu.memory_space<vmem>>) attributes {dimension_semantics = [#tpu.dimension_semantics<parallel>, #tpu.dimension_semantics<arbitrary>], iteration_bounds = array<i64: 1, 2>, scalar_prefetch = 0 : i64, scratch_operands = 1 : i64, tpu.core_type = #tpu.core_type<tc>, window_params = [{transform_indices = @transform_0, window_bounds = array<i64: 8, 512>}, {transform_indices = @transform_1, window_bounds = array<i64: 512, 8>}, {pipeline_mode = #tpu.pipeline_mode<synchronous>, transform_indices = @transform_2, window_bounds = array<i64: 1, 8>}, {transform_indices = @transform_3, window_bounds = array<i64: 8, 8>}]} {
    %c0_i32 = arith.constant 0 : i32
    %0 = arith.cmpi eq, %arg1, %c0_i32 : i32
    %1 = arith.extui %0 : i1 to i32
    %c0_i32_0 = arith.constant 0 : i32
    %2 = arith.cmpi ne, %1, %c0_i32_0 : i32
    scf.if %2 {
      %c0_9 = arith.constant 0 : index
      %c0_10 = arith.constant 0 : index
      %12 = vector.load %arg4[%c0_9, %c0_10] : memref<1x8xf32, #tpu.memory_space<vmem>>, vector<1x8xf32>
      %13 = vector.shape_cast %12 : vector<1x8xf32> to vector<1x8xf32>
      %14 = vector.broadcast %13 : vector<1x8xf32> to vector<8x8xf32>
      %c0_11 = arith.constant 0 : index
      %c0_12 = arith.constant 0 : index
      %15 = vector.load %arg6[%c0_11, %c0_12] : memref<8x8xf32, #tpu.memory_space<vmem>>, vector<8x8xf32>
      tpu.vector_store %arg6[%c0_11, %c0_12], %14 {strides = array<i32>} : memref<8x8xf32, #tpu.memory_space<vmem>>, vector<8x8xf32>,
    } else {
    }
    %c0 = arith.constant 0 : index
    %c0_1 = arith.constant 0 : index
    %3 = vector.load %arg6[%c0, %c0_1] : memref<8x8xf32, #tpu.memory_space<vmem>>, vector<8x8xf32>
    %c0_2 = arith.constant 0 : index
    %c0_3 = arith.constant 0 : index
    %4 = vector.load %arg2[%c0_2, %c0_3] : memref<8x512xbf16, #tpu.memory_space<vmem>>, vector<8x512xbf16>
    %c0_4 = arith.constant 0 : index
    %c0_5 = arith.constant 0 : index
    %5 = vector.load %arg3[%c0_4, %c0_5] : memref<512x8xbf16, #tpu.memory_space<vmem>>, vector<512x8xbf16>
    %cst = arith.constant dense<0.000000e+00> : vector<8x8xf32>
    %6 = tpu.matmul %4, %5, %cst {dimension_numbers = #tpu.dot_dimension_numbers<[1], [0], [0], [1], [0, 0, 1, 1], [], []>} : vector<8x512xbf16>, vector<512x8xbf16>, vector<8x8xf32> -> vector<8x8xf32>
    %7 = arith.addf %3, %6 : vector<8x8xf32>
    %c0_6 = arith.constant 0 : index
    %c0_7 = arith.constant 0 : index
    %8 = vector.load %arg6[%c0_6, %c0_7] : memref<8x8xf32, #tpu.memory_space<vmem>>, vector<8x8xf32>
    tpu.vector_store %arg6[%c0_6, %c0_7], %7 {strides = array<i32>} : memref<8x8xf32, #tpu.memory_space<vmem>>, vector<8x8xf32>,
    %c1_i32 = arith.constant 1 : i32
    %9 = arith.cmpi eq, %arg1, %c1_i32 : i32
    %10 = arith.extui %9 : i1 to i32
    %c0_i32_8 = arith.constant 0 : i32
    %11 = arith.cmpi ne, %10, %c0_i32_8 : i32
    scf.if %11 {
      %c0_9 = arith.constant 0 : index
      %c0_10 = arith.constant 0 : index
      %12 = vector.load %arg6[%c0_9, %c0_10] : memref<8x8xf32, #tpu.memory_space<vmem>>, vector<8x8xf32>
      %13 = arith.truncf %12 : vector<8x8xf32> to vector<8x8xbf16>
      %c0_11 = arith.constant 0 : index
      %c0_12 = arith.constant 0 : index
      %14 = vector.load %arg5[%c0_11, %c0_12] : memref<8x8xbf16, #tpu.memory_space<vmem>>, vector<8x8xbf16>
      tpu.vector_store %arg5[%c0_11, %c0_12], %13 {strides = array<i32>} : memref<8x8xbf16, #tpu.memory_space<vmem>>, vector<8x8xbf16>,
    } else {
    }
    return
  }
  func.func @transform_0(%arg0: i32, %arg1: i32) -> (i32, i32) {
    %c0_i32 = arith.constant 0 : i32
    return %arg0, %arg1 : i32, i32
  }
  func.func @transform_1(%arg0: i32, %arg1: i32) -> (i32, i32) {
    %c0_i32 = arith.constant 0 : i32
    %c0_i32_0 = arith.constant 0 : i32
    return %arg1, %c0_i32 : i32, i32
  }
  func.func @transform_2(%arg0: i32, %arg1: i32) -> (i32, i32) {
    %c0_i32 = arith.constant 0 : i32
    %c0_i32_0 = arith.constant 0 : i32
    %c0_i32_1 = arith.constant 0 : i32
    return %c0_i32, %c0_i32_0 : i32, i32
  }
  func.func @transform_3(%arg0: i32, %arg1: i32) -> (i32, i32) {
    %c0_i32 = arith.constant 0 : i32
    %c0_i32_0 = arith.constant 0 : i32
    return %arg0, %c0_i32 : i32, i32
  }
}

module attributes {stable_mosaic.version = 11 : i64} {
  func.func @_mm_bias_upadd_kernel(%arg0: i32, %arg1: i32, %arg2: memref<16x512xbf16, #tpu.memory_space<vmem>>, %arg3: memref<512x8xbf16, #tpu.memory_space<vmem>>, %arg4: memref<1x8xf32, #tpu.memory_space<vmem>>, %arg5: memref<2x4x8xbf16, #tpu.memory_space<vmem>>, %arg6: memref<16x8xbf16, #tpu.memory_space<vmem>>, %arg7: memref<16x8xf32, #tpu.memory_space<vmem>>) attributes {dimension_semantics = [#tpu.dimension_semantics<parallel>, #tpu.dimension_semantics<arbitrary>], iteration_bounds = array<i64: 2, 1>, scalar_prefetch = 0 : i64, scratch_operands = 1 : i64, tpu.core_type = #tpu.core_type<tc>, window_params = [{transform_indices = @transform_0, window_bounds = array<i64: 16, 512>}, {transform_indices = @transform_1, window_bounds = array<i64: 512, 8>}, {pipeline_mode = #tpu.pipeline_mode<synchronous>, transform_indices = @transform_2, window_bounds = array<i64: 1, 8>}, {transform_indices = @transform_3, window_bounds = array<i64: 2, 4, 8>}, {transform_indices = @transform_4, window_bounds = array<i64: 16, 8>}]} {
    %c0_i32 = arith.constant 0 : i32
    %0 = arith.cmpi eq, %arg1, %c0_i32 : i32
    %1 = arith.extui %0 : i1 to i32
    %c0_i32_0 = arith.constant 0 : i32
    %2 = arith.cmpi ne, %1, %c0_i32_0 : i32
    scf.if %2 {
      %c0_10 = arith.constant 0 : index
      %c0_11 = arith.constant 0 : index
      %12 = vector.load %arg4[%c0_10, %c0_11] : memref<1x8xf32, #tpu.memory_space<vmem>>, vector<1x8xf32>
      %c0_12 = arith.constant 0 : index
      %c0_13 = arith.constant 0 : index
      %c0_14 = arith.constant 0 : index
      %13 = vector.load %arg5[%c0_12, %c0_13, %c0_14] : memref<2x4x8xbf16, #tpu.memory_space<vmem>>, vector<1x4x8xbf16>
      %14 = vector.shape_cast %13 : vector<1x4x8xbf16> to vector<4x8xbf16>
      %15 = arith.extf %14 : vector<4x8xbf16> to vector<4x8xf32>
      %16 = vector.broadcast %12 : vector<1x8xf32> to vector<4x8xf32>
      %17 = arith.addf %15, %16 : vector<4x8xf32>
      %c0_15 = arith.constant 0 : index
      %c0_16 = arith.constant 0 : index
      %18 = vector.load %arg7[%c0_15, %c0_16] : memref<16x8xf32, #tpu.memory_space<vmem>>, vector<4x8xf32>
      tpu.vector_store %arg7[%c0_15, %c0_16], %17 {strides = array<i32>} : memref<16x8xf32, #tpu.memory_space<vmem>>, vector<4x8xf32>,
      %c0_17 = arith.constant 0 : index
      %c0_18 = arith.constant 0 : index
      %c0_19 = arith.constant 0 : index
      %19 = vector.load %arg5[%c0_17, %c0_18, %c0_19] : memref<2x4x8xbf16, #tpu.memory_space<vmem>>, vector<1x4x8xbf16>
      %20 = vector.shape_cast %19 : vector<1x4x8xbf16> to vector<4x8xbf16>
      %21 = arith.extf %20 : vector<4x8xbf16> to vector<4x8xf32>
      %22 = vector.broadcast %12 : vector<1x8xf32> to vector<4x8xf32>
      %23 = arith.addf %21, %22 : vector<4x8xf32>
      %c4 = arith.constant 4 : index
      %c0_20 = arith.constant 0 : index
      %24 = vector.load %arg7[%c4, %c0_20] : memref<16x8xf32, #tpu.memory_space<vmem>>, vector<4x8xf32>
      tpu.vector_store %arg7[%c4, %c0_20], %23 {strides = array<i32>} : memref<16x8xf32, #tpu.memory_space<vmem>>, vector<4x8xf32>,
      %c1 = arith.constant 1 : index
      %c0_21 = arith.constant 0 : index
      %c0_22 = arith.constant 0 : index
      %25 = vector.load %arg5[%c1, %c0_21, %c0_22] : memref<2x4x8xbf16, #tpu.memory_space<vmem>>, vector<1x4x8xbf16>
      %26 = vector.shape_cast %25 : vector<1x4x8xbf16> to vector<4x8xbf16>
      %27 = arith.extf %26 : vector<4x8xbf16> to vector<4x8xf32>
      %28 = vector.broadcast %12 : vector<1x8xf32> to vector<4x8xf32>
      %29 = arith.addf %27, %28 : vector<4x8xf32>
      %c8 = arith.constant 8 : index
      %c0_23 = arith.constant 0 : index
      %30 = vector.load %arg7[%c8, %c0_23] : memref<16x8xf32, #tpu.memory_space<vmem>>, vector<4x8xf32>
      tpu.vector_store %arg7[%c8, %c0_23], %29 {strides = array<i32>} : memref<16x8xf32, #tpu.memory_space<vmem>>, vector<4x8xf32>,
      %c1_24 = arith.constant 1 : index
      %c0_25 = arith.constant 0 : index
      %c0_26 = arith.constant 0 : index
      %31 = vector.load %arg5[%c1_24, %c0_25, %c0_26] : memref<2x4x8xbf16, #tpu.memory_space<vmem>>, vector<1x4x8xbf16>
      %32 = vector.shape_cast %31 : vector<1x4x8xbf16> to vector<4x8xbf16>
      %33 = arith.extf %32 : vector<4x8xbf16> to vector<4x8xf32>
      %34 = vector.broadcast %12 : vector<1x8xf32> to vector<4x8xf32>
      %35 = arith.addf %33, %34 : vector<4x8xf32>
      %c12 = arith.constant 12 : index
      %c0_27 = arith.constant 0 : index
      %36 = vector.load %arg7[%c12, %c0_27] : memref<16x8xf32, #tpu.memory_space<vmem>>, vector<4x8xf32>
      tpu.vector_store %arg7[%c12, %c0_27], %35 {strides = array<i32>} : memref<16x8xf32, #tpu.memory_space<vmem>>, vector<4x8xf32>,
    } else {
    }
    %c0 = arith.constant 0 : index
    %c0_1 = arith.constant 0 : index
    %3 = vector.load %arg7[%c0, %c0_1] : memref<16x8xf32, #tpu.memory_space<vmem>>, vector<16x8xf32>
    %c0_2 = arith.constant 0 : index
    %c0_3 = arith.constant 0 : index
    %4 = vector.load %arg2[%c0_2, %c0_3] : memref<16x512xbf16, #tpu.memory_space<vmem>>, vector<16x512xbf16>
    %c0_4 = arith.constant 0 : index
    %c0_5 = arith.constant 0 : index
    %5 = vector.load %arg3[%c0_4, %c0_5] : memref<512x8xbf16, #tpu.memory_space<vmem>>, vector<512x8xbf16>
    %cst = arith.constant dense<0.000000e+00> : vector<16x8xf32>
    %6 = tpu.matmul %4, %5, %cst {dimension_numbers = #tpu.dot_dimension_numbers<[1], [0], [0], [1], [0, 0, 1, 1], [], []>} : vector<16x512xbf16>, vector<512x8xbf16>, vector<16x8xf32> -> vector<16x8xf32>
    %7 = arith.addf %3, %6 : vector<16x8xf32>
    %c0_6 = arith.constant 0 : index
    %c0_7 = arith.constant 0 : index
    %8 = vector.load %arg7[%c0_6, %c0_7] : memref<16x8xf32, #tpu.memory_space<vmem>>, vector<16x8xf32>
    tpu.vector_store %arg7[%c0_6, %c0_7], %7 {strides = array<i32>} : memref<16x8xf32, #tpu.memory_space<vmem>>, vector<16x8xf32>,
    %c0_i32_8 = arith.constant 0 : i32
    %9 = arith.cmpi eq, %arg1, %c0_i32_8 : i32
    %10 = arith.extui %9 : i1 to i32
    %c0_i32_9 = arith.constant 0 : i32
    %11 = arith.cmpi ne, %10, %c0_i32_9 : i32
    scf.if %11 {
      %c0_10 = arith.constant 0 : index
      %c0_11 = arith.constant 0 : index
      %12 = vector.load %arg7[%c0_10, %c0_11] : memref<16x8xf32, #tpu.memory_space<vmem>>, vector<16x8xf32>
      %13 = arith.truncf %12 : vector<16x8xf32> to vector<16x8xbf16>
      %c0_12 = arith.constant 0 : index
      %c0_13 = arith.constant 0 : index
      %14 = vector.load %arg6[%c0_12, %c0_13] : memref<16x8xbf16, #tpu.memory_space<vmem>>, vector<16x8xbf16>
      tpu.vector_store %arg6[%c0_12, %c0_13], %13 {strides = array<i32>} : memref<16x8xbf16, #tpu.memory_space<vmem>>, vector<16x8xbf16>,
    } else {
    }
    return
  }
  func.func @transform_0(%arg0: i32, %arg1: i32) -> (i32, i32) {
    %c0_i32 = arith.constant 0 : i32
    return %arg0, %arg1 : i32, i32
  }
  func.func @transform_1(%arg0: i32, %arg1: i32) -> (i32, i32) {
    %c0_i32 = arith.constant 0 : i32
    %c0_i32_0 = arith.constant 0 : i32
    return %arg1, %c0_i32 : i32, i32
  }
  func.func @transform_2(%arg0: i32, %arg1: i32) -> (i32, i32) {
    %c0_i32 = arith.constant 0 : i32
    %c0_i32_0 = arith.constant 0 : i32
    %c0_i32_1 = arith.constant 0 : i32
    return %c0_i32, %c0_i32_0 : i32, i32
  }
  func.func @transform_3(%arg0: i32, %arg1: i32) -> (i32, i32, i32) {
    %c0_i32 = arith.constant 0 : i32
    %c0_i32_0 = arith.constant 0 : i32
    %c0_i32_1 = arith.constant 0 : i32
    return %arg0, %c0_i32, %c0_i32_0 : i32, i32, i32
  }
  func.func @transform_4(%arg0: i32, %arg1: i32) -> (i32, i32) {
    %c0_i32 = arith.constant 0 : i32
    %c0_i32_0 = arith.constant 0 : i32
    return %arg0, %c0_i32 : i32, i32
  }
}

module attributes {stable_mosaic.version = 11 : i64} {
  func.func @_mm_bias_upadd_kernel(%arg0: i32, %arg1: i32, %arg2: memref<64x256xbf16, #tpu.memory_space<vmem>>, %arg3: memref<256x8xbf16, #tpu.memory_space<vmem>>, %arg4: memref<1x8xf32, #tpu.memory_space<vmem>>, %arg5: memref<4x8x8xbf16, #tpu.memory_space<vmem>>, %arg6: memref<64x8xbf16, #tpu.memory_space<vmem>>, %arg7: memref<64x8xf32, #tpu.memory_space<vmem>>) attributes {dimension_semantics = [#tpu.dimension_semantics<parallel>, #tpu.dimension_semantics<arbitrary>], iteration_bounds = array<i64: 2, 1>, scalar_prefetch = 0 : i64, scratch_operands = 1 : i64, tpu.core_type = #tpu.core_type<tc>, window_params = [{transform_indices = @transform_0, window_bounds = array<i64: 64, 256>}, {transform_indices = @transform_1, window_bounds = array<i64: 256, 8>}, {pipeline_mode = #tpu.pipeline_mode<synchronous>, transform_indices = @transform_2, window_bounds = array<i64: 1, 8>}, {transform_indices = @transform_3, window_bounds = array<i64: 4, 8, 8>}, {transform_indices = @transform_4, window_bounds = array<i64: 64, 8>}]} {
    %c0_i32 = arith.constant 0 : i32
    %0 = arith.cmpi eq, %arg1, %c0_i32 : i32
    %1 = arith.extui %0 : i1 to i32
    %c0_i32_0 = arith.constant 0 : i32
    %2 = arith.cmpi ne, %1, %c0_i32_0 : i32
    scf.if %2 {
      %c0_10 = arith.constant 0 : index
      %c0_11 = arith.constant 0 : index
      %12 = vector.load %arg4[%c0_10, %c0_11] : memref<1x8xf32, #tpu.memory_space<vmem>>, vector<1x8xf32>
      %c0_12 = arith.constant 0 : index
      %c0_13 = arith.constant 0 : index
      %c0_14 = arith.constant 0 : index
      %13 = vector.load %arg5[%c0_12, %c0_13, %c0_14] : memref<4x8x8xbf16, #tpu.memory_space<vmem>>, vector<1x8x8xbf16>
      %14 = vector.shape_cast %13 : vector<1x8x8xbf16> to vector<8x8xbf16>
      %15 = arith.extf %14 : vector<8x8xbf16> to vector<8x8xf32>
      %16 = vector.broadcast %12 : vector<1x8xf32> to vector<8x8xf32>
      %17 = arith.addf %15, %16 : vector<8x8xf32>
      %c0_15 = arith.constant 0 : index
      %c0_16 = arith.constant 0 : index
      %18 = vector.load %arg7[%c0_15, %c0_16] : memref<64x8xf32, #tpu.memory_space<vmem>>, vector<8x8xf32>
      tpu.vector_store %arg7[%c0_15, %c0_16], %17 {strides = array<i32>} : memref<64x8xf32, #tpu.memory_space<vmem>>, vector<8x8xf32>,
      %c0_17 = arith.constant 0 : index
      %c0_18 = arith.constant 0 : index
      %c0_19 = arith.constant 0 : index
      %19 = vector.load %arg5[%c0_17, %c0_18, %c0_19] : memref<4x8x8xbf16, #tpu.memory_space<vmem>>, vector<1x8x8xbf16>
      %20 = vector.shape_cast %19 : vector<1x8x8xbf16> to vector<8x8xbf16>
      %21 = arith.extf %20 : vector<8x8xbf16> to vector<8x8xf32>
      %22 = vector.broadcast %12 : vector<1x8xf32> to vector<8x8xf32>
      %23 = arith.addf %21, %22 : vector<8x8xf32>
      %c8 = arith.constant 8 : index
      %c0_20 = arith.constant 0 : index
      %24 = vector.load %arg7[%c8, %c0_20] : memref<64x8xf32, #tpu.memory_space<vmem>>, vector<8x8xf32>
      tpu.vector_store %arg7[%c8, %c0_20], %23 {strides = array<i32>} : memref<64x8xf32, #tpu.memory_space<vmem>>, vector<8x8xf32>,
      %c1 = arith.constant 1 : index
      %c0_21 = arith.constant 0 : index
      %c0_22 = arith.constant 0 : index
      %25 = vector.load %arg5[%c1, %c0_21, %c0_22] : memref<4x8x8xbf16, #tpu.memory_space<vmem>>, vector<1x8x8xbf16>
      %26 = vector.shape_cast %25 : vector<1x8x8xbf16> to vector<8x8xbf16>
      %27 = arith.extf %26 : vector<8x8xbf16> to vector<8x8xf32>
      %28 = vector.broadcast %12 : vector<1x8xf32> to vector<8x8xf32>
      %29 = arith.addf %27, %28 : vector<8x8xf32>
      %c16 = arith.constant 16 : index
      %c0_23 = arith.constant 0 : index
      %30 = vector.load %arg7[%c16, %c0_23] : memref<64x8xf32, #tpu.memory_space<vmem>>, vector<8x8xf32>
      tpu.vector_store %arg7[%c16, %c0_23], %29 {strides = array<i32>} : memref<64x8xf32, #tpu.memory_space<vmem>>, vector<8x8xf32>,
      %c1_24 = arith.constant 1 : index
      %c0_25 = arith.constant 0 : index
      %c0_26 = arith.constant 0 : index
      %31 = vector.load %arg5[%c1_24, %c0_25, %c0_26] : memref<4x8x8xbf16, #tpu.memory_space<vmem>>, vector<1x8x8xbf16>
      %32 = vector.shape_cast %31 : vector<1x8x8xbf16> to vector<8x8xbf16>
      %33 = arith.extf %32 : vector<8x8xbf16> to vector<8x8xf32>
      %34 = vector.broadcast %12 : vector<1x8xf32> to vector<8x8xf32>
      %35 = arith.addf %33, %34 : vector<8x8xf32>
      %c24 = arith.constant 24 : index
      %c0_27 = arith.constant 0 : index
      %36 = vector.load %arg7[%c24, %c0_27] : memref<64x8xf32, #tpu.memory_space<vmem>>, vector<8x8xf32>
      tpu.vector_store %arg7[%c24, %c0_27], %35 {strides = array<i32>} : memref<64x8xf32, #tpu.memory_space<vmem>>, vector<8x8xf32>,
      %c2 = arith.constant 2 : index
      %c0_28 = arith.constant 0 : index
      %c0_29 = arith.constant 0 : index
      %37 = vector.load %arg5[%c2, %c0_28, %c0_29] : memref<4x8x8xbf16, #tpu.memory_space<vmem>>, vector<1x8x8xbf16>
      %38 = vector.shape_cast %37 : vector<1x8x8xbf16> to vector<8x8xbf16>
      %39 = arith.extf %38 : vector<8x8xbf16> to vector<8x8xf32>
      %40 = vector.broadcast %12 : vector<1x8xf32> to vector<8x8xf32>
      %41 = arith.addf %39, %40 : vector<8x8xf32>
      %c32 = arith.constant 32 : index
      %c0_30 = arith.constant 0 : index
      %42 = vector.load %arg7[%c32, %c0_30] : memref<64x8xf32, #tpu.memory_space<vmem>>, vector<8x8xf32>
      tpu.vector_store %arg7[%c32, %c0_30], %41 {strides = array<i32>} : memref<64x8xf32, #tpu.memory_space<vmem>>, vector<8x8xf32>,
      %c2_31 = arith.constant 2 : index
      %c0_32 = arith.constant 0 : index
      %c0_33 = arith.constant 0 : index
      %43 = vector.load %arg5[%c2_31, %c0_32, %c0_33] : memref<4x8x8xbf16, #tpu.memory_space<vmem>>, vector<1x8x8xbf16>
      %44 = vector.shape_cast %43 : vector<1x8x8xbf16> to vector<8x8xbf16>
      %45 = arith.extf %44 : vector<8x8xbf16> to vector<8x8xf32>
      %46 = vector.broadcast %12 : vector<1x8xf32> to vector<8x8xf32>
      %47 = arith.addf %45, %46 : vector<8x8xf32>
      %c40 = arith.constant 40 : index
      %c0_34 = arith.constant 0 : index
      %48 = vector.load %arg7[%c40, %c0_34] : memref<64x8xf32, #tpu.memory_space<vmem>>, vector<8x8xf32>
      tpu.vector_store %arg7[%c40, %c0_34], %47 {strides = array<i32>} : memref<64x8xf32, #tpu.memory_space<vmem>>, vector<8x8xf32>,
      %c3 = arith.constant 3 : index
      %c0_35 = arith.constant 0 : index
      %c0_36 = arith.constant 0 : index
      %49 = vector.load %arg5[%c3, %c0_35, %c0_36] : memref<4x8x8xbf16, #tpu.memory_space<vmem>>, vector<1x8x8xbf16>
      %50 = vector.shape_cast %49 : vector<1x8x8xbf16> to vector<8x8xbf16>
      %51 = arith.extf %50 : vector<8x8xbf16> to vector<8x8xf32>
      %52 = vector.broadcast %12 : vector<1x8xf32> to vector<8x8xf32>
      %53 = arith.addf %51, %52 : vector<8x8xf32>
      %c48 = arith.constant 48 : index
      %c0_37 = arith.constant 0 : index
      %54 = vector.load %arg7[%c48, %c0_37] : memref<64x8xf32, #tpu.memory_space<vmem>>, vector<8x8xf32>
      tpu.vector_store %arg7[%c48, %c0_37], %53 {strides = array<i32>} : memref<64x8xf32, #tpu.memory_space<vmem>>, vector<8x8xf32>,
      %c3_38 = arith.constant 3 : index
      %c0_39 = arith.constant 0 : index
      %c0_40 = arith.constant 0 : index
      %55 = vector.load %arg5[%c3_38, %c0_39, %c0_40] : memref<4x8x8xbf16, #tpu.memory_space<vmem>>, vector<1x8x8xbf16>
      %56 = vector.shape_cast %55 : vector<1x8x8xbf16> to vector<8x8xbf16>
      %57 = arith.extf %56 : vector<8x8xbf16> to vector<8x8xf32>
      %58 = vector.broadcast %12 : vector<1x8xf32> to vector<8x8xf32>
      %59 = arith.addf %57, %58 : vector<8x8xf32>
      %c56 = arith.constant 56 : index
      %c0_41 = arith.constant 0 : index
      %60 = vector.load %arg7[%c56, %c0_41] : memref<64x8xf32, #tpu.memory_space<vmem>>, vector<8x8xf32>
      tpu.vector_store %arg7[%c56, %c0_41], %59 {strides = array<i32>} : memref<64x8xf32, #tpu.memory_space<vmem>>, vector<8x8xf32>,
    } else {
    }
    %c0 = arith.constant 0 : index
    %c0_1 = arith.constant 0 : index
    %3 = vector.load %arg7[%c0, %c0_1] : memref<64x8xf32, #tpu.memory_space<vmem>>, vector<64x8xf32>
    %c0_2 = arith.constant 0 : index
    %c0_3 = arith.constant 0 : index
    %4 = vector.load %arg2[%c0_2, %c0_3] : memref<64x256xbf16, #tpu.memory_space<vmem>>, vector<64x256xbf16>
    %c0_4 = arith.constant 0 : index
    %c0_5 = arith.constant 0 : index
    %5 = vector.load %arg3[%c0_4, %c0_5] : memref<256x8xbf16, #tpu.memory_space<vmem>>, vector<256x8xbf16>
    %cst = arith.constant dense<0.000000e+00> : vector<64x8xf32>
    %6 = tpu.matmul %4, %5, %cst {dimension_numbers = #tpu.dot_dimension_numbers<[1], [0], [0], [1], [0, 0, 1, 1], [], []>} : vector<64x256xbf16>, vector<256x8xbf16>, vector<64x8xf32> -> vector<64x8xf32>
    %7 = arith.addf %3, %6 : vector<64x8xf32>
    %c0_6 = arith.constant 0 : index
    %c0_7 = arith.constant 0 : index
    %8 = vector.load %arg7[%c0_6, %c0_7] : memref<64x8xf32, #tpu.memory_space<vmem>>, vector<64x8xf32>
    tpu.vector_store %arg7[%c0_6, %c0_7], %7 {strides = array<i32>} : memref<64x8xf32, #tpu.memory_space<vmem>>, vector<64x8xf32>,
    %c0_i32_8 = arith.constant 0 : i32
    %9 = arith.cmpi eq, %arg1, %c0_i32_8 : i32
    %10 = arith.extui %9 : i1 to i32
    %c0_i32_9 = arith.constant 0 : i32
    %11 = arith.cmpi ne, %10, %c0_i32_9 : i32
    scf.if %11 {
      %c0_10 = arith.constant 0 : index
      %c0_11 = arith.constant 0 : index
      %12 = vector.load %arg7[%c0_10, %c0_11] : memref<64x8xf32, #tpu.memory_space<vmem>>, vector<64x8xf32>
      %13 = arith.truncf %12 : vector<64x8xf32> to vector<64x8xbf16>
      %c0_12 = arith.constant 0 : index
      %c0_13 = arith.constant 0 : index
      %14 = vector.load %arg6[%c0_12, %c0_13] : memref<64x8xbf16, #tpu.memory_space<vmem>>, vector<64x8xbf16>
      tpu.vector_store %arg6[%c0_12, %c0_13], %13 {strides = array<i32>} : memref<64x8xbf16, #tpu.memory_space<vmem>>, vector<64x8xbf16>,
    } else {
    }
    return
  }
  func.func @transform_0(%arg0: i32, %arg1: i32) -> (i32, i32) {
    %c0_i32 = arith.constant 0 : i32
    return %arg0, %arg1 : i32, i32
  }
  func.func @transform_1(%arg0: i32, %arg1: i32) -> (i32, i32) {
    %c0_i32 = arith.constant 0 : i32
    %c0_i32_0 = arith.constant 0 : i32
    return %arg1, %c0_i32 : i32, i32
  }
  func.func @transform_2(%arg0: i32, %arg1: i32) -> (i32, i32) {
    %c0_i32 = arith.constant 0 : i32
    %c0_i32_0 = arith.constant 0 : i32
    %c0_i32_1 = arith.constant 0 : i32
    return %c0_i32, %c0_i32_0 : i32, i32
  }
  func.func @transform_3(%arg0: i32, %arg1: i32) -> (i32, i32, i32) {
    %c0_i32 = arith.constant 0 : i32
    %c0_i32_0 = arith.constant 0 : i32
    %c0_i32_1 = arith.constant 0 : i32
    return %arg0, %c0_i32, %c0_i32_0 : i32, i32, i32
  }
  func.func @transform_4(%arg0: i32, %arg1: i32) -> (i32, i32) {
    %c0_i32 = arith.constant 0 : i32
    %c0_i32_0 = arith.constant 0 : i32
    return %arg0, %c0_i32 : i32, i32
  }
}

module attributes {stable_mosaic.version = 11 : i64} {
  func.func @_conv3x3_kernel(%arg0: i32, %arg1: memref<1x168x8xbf16, #tpu.memory_space<vmem>>, %arg2: memref<9x8x8xbf16, #tpu.memory_space<vmem>>, %arg3: memref<1x8xf32, #tpu.memory_space<vmem>>, %arg4: memref<1x128x8xf32, #tpu.memory_space<vmem>>, %arg5: memref<128x8xf32, #tpu.memory_space<vmem>>) attributes {dimension_semantics = [#tpu.dimension_semantics<parallel>], iteration_bounds = array<i64: 2>, scalar_prefetch = 0 : i64, scratch_operands = 1 : i64, tpu.core_type = #tpu.core_type<tc>, window_params = [{transform_indices = @transform_0, window_bounds = array<i64: 1, 168, 8>}, {pipeline_mode = #tpu.pipeline_mode<synchronous>, transform_indices = @transform_1, window_bounds = array<i64: 9, 8, 8>}, {pipeline_mode = #tpu.pipeline_mode<synchronous>, transform_indices = @transform_2, window_bounds = array<i64: 1, 8>}, {transform_indices = @transform_3, window_bounds = array<i64: 1, 128, 8>}]} {
    %c0 = arith.constant 0 : index
    %c0_0 = arith.constant 0 : index
    %c0_1 = arith.constant 0 : index
    %0 = vector.load %arg1[%c0, %c0_0, %c0_1] : memref<1x168x8xbf16, #tpu.memory_space<vmem>>, vector<1x168x8xbf16>
    %1 = vector.shape_cast %0 : vector<1x168x8xbf16> to vector<168x8xbf16>
    %c0_2 = arith.constant 0 : index
    %c0_3 = arith.constant 0 : index
    %2 = vector.load %arg3[%c0_2, %c0_3] : memref<1x8xf32, #tpu.memory_space<vmem>>, vector<1x8xf32>
    %3 = vector.shape_cast %2 : vector<1x8xf32> to vector<1x8xf32>
    %4 = vector.broadcast %3 : vector<1x8xf32> to vector<128x8xf32>
    %c0_4 = arith.constant 0 : index
    %c0_5 = arith.constant 0 : index
    %5 = vector.load %arg5[%c0_4, %c0_5] : memref<128x8xf32, #tpu.memory_space<vmem>>, vector<128x8xf32>
    tpu.vector_store %arg5[%c0_4, %c0_5], %4 {strides = array<i32>} : memref<128x8xf32, #tpu.memory_space<vmem>>, vector<128x8xf32>,
    %c0_6 = arith.constant 0 : index
    %c0_7 = arith.constant 0 : index
    %6 = vector.load %arg5[%c0_6, %c0_7] : memref<128x8xf32, #tpu.memory_space<vmem>>, vector<128x8xf32>
    %7 = vector.extract_strided_slice %1 {offsets = [0, 0], sizes = [128, 8], strides = [1, 1]} : vector<168x8xbf16> to vector<128x8xbf16>
    %c0_8 = arith.constant 0 : index
    %c0_9 = arith.constant 0 : index
    %c0_10 = arith.constant 0 : index
    %8 = vector.load %arg2[%c0_8, %c0_9, %c0_10] : memref<9x8x8xbf16, #tpu.memory_space<vmem>>, vector<1x8x8xbf16>
    %9 = vector.shape_cast %8 : vector<1x8x8xbf16> to vector<8x8xbf16>
    %cst = arith.constant dense<0.000000e+00> : vector<128x8xf32>
    %10 = tpu.matmul %7, %9, %cst {dimension_numbers = #tpu.dot_dimension_numbers<[1], [0], [0], [1], [0, 0, 1, 1], [], []>} : vector<128x8xbf16>, vector<8x8xbf16>, vector<128x8xf32> -> vector<128x8xf32>
    %11 = arith.addf %6, %10 : vector<128x8xf32>
    %c0_11 = arith.constant 0 : index
    %c0_12 = arith.constant 0 : index
    %12 = vector.load %arg5[%c0_11, %c0_12] : memref<128x8xf32, #tpu.memory_space<vmem>>, vector<128x8xf32>
    tpu.vector_store %arg5[%c0_11, %c0_12], %11 {strides = array<i32>} : memref<128x8xf32, #tpu.memory_space<vmem>>, vector<128x8xf32>,
    %c0_13 = arith.constant 0 : index
    %c0_14 = arith.constant 0 : index
    %13 = vector.load %arg5[%c0_13, %c0_14] : memref<128x8xf32, #tpu.memory_space<vmem>>, vector<128x8xf32>
    %14 = vector.extract_strided_slice %1 {offsets = [1, 0], sizes = [128, 8], strides = [1, 1]} : vector<168x8xbf16> to vector<128x8xbf16>
    %c1 = arith.constant 1 : index
    %c0_15 = arith.constant 0 : index
    %c0_16 = arith.constant 0 : index
    %15 = vector.load %arg2[%c1, %c0_15, %c0_16] : memref<9x8x8xbf16, #tpu.memory_space<vmem>>, vector<1x8x8xbf16>
    %16 = vector.shape_cast %15 : vector<1x8x8xbf16> to vector<8x8xbf16>
    %cst_17 = arith.constant dense<0.000000e+00> : vector<128x8xf32>
    %17 = tpu.matmul %14, %16, %cst_17 {dimension_numbers = #tpu.dot_dimension_numbers<[1], [0], [0], [1], [0, 0, 1, 1], [], []>} : vector<128x8xbf16>, vector<8x8xbf16>, vector<128x8xf32> -> vector<128x8xf32>
    %18 = arith.addf %13, %17 : vector<128x8xf32>
    %c0_18 = arith.constant 0 : index
    %c0_19 = arith.constant 0 : index
    %19 = vector.load %arg5[%c0_18, %c0_19] : memref<128x8xf32, #tpu.memory_space<vmem>>, vector<128x8xf32>
    tpu.vector_store %arg5[%c0_18, %c0_19], %18 {strides = array<i32>} : memref<128x8xf32, #tpu.memory_space<vmem>>, vector<128x8xf32>,
    %c0_20 = arith.constant 0 : index
    %c0_21 = arith.constant 0 : index
    %20 = vector.load %arg5[%c0_20, %c0_21] : memref<128x8xf32, #tpu.memory_space<vmem>>, vector<128x8xf32>
    %21 = vector.extract_strided_slice %1 {offsets = [2, 0], sizes = [128, 8], strides = [1, 1]} : vector<168x8xbf16> to vector<128x8xbf16>
    %c2 = arith.constant 2 : index
    %c0_22 = arith.constant 0 : index
    %c0_23 = arith.constant 0 : index
    %22 = vector.load %arg2[%c2, %c0_22, %c0_23] : memref<9x8x8xbf16, #tpu.memory_space<vmem>>, vector<1x8x8xbf16>
    %23 = vector.shape_cast %22 : vector<1x8x8xbf16> to vector<8x8xbf16>
    %cst_24 = arith.constant dense<0.000000e+00> : vector<128x8xf32>
    %24 = tpu.matmul %21, %23, %cst_24 {dimension_numbers = #tpu.dot_dimension_numbers<[1], [0], [0], [1], [0, 0, 1, 1], [], []>} : vector<128x8xbf16>, vector<8x8xbf16>, vector<128x8xf32> -> vector<128x8xf32>
    %25 = arith.addf %20, %24 : vector<128x8xf32>
    %c0_25 = arith.constant 0 : index
    %c0_26 = arith.constant 0 : index
    %26 = vector.load %arg5[%c0_25, %c0_26] : memref<128x8xf32, #tpu.memory_space<vmem>>, vector<128x8xf32>
    tpu.vector_store %arg5[%c0_25, %c0_26], %25 {strides = array<i32>} : memref<128x8xf32, #tpu.memory_space<vmem>>, vector<128x8xf32>,
    %c0_27 = arith.constant 0 : index
    %c0_28 = arith.constant 0 : index
    %27 = vector.load %arg5[%c0_27, %c0_28] : memref<128x8xf32, #tpu.memory_space<vmem>>, vector<128x8xf32>
    %28 = vector.extract_strided_slice %1 {offsets = [16, 0], sizes = [128, 8], strides = [1, 1]} : vector<168x8xbf16> to vector<128x8xbf16>
    %c3 = arith.constant 3 : index
    %c0_29 = arith.constant 0 : index
    %c0_30 = arith.constant 0 : index
    %29 = vector.load %arg2[%c3, %c0_29, %c0_30] : memref<9x8x8xbf16, #tpu.memory_space<vmem>>, vector<1x8x8xbf16>
    %30 = vector.shape_cast %29 : vector<1x8x8xbf16> to vector<8x8xbf16>
    %cst_31 = arith.constant dense<0.000000e+00> : vector<128x8xf32>
    %31 = tpu.matmul %28, %30, %cst_31 {dimension_numbers = #tpu.dot_dimension_numbers<[1], [0], [0], [1], [0, 0, 1, 1], [], []>} : vector<128x8xbf16>, vector<8x8xbf16>, vector<128x8xf32> -> vector<128x8xf32>
    %32 = arith.addf %27, %31 : vector<128x8xf32>
    %c0_32 = arith.constant 0 : index
    %c0_33 = arith.constant 0 : index
    %33 = vector.load %arg5[%c0_32, %c0_33] : memref<128x8xf32, #tpu.memory_space<vmem>>, vector<128x8xf32>
    tpu.vector_store %arg5[%c0_32, %c0_33], %32 {strides = array<i32>} : memref<128x8xf32, #tpu.memory_space<vmem>>, vector<128x8xf32>,
    %c0_34 = arith.constant 0 : index
    %c0_35 = arith.constant 0 : index
    %34 = vector.load %arg5[%c0_34, %c0_35] : memref<128x8xf32, #tpu.memory_space<vmem>>, vector<128x8xf32>
    %35 = vector.extract_strided_slice %1 {offsets = [17, 0], sizes = [128, 8], strides = [1, 1]} : vector<168x8xbf16> to vector<128x8xbf16>
    %c4 = arith.constant 4 : index
    %c0_36 = arith.constant 0 : index
    %c0_37 = arith.constant 0 : index
    %36 = vector.load %arg2[%c4, %c0_36, %c0_37] : memref<9x8x8xbf16, #tpu.memory_space<vmem>>, vector<1x8x8xbf16>
    %37 = vector.shape_cast %36 : vector<1x8x8xbf16> to vector<8x8xbf16>
    %cst_38 = arith.constant dense<0.000000e+00> : vector<128x8xf32>
    %38 = tpu.matmul %35, %37, %cst_38 {dimension_numbers = #tpu.dot_dimension_numbers<[1], [0], [0], [1], [0, 0, 1, 1], [], []>} : vector<128x8xbf16>, vector<8x8xbf16>, vector<128x8xf32> -> vector<128x8xf32>
    %39 = arith.addf %34, %38 : vector<128x8xf32>
    %c0_39 = arith.constant 0 : index
    %c0_40 = arith.constant 0 : index
    %40 = vector.load %arg5[%c0_39, %c0_40] : memref<128x8xf32, #tpu.memory_space<vmem>>, vector<128x8xf32>
    tpu.vector_store %arg5[%c0_39, %c0_40], %39 {strides = array<i32>} : memref<128x8xf32, #tpu.memory_space<vmem>>, vector<128x8xf32>,
    %c0_41 = arith.constant 0 : index
    %c0_42 = arith.constant 0 : index
    %41 = vector.load %arg5[%c0_41, %c0_42] : memref<128x8xf32, #tpu.memory_space<vmem>>, vector<128x8xf32>
    %42 = vector.extract_strided_slice %1 {offsets = [18, 0], sizes = [128, 8], strides = [1, 1]} : vector<168x8xbf16> to vector<128x8xbf16>
    %c5 = arith.constant 5 : index
    %c0_43 = arith.constant 0 : index
    %c0_44 = arith.constant 0 : index
    %43 = vector.load %arg2[%c5, %c0_43, %c0_44] : memref<9x8x8xbf16, #tpu.memory_space<vmem>>, vector<1x8x8xbf16>
    %44 = vector.shape_cast %43 : vector<1x8x8xbf16> to vector<8x8xbf16>
    %cst_45 = arith.constant dense<0.000000e+00> : vector<128x8xf32>
    %45 = tpu.matmul %42, %44, %cst_45 {dimension_numbers = #tpu.dot_dimension_numbers<[1], [0], [0], [1], [0, 0, 1, 1], [], []>} : vector<128x8xbf16>, vector<8x8xbf16>, vector<128x8xf32> -> vector<128x8xf32>
    %46 = arith.addf %41, %45 : vector<128x8xf32>
    %c0_46 = arith.constant 0 : index
    %c0_47 = arith.constant 0 : index
    %47 = vector.load %arg5[%c0_46, %c0_47] : memref<128x8xf32, #tpu.memory_space<vmem>>, vector<128x8xf32>
    tpu.vector_store %arg5[%c0_46, %c0_47], %46 {strides = array<i32>} : memref<128x8xf32, #tpu.memory_space<vmem>>, vector<128x8xf32>,
    %c0_48 = arith.constant 0 : index
    %c0_49 = arith.constant 0 : index
    %48 = vector.load %arg5[%c0_48, %c0_49] : memref<128x8xf32, #tpu.memory_space<vmem>>, vector<128x8xf32>
    %49 = vector.extract_strided_slice %1 {offsets = [32, 0], sizes = [128, 8], strides = [1, 1]} : vector<168x8xbf16> to vector<128x8xbf16>
    %c6 = arith.constant 6 : index
    %c0_50 = arith.constant 0 : index
    %c0_51 = arith.constant 0 : index
    %50 = vector.load %arg2[%c6, %c0_50, %c0_51] : memref<9x8x8xbf16, #tpu.memory_space<vmem>>, vector<1x8x8xbf16>
    %51 = vector.shape_cast %50 : vector<1x8x8xbf16> to vector<8x8xbf16>
    %cst_52 = arith.constant dense<0.000000e+00> : vector<128x8xf32>
    %52 = tpu.matmul %49, %51, %cst_52 {dimension_numbers = #tpu.dot_dimension_numbers<[1], [0], [0], [1], [0, 0, 1, 1], [], []>} : vector<128x8xbf16>, vector<8x8xbf16>, vector<128x8xf32> -> vector<128x8xf32>
    %53 = arith.addf %48, %52 : vector<128x8xf32>
    %c0_53 = arith.constant 0 : index
    %c0_54 = arith.constant 0 : index
    %54 = vector.load %arg5[%c0_53, %c0_54] : memref<128x8xf32, #tpu.memory_space<vmem>>, vector<128x8xf32>
    tpu.vector_store %arg5[%c0_53, %c0_54], %53 {strides = array<i32>} : memref<128x8xf32, #tpu.memory_space<vmem>>, vector<128x8xf32>,
    %c0_55 = arith.constant 0 : index
    %c0_56 = arith.constant 0 : index
    %55 = vector.load %arg5[%c0_55, %c0_56] : memref<128x8xf32, #tpu.memory_space<vmem>>, vector<128x8xf32>
    %56 = vector.extract_strided_slice %1 {offsets = [33, 0], sizes = [128, 8], strides = [1, 1]} : vector<168x8xbf16> to vector<128x8xbf16>
    %c7 = arith.constant 7 : index
    %c0_57 = arith.constant 0 : index
    %c0_58 = arith.constant 0 : index
    %57 = vector.load %arg2[%c7, %c0_57, %c0_58] : memref<9x8x8xbf16, #tpu.memory_space<vmem>>, vector<1x8x8xbf16>
    %58 = vector.shape_cast %57 : vector<1x8x8xbf16> to vector<8x8xbf16>
    %cst_59 = arith.constant dense<0.000000e+00> : vector<128x8xf32>
    %59 = tpu.matmul %56, %58, %cst_59 {dimension_numbers = #tpu.dot_dimension_numbers<[1], [0], [0], [1], [0, 0, 1, 1], [], []>} : vector<128x8xbf16>, vector<8x8xbf16>, vector<128x8xf32> -> vector<128x8xf32>
    %60 = arith.addf %55, %59 : vector<128x8xf32>
    %c0_60 = arith.constant 0 : index
    %c0_61 = arith.constant 0 : index
    %61 = vector.load %arg5[%c0_60, %c0_61] : memref<128x8xf32, #tpu.memory_space<vmem>>, vector<128x8xf32>
    tpu.vector_store %arg5[%c0_60, %c0_61], %60 {strides = array<i32>} : memref<128x8xf32, #tpu.memory_space<vmem>>, vector<128x8xf32>,
    %c0_62 = arith.constant 0 : index
    %c0_63 = arith.constant 0 : index
    %62 = vector.load %arg5[%c0_62, %c0_63] : memref<128x8xf32, #tpu.memory_space<vmem>>, vector<128x8xf32>
    %63 = vector.extract_strided_slice %1 {offsets = [34, 0], sizes = [128, 8], strides = [1, 1]} : vector<168x8xbf16> to vector<128x8xbf16>
    %c8 = arith.constant 8 : index
    %c0_64 = arith.constant 0 : index
    %c0_65 = arith.constant 0 : index
    %64 = vector.load %arg2[%c8, %c0_64, %c0_65] : memref<9x8x8xbf16, #tpu.memory_space<vmem>>, vector<1x8x8xbf16>
    %65 = vector.shape_cast %64 : vector<1x8x8xbf16> to vector<8x8xbf16>
    %cst_66 = arith.constant dense<0.000000e+00> : vector<128x8xf32>
    %66 = tpu.matmul %63, %65, %cst_66 {dimension_numbers = #tpu.dot_dimension_numbers<[1], [0], [0], [1], [0, 0, 1, 1], [], []>} : vector<128x8xbf16>, vector<8x8xbf16>, vector<128x8xf32> -> vector<128x8xf32>
    %67 = arith.addf %62, %66 : vector<128x8xf32>
    %c0_67 = arith.constant 0 : index
    %c0_68 = arith.constant 0 : index
    %68 = vector.load %arg5[%c0_67, %c0_68] : memref<128x8xf32, #tpu.memory_space<vmem>>, vector<128x8xf32>
    tpu.vector_store %arg5[%c0_67, %c0_68], %67 {strides = array<i32>} : memref<128x8xf32, #tpu.memory_space<vmem>>, vector<128x8xf32>,
    %c0_69 = arith.constant 0 : index
    %c0_70 = arith.constant 0 : index
    %69 = vector.load %arg5[%c0_69, %c0_70] : memref<128x8xf32, #tpu.memory_space<vmem>>, vector<128x8xf32>
    %c0_71 = arith.constant 0 : index
    %c0_72 = arith.constant 0 : index
    %c0_73 = arith.constant 0 : index
    %70 = vector.load %arg4[%c0_71, %c0_72, %c0_73] : memref<1x128x8xf32, #tpu.memory_space<vmem>>, vector<1x128x8xf32>
    %71 = vector.shape_cast %70 : vector<1x128x8xf32> to vector<128x8xf32>
    %72 = vector.shape_cast %69 : vector<128x8xf32> to vector<1x128x8xf32>
    tpu.vector_store %arg4[%c0_71, %c0_72, %c0_73], %72 {strides = array<i32>} : memref<1x128x8xf32, #tpu.memory_space<vmem>>, vector<1x128x8xf32>,
    return
  }
  func.func @transform_0(%arg0: i32) -> (i32, i32, i32) {
    %c0_i32 = arith.constant 0 : i32
    %c0_i32_0 = arith.constant 0 : i32
    %c0_i32_1 = arith.constant 0 : i32
    return %arg0, %c0_i32, %c0_i32_0 : i32, i32, i32
  }
  func.func @transform_1(%arg0: i32) -> (i32, i32, i32) {
    %c0_i32 = arith.constant 0 : i32
    %c0_i32_0 = arith.constant 0 : i32
    %c0_i32_1 = arith.constant 0 : i32
    %c0_i32_2 = arith.constant 0 : i32
    return %c0_i32, %c0_i32_0, %c0_i32_1 : i32, i32, i32
  }
  func.func @transform_2(%arg0: i32) -> (i32, i32) {
    %c0_i32 = arith.constant 0 : i32
    %c0_i32_0 = arith.constant 0 : i32
    %c0_i32_1 = arith.constant 0 : i32
    return %c0_i32, %c0_i32_0 : i32, i32
  }
  func.func @transform_3(%arg0: i32) -> (i32, i32, i32) {
    %c0_i32 = arith.constant 0 : i32
    %c0_i32_0 = arith.constant 0 : i32
    %c0_i32_1 = arith.constant 0 : i32
    return %arg0, %c0_i32, %c0_i32_0 : i32, i32, i32
  }
}

module attributes {stable_mosaic.version = 11 : i64} {
  func.func @_conv3x3_kernel(%arg0: i32, %arg1: memref<1x56x8xbf16, #tpu.memory_space<vmem>>, %arg2: memref<9x8x8xbf16, #tpu.memory_space<vmem>>, %arg3: memref<1x8xf32, #tpu.memory_space<vmem>>, %arg4: memref<1x32x8xf32, #tpu.memory_space<vmem>>, %arg5: memref<32x8xf32, #tpu.memory_space<vmem>>) attributes {dimension_semantics = [#tpu.dimension_semantics<parallel>], iteration_bounds = array<i64: 2>, scalar_prefetch = 0 : i64, scratch_operands = 1 : i64, tpu.core_type = #tpu.core_type<tc>, window_params = [{transform_indices = @transform_0, window_bounds = array<i64: 1, 56, 8>}, {pipeline_mode = #tpu.pipeline_mode<synchronous>, transform_indices = @transform_1, window_bounds = array<i64: 9, 8, 8>}, {pipeline_mode = #tpu.pipeline_mode<synchronous>, transform_indices = @transform_2, window_bounds = array<i64: 1, 8>}, {transform_indices = @transform_3, window_bounds = array<i64: 1, 32, 8>}]} {
    %c0 = arith.constant 0 : index
    %c0_0 = arith.constant 0 : index
    %c0_1 = arith.constant 0 : index
    %0 = vector.load %arg1[%c0, %c0_0, %c0_1] : memref<1x56x8xbf16, #tpu.memory_space<vmem>>, vector<1x56x8xbf16>
    %1 = vector.shape_cast %0 : vector<1x56x8xbf16> to vector<56x8xbf16>
    %c0_2 = arith.constant 0 : index
    %c0_3 = arith.constant 0 : index
    %2 = vector.load %arg3[%c0_2, %c0_3] : memref<1x8xf32, #tpu.memory_space<vmem>>, vector<1x8xf32>
    %3 = vector.shape_cast %2 : vector<1x8xf32> to vector<1x8xf32>
    %4 = vector.broadcast %3 : vector<1x8xf32> to vector<32x8xf32>
    %c0_4 = arith.constant 0 : index
    %c0_5 = arith.constant 0 : index
    %5 = vector.load %arg5[%c0_4, %c0_5] : memref<32x8xf32, #tpu.memory_space<vmem>>, vector<32x8xf32>
    tpu.vector_store %arg5[%c0_4, %c0_5], %4 {strides = array<i32>} : memref<32x8xf32, #tpu.memory_space<vmem>>, vector<32x8xf32>,
    %c0_6 = arith.constant 0 : index
    %c0_7 = arith.constant 0 : index
    %6 = vector.load %arg5[%c0_6, %c0_7] : memref<32x8xf32, #tpu.memory_space<vmem>>, vector<32x8xf32>
    %7 = vector.extract_strided_slice %1 {offsets = [0, 0], sizes = [32, 8], strides = [1, 1]} : vector<56x8xbf16> to vector<32x8xbf16>
    %c0_8 = arith.constant 0 : index
    %c0_9 = arith.constant 0 : index
    %c0_10 = arith.constant 0 : index
    %8 = vector.load %arg2[%c0_8, %c0_9, %c0_10] : memref<9x8x8xbf16, #tpu.memory_space<vmem>>, vector<1x8x8xbf16>
    %9 = vector.shape_cast %8 : vector<1x8x8xbf16> to vector<8x8xbf16>
    %cst = arith.constant dense<0.000000e+00> : vector<32x8xf32>
    %10 = tpu.matmul %7, %9, %cst {dimension_numbers = #tpu.dot_dimension_numbers<[1], [0], [0], [1], [0, 0, 1, 1], [], []>} : vector<32x8xbf16>, vector<8x8xbf16>, vector<32x8xf32> -> vector<32x8xf32>
    %11 = arith.addf %6, %10 : vector<32x8xf32>
    %c0_11 = arith.constant 0 : index
    %c0_12 = arith.constant 0 : index
    %12 = vector.load %arg5[%c0_11, %c0_12] : memref<32x8xf32, #tpu.memory_space<vmem>>, vector<32x8xf32>
    tpu.vector_store %arg5[%c0_11, %c0_12], %11 {strides = array<i32>} : memref<32x8xf32, #tpu.memory_space<vmem>>, vector<32x8xf32>,
    %c0_13 = arith.constant 0 : index
    %c0_14 = arith.constant 0 : index
    %13 = vector.load %arg5[%c0_13, %c0_14] : memref<32x8xf32, #tpu.memory_space<vmem>>, vector<32x8xf32>
    %14 = vector.extract_strided_slice %1 {offsets = [1, 0], sizes = [32, 8], strides = [1, 1]} : vector<56x8xbf16> to vector<32x8xbf16>
    %c1 = arith.constant 1 : index
    %c0_15 = arith.constant 0 : index
    %c0_16 = arith.constant 0 : index
    %15 = vector.load %arg2[%c1, %c0_15, %c0_16] : memref<9x8x8xbf16, #tpu.memory_space<vmem>>, vector<1x8x8xbf16>
    %16 = vector.shape_cast %15 : vector<1x8x8xbf16> to vector<8x8xbf16>
    %cst_17 = arith.constant dense<0.000000e+00> : vector<32x8xf32>
    %17 = tpu.matmul %14, %16, %cst_17 {dimension_numbers = #tpu.dot_dimension_numbers<[1], [0], [0], [1], [0, 0, 1, 1], [], []>} : vector<32x8xbf16>, vector<8x8xbf16>, vector<32x8xf32> -> vector<32x8xf32>
    %18 = arith.addf %13, %17 : vector<32x8xf32>
    %c0_18 = arith.constant 0 : index
    %c0_19 = arith.constant 0 : index
    %19 = vector.load %arg5[%c0_18, %c0_19] : memref<32x8xf32, #tpu.memory_space<vmem>>, vector<32x8xf32>
    tpu.vector_store %arg5[%c0_18, %c0_19], %18 {strides = array<i32>} : memref<32x8xf32, #tpu.memory_space<vmem>>, vector<32x8xf32>,
    %c0_20 = arith.constant 0 : index
    %c0_21 = arith.constant 0 : index
    %20 = vector.load %arg5[%c0_20, %c0_21] : memref<32x8xf32, #tpu.memory_space<vmem>>, vector<32x8xf32>
    %21 = vector.extract_strided_slice %1 {offsets = [2, 0], sizes = [32, 8], strides = [1, 1]} : vector<56x8xbf16> to vector<32x8xbf16>
    %c2 = arith.constant 2 : index
    %c0_22 = arith.constant 0 : index
    %c0_23 = arith.constant 0 : index
    %22 = vector.load %arg2[%c2, %c0_22, %c0_23] : memref<9x8x8xbf16, #tpu.memory_space<vmem>>, vector<1x8x8xbf16>
    %23 = vector.shape_cast %22 : vector<1x8x8xbf16> to vector<8x8xbf16>
    %cst_24 = arith.constant dense<0.000000e+00> : vector<32x8xf32>
    %24 = tpu.matmul %21, %23, %cst_24 {dimension_numbers = #tpu.dot_dimension_numbers<[1], [0], [0], [1], [0, 0, 1, 1], [], []>} : vector<32x8xbf16>, vector<8x8xbf16>, vector<32x8xf32> -> vector<32x8xf32>
    %25 = arith.addf %20, %24 : vector<32x8xf32>
    %c0_25 = arith.constant 0 : index
    %c0_26 = arith.constant 0 : index
    %26 = vector.load %arg5[%c0_25, %c0_26] : memref<32x8xf32, #tpu.memory_space<vmem>>, vector<32x8xf32>
    tpu.vector_store %arg5[%c0_25, %c0_26], %25 {strides = array<i32>} : memref<32x8xf32, #tpu.memory_space<vmem>>, vector<32x8xf32>,
    %c0_27 = arith.constant 0 : index
    %c0_28 = arith.constant 0 : index
    %27 = vector.load %arg5[%c0_27, %c0_28] : memref<32x8xf32, #tpu.memory_space<vmem>>, vector<32x8xf32>
    %28 = vector.extract_strided_slice %1 {offsets = [8, 0], sizes = [32, 8], strides = [1, 1]} : vector<56x8xbf16> to vector<32x8xbf16>
    %c3 = arith.constant 3 : index
    %c0_29 = arith.constant 0 : index
    %c0_30 = arith.constant 0 : index
    %29 = vector.load %arg2[%c3, %c0_29, %c0_30] : memref<9x8x8xbf16, #tpu.memory_space<vmem>>, vector<1x8x8xbf16>
    %30 = vector.shape_cast %29 : vector<1x8x8xbf16> to vector<8x8xbf16>
    %cst_31 = arith.constant dense<0.000000e+00> : vector<32x8xf32>
    %31 = tpu.matmul %28, %30, %cst_31 {dimension_numbers = #tpu.dot_dimension_numbers<[1], [0], [0], [1], [0, 0, 1, 1], [], []>} : vector<32x8xbf16>, vector<8x8xbf16>, vector<32x8xf32> -> vector<32x8xf32>
    %32 = arith.addf %27, %31 : vector<32x8xf32>
    %c0_32 = arith.constant 0 : index
    %c0_33 = arith.constant 0 : index
    %33 = vector.load %arg5[%c0_32, %c0_33] : memref<32x8xf32, #tpu.memory_space<vmem>>, vector<32x8xf32>
    tpu.vector_store %arg5[%c0_32, %c0_33], %32 {strides = array<i32>} : memref<32x8xf32, #tpu.memory_space<vmem>>, vector<32x8xf32>,
    %c0_34 = arith.constant 0 : index
    %c0_35 = arith.constant 0 : index
    %34 = vector.load %arg5[%c0_34, %c0_35] : memref<32x8xf32, #tpu.memory_space<vmem>>, vector<32x8xf32>
    %35 = vector.extract_strided_slice %1 {offsets = [9, 0], sizes = [32, 8], strides = [1, 1]} : vector<56x8xbf16> to vector<32x8xbf16>
    %c4 = arith.constant 4 : index
    %c0_36 = arith.constant 0 : index
    %c0_37 = arith.constant 0 : index
    %36 = vector.load %arg2[%c4, %c0_36, %c0_37] : memref<9x8x8xbf16, #tpu.memory_space<vmem>>, vector<1x8x8xbf16>
    %37 = vector.shape_cast %36 : vector<1x8x8xbf16> to vector<8x8xbf16>
    %cst_38 = arith.constant dense<0.000000e+00> : vector<32x8xf32>
    %38 = tpu.matmul %35, %37, %cst_38 {dimension_numbers = #tpu.dot_dimension_numbers<[1], [0], [0], [1], [0, 0, 1, 1], [], []>} : vector<32x8xbf16>, vector<8x8xbf16>, vector<32x8xf32> -> vector<32x8xf32>
    %39 = arith.addf %34, %38 : vector<32x8xf32>
    %c0_39 = arith.constant 0 : index
    %c0_40 = arith.constant 0 : index
    %40 = vector.load %arg5[%c0_39, %c0_40] : memref<32x8xf32, #tpu.memory_space<vmem>>, vector<32x8xf32>
    tpu.vector_store %arg5[%c0_39, %c0_40], %39 {strides = array<i32>} : memref<32x8xf32, #tpu.memory_space<vmem>>, vector<32x8xf32>,
    %c0_41 = arith.constant 0 : index
    %c0_42 = arith.constant 0 : index
    %41 = vector.load %arg5[%c0_41, %c0_42] : memref<32x8xf32, #tpu.memory_space<vmem>>, vector<32x8xf32>
    %42 = vector.extract_strided_slice %1 {offsets = [10, 0], sizes = [32, 8], strides = [1, 1]} : vector<56x8xbf16> to vector<32x8xbf16>
    %c5 = arith.constant 5 : index
    %c0_43 = arith.constant 0 : index
    %c0_44 = arith.constant 0 : index
    %43 = vector.load %arg2[%c5, %c0_43, %c0_44] : memref<9x8x8xbf16, #tpu.memory_space<vmem>>, vector<1x8x8xbf16>
    %44 = vector.shape_cast %43 : vector<1x8x8xbf16> to vector<8x8xbf16>
    %cst_45 = arith.constant dense<0.000000e+00> : vector<32x8xf32>
    %45 = tpu.matmul %42, %44, %cst_45 {dimension_numbers = #tpu.dot_dimension_numbers<[1], [0], [0], [1], [0, 0, 1, 1], [], []>} : vector<32x8xbf16>, vector<8x8xbf16>, vector<32x8xf32> -> vector<32x8xf32>
    %46 = arith.addf %41, %45 : vector<32x8xf32>
    %c0_46 = arith.constant 0 : index
    %c0_47 = arith.constant 0 : index
    %47 = vector.load %arg5[%c0_46, %c0_47] : memref<32x8xf32, #tpu.memory_space<vmem>>, vector<32x8xf32>
    tpu.vector_store %arg5[%c0_46, %c0_47], %46 {strides = array<i32>} : memref<32x8xf32, #tpu.memory_space<vmem>>, vector<32x8xf32>,
    %c0_48 = arith.constant 0 : index
    %c0_49 = arith.constant 0 : index
    %48 = vector.load %arg5[%c0_48, %c0_49] : memref<32x8xf32, #tpu.memory_space<vmem>>, vector<32x8xf32>
    %49 = vector.extract_strided_slice %1 {offsets = [16, 0], sizes = [32, 8], strides = [1, 1]} : vector<56x8xbf16> to vector<32x8xbf16>
    %c6 = arith.constant 6 : index
    %c0_50 = arith.constant 0 : index
    %c0_51 = arith.constant 0 : index
    %50 = vector.load %arg2[%c6, %c0_50, %c0_51] : memref<9x8x8xbf16, #tpu.memory_space<vmem>>, vector<1x8x8xbf16>
    %51 = vector.shape_cast %50 : vector<1x8x8xbf16> to vector<8x8xbf16>
    %cst_52 = arith.constant dense<0.000000e+00> : vector<32x8xf32>
    %52 = tpu.matmul %49, %51, %cst_52 {dimension_numbers = #tpu.dot_dimension_numbers<[1], [0], [0], [1], [0, 0, 1, 1], [], []>} : vector<32x8xbf16>, vector<8x8xbf16>, vector<32x8xf32> -> vector<32x8xf32>
    %53 = arith.addf %48, %52 : vector<32x8xf32>
    %c0_53 = arith.constant 0 : index
    %c0_54 = arith.constant 0 : index
    %54 = vector.load %arg5[%c0_53, %c0_54] : memref<32x8xf32, #tpu.memory_space<vmem>>, vector<32x8xf32>
    tpu.vector_store %arg5[%c0_53, %c0_54], %53 {strides = array<i32>} : memref<32x8xf32, #tpu.memory_space<vmem>>, vector<32x8xf32>,
    %c0_55 = arith.constant 0 : index
    %c0_56 = arith.constant 0 : index
    %55 = vector.load %arg5[%c0_55, %c0_56] : memref<32x8xf32, #tpu.memory_space<vmem>>, vector<32x8xf32>
    %56 = vector.extract_strided_slice %1 {offsets = [17, 0], sizes = [32, 8], strides = [1, 1]} : vector<56x8xbf16> to vector<32x8xbf16>
    %c7 = arith.constant 7 : index
    %c0_57 = arith.constant 0 : index
    %c0_58 = arith.constant 0 : index
    %57 = vector.load %arg2[%c7, %c0_57, %c0_58] : memref<9x8x8xbf16, #tpu.memory_space<vmem>>, vector<1x8x8xbf16>
    %58 = vector.shape_cast %57 : vector<1x8x8xbf16> to vector<8x8xbf16>
    %cst_59 = arith.constant dense<0.000000e+00> : vector<32x8xf32>
    %59 = tpu.matmul %56, %58, %cst_59 {dimension_numbers = #tpu.dot_dimension_numbers<[1], [0], [0], [1], [0, 0, 1, 1], [], []>} : vector<32x8xbf16>, vector<8x8xbf16>, vector<32x8xf32> -> vector<32x8xf32>
    %60 = arith.addf %55, %59 : vector<32x8xf32>
    %c0_60 = arith.constant 0 : index
    %c0_61 = arith.constant 0 : index
    %61 = vector.load %arg5[%c0_60, %c0_61] : memref<32x8xf32, #tpu.memory_space<vmem>>, vector<32x8xf32>
    tpu.vector_store %arg5[%c0_60, %c0_61], %60 {strides = array<i32>} : memref<32x8xf32, #tpu.memory_space<vmem>>, vector<32x8xf32>,
    %c0_62 = arith.constant 0 : index
    %c0_63 = arith.constant 0 : index
    %62 = vector.load %arg5[%c0_62, %c0_63] : memref<32x8xf32, #tpu.memory_space<vmem>>, vector<32x8xf32>
    %63 = vector.extract_strided_slice %1 {offsets = [18, 0], sizes = [32, 8], strides = [1, 1]} : vector<56x8xbf16> to vector<32x8xbf16>
    %c8 = arith.constant 8 : index
    %c0_64 = arith.constant 0 : index
    %c0_65 = arith.constant 0 : index
    %64 = vector.load %arg2[%c8, %c0_64, %c0_65] : memref<9x8x8xbf16, #tpu.memory_space<vmem>>, vector<1x8x8xbf16>
    %65 = vector.shape_cast %64 : vector<1x8x8xbf16> to vector<8x8xbf16>
    %cst_66 = arith.constant dense<0.000000e+00> : vector<32x8xf32>
    %66 = tpu.matmul %63, %65, %cst_66 {dimension_numbers = #tpu.dot_dimension_numbers<[1], [0], [0], [1], [0, 0, 1, 1], [], []>} : vector<32x8xbf16>, vector<8x8xbf16>, vector<32x8xf32> -> vector<32x8xf32>
    %67 = arith.addf %62, %66 : vector<32x8xf32>
    %c0_67 = arith.constant 0 : index
    %c0_68 = arith.constant 0 : index
    %68 = vector.load %arg5[%c0_67, %c0_68] : memref<32x8xf32, #tpu.memory_space<vmem>>, vector<32x8xf32>
    tpu.vector_store %arg5[%c0_67, %c0_68], %67 {strides = array<i32>} : memref<32x8xf32, #tpu.memory_space<vmem>>, vector<32x8xf32>,
    %c0_69 = arith.constant 0 : index
    %c0_70 = arith.constant 0 : index
    %69 = vector.load %arg5[%c0_69, %c0_70] : memref<32x8xf32, #tpu.memory_space<vmem>>, vector<32x8xf32>
    %c0_71 = arith.constant 0 : index
    %c0_72 = arith.constant 0 : index
    %c0_73 = arith.constant 0 : index
    %70 = vector.load %arg4[%c0_71, %c0_72, %c0_73] : memref<1x32x8xf32, #tpu.memory_space<vmem>>, vector<1x32x8xf32>
    %71 = vector.shape_cast %70 : vector<1x32x8xf32> to vector<32x8xf32>
    %72 = vector.shape_cast %69 : vector<32x8xf32> to vector<1x32x8xf32>
    tpu.vector_store %arg4[%c0_71, %c0_72, %c0_73], %72 {strides = array<i32>} : memref<1x32x8xf32, #tpu.memory_space<vmem>>, vector<1x32x8xf32>,
    return
  }
  func.func @transform_0(%arg0: i32) -> (i32, i32, i32) {
    %c0_i32 = arith.constant 0 : i32
    %c0_i32_0 = arith.constant 0 : i32
    %c0_i32_1 = arith.constant 0 : i32
    return %arg0, %c0_i32, %c0_i32_0 : i32, i32, i32
  }
  func.func @transform_1(%arg0: i32) -> (i32, i32, i32) {
    %c0_i32 = arith.constant 0 : i32
    %c0_i32_0 = arith.constant 0 : i32
    %c0_i32_1 = arith.constant 0 : i32
    %c0_i32_2 = arith.constant 0 : i32
    return %c0_i32, %c0_i32_0, %c0_i32_1 : i32, i32, i32
  }
  func.func @transform_2(%arg0: i32) -> (i32, i32) {
    %c0_i32 = arith.constant 0 : i32
    %c0_i32_0 = arith.constant 0 : i32
    %c0_i32_1 = arith.constant 0 : i32
    return %c0_i32, %c0_i32_0 : i32, i32
  }
  func.func @transform_3(%arg0: i32) -> (i32, i32, i32) {
    %c0_i32 = arith.constant 0 : i32
    %c0_i32_0 = arith.constant 0 : i32
    %c0_i32_1 = arith.constant 0 : i32
    return %arg0, %c0_i32, %c0_i32_0 : i32, i32, i32
  }
}

module attributes {stable_mosaic.version = 11 : i64} {
  func.func @_conv3x3_kernel(%arg0: i32, %arg1: memref<1x40x8xbf16, #tpu.memory_space<vmem>>, %arg2: memref<9x8x8xbf16, #tpu.memory_space<vmem>>, %arg3: memref<1x8xf32, #tpu.memory_space<vmem>>, %arg4: memref<1x16x8xf32, #tpu.memory_space<vmem>>, %arg5: memref<16x8xf32, #tpu.memory_space<vmem>>) attributes {dimension_semantics = [#tpu.dimension_semantics<parallel>], iteration_bounds = array<i64: 2>, scalar_prefetch = 0 : i64, scratch_operands = 1 : i64, tpu.core_type = #tpu.core_type<tc>, window_params = [{transform_indices = @transform_0, window_bounds = array<i64: 1, 40, 8>}, {pipeline_mode = #tpu.pipeline_mode<synchronous>, transform_indices = @transform_1, window_bounds = array<i64: 9, 8, 8>}, {pipeline_mode = #tpu.pipeline_mode<synchronous>, transform_indices = @transform_2, window_bounds = array<i64: 1, 8>}, {transform_indices = @transform_3, window_bounds = array<i64: 1, 16, 8>}]} {
    %c0 = arith.constant 0 : index
    %c0_0 = arith.constant 0 : index
    %c0_1 = arith.constant 0 : index
    %0 = vector.load %arg1[%c0, %c0_0, %c0_1] : memref<1x40x8xbf16, #tpu.memory_space<vmem>>, vector<1x40x8xbf16>
    %1 = vector.shape_cast %0 : vector<1x40x8xbf16> to vector<40x8xbf16>
    %c0_2 = arith.constant 0 : index
    %c0_3 = arith.constant 0 : index
    %2 = vector.load %arg3[%c0_2, %c0_3] : memref<1x8xf32, #tpu.memory_space<vmem>>, vector<1x8xf32>
    %3 = vector.shape_cast %2 : vector<1x8xf32> to vector<1x8xf32>
    %4 = vector.broadcast %3 : vector<1x8xf32> to vector<16x8xf32>
    %c0_4 = arith.constant 0 : index
    %c0_5 = arith.constant 0 : index
    %5 = vector.load %arg5[%c0_4, %c0_5] : memref<16x8xf32, #tpu.memory_space<vmem>>, vector<16x8xf32>
    tpu.vector_store %arg5[%c0_4, %c0_5], %4 {strides = array<i32>} : memref<16x8xf32, #tpu.memory_space<vmem>>, vector<16x8xf32>,
    %c0_6 = arith.constant 0 : index
    %c0_7 = arith.constant 0 : index
    %6 = vector.load %arg5[%c0_6, %c0_7] : memref<16x8xf32, #tpu.memory_space<vmem>>, vector<16x8xf32>
    %7 = vector.extract_strided_slice %1 {offsets = [0, 0], sizes = [16, 8], strides = [1, 1]} : vector<40x8xbf16> to vector<16x8xbf16>
    %c0_8 = arith.constant 0 : index
    %c0_9 = arith.constant 0 : index
    %c0_10 = arith.constant 0 : index
    %8 = vector.load %arg2[%c0_8, %c0_9, %c0_10] : memref<9x8x8xbf16, #tpu.memory_space<vmem>>, vector<1x8x8xbf16>
    %9 = vector.shape_cast %8 : vector<1x8x8xbf16> to vector<8x8xbf16>
    %cst = arith.constant dense<0.000000e+00> : vector<16x8xf32>
    %10 = tpu.matmul %7, %9, %cst {dimension_numbers = #tpu.dot_dimension_numbers<[1], [0], [0], [1], [0, 0, 1, 1], [], []>} : vector<16x8xbf16>, vector<8x8xbf16>, vector<16x8xf32> -> vector<16x8xf32>
    %11 = arith.addf %6, %10 : vector<16x8xf32>
    %c0_11 = arith.constant 0 : index
    %c0_12 = arith.constant 0 : index
    %12 = vector.load %arg5[%c0_11, %c0_12] : memref<16x8xf32, #tpu.memory_space<vmem>>, vector<16x8xf32>
    tpu.vector_store %arg5[%c0_11, %c0_12], %11 {strides = array<i32>} : memref<16x8xf32, #tpu.memory_space<vmem>>, vector<16x8xf32>,
    %c0_13 = arith.constant 0 : index
    %c0_14 = arith.constant 0 : index
    %13 = vector.load %arg5[%c0_13, %c0_14] : memref<16x8xf32, #tpu.memory_space<vmem>>, vector<16x8xf32>
    %14 = vector.extract_strided_slice %1 {offsets = [1, 0], sizes = [16, 8], strides = [1, 1]} : vector<40x8xbf16> to vector<16x8xbf16>
    %c1 = arith.constant 1 : index
    %c0_15 = arith.constant 0 : index
    %c0_16 = arith.constant 0 : index
    %15 = vector.load %arg2[%c1, %c0_15, %c0_16] : memref<9x8x8xbf16, #tpu.memory_space<vmem>>, vector<1x8x8xbf16>
    %16 = vector.shape_cast %15 : vector<1x8x8xbf16> to vector<8x8xbf16>
    %cst_17 = arith.constant dense<0.000000e+00> : vector<16x8xf32>
    %17 = tpu.matmul %14, %16, %cst_17 {dimension_numbers = #tpu.dot_dimension_numbers<[1], [0], [0], [1], [0, 0, 1, 1], [], []>} : vector<16x8xbf16>, vector<8x8xbf16>, vector<16x8xf32> -> vector<16x8xf32>
    %18 = arith.addf %13, %17 : vector<16x8xf32>
    %c0_18 = arith.constant 0 : index
    %c0_19 = arith.constant 0 : index
    %19 = vector.load %arg5[%c0_18, %c0_19] : memref<16x8xf32, #tpu.memory_space<vmem>>, vector<16x8xf32>
    tpu.vector_store %arg5[%c0_18, %c0_19], %18 {strides = array<i32>} : memref<16x8xf32, #tpu.memory_space<vmem>>, vector<16x8xf32>,
    %c0_20 = arith.constant 0 : index
    %c0_21 = arith.constant 0 : index
    %20 = vector.load %arg5[%c0_20, %c0_21] : memref<16x8xf32, #tpu.memory_space<vmem>>, vector<16x8xf32>
    %21 = vector.extract_strided_slice %1 {offsets = [2, 0], sizes = [16, 8], strides = [1, 1]} : vector<40x8xbf16> to vector<16x8xbf16>
    %c2 = arith.constant 2 : index
    %c0_22 = arith.constant 0 : index
    %c0_23 = arith.constant 0 : index
    %22 = vector.load %arg2[%c2, %c0_22, %c0_23] : memref<9x8x8xbf16, #tpu.memory_space<vmem>>, vector<1x8x8xbf16>
    %23 = vector.shape_cast %22 : vector<1x8x8xbf16> to vector<8x8xbf16>
    %cst_24 = arith.constant dense<0.000000e+00> : vector<16x8xf32>
    %24 = tpu.matmul %21, %23, %cst_24 {dimension_numbers = #tpu.dot_dimension_numbers<[1], [0], [0], [1], [0, 0, 1, 1], [], []>} : vector<16x8xbf16>, vector<8x8xbf16>, vector<16x8xf32> -> vector<16x8xf32>
    %25 = arith.addf %20, %24 : vector<16x8xf32>
    %c0_25 = arith.constant 0 : index
    %c0_26 = arith.constant 0 : index
    %26 = vector.load %arg5[%c0_25, %c0_26] : memref<16x8xf32, #tpu.memory_space<vmem>>, vector<16x8xf32>
    tpu.vector_store %arg5[%c0_25, %c0_26], %25 {strides = array<i32>} : memref<16x8xf32, #tpu.memory_space<vmem>>, vector<16x8xf32>,
    %c0_27 = arith.constant 0 : index
    %c0_28 = arith.constant 0 : index
    %27 = vector.load %arg5[%c0_27, %c0_28] : memref<16x8xf32, #tpu.memory_space<vmem>>, vector<16x8xf32>
    %28 = vector.extract_strided_slice %1 {offsets = [8, 0], sizes = [16, 8], strides = [1, 1]} : vector<40x8xbf16> to vector<16x8xbf16>
    %c3 = arith.constant 3 : index
    %c0_29 = arith.constant 0 : index
    %c0_30 = arith.constant 0 : index
    %29 = vector.load %arg2[%c3, %c0_29, %c0_30] : memref<9x8x8xbf16, #tpu.memory_space<vmem>>, vector<1x8x8xbf16>
    %30 = vector.shape_cast %29 : vector<1x8x8xbf16> to vector<8x8xbf16>
    %cst_31 = arith.constant dense<0.000000e+00> : vector<16x8xf32>
    %31 = tpu.matmul %28, %30, %cst_31 {dimension_numbers = #tpu.dot_dimension_numbers<[1], [0], [0], [1], [0, 0, 1, 1], [], []>} : vector<16x8xbf16>, vector<8x8xbf16>, vector<16x8xf32> -> vector<16x8xf32>
    %32 = arith.addf %27, %31 : vector<16x8xf32>
    %c0_32 = arith.constant 0 : index
    %c0_33 = arith.constant 0 : index
    %33 = vector.load %arg5[%c0_32, %c0_33] : memref<16x8xf32, #tpu.memory_space<vmem>>, vector<16x8xf32>
    tpu.vector_store %arg5[%c0_32, %c0_33], %32 {strides = array<i32>} : memref<16x8xf32, #tpu.memory_space<vmem>>, vector<16x8xf32>,
    %c0_34 = arith.constant 0 : index
    %c0_35 = arith.constant 0 : index
    %34 = vector.load %arg5[%c0_34, %c0_35] : memref<16x8xf32, #tpu.memory_space<vmem>>, vector<16x8xf32>
    %35 = vector.extract_strided_slice %1 {offsets = [9, 0], sizes = [16, 8], strides = [1, 1]} : vector<40x8xbf16> to vector<16x8xbf16>
    %c4 = arith.constant 4 : index
    %c0_36 = arith.constant 0 : index
    %c0_37 = arith.constant 0 : index
    %36 = vector.load %arg2[%c4, %c0_36, %c0_37] : memref<9x8x8xbf16, #tpu.memory_space<vmem>>, vector<1x8x8xbf16>
    %37 = vector.shape_cast %36 : vector<1x8x8xbf16> to vector<8x8xbf16>
    %cst_38 = arith.constant dense<0.000000e+00> : vector<16x8xf32>
    %38 = tpu.matmul %35, %37, %cst_38 {dimension_numbers = #tpu.dot_dimension_numbers<[1], [0], [0], [1], [0, 0, 1, 1], [], []>} : vector<16x8xbf16>, vector<8x8xbf16>, vector<16x8xf32> -> vector<16x8xf32>
    %39 = arith.addf %34, %38 : vector<16x8xf32>
    %c0_39 = arith.constant 0 : index
    %c0_40 = arith.constant 0 : index
    %40 = vector.load %arg5[%c0_39, %c0_40] : memref<16x8xf32, #tpu.memory_space<vmem>>, vector<16x8xf32>
    tpu.vector_store %arg5[%c0_39, %c0_40], %39 {strides = array<i32>} : memref<16x8xf32, #tpu.memory_space<vmem>>, vector<16x8xf32>,
    %c0_41 = arith.constant 0 : index
    %c0_42 = arith.constant 0 : index
    %41 = vector.load %arg5[%c0_41, %c0_42] : memref<16x8xf32, #tpu.memory_space<vmem>>, vector<16x8xf32>
    %42 = vector.extract_strided_slice %1 {offsets = [10, 0], sizes = [16, 8], strides = [1, 1]} : vector<40x8xbf16> to vector<16x8xbf16>
    %c5 = arith.constant 5 : index
    %c0_43 = arith.constant 0 : index
    %c0_44 = arith.constant 0 : index
    %43 = vector.load %arg2[%c5, %c0_43, %c0_44] : memref<9x8x8xbf16, #tpu.memory_space<vmem>>, vector<1x8x8xbf16>
    %44 = vector.shape_cast %43 : vector<1x8x8xbf16> to vector<8x8xbf16>
    %cst_45 = arith.constant dense<0.000000e+00> : vector<16x8xf32>
    %45 = tpu.matmul %42, %44, %cst_45 {dimension_numbers = #tpu.dot_dimension_numbers<[1], [0], [0], [1], [0, 0, 1, 1], [], []>} : vector<16x8xbf16>, vector<8x8xbf16>, vector<16x8xf32> -> vector<16x8xf32>
    %46 = arith.addf %41, %45 : vector<16x8xf32>
    %c0_46 = arith.constant 0 : index
    %c0_47 = arith.constant 0 : index
    %47 = vector.load %arg5[%c0_46, %c0_47] : memref<16x8xf32, #tpu.memory_space<vmem>>, vector<16x8xf32>
    tpu.vector_store %arg5[%c0_46, %c0_47], %46 {strides = array<i32>} : memref<16x8xf32, #tpu.memory_space<vmem>>, vector<16x8xf32>,
    %c0_48 = arith.constant 0 : index
    %c0_49 = arith.constant 0 : index
    %48 = vector.load %arg5[%c0_48, %c0_49] : memref<16x8xf32, #tpu.memory_space<vmem>>, vector<16x8xf32>
    %49 = vector.extract_strided_slice %1 {offsets = [16, 0], sizes = [16, 8], strides = [1, 1]} : vector<40x8xbf16> to vector<16x8xbf16>
    %c6 = arith.constant 6 : index
    %c0_50 = arith.constant 0 : index
    %c0_51 = arith.constant 0 : index
    %50 = vector.load %arg2[%c6, %c0_50, %c0_51] : memref<9x8x8xbf16, #tpu.memory_space<vmem>>, vector<1x8x8xbf16>
    %51 = vector.shape_cast %50 : vector<1x8x8xbf16> to vector<8x8xbf16>
    %cst_52 = arith.constant dense<0.000000e+00> : vector<16x8xf32>
    %52 = tpu.matmul %49, %51, %cst_52 {dimension_numbers = #tpu.dot_dimension_numbers<[1], [0], [0], [1], [0, 0, 1, 1], [], []>} : vector<16x8xbf16>, vector<8x8xbf16>, vector<16x8xf32> -> vector<16x8xf32>
    %53 = arith.addf %48, %52 : vector<16x8xf32>
    %c0_53 = arith.constant 0 : index
    %c0_54 = arith.constant 0 : index
    %54 = vector.load %arg5[%c0_53, %c0_54] : memref<16x8xf32, #tpu.memory_space<vmem>>, vector<16x8xf32>
    tpu.vector_store %arg5[%c0_53, %c0_54], %53 {strides = array<i32>} : memref<16x8xf32, #tpu.memory_space<vmem>>, vector<16x8xf32>,
    %c0_55 = arith.constant 0 : index
    %c0_56 = arith.constant 0 : index
    %55 = vector.load %arg5[%c0_55, %c0_56] : memref<16x8xf32, #tpu.memory_space<vmem>>, vector<16x8xf32>
    %56 = vector.extract_strided_slice %1 {offsets = [17, 0], sizes = [16, 8], strides = [1, 1]} : vector<40x8xbf16> to vector<16x8xbf16>
    %c7 = arith.constant 7 : index
    %c0_57 = arith.constant 0 : index
    %c0_58 = arith.constant 0 : index
    %57 = vector.load %arg2[%c7, %c0_57, %c0_58] : memref<9x8x8xbf16, #tpu.memory_space<vmem>>, vector<1x8x8xbf16>
    %58 = vector.shape_cast %57 : vector<1x8x8xbf16> to vector<8x8xbf16>
    %cst_59 = arith.constant dense<0.000000e+00> : vector<16x8xf32>
    %59 = tpu.matmul %56, %58, %cst_59 {dimension_numbers = #tpu.dot_dimension_numbers<[1], [0], [0], [1], [0, 0, 1, 1], [], []>} : vector<16x8xbf16>, vector<8x8xbf16>, vector<16x8xf32> -> vector<16x8xf32>
    %60 = arith.addf %55, %59 : vector<16x8xf32>
    %c0_60 = arith.constant 0 : index
    %c0_61 = arith.constant 0 : index
    %61 = vector.load %arg5[%c0_60, %c0_61] : memref<16x8xf32, #tpu.memory_space<vmem>>, vector<16x8xf32>
    tpu.vector_store %arg5[%c0_60, %c0_61], %60 {strides = array<i32>} : memref<16x8xf32, #tpu.memory_space<vmem>>, vector<16x8xf32>,
    %c0_62 = arith.constant 0 : index
    %c0_63 = arith.constant 0 : index
    %62 = vector.load %arg5[%c0_62, %c0_63] : memref<16x8xf32, #tpu.memory_space<vmem>>, vector<16x8xf32>
    %63 = vector.extract_strided_slice %1 {offsets = [18, 0], sizes = [16, 8], strides = [1, 1]} : vector<40x8xbf16> to vector<16x8xbf16>
    %c8 = arith.constant 8 : index
    %c0_64 = arith.constant 0 : index
    %c0_65 = arith.constant 0 : index
    %64 = vector.load %arg2[%c8, %c0_64, %c0_65] : memref<9x8x8xbf16, #tpu.memory_space<vmem>>, vector<1x8x8xbf16>
    %65 = vector.shape_cast %64 : vector<1x8x8xbf16> to vector<8x8xbf16>
    %cst_66 = arith.constant dense<0.000000e+00> : vector<16x8xf32>
    %66 = tpu.matmul %63, %65, %cst_66 {dimension_numbers = #tpu.dot_dimension_numbers<[1], [0], [0], [1], [0, 0, 1, 1], [], []>} : vector<16x8xbf16>, vector<8x8xbf16>, vector<16x8xf32> -> vector<16x8xf32>
    %67 = arith.addf %62, %66 : vector<16x8xf32>
    %c0_67 = arith.constant 0 : index
    %c0_68 = arith.constant 0 : index
    %68 = vector.load %arg5[%c0_67, %c0_68] : memref<16x8xf32, #tpu.memory_space<vmem>>, vector<16x8xf32>
    tpu.vector_store %arg5[%c0_67, %c0_68], %67 {strides = array<i32>} : memref<16x8xf32, #tpu.memory_space<vmem>>, vector<16x8xf32>,
    %c0_69 = arith.constant 0 : index
    %c0_70 = arith.constant 0 : index
    %69 = vector.load %arg5[%c0_69, %c0_70] : memref<16x8xf32, #tpu.memory_space<vmem>>, vector<16x8xf32>
    %c0_71 = arith.constant 0 : index
    %c0_72 = arith.constant 0 : index
    %c0_73 = arith.constant 0 : index
    %70 = vector.load %arg4[%c0_71, %c0_72, %c0_73] : memref<1x16x8xf32, #tpu.memory_space<vmem>>, vector<1x16x8xf32>
    %71 = vector.shape_cast %70 : vector<1x16x8xf32> to vector<16x8xf32>
    %72 = vector.shape_cast %69 : vector<16x8xf32> to vector<1x16x8xf32>
    tpu.vector_store %arg4[%c0_71, %c0_72, %c0_73], %72 {strides = array<i32>} : memref<1x16x8xf32, #tpu.memory_space<vmem>>, vector<1x16x8xf32>,
    return
  }
  func.func @transform_0(%arg0: i32) -> (i32, i32, i32) {
    %c0_i32 = arith.constant 0 : i32
    %c0_i32_0 = arith.constant 0 : i32
    %c0_i32_1 = arith.constant 0 : i32
    return %arg0, %c0_i32, %c0_i32_0 : i32, i32, i32
  }
  func.func @transform_1(%arg0: i32) -> (i32, i32, i32) {
    %c0_i32 = arith.constant 0 : i32
    %c0_i32_0 = arith.constant 0 : i32
    %c0_i32_1 = arith.constant 0 : i32
    %c0_i32_2 = arith.constant 0 : i32
    return %c0_i32, %c0_i32_0, %c0_i32_1 : i32, i32, i32
  }
  func.func @transform_2(%arg0: i32) -> (i32, i32) {
    %c0_i32 = arith.constant 0 : i32
    %c0_i32_0 = arith.constant 0 : i32
    %c0_i32_1 = arith.constant 0 : i32
    return %c0_i32, %c0_i32_0 : i32, i32
  }
  func.func @transform_3(%arg0: i32) -> (i32, i32, i32) {
    %c0_i32 = arith.constant 0 : i32
    %c0_i32_0 = arith.constant 0 : i32
    %c0_i32_1 = arith.constant 0 : i32
    return %arg0, %c0_i32, %c0_i32_0 : i32, i32, i32
  }
}

</mosaic_0001>

<llo_original>
// kernel: _lambda_.9
$region0: #{_lambda_.9}
  #allocation0 [shape = 'u32[]', space=smem, size = 0x4, offset = 0x4, fixed_abs, tag = 'smem constant byte address 0x4 - core index']
  #allocation1 [shape = 'u32[72,128]{1,0:T(1,128)}', space=vmem, size = 0x9000, scoped, tag = 'internal scratch']
  #allocation2 [shape = 'f32[64,256]{1,0:T(8,128)}', space=vmem, size = 0x10000, scoped, tag = 'scratch operand']
  %s0 = inlined_call_operand.vmem [shape: bf16[128,8], index: 0, kind: input, shape index: {}]
  %s1 = inlined_call_operand.hbm [shape: bf16[8,256], index: 1, kind: input, shape index: {}]
  %s2 = inlined_call_operand.hbm [shape: f32[1,256], index: 2, kind: input, shape index: {}]
  %s3 = inlined_call_operand.vmem [shape: bf16[128,256], index: 3, kind: output, shape index: {}]
  %s4 = sld [smem:[#allocation0]]
  $region61: #{_lambda_.9} parent=0
    _
  %s6 = ssub.s32 1, %s4
  %s7 = scalar_select 0, %s6, %s4
  $region1: #{_lambda_.9} parent=0
    #allocation3 [shape = 'u8[4096]{0}', space=vmem, size = 0x1000, scoped, tag = 'input window, operand 1, single buffered']
    #allocation4 [shape = 's32[2]{0}', space=sflag, size = 0x8, scoped, tag = 'scoped memory for _lambda_.9']
    #allocation5 [shape = 'u8[1024]{0}', space=vmem, size = 0x400, scoped, tag = 'input window, operand 2, single buffered']
    #allocation6 [shape = 's32[1]{0}', space=sflag, size = 0x4, scoped, tag = 'scoped memory for _lambda_.9']
    %8 = vsyncpa [#allocation4], 0
    %9 = vsyncpa [#allocation6], 0
    loop: start=0, step=1, limit=4
    $region2: #{_lambda_.9} parent=1 // loop_pre_header
      _
    $region3: #{_lambda_.9} parent=1 // loop_header
      %s11 = sphi 0, %s15
      %p12 = scmp.ge.s32.totalorder %s11, 4
      %s18 = sphi 0, %s30
      %s19 = sphi 0, %s26
      %s20 = sphi 0, %s18
      %s21 = sphi 0, %s19
      %s22 = sphi 0, %s20
      %s23 = sphi 0, %s21
      %s35 = sphi 0, %s37
      %s38 = sphi 0, %s35
      %s39 = sphi 0, %s38
      %s55 = sphi 0, %s39
      %s61 = sphi 0, %s63
      %s64 = sphi 0, %s61
      %s65 = sphi 0, %s64
      %s81 = sphi 0, %s65
      %s85 = sphi 0, %s85
      %s87 = sphi 0, %s85
      %s88 = sphi 0, %s87
      %s102 = sphi 0, %s88
      %s108 = sphi 0, %s110
      %s111 = sphi 0, %s108
      %s112 = sphi 0, %s111
      %s128 = sphi 0, %s112
    $region4: #{_lambda_.9} parent=1 // loop_header_branch
      %14 = sbr.rel (%p12) target = $region8
    $region5: #{_lambda_.9} parent=1 // loop_body
      %s16 = ssub.s32 %s11, 1
      %s17 = ssub.s32 %s11, 2
      %s24 = sadd.s32 1, %s19
      %p25 = scmp.ge.s32.totalorder %s24, 1
      %s26 = scalar_select %p25, 0, %s24
      %s27 = sadd.s32 1, %s18
      %s28 = scalar_select %p25, %s27, %s18
      %p29 = scmp.ge.s32.totalorder %s28, 2
      %s30 = scalar_select %p29, 0, %s28
      %s31 = ssub.s32 %s18, %s30
      %s32 = ssub.s32 %s19, %s26
      %s33 = sor.u32 %s31, %s32
      %p34 = scmp.eq.s32.totalorder %s33, 0
      %s36 = sadd.s32 %s35, 1
      %s37 = scalar_select %p34, %s35, %s36
      %p40 = pneg %p34
      %p41 = scmp.eq.s32.totalorder %s11, 1
      %p42 = por %p40, %p41
      %p43 = scmp.ne.s32.totalorder %s35, %s38
      %p44 = scmp.eq.s32.totalorder %s11, 0
      %p45 = por %p43, %p44
      %p46 = scmp.ne.s32.totalorder %s35, %s38
      %p47 = scmp.eq.s32.totalorder %s16, 1
      %p48 = por %p46, %p47
      %p49 = scmp.ne.s32.totalorder %s38, %s39
      %p50 = scmp.eq.s32.totalorder %s16, 0
      %p51 = por %p49, %p50
      %p52 = scmp.ne.s32.totalorder %s38, %s39
      %p53 = scmp.eq.s32.totalorder %s17, 1
      %p54 = por %p52, %p53
      %p56 = scmp.ne.s32.totalorder %s39, %s55
      %p57 = scmp.eq.s32.totalorder %s17, 0
      %p58 = por %p56, %p57
      %s59 = ssub.s32 %s19, %s26
      %p60 = scmp.eq.s32.totalorder %s59, 0
      %s62 = sadd.s32 %s61, 1
      %s63 = scalar_select %p60, %s61, %s62
      %p66 = pneg %p60
      %p67 = scmp.eq.s32.totalorder %s11, 1
      %p68 = por %p66, %p67
      %p69 = scmp.ne.s32.totalorder %s61, %s64
      %p70 = scmp.eq.s32.totalorder %s11, 0
      %p71 = por %p69, %p70
      %p72 = scmp.ne.s32.totalorder %s61, %s64
      %p73 = scmp.eq.s32.totalorder %s16, 1
      %p74 = por %p72, %p73
      %p75 = scmp.ne.s32.totalorder %s64, %s65
      %p76 = scmp.eq.s32.totalorder %s16, 0
      %p77 = por %p75, %p76
      %p78 = scmp.ne.s32.totalorder %s64, %s65
      %p79 = scmp.eq.s32.totalorder %s17, 1
      %p80 = por %p78, %p79
      %p82 = scmp.ne.s32.totalorder %s65, %s81
      %p83 = scmp.eq.s32.totalorder %s17, 0
      %p84 = por %p82, %p83
      %s86 = sadd.s32 %s85, 1
      %p89 = scmp.eq.s32.totalorder %s11, 1
      %p90 = scmp.ne.s32.totalorder %s85, %s87
      %p91 = scmp.eq.s32.totalorder %s11, 0
      %p92 = por %p90, %p91
      %p93 = scmp.ne.s32.totalorder %s85, %s87
      %p94 = scmp.eq.s32.totalorder %s16, 1
      %p95 = por %p93, %p94
      %p96 = scmp.ne.s32.totalorder %s87, %s88
      %p97 = scmp.eq.s32.totalorder %s16, 0
      %p98 = por %p96, %p97
      %p99 = scmp.ne.s32.totalorder %s87, %s88
      %p100 = scmp.eq.s32.totalorder %s17, 1
      %p101 = por %p99, %p100
      %p103 = scmp.ne.s32.totalorder %s88, %s102
      %p104 = scmp.eq.s32.totalorder %s17, 0
      %p105 = por %p103, %p104
      %s106 = ssub.s32 %s18, %s30
      %p107 = scmp.eq.s32.totalorder %s106, 0
      %s109 = sadd.s32 %s108, 1
      %s110 = scalar_select %p107, %s108, %s109
      %p113 = pneg %p107
      %p114 = scmp.eq.s32.totalorder %s11, 1
      %p115 = por %p113, %p114
      %p116 = scmp.ne.s32.totalorder %s108, %s111
      %p117 = scmp.eq.s32.totalorder %s11, 0
      %p118 = por %p116, %p117
      %p119 = scmp.ne.s32.totalorder %s108, %s111
      %p120 = scmp.eq.s32.totalorder %s16, 1
      %p121 = por %p119, %p120
      %p122 = scmp.ne.s32.totalorder %s111, %s112
      %p123 = scmp.eq.s32.totalorder %s16, 0
      %p124 = por %p122, %p123
      %p125 = scmp.ne.s32.totalorder %s111, %s112
      %p126 = scmp.eq.s32.totalorder %s17, 1
      %p127 = por %p125, %p126
      %p129 = scmp.ne.s32.totalorder %s112, %s128
      %p130 = scmp.eq.s32.totalorder %s17, 0
      %p131 = por %p129, %p130
      %p132 = scmp.le.s32.totalorder 1, %s11
      %p133 = scmp.lt.s32.totalorder %s11, 3
      %p134 = pnand %p132, %p133
      %p135 = pneg %p134
      // Predicated region
      $region9: #{_lambda_.9} parent=5 // pred_check
        _
      $region10: #{_lambda_.9} parent=5 // pred_check_branch
        %137 = sbr.rel (%p134) target = $region12
      $region11: #{_lambda_.9} parent=5 // pred_region
        %s138 = ssub.s32 %s11, 1
        // Predicated region
        $region13: #{_lambda_.9} parent=11 // pred_check
          %p139 = pneg %p77
        $region14: #{_lambda_.9} parent=11 // pred_check_branch
          %141 = sbr.rel (%p139) target = $region16
        $region15: #{_lambda_.9} parent=11 // pred_region
          %143 = vsyncadd [#allocation4], 0
          %s144 = smul.addr %s21, 2
          %s145 = smul.addr %s144, 4
          %s146 = scalar_lea.hbm %s1, %s145
          %s148 = sshll.u32 %s146, 4
          %s149 = int_to_ptr.hbm [resolvable:$true] %s148
          %s150 = sshll.u32 [#allocation3], 4
          %s151 = int_to_ptr.vmem [resolvable:$true] %s150
          %153 = dma.hbm_to_vmem [thread:$0]  %s149, 128, %s151, [#allocation4]
        $region16: #{_lambda_.9} parent=11 // pred_fallthru
          _
        // Predicated region
        $region17: #{_lambda_.9} parent=11 // pred_check
          %p154 = pneg %p98
        $region18: #{_lambda_.9} parent=11 // pred_check_branch
          %156 = sbr.rel (%p154) target = $region20
        $region19: #{_lambda_.9} parent=11 // pred_region
          %158 = vsyncadd [#allocation6], 0
          %s160 = sshll.u32 %s2, 4
          %s161 = int_to_ptr.hbm [resolvable:$true] %s160
          %s162 = sshll.u32 [#allocation5], 4
          %s163 = int_to_ptr.vmem [resolvable:$true] %s162
          %165 = dma.hbm_to_vmem [thread:$0]  %s161, 32, %s163, [#allocation6]
        $region20: #{_lambda_.9} parent=11 // pred_fallthru
          _
      $region12: #{_lambda_.9} parent=5 // pred_fallthru
        _
      %p166 = scmp.lt.s32.totalorder %s11, 2
      // Predicated region
      $region21: #{_lambda_.9} parent=5 // pred_check
        %p167 = pneg %p166
      $region22: #{_lambda_.9} parent=5 // pred_check_branch
        %169 = sbr.rel (%p167) target = $region24
      $region23: #{_lambda_.9} parent=5 // pred_region
        // Predicated region
        $region25: #{_lambda_.9} parent=23 // pred_check
          %p170 = pneg %p45
        $region26: #{_lambda_.9} parent=23 // pred_check_branch
          %172 = sbr.rel (%p170) target = $region28
        $region27: #{_lambda_.9} parent=23 // pred_region
          %s173 = smul.u32 8, %s18
          %p174 = scmp.lt.s32.totalorder %s173, 15
          %s175 = scalar_select %p174, %s173, 15
          %p176 = scmp.lt.s32.totalorder %s19, 0
          %s177 = scalar_select %p176, %s19, 0
          %s178 = sadd.s32 %s177, %s175
          %s179 = smul.addr %s178, 4
          %s180 = scalar_lea.vmem %s0, %s179
          %s181 = smul.u32 8, %s18
        $region28: #{_lambda_.9} parent=23 // pred_fallthru
          _
      $region24: #{_lambda_.9} parent=5 // pred_fallthru
        _
      %p182 = scmp.le.s32.totalorder 1, %s11
      %p183 = scmp.lt.s32.totalorder %s11, 3
      %p184 = pnand %p182, %p183
      %p185 = pneg %p184
      // Predicated region
      $region29: #{_lambda_.9} parent=5 // pred_check
        _
      $region30: #{_lambda_.9} parent=5 // pred_check_branch
        %187 = sbr.rel (%p184) target = $region32
      $region31: #{_lambda_.9} parent=5 // pred_region
        %s188 = ssub.s32 %s11, 1
        // Predicated region
        $region33: #{_lambda_.9} parent=31 // pred_check
          %p189 = pneg %p77
        $region34: #{_lambda_.9} parent=31 // pred_check_branch
          %191 = sbr.rel (%p189) target = $region36
        $region35: #{_lambda_.9} parent=31 // pred_region
          %193 = dma.done [#allocation4], 128
        $region36: #{_lambda_.9} parent=31 // pred_fallthru
          _
        // Predicated region
        $region37: #{_lambda_.9} parent=31 // pred_check
          %p194 = pneg %p98
        $region38: #{_lambda_.9} parent=31 // pred_check_branch
          %196 = sbr.rel (%p194) target = $region40
        $region39: #{_lambda_.9} parent=31 // pred_region
          %198 = dma.done [#allocation6], 32
        $region40: #{_lambda_.9} parent=31 // pred_fallthru
          _
        %s199 = smul.u32 8, %s20
        %p200 = scmp.lt.s32.totalorder %s199, 15
        %s201 = scalar_select %p200, %s199, 15
        %p202 = scmp.lt.s32.totalorder %s21, 0
        %s203 = scalar_select %p202, %s21, 0
        %s204 = sadd.s32 %s203, %s201
        %s205 = smul.addr %s204, 4
        %s206 = scalar_lea.vmem %s0, %s205
        %p207 = pneg %p51
        %p208 = pneg %p48
        %p209 = pneg %p77
        %p210 = pneg %p74
        %p211 = pneg %p98
        %p212 = pneg %p95
        %p213 = pneg %p124
        %p214 = pneg %p121
        %s215 = smul.u32 8, %s20
        %p216 = scmp.lt.s32.totalorder %s215, 15
        %s217 = scalar_select %p216, %s215, 15
        %s218 = smul.addr %s217, 2
        %s219 = smul.addr %s218, 4
        %s220 = scalar_lea.vmem %s3, %s219
        %s221 = smul.u32 8, %s20
        %p222 = scmp.lt.s32.totalorder %s221, 15
        %s223 = scalar_select %p222, %s221, 15
        %p224 = scmp.lt.s32.totalorder %s21, 0
        %s225 = scalar_select %p224, %s21, 0
        %s226 = sadd.s32 %s225, %s223
        %s227 = smul.addr %s226, 4
        %s228 = scalar_lea.vmem %s0, %s227
        %s229 = smul.u32 8, %s20
        %s230 = smul.u32 8, %s20
        %p231 = scmp.lt.s32.totalorder %s230, 15
        %s232 = scalar_select %p231, %s230, 15
        %s233 = smul.addr %s232, 2
        %s234 = smul.addr %s233, 4
        %s235 = scalar_lea.vmem %s3, %s234
        %s236 = smul.u32 8, %s20
        %p238 = scmp.eq.s32.totalorder %s21, 0
        // Predicated region
        $region41: #{_lambda_.9} parent=31 // pred_check
          %p239 = pneg %p238
        $region42: #{_lambda_.9} parent=31 // pred_check_branch
          %241 = sbr.rel (%p239) target = $region44
        $region43: #{_lambda_.9} parent=31 // pred_region
          %v242 = vld [vmem:[#allocation5] sm:$0x3]
          %v244 = vperm.slane %v242, 0
          %v245 = vperm.slane %v242, 1
          %248 = vst [vmem:[#allocation2] sm:$0xff] %v244
          %249 = vst [vmem:[#allocation2 + $0x8] sm:$0xff] %v245
          %250 = vst [vmem:[#allocation2 + $0x10] sm:$0xff] %v244
          %251 = vst [vmem:[#allocation2 + $0x18] sm:$0xff] %v245
          %252 = vst [vmem:[#allocation2 + $0x20] sm:$0xff] %v244
          %253 = vst [vmem:[#allocation2 + $0x28] sm:$0xff] %v245
          %254 = vst [vmem:[#allocation2 + $0x30] sm:$0xff] %v244
          %255 = vst [vmem:[#allocation2 + $0x38] sm:$0xff] %v245
          %256 = vst [vmem:[#allocation2 + $0x40] sm:$0xff] %v244
          %257 = vst [vmem:[#allocation2 + $0x48] sm:$0xff] %v245
          %258 = vst [vmem:[#allocation2 + $0x50] sm:$0xff] %v244
          %259 = vst [vmem:[#allocation2 + $0x58] sm:$0xff] %v245
          %260 = vst [vmem:[#allocation2 + $0x60] sm:$0xff] %v244
          %261 = vst [vmem:[#allocation2 + $0x68] sm:$0xff] %v245
          %262 = vst [vmem:[#allocation2 + $0x70] sm:$0xff] %v244
          %263 = vst [vmem:[#allocation2 + $0x78] sm:$0xff] %v245
        $region44: #{_lambda_.9} parent=31 // pred_fallthru
          _
        %v264 = vld [vmem:[#allocation2] sm:$0xff]
        %v265 = vld [vmem:[#allocation2 + $0x8] sm:$0xff]
        %v266 = vld [vmem:[#allocation2 + $0x10] sm:$0xff]
        %v267 = vld [vmem:[#allocation2 + $0x18] sm:$0xff]
        %v268 = vld [vmem:[#allocation2 + $0x20] sm:$0xff]
        %v269 = vld [vmem:[#allocation2 + $0x28] sm:$0xff]
        %v270 = vld [vmem:[#allocation2 + $0x30] sm:$0xff]
        %v271 = vld [vmem:[#allocation2 + $0x38] sm:$0xff]
        %v272 = vld [vmem:[#allocation2 + $0x40] sm:$0xff]
        %v273 = vld [vmem:[#allocation2 + $0x48] sm:$0xff]
        %v274 = vld [vmem:[#allocation2 + $0x50] sm:$0xff]
        %v275 = vld [vmem:[#allocation2 + $0x58] sm:$0xff]
        %v276 = vld [vmem:[#allocation2 + $0x60] sm:$0xff]
        %v277 = vld [vmem:[#allocation2 + $0x68] sm:$0xff]
        %v278 = vld [vmem:[#allocation2 + $0x70] sm:$0xff]
        %v279 = vld [vmem:[#allocation2 + $0x78] sm:$0xff]
        %v280 = vld [vmem:[%s228] sm:$0xf]
        %v281 = vld [vmem:[%s228 + $0x4] sm:$0xf]
        %v282 = vld [vmem:[%s228 + $0x8] sm:$0xf]
        %v283 = vld [vmem:[%s228 + $0xc] sm:$0xf]
        %v284 = vld [vmem:[%s228 + $0x10] sm:$0xf]
        %v285 = vld [vmem:[%s228 + $0x14] sm:$0xf]
        %v286 = vld [vmem:[%s228 + $0x18] sm:$0xf]
        %v287 = vld [vmem:[%s228 + $0x1c] sm:$0xf]
        %v288 = vld [vmem:[#allocation3] sm:$0xff]
        %v297 = vunpack.c.l.b16 %v280
        %v298 = vunpack.c.l.b16 %v281
        %v299 = vunpack.c.l.b16 %v282
        %v300 = vunpack.c.l.b16 %v283
        %v301 = vunpack.c.l.b16 %v284
        %v302 = vunpack.c.l.b16 %v285
        %v303 = vunpack.c.l.b16 %v286
        %v304 = vunpack.c.l.b16 %v287
        %v305 = vpack.c.b16 %v298, %v297
        %v306 = vpack.c.b16 %v300, %v299
        %v307 = vpack.c.b16 %v302, %v301
        %v308 = vpack.c.b16 %v304, %v303
        %v310 = vunpack.c.l.b16 %v288
        %v311 = vunpack.c.h.b16 %v288
        %v312 = vpack.c.b16 %v310, %v310
        %v313 = vpack.c.b16 %v311, %v311
        %vm314 = vcmask 64512
        %v316 = vsel %vm314, %v305, 0
        %v319 = vsel %vm314, %v306, 0
        %v322 = vsel %vm314, %v307, 0
        %v325 = vsel %vm314, %v308, 0
        %vm327 = vcmask 1043456
        %v329 = vsel %vm327, %v312, 0
        %v332 = vsel %vm327, %v313, 0
        %334 = vmatpush.bf16.msra.mxu0 0
        %335 = vmatpush.bf16.msra.mxu0 0
        %336 = vmatpush.bf16.msra.mxu0 0
        %337 = vmatpush.bf16.msra.mxu0 0
        %338 = vmatpush.bf16.msra.mxu0 0
        %339 = vmatpush.bf16.msra.mxu0 0
        %340 = vmatpush.bf16.msra.mxu0 0
        %341 = vmatpush.bf16.msra.mxu0 %v329
        %342 = vmatmul.bf16.gmra.mxu0 %v316
        %v343 = vpop.f32.mrf.mxu0
        %v344 = vadd.f32 0.0, %v343
        %v345 = vpop.f32.mrf.mxu0
        %v346 = vadd.f32 0.0, %v345
        %347 = vmatmul.bf16.gmra.mxu0 %v319
        %v348 = vpop.f32.mrf.mxu0
        %v349 = vadd.f32 0.0, %v348
        %v350 = vpop.f32.mrf.mxu0
        %v351 = vadd.f32 0.0, %v350
        %352 = vmatmul.bf16.gmra.mxu0 %v322
        %v353 = vpop.f32.mrf.mxu0
        %v354 = vadd.f32 0.0, %v353
        %v355 = vpop.f32.mrf.mxu0
        %v356 = vadd.f32 0.0, %v355
        %357 = vmatmul.bf16.gmra.mxu0 %v325
        %v358 = vpop.f32.mrf.mxu0
        %v359 = vadd.f32 0.0, %v358
        %v360 = vpop.f32.mrf.mxu0
        %v361 = vadd.f32 0.0, %v360
        %362 = vdwg.mxu0
        %363 = vmatpush.bf16.msra.mxu0 0
        %364 = vmatpush.bf16.msra.mxu0 0
        %365 = vmatpush.bf16.msra.mxu0 0
        %366 = vmatpush.bf16.msra.mxu0 0
        %367 = vmatpush.bf16.msra.mxu0 0
        %368 = vmatpush.bf16.msra.mxu0 0
        %369 = vmatpush.bf16.msra.mxu0 0
        %370 = vmatpush.bf16.msra.mxu0 %v332
        %371 = vmatmul.bf16.gmra.mxu0 %v316
        %v372 = vpop.f32.mrf.mxu0
        %v373 = vadd.f32 0.0, %v372
        %v374 = vpop.f32.mrf.mxu0
        %v375 = vadd.f32 0.0, %v374
        %376 = vmatmul.bf16.gmra.mxu0 %v319
        %v377 = vpop.f32.mrf.mxu0
        %v378 = vadd.f32 0.0, %v377
        %v379 = vpop.f32.mrf.mxu0
        %v380 = vadd.f32 0.0, %v379
        %381 = vmatmul.bf16.gmra.mxu0 %v322
        %v382 = vpop.f32.mrf.mxu0
        %v383 = vadd.f32 0.0, %v382
        %v384 = vpop.f32.mrf.mxu0
        %v385 = vadd.f32 0.0, %v384
        %386 = vmatmul.bf16.gmra.mxu0 %v325
        %v387 = vpop.f32.mrf.mxu0
        %v388 = vadd.f32 0.0, %v387
        %v389 = vpop.f32.mrf.mxu0
        %v390 = vadd.f32 0.0, %v389
        %391 = vdwg.mxu0
        %v392 = vadd.f32 %v264, %v344
        %v393 = vadd.f32 %v265, %v373
        %v394 = vadd.f32 %v266, %v346
        %v395 = vadd.f32 %v267, %v375
        %v396 = vadd.f32 %v268, %v349
        %v397 = vadd.f32 %v269, %v378
        %v398 = vadd.f32 %v270, %v351
        %v399 = vadd.f32 %v271, %v380
        %v400 = vadd.f32 %v272, %v354
        %v401 = vadd.f32 %v273, %v383
        %v402 = vadd.f32 %v274, %v356
        %v403 = vadd.f32 %v275, %v385
        %v404 = vadd.f32 %v276, %v359
        %v405 = vadd.f32 %v277, %v388
        %v406 = vadd.f32 %v278, %v361
        %v407 = vadd.f32 %v279, %v390
        %408 = vst [vmem:[#allocation2] sm:$0xff] %v392
        %409 = vst [vmem:[#allocation2 + $0x8] sm:$0xff] %v393
        %410 = vst [vmem:[#allocation2 + $0x10] sm:$0xff] %v394
        %411 = vst [vmem:[#allocation2 + $0x18] sm:$0xff] %v395
        %412 = vst [vmem:[#allocation2 + $0x20] sm:$0xff] %v396
        %413 = vst [vmem:[#allocation2 + $0x28] sm:$0xff] %v397
        %414 = vst [vmem:[#allocation2 + $0x30] sm:$0xff] %v398
        %415 = vst [vmem:[#allocation2 + $0x38] sm:$0xff] %v399
        %416 = vst [vmem:[#allocation2 + $0x40] sm:$0xff] %v400
        %417 = vst [vmem:[#allocation2 + $0x48] sm:$0xff] %v401
        %418 = vst [vmem:[#allocation2 + $0x50] sm:$0xff] %v402
        %419 = vst [vmem:[#allocation2 + $0x58] sm:$0xff] %v403
        %420 = vst [vmem:[#allocation2 + $0x60] sm:$0xff] %v404
        %421 = vst [vmem:[#allocation2 + $0x68] sm:$0xff] %v405
        %422 = vst [vmem:[#allocation2 + $0x70] sm:$0xff] %v406
        %423 = vst [vmem:[#allocation2 + $0x78] sm:$0xff] %v407
        // Predicated region
        $region45: #{_lambda_.9} parent=31 // pred_check
          %p424 = pneg %p238
        $region46: #{_lambda_.9} parent=31 // pred_check_branch
          %426 = sbr.rel (%p424) target = $region48
        $region47: #{_lambda_.9} parent=31 // pred_region
          %v427 = vld [vmem:[#allocation2] sm:$0xff]
          %v428 = vld [vmem:[#allocation2 + $0x8] sm:$0xff]
          %v429 = vld [vmem:[#allocation2 + $0x10] sm:$0xff]
          %v430 = vld [vmem:[#allocation2 + $0x18] sm:$0xff]
          %v431 = vld [vmem:[#allocation2 + $0x20] sm:$0xff]
          %v432 = vld [vmem:[#allocation2 + $0x28] sm:$0xff]
          %v433 = vld [vmem:[#allocation2 + $0x30] sm:$0xff]
          %v434 = vld [vmem:[#allocation2 + $0x38] sm:$0xff]
          %v435 = vld [vmem:[#allocation2 + $0x40] sm:$0xff]
          %v436 = vld [vmem:[#allocation2 + $0x48] sm:$0xff]
          %v437 = vld [vmem:[#allocation2 + $0x50] sm:$0xff]
          %v438 = vld [vmem:[#allocation2 + $0x58] sm:$0xff]
          %v439 = vld [vmem:[#allocation2 + $0x60] sm:$0xff]
          %v440 = vld [vmem:[#allocation2 + $0x68] sm:$0xff]
          %v441 = vld [vmem:[#allocation2 + $0x70] sm:$0xff]
          %v442 = vld [vmem:[#allocation2 + $0x78] sm:$0xff]
          %v443 = vpack.c.bf16 %v428, %v427
          %v444 = vpack.c.bf16 %v430, %v429
          %v445 = vpack.c.bf16 %v432, %v431
          %v446 = vpack.c.bf16 %v434, %v433
          %v447 = vpack.c.bf16 %v436, %v435
          %v448 = vpack.c.bf16 %v438, %v437
          %v449 = vpack.c.bf16 %v440, %v439
          %v450 = vpack.c.bf16 %v442, %v441
          %451 = vst [vmem:[%s235] sm:$0xff] %v443
          %452 = vst [vmem:[%s235 + $0x8] sm:$0xff] %v444
          %453 = vst [vmem:[%s235 + $0x10] sm:$0xff] %v445
          %454 = vst [vmem:[%s235 + $0x18] sm:$0xff] %v446
          %455 = vst [vmem:[%s235 + $0x20] sm:$0xff] %v447
          %456 = vst [vmem:[%s235 + $0x28] sm:$0xff] %v448
          %457 = vst [vmem:[%s235 + $0x30] sm:$0xff] %v449
          %458 = vst [vmem:[%s235 + $0x38] sm:$0xff] %v450
        $region48: #{_lambda_.9} parent=31 // pred_fallthru
          _
        %s459 = smul.u32 8, %s20
        %p460 = scmp.lt.s32.totalorder %s459, 15
        %s461 = scalar_select %p460, %s459, 15
        %s462 = smul.addr %s461, 2
        %s463 = smul.addr %s462, 4
        %s464 = scalar_lea.vmem %s3, %s463
        // Predicated region
        $region49: #{_lambda_.9} parent=31 // pred_check
          %p465 = pneg %p121
        $region50: #{_lambda_.9} parent=31 // pred_check_branch
          %467 = sbr.rel (%p465) target = $region52
        $region51: #{_lambda_.9} parent=31 // pred_region
          %s468 = smul.u32 8, %s20
        $region52: #{_lambda_.9} parent=31 // pred_fallthru
          _
      $region32: #{_lambda_.9} parent=5 // pred_fallthru
        _
      %p469 = scmp.le.s32.totalorder 2, %s11
      // Predicated region
      $region53: #{_lambda_.9} parent=5 // pred_check
        %p470 = pneg %p469
      $region54: #{_lambda_.9} parent=5 // pred_check_branch
        %472 = sbr.rel (%p470) target = $region56
      $region55: #{_lambda_.9} parent=5 // pred_region
        %s473 = ssub.s32 %s11, 2
        // Predicated region
        $region57: #{_lambda_.9} parent=55 // pred_check
          %p474 = pneg %p127
        $region58: #{_lambda_.9} parent=55 // pred_check_branch
          %476 = sbr.rel (%p474) target = $region60
        $region59: #{_lambda_.9} parent=55 // pred_region
          %s477 = smul.u32 8, %s22
          %p478 = scmp.lt.s32.totalorder %s477, 15
          %s479 = scalar_select %p478, %s477, 15
          %s480 = smul.addr %s479, 2
          %s481 = smul.addr %s480, 4
          %s482 = scalar_lea.vmem %s3, %s481
        $region60: #{_lambda_.9} parent=55 // pred_fallthru
          _
      $region56: #{_lambda_.9} parent=5 // pred_fallthru
        _
    $region6: #{_lambda_.9} parent=1 // loop_footer
      %s15 = sadd.s32 1, %s11
    $region7: #{_lambda_.9} parent=1 // loop_footer_branch
      %10 = sbr.rel target = $region3
    $region8: #{_lambda_.9} parent=1 // loop_exit
      _
    %483 = vsyncpa [#allocation4], 1
    %s484 = scalar_lea.sflag [#allocation4], 1
    %485 = vsyncpa %s484, 1
    %486 = vsyncpa [#allocation6], 1

// kernel: _lambda_.12
$region0: #{_lambda_.12}
  #allocation0 [shape = 'u32[]', space=smem, size = 0x4, offset = 0x4, fixed_abs, tag = 'smem constant byte address 0x4 - core index']
  #allocation1 [shape = 'u32[72,128]{1,0:T(1,128)}', space=vmem, size = 0x9000, scoped, tag = 'internal scratch']
  #allocation2 [shape = 'f32[8,8]{1,0:T(8,128)}', space=vmem, size = 0x1000, scoped, tag = 'scratch operand']
  %s0 = inlined_call_operand.vmem [shape: bf16[8,1024], index: 0, kind: input, shape index: {}]
  %s1 = inlined_call_operand.vmem [shape: bf16[1024,8], index: 1, kind: input, shape index: {}]
  %s2 = inlined_call_operand.vmem [shape: f32[1,8], index: 2, kind: input, shape index: {}]
  %s3 = inlined_call_operand.vmem [shape: bf16[8,8], index: 3, kind: output, shape index: {}]
  %s4 = sld [smem:[#allocation0]]
  $region53: #{_lambda_.12} parent=0
    _
  %s6 = ssub.s32 1, %s4
  %s7 = scalar_select 0, %s6, %s4
  loop: start=0, step=1, limit=4
  $region2: #{_lambda_.12} parent=0 // loop_pre_header
    _
  $region3: #{_lambda_.12} parent=0 // loop_header
    %s9 = sphi 0, %s13
    %p10 = scmp.ge.s32.totalorder %s9, 4
    %s16 = sphi 0, %s28
    %s17 = sphi 0, %s24
    %s18 = sphi 0, %s16
    %s19 = sphi 0, %s17
    %s20 = sphi 0, %s18
    %s21 = sphi 0, %s19
    %s33 = sphi 0, %s35
    %s36 = sphi 0, %s33
    %s37 = sphi 0, %s36
    %s53 = sphi 0, %s37
    %s59 = sphi 0, %s61
    %s62 = sphi 0, %s59
    %s63 = sphi 0, %s62
    %s79 = sphi 0, %s63
    %s83 = sphi 0, %s83
    %s85 = sphi 0, %s83
    %s86 = sphi 0, %s85
    %s100 = sphi 0, %s86
    %s106 = sphi 0, %s108
    %s109 = sphi 0, %s106
    %s110 = sphi 0, %s109
    %s126 = sphi 0, %s110
  $region4: #{_lambda_.12} parent=0 // loop_header_branch
    %12 = sbr.rel (%p10) target = $region8
  $region5: #{_lambda_.12} parent=0 // loop_body
    %s14 = ssub.s32 %s9, 1
    %s15 = ssub.s32 %s9, 2
    %s22 = sadd.s32 1, %s17
    %p23 = scmp.ge.s32.totalorder %s22, 2
    %s24 = scalar_select %p23, 0, %s22
    %s25 = sadd.s32 1, %s16
    %s26 = scalar_select %p23, %s25, %s16
    %p27 = scmp.ge.s32.totalorder %s26, 1
    %s28 = scalar_select %p27, 0, %s26
    %s29 = ssub.s32 %s16, %s28
    %s30 = ssub.s32 %s17, %s24
    %s31 = sor.u32 %s29, %s30
    %p32 = scmp.eq.s32.totalorder %s31, 0
    %s34 = sadd.s32 %s33, 1
    %s35 = scalar_select %p32, %s33, %s34
    %p38 = pneg %p32
    %p39 = scmp.eq.s32.totalorder %s9, 1
    %p40 = por %p38, %p39
    %p41 = scmp.ne.s32.totalorder %s33, %s36
    %p42 = scmp.eq.s32.totalorder %s9, 0
    %p43 = por %p41, %p42
    %p44 = scmp.ne.s32.totalorder %s33, %s36
    %p45 = scmp.eq.s32.totalorder %s14, 1
    %p46 = por %p44, %p45
    %p47 = scmp.ne.s32.totalorder %s36, %s37
    %p48 = scmp.eq.s32.totalorder %s14, 0
    %p49 = por %p47, %p48
    %p50 = scmp.ne.s32.totalorder %s36, %s37
    %p51 = scmp.eq.s32.totalorder %s15, 1
    %p52 = por %p50, %p51
    %p54 = scmp.ne.s32.totalorder %s37, %s53
    %p55 = scmp.eq.s32.totalorder %s15, 0
    %p56 = por %p54, %p55
    %s57 = ssub.s32 %s17, %s24
    %p58 = scmp.eq.s32.totalorder %s57, 0
    %s60 = sadd.s32 %s59, 1
    %s61 = scalar_select %p58, %s59, %s60
    %p64 = pneg %p58
    %p65 = scmp.eq.s32.totalorder %s9, 1
    %p66 = por %p64, %p65
    %p67 = scmp.ne.s32.totalorder %s59, %s62
    %p68 = scmp.eq.s32.totalorder %s9, 0
    %p69 = por %p67, %p68
    %p70 = scmp.ne.s32.totalorder %s59, %s62
    %p71 = scmp.eq.s32.totalorder %s14, 1
    %p72 = por %p70, %p71
    %p73 = scmp.ne.s32.totalorder %s62, %s63
    %p74 = scmp.eq.s32.totalorder %s14, 0
    %p75 = por %p73, %p74
    %p76 = scmp.ne.s32.totalorder %s62, %s63
    %p77 = scmp.eq.s32.totalorder %s15, 1
    %p78 = por %p76, %p77
    %p80 = scmp.ne.s32.totalorder %s63, %s79
    %p81 = scmp.eq.s32.totalorder %s15, 0
    %p82 = por %p80, %p81
    %s84 = sadd.s32 %s83, 1
    %p87 = scmp.eq.s32.totalorder %s9, 1
    %p88 = scmp.ne.s32.totalorder %s83, %s85
    %p89 = scmp.eq.s32.totalorder %s9, 0
    %p90 = por %p88, %p89
    %p91 = scmp.ne.s32.totalorder %s83, %s85
    %p92 = scmp.eq.s32.totalorder %s14, 1
    %p93 = por %p91, %p92
    %p94 = scmp.ne.s32.totalorder %s85, %s86
    %p95 = scmp.eq.s32.totalorder %s14, 0
    %p96 = por %p94, %p95
    %p97 = scmp.ne.s32.totalorder %s85, %s86
    %p98 = scmp.eq.s32.totalorder %s15, 1
    %p99 = por %p97, %p98
    %p101 = scmp.ne.s32.totalorder %s86, %s100
    %p102 = scmp.eq.s32.totalorder %s15, 0
    %p103 = por %p101, %p102
    %s104 = ssub.s32 %s16, %s28
    %p105 = scmp.eq.s32.totalorder %s104, 0
    %s107 = sadd.s32 %s106, 1
    %s108 = scalar_select %p105, %s106, %s107
    %p111 = pneg %p105
    %p112 = scmp.eq.s32.totalorder %s9, 1
    %p113 = por %p111, %p112
    %p114 = scmp.ne.s32.totalorder %s106, %s109
    %p115 = scmp.eq.s32.totalorder %s9, 0
    %p116 = por %p114, %p115
    %p117 = scmp.ne.s32.totalorder %s106, %s109
    %p118 = scmp.eq.s32.totalorder %s14, 1
    %p119 = por %p117, %p118
    %p120 = scmp.ne.s32.totalorder %s109, %s110
    %p121 = scmp.eq.s32.totalorder %s14, 0
    %p122 = por %p120, %p121
    %p123 = scmp.ne.s32.totalorder %s109, %s110
    %p124 = scmp.eq.s32.totalorder %s15, 1
    %p125 = por %p123, %p124
    %p127 = scmp.ne.s32.totalorder %s110, %s126
    %p128 = scmp.eq.s32.totalorder %s15, 0
    %p129 = por %p127, %p128
    %p130 = scmp.le.s32.totalorder 1, %s9
    %p131 = scmp.lt.s32.totalorder %s9, 3
    %p132 = pnand %p130, %p131
    %p133 = pneg %p132
    // Predicated region
    $region9: #{_lambda_.12} parent=5 // pred_check
      _
    $region10: #{_lambda_.12} parent=5 // pred_check_branch
      %135 = sbr.rel (%p132) target = $region12
    $region11: #{_lambda_.12} parent=5 // pred_region
      %s136 = ssub.s32 %s9, 1
      // Predicated region
      $region13: #{_lambda_.12} parent=11 // pred_check
        %p137 = pneg %p96
      $region14: #{_lambda_.12} parent=11 // pred_check_branch
        %139 = sbr.rel (%p137) target = $region16
      $region15: #{_lambda_.12} parent=11 // pred_region
        _
      $region16: #{_lambda_.12} parent=11 // pred_fallthru
        _
    $region12: #{_lambda_.12} parent=5 // pred_fallthru
      _
    %p140 = scmp.lt.s32.totalorder %s9, 2
    // Predicated region
    $region17: #{_lambda_.12} parent=5 // pred_check
      %p141 = pneg %p140
    $region18: #{_lambda_.12} parent=5 // pred_check_branch
      %143 = sbr.rel (%p141) target = $region20
    $region19: #{_lambda_.12} parent=5 // pred_region
      // Predicated region
      $region21: #{_lambda_.12} parent=19 // pred_check
        %p144 = pneg %p43
      $region22: #{_lambda_.12} parent=19 // pred_check_branch
        %146 = sbr.rel (%p144) target = $region24
      $region23: #{_lambda_.12} parent=19 // pred_region
        %s147 = smul.u32 4, %s17
        %p148 = scmp.lt.s32.totalorder %s16, 0
        %s149 = scalar_select %p148, %s16, 0
        %p150 = scmp.lt.s32.totalorder %s147, 7
        %s151 = scalar_select %p150, %s147, 7
        %s152 = smul.addr %s149, 8
        %s153 = sadd.s32 %s151, %s152
        %s154 = smul.addr %s153, 4
        %s155 = scalar_lea.vmem %s0, %s154
        %s156 = smul.u32 4, %s17
      $region24: #{_lambda_.12} parent=19 // pred_fallthru
        _
      // Predicated region
      $region25: #{_lambda_.12} parent=19 // pred_check
        %p157 = pneg %p69
      $region26: #{_lambda_.12} parent=19 // pred_check_branch
        %159 = sbr.rel (%p157) target = $region28
      $region27: #{_lambda_.12} parent=19 // pred_region
        %s160 = smul.u32 64, %s17
        %p161 = scmp.lt.s32.totalorder %s160, 127
        %s162 = scalar_select %p161, %s160, 127
        %s163 = smul.addr %s162, 4
        %s164 = scalar_lea.vmem %s1, %s163
        %s165 = smul.u32 64, %s17
      $region28: #{_lambda_.12} parent=19 // pred_fallthru
        _
    $region20: #{_lambda_.12} parent=5 // pred_fallthru
      _
    %p166 = scmp.le.s32.totalorder 1, %s9
    %p167 = scmp.lt.s32.totalorder %s9, 3
    %p168 = pnand %p166, %p167
    %p169 = pneg %p168
    // Predicated region
    $region29: #{_lambda_.12} parent=5 // pred_check
      _
    $region30: #{_lambda_.12} parent=5 // pred_check_branch
      %171 = sbr.rel (%p168) target = $region32
    $region31: #{_lambda_.12} parent=5 // pred_region
      %s172 = ssub.s32 %s9, 1
      %s173 = smul.u32 4, %s19
      %p174 = scmp.lt.s32.totalorder %s18, 0
      %s175 = scalar_select %p174, %s18, 0
      %p176 = scmp.lt.s32.totalorder %s173, 7
      %s177 = scalar_select %p176, %s173, 7
      %s178 = smul.addr %s175, 8
      %s179 = sadd.s32 %s177, %s178
      %s180 = smul.addr %s179, 4
      %s181 = scalar_lea.vmem %s0, %s180
      %p182 = pneg %p49
      %p183 = pneg %p46
      %s184 = smul.u32 64, %s19
      %p185 = scmp.lt.s32.totalorder %s184, 127
      %s186 = scalar_select %p185, %s184, 127
      %s187 = smul.addr %s186, 4
      %s188 = scalar_lea.vmem %s1, %s187
      %p189 = pneg %p75
      %p190 = pneg %p72
      %p191 = pneg %p96
      %p192 = pneg %p93
      %p193 = pneg %p122
      %p194 = pneg %p119
      %p195 = scmp.lt.s32.totalorder %s18, 0
      %s196 = scalar_select %p195, %s18, 0
      %s197 = smul.addr %s196, 4
      %s198 = scalar_lea.vmem %s3, %s197
      %s199 = smul.u32 4, %s19
      %p200 = scmp.lt.s32.totalorder %s18, 0
      %s201 = scalar_select %p200, %s18, 0
      %p202 = scmp.lt.s32.totalorder %s199, 7
      %s203 = scalar_select %p202, %s199, 7
      %s204 = smul.addr %s201, 8
      %s205 = sadd.s32 %s203, %s204
      %s206 = smul.addr %s205, 4
      %s207 = scalar_lea.vmem %s0, %s206
      %s208 = smul.u32 4, %s19
      %s209 = smul.u32 64, %s19
      %p210 = scmp.lt.s32.totalorder %s209, 127
      %s211 = scalar_select %p210, %s209, 127
      %s212 = smul.addr %s211, 4
      %s213 = scalar_lea.vmem %s1, %s212
      %s214 = smul.u32 64, %s19
      %p215 = scmp.lt.s32.totalorder %s18, 0
      %s216 = scalar_select %p215, %s18, 0
      %s217 = smul.addr %s216, 4
      %s218 = scalar_lea.vmem %s3, %s217
      %p219 = scmp.eq.s32.totalorder %s19, 0
      // Predicated region
      $region33: #{_lambda_.12} parent=31 // pred_check
        %p220 = pneg %p219
      $region34: #{_lambda_.12} parent=31 // pred_check_branch
        %222 = sbr.rel (%p220) target = $region36
      $region35: #{_lambda_.12} parent=31 // pred_region
        %v223 = vld [vmem:[%s2] sm:$0x1]
        %v225 = vperm.slane %v223, 0
        %vm227 = vcmask 64512
        %228 = vst.msk [vmem:[#allocation2] sm:$0xff] %vm227, %v225
      $region36: #{_lambda_.12} parent=31 // pred_fallthru
        _
      %v229 = vld [vmem:[#allocation2] sm:$0xff]
      %v230 = vld [vmem:[%s207] sm:$0xff]
      %v231 = vld [vmem:[%s207 + $0x8] sm:$0xff]
      %v232 = vld [vmem:[%s213] sm:$0xf]
      %v233 = vld [vmem:[%s213 + $0x4] sm:$0xf]
      %v234 = vld [vmem:[%s213 + $0x8] sm:$0xf]
      %v235 = vld [vmem:[%s213 + $0xc] sm:$0xf]
      %v236 = vld [vmem:[%s213 + $0x10] sm:$0xf]
      %v237 = vld [vmem:[%s213 + $0x14] sm:$0xf]
      %v238 = vld [vmem:[%s213 + $0x18] sm:$0xf]
      %v239 = vld [vmem:[%s213 + $0x1c] sm:$0xf]
      %v240 = vld [vmem:[%s213 + $0x20] sm:$0xf]
      %v241 = vld [vmem:[%s213 + $0x24] sm:$0xf]
      %v242 = vld [vmem:[%s213 + $0x28] sm:$0xf]
      %v243 = vld [vmem:[%s213 + $0x2c] sm:$0xf]
      %v244 = vld [vmem:[%s213 + $0x30] sm:$0xf]
      %v245 = vld [vmem:[%s213 + $0x34] sm:$0xf]
      %v246 = vld [vmem:[%s213 + $0x38] sm:$0xf]
      %v247 = vld [vmem:[%s213 + $0x3c] sm:$0xf]
      %v248 = vld [vmem:[%s213 + $0x40] sm:$0xf]
      %v249 = vld [vmem:[%s213 + $0x44] sm:$0xf]
      %v250 = vld [vmem:[%s213 + $0x48] sm:$0xf]
      %v251 = vld [vmem:[%s213 + $0x4c] sm:$0xf]
      %v252 = vld [vmem:[%s213 + $0x50] sm:$0xf]
      %v253 = vld [vmem:[%s213 + $0x54] sm:$0xf]
      %v254 = vld [vmem:[%s213 + $0x58] sm:$0xf]
      %v255 = vld [vmem:[%s213 + $0x5c] sm:$0xf]
      %v256 = vld [vmem:[%s213 + $0x60] sm:$0xf]
      %v257 = vld [vmem:[%s213 + $0x64] sm:$0xf]
      %v258 = vld [vmem:[%s213 + $0x68] sm:$0xf]
      %v259 = vld [vmem:[%s213 + $0x6c] sm:$0xf]
      %v260 = vld [vmem:[%s213 + $0x70] sm:$0xf]
      %v261 = vld [vmem:[%s213 + $0x74] sm:$0xf]
      %v262 = vld [vmem:[%s213 + $0x78] sm:$0xf]
      %v263 = vld [vmem:[%s213 + $0x7c] sm:$0xf]
      %v264 = vld [vmem:[%s213 + $0x80] sm:$0xf]
      %v265 = vld [vmem:[%s213 + $0x84] sm:$0xf]
      %v266 = vld [vmem:[%s213 + $0x88] sm:$0xf]
      %v267 = vld [vmem:[%s213 + $0x8c] sm:$0xf]
      %v268 = vld [vmem:[%s213 + $0x90] sm:$0xf]
      %v269 = vld [vmem:[%s213 + $0x94] sm:$0xf]
      %v270 = vld [vmem:[%s213 + $0x98] sm:$0xf]
      %v271 = vld [vmem:[%s213 + $0x9c] sm:$0xf]
      %v272 = vld [vmem:[%s213 + $0xa0] sm:$0xf]
      %v273 = vld [vmem:[%s213 + $0xa4] sm:$0xf]
      %v274 = vld [vmem:[%s213 + $0xa8] sm:$0xf]
      %v275 = vld [vmem:[%s213 + $0xac] sm:$0xf]
      %v276 = vld [vmem:[%s213 + $0xb0] sm:$0xf]
      %v277 = vld [vmem:[%s213 + $0xb4] sm:$0xf]
      %v278 = vld [vmem:[%s213 + $0xb8] sm:$0xf]
      %v279 = vld [vmem:[%s213 + $0xbc] sm:$0xf]
      %v280 = vld [vmem:[%s213 + $0xc0] sm:$0xf]
      %v281 = vld [vmem:[%s213 + $0xc4] sm:$0xf]
      %v282 = vld [vmem:[%s213 + $0xc8] sm:$0xf]
      %v283 = vld [vmem:[%s213 + $0xcc] sm:$0xf]
      %v284 = vld [vmem:[%s213 + $0xd0] sm:$0xf]
      %v285 = vld [vmem:[%s213 + $0xd4] sm:$0xf]
      %v286 = vld [vmem:[%s213 + $0xd8] sm:$0xf]
      %v287 = vld [vmem:[%s213 + $0xdc] sm:$0xf]
      %v288 = vld [vmem:[%s213 + $0xe0] sm:$0xf]
      %v289 = vld [vmem:[%s213 + $0xe4] sm:$0xf]
      %v290 = vld [vmem:[%s213 + $0xe8] sm:$0xf]
      %v291 = vld [vmem:[%s213 + $0xec] sm:$0xf]
      %v292 = vld [vmem:[%s213 + $0xf0] sm:$0xf]
      %v293 = vld [vmem:[%s213 + $0xf4] sm:$0xf]
      %v294 = vld [vmem:[%s213 + $0xf8] sm:$0xf]
      %v295 = vld [vmem:[%s213 + $0xfc] sm:$0xf]
      %v298 = vunpack.c.l.b16 %v230
      %v299 = vunpack.c.h.b16 %v230
      %v300 = vunpack.c.l.b16 %v231
      %v301 = vunpack.c.h.b16 %v231
      %v302 = vpack.c.b16 %v298, %v298
      %v303 = vpack.c.b16 %v299, %v299
      %v304 = vpack.c.b16 %v300, %v300
      %v305 = vpack.c.b16 %v301, %v301
      %v374 = vunpack.c.l.b16 %v232
      %v375 = vunpack.c.l.b16 %v233
      %v376 = vunpack.c.l.b16 %v234
      %v377 = vunpack.c.l.b16 %v235
      %v378 = vunpack.c.l.b16 %v236
      %v379 = vunpack.c.l.b16 %v237
      %v380 = vunpack.c.l.b16 %v238
      %v381 = vunpack.c.l.b16 %v239
      %v382 = vunpack.c.l.b16 %v240
      %v383 = vunpack.c.l.b16 %v241
      %v384 = vunpack.c.l.b16 %v242
      %v385 = vunpack.c.l.b16 %v243
      %v386 = vunpack.c.l.b16 %v244
      %v387 = vunpack.c.l.b16 %v245
      %v388 = vunpack.c.l.b16 %v246
      %v389 = vunpack.c.l.b16 %v247
      %v390 = vunpack.c.l.b16 %v248
      %v391 = vunpack.c.l.b16 %v249
      %v392 = vunpack.c.l.b16 %v250
      %v393 = vunpack.c.l.b16 %v251
      %v394 = vunpack.c.l.b16 %v252
      %v395 = vunpack.c.l.b16 %v253
      %v396 = vunpack.c.l.b16 %v254
      %v397 = vunpack.c.l.b16 %v255
      %v398 = vunpack.c.l.b16 %v256
      %v399 = vunpack.c.l.b16 %v257
      %v400 = vunpack.c.l.b16 %v258
      %v401 = vunpack.c.l.b16 %v259
      %v402 = vunpack.c.l.b16 %v260
      %v403 = vunpack.c.l.b16 %v261
      %v404 = vunpack.c.l.b16 %v262
      %v405 = vunpack.c.l.b16 %v263
      %v406 = vunpack.c.l.b16 %v264
      %v407 = vunpack.c.l.b16 %v265
      %v408 = vunpack.c.l.b16 %v266
      %v409 = vunpack.c.l.b16 %v267
      %v410 = vunpack.c.l.b16 %v268
      %v411 = vunpack.c.l.b16 %v269
      %v412 = vunpack.c.l.b16 %v270
      %v413 = vunpack.c.l.b16 %v271
      %v414 = vunpack.c.l.b16 %v272
      %v415 = vunpack.c.l.b16 %v273
      %v416 = vunpack.c.l.b16 %v274
      %v417 = vunpack.c.l.b16 %v275
      %v418 = vunpack.c.l.b16 %v276
      %v419 = vunpack.c.l.b16 %v277
      %v420 = vunpack.c.l.b16 %v278
      %v421 = vunpack.c.l.b16 %v279
      %v422 = vunpack.c.l.b16 %v280
      %v423 = vunpack.c.l.b16 %v281
      %v424 = vunpack.c.l.b16 %v282
      %v425 = vunpack.c.l.b16 %v283
      %v426 = vunpack.c.l.b16 %v284
      %v427 = vunpack.c.l.b16 %v285
      %v428 = vunpack.c.l.b16 %v286
      %v429 = vunpack.c.l.b16 %v287
      %v430 = vunpack.c.l.b16 %v288
      %v431 = vunpack.c.l.b16 %v289
      %v432 = vunpack.c.l.b16 %v290
      %v433 = vunpack.c.l.b16 %v291
      %v434 = vunpack.c.l.b16 %v292
      %v435 = vunpack.c.l.b16 %v293
      %v436 = vunpack.c.l.b16 %v294
      %v437 = vunpack.c.l.b16 %v295
      %v438 = vpack.c.b16 %v375, %v374
      %v439 = vpack.c.b16 %v377, %v376
      %v440 = vpack.c.b16 %v379, %v378
      %v441 = vpack.c.b16 %v381, %v380
      %v442 = vpack.c.b16 %v383, %v382
      %v443 = vpack.c.b16 %v385, %v384
      %v444 = vpack.c.b16 %v387, %v386
      %v445 = vpack.c.b16 %v389, %v388
      %v446 = vpack.c.b16 %v391, %v390
      %v447 = vpack.c.b16 %v393, %v392
      %v448 = vpack.c.b16 %v395, %v394
      %v449 = vpack.c.b16 %v397, %v396
      %v450 = vpack.c.b16 %v399, %v398
      %v451 = vpack.c.b16 %v401, %v400
      %v452 = vpack.c.b16 %v403, %v402
      %v453 = vpack.c.b16 %v405, %v404
      %v454 = vpack.c.b16 %v407, %v406
      %v455 = vpack.c.b16 %v409, %v408
      %v456 = vpack.c.b16 %v411, %v410
      %v457 = vpack.c.b16 %v413, %v412
      %v458 = vpack.c.b16 %v415, %v414
      %v459 = vpack.c.b16 %v417, %v416
      %v460 = vpack.c.b16 %v419, %v418
      %v461 = vpack.c.b16 %v421, %v420
      %v462 = vpack.c.b16 %v423, %v422
      %v463 = vpack.c.b16 %v425, %v424
      %v464 = vpack.c.b16 %v427, %v426
      %v465 = vpack.c.b16 %v429, %v428
      %v466 = vpack.c.b16 %v431, %v430
      %v467 = vpack.c.b16 %v433, %v432
      %v468 = vpack.c.b16 %v435, %v434
      %v469 = vpack.c.b16 %v437, %v436
      %502 = vmatpush.bf16.msra.mxu0 %v445
      %503 = vmatpush.bf16.msra.mxu0 %v444
      %504 = vmatpush.bf16.msra.mxu0 %v443
      %505 = vmatpush.bf16.msra.mxu0 %v442
      %506 = vmatpush.bf16.msra.mxu0 %v441
      %507 = vmatpush.bf16.msra.mxu0 %v440
      %508 = vmatpush.bf16.msra.mxu0 %v439
      %509 = vmatpush.bf16.msra.mxu0 %v438
      %510 = vmatmul.bf16.gmra.mxu0 %v302
      %v511 = vpop.f32.mrf.mxu0
      %v512 = vadd.f32 0.0, %v511
      %v513 = vpop.f32.mrf.mxu0
      %514 = vdwg.mxu0
      %515 = vmatpush.bf16.msra.mxu0 %v453
      %516 = vmatpush.bf16.msra.mxu0 %v452
      %517 = vmatpush.bf16.msra.mxu0 %v451
      %518 = vmatpush.bf16.msra.mxu0 %v450
      %519 = vmatpush.bf16.msra.mxu0 %v449
      %520 = vmatpush.bf16.msra.mxu0 %v448
      %521 = vmatpush.bf16.msra.mxu0 %v447
      %522 = vmatpush.bf16.msra.mxu0 %v446
      %523 = vmatmul.bf16.gmra.mxu0 %v303
      %v524 = vpop.f32.mrf.mxu0
      %v525 = vadd.f32 %v512, %v524
      %v526 = vpop.f32.mrf.mxu0
      %527 = vdwg.mxu0
      %528 = vmatpush.bf16.msra.mxu0 %v461
      %529 = vmatpush.bf16.msra.mxu0 %v460
      %530 = vmatpush.bf16.msra.mxu0 %v459
      %531 = vmatpush.bf16.msra.mxu0 %v458
      %532 = vmatpush.bf16.msra.mxu0 %v457
      %533 = vmatpush.bf16.msra.mxu0 %v456
      %534 = vmatpush.bf16.msra.mxu0 %v455
      %535 = vmatpush.bf16.msra.mxu0 %v454
      %536 = vmatmul.bf16.gmra.mxu0 %v304
      %v537 = vpop.f32.mrf.mxu0
      %v538 = vadd.f32 %v525, %v537
      %v539 = vpop.f32.mrf.mxu0
      %540 = vdwg.mxu0
      %541 = vmatpush.bf16.msra.mxu0 %v469
      %542 = vmatpush.bf16.msra.mxu0 %v468
      %543 = vmatpush.bf16.msra.mxu0 %v467
      %544 = vmatpush.bf16.msra.mxu0 %v466
      %545 = vmatpush.bf16.msra.mxu0 %v465
      %546 = vmatpush.bf16.msra.mxu0 %v464
      %547 = vmatpush.bf16.msra.mxu0 %v463
      %548 = vmatpush.bf16.msra.mxu0 %v462
      %549 = vmatmul.bf16.gmra.mxu0 %v305
      %v550 = vpop.f32.mrf.mxu0
      %v551 = vadd.f32 %v538, %v550
      %v552 = vpop.f32.mrf.mxu0
      %553 = vdwg.mxu0
      %v554 = vadd.f32 %v229, %v551
      %vm555 = vcmask 64512
      %556 = vst.msk [vmem:[#allocation2] sm:$0xff] %vm555, %v554
      %p557 = scmp.eq.s32.totalorder %s19, 1
      // Predicated region
      $region37: #{_lambda_.12} parent=31 // pred_check
        %p558 = pneg %p557
      $region38: #{_lambda_.12} parent=31 // pred_check_branch
        %560 = sbr.rel (%p558) target = $region40
      $region39: #{_lambda_.12} parent=31 // pred_region
        %v561 = vld [vmem:[#allocation2] sm:$0xff]
        %v562 = vpack.c.bf16 %v561, %v561
        %vm563 = vcmask 60416
        %564 = vst.msk [vmem:[%s218] sm:$0xf] %vm563, %v562
      $region40: #{_lambda_.12} parent=31 // pred_fallthru
        _
      %p565 = scmp.lt.s32.totalorder %s18, 0
      %s566 = scalar_select %p565, %s18, 0
      %s567 = smul.addr %s566, 4
      %s568 = scalar_lea.vmem %s3, %s567
      // Predicated region
      $region41: #{_lambda_.12} parent=31 // pred_check
        %p569 = pneg %p119
      $region42: #{_lambda_.12} parent=31 // pred_check_branch
        %571 = sbr.rel (%p569) target = $region44
      $region43: #{_lambda_.12} parent=31 // pred_region
        _
      $region44: #{_lambda_.12} parent=31 // pred_fallthru
        _
      // Predicated region
      $region45: #{_lambda_.12} parent=31 // pred_check
        %p572 = pneg %p119
      $region46: #{_lambda_.12} parent=31 // pred_check_branch
        %574 = sbr.rel (%p572) target = $region48
      $region47: #{_lambda_.12} parent=31 // pred_region
        %p575 = scmp.lt.s32.totalorder %s18, 0
        %s576 = scalar_select %p575, %s18, 0
        %s577 = smul.addr %s576, 4
        %s578 = scalar_lea.vmem %s3, %s577
      $region48: #{_lambda_.12} parent=31 // pred_fallthru
        _
    $region32: #{_lambda_.12} parent=5 // pred_fallthru
      _
    %p579 = scmp.le.s32.totalorder 2, %s9
    // Predicated region
    $region49: #{_lambda_.12} parent=5 // pred_check
      %p580 = pneg %p579
    $region50: #{_lambda_.12} parent=5 // pred_check_branch
      %582 = sbr.rel (%p580) target = $region52
    $region51: #{_lambda_.12} parent=5 // pred_region
      %s583 = ssub.s32 %s9, 2
    $region52: #{_lambda_.12} parent=5 // pred_fallthru
      _
  $region6: #{_lambda_.12} parent=0 // loop_footer
    %s13 = sadd.s32 1, %s9
  $region7: #{_lambda_.12} parent=0 // loop_footer_branch
    %8 = sbr.rel target = $region3
  $region8: #{_lambda_.12} parent=0 // loop_exit
    _

// kernel: _lambda_.10
$region0: #{_lambda_.10}
  #allocation0 [shape = 'u32[]', space=smem, size = 0x4, offset = 0x4, fixed_abs, tag = 'smem constant byte address 0x4 - core index']
  #allocation1 [shape = 'u32[72,128]{1,0:T(1,128)}', space=vmem, size = 0x9000, scoped, tag = 'internal scratch']
  #allocation2 [shape = 'f32[16,512]{1,0:T(8,128)}', space=vmem, size = 0x8000, scoped, tag = 'scratch operand']
  %s0 = inlined_call_operand.vmem [shape: bf16[32,256], index: 0, kind: input, shape index: {}]
  %s1 = inlined_call_operand.vmem [shape: bf16[256,512], index: 1, kind: input, shape index: {}]
  %s2 = inlined_call_operand.vmem [shape: f32[1,512], index: 2, kind: input, shape index: {}]
  %s3 = inlined_call_operand.vmem [shape: bf16[32,512], index: 3, kind: output, shape index: {}]
  %s4 = sld [smem:[#allocation0]]
  $region53: #{_lambda_.10} parent=0
    _
  %s6 = ssub.s32 1, %s4
  %s7 = scalar_select 0, %s6, %s4
  loop: start=0, step=1, limit=4
  $region2: #{_lambda_.10} parent=0 // loop_pre_header
    _
  $region3: #{_lambda_.10} parent=0 // loop_header
    %s9 = sphi 0, %s13
    %p10 = scmp.ge.s32.totalorder %s9, 4
    %s16 = sphi 0, %s28
    %s17 = sphi 0, %s24
    %s18 = sphi 0, %s16
    %s19 = sphi 0, %s17
    %s20 = sphi 0, %s18
    %s21 = sphi 0, %s19
    %s33 = sphi 0, %s35
    %s36 = sphi 0, %s33
    %s37 = sphi 0, %s36
    %s53 = sphi 0, %s37
    %s59 = sphi 0, %s61
    %s62 = sphi 0, %s59
    %s63 = sphi 0, %s62
    %s79 = sphi 0, %s63
    %s83 = sphi 0, %s83
    %s85 = sphi 0, %s83
    %s86 = sphi 0, %s85
    %s100 = sphi 0, %s86
    %s106 = sphi 0, %s108
    %s109 = sphi 0, %s106
    %s110 = sphi 0, %s109
    %s126 = sphi 0, %s110
  $region4: #{_lambda_.10} parent=0 // loop_header_branch
    %12 = sbr.rel (%p10) target = $region8
  $region5: #{_lambda_.10} parent=0 // loop_body
    %s14 = ssub.s32 %s9, 1
    %s15 = ssub.s32 %s9, 2
    %s22 = sadd.s32 1, %s17
    %p23 = scmp.ge.s32.totalorder %s22, 1
    %s24 = scalar_select %p23, 0, %s22
    %s25 = sadd.s32 1, %s16
    %s26 = scalar_select %p23, %s25, %s16
    %p27 = scmp.ge.s32.totalorder %s26, 2
    %s28 = scalar_select %p27, 0, %s26
    %s29 = ssub.s32 %s16, %s28
    %s30 = ssub.s32 %s17, %s24
    %s31 = sor.u32 %s29, %s30
    %p32 = scmp.eq.s32.totalorder %s31, 0
    %s34 = sadd.s32 %s33, 1
    %s35 = scalar_select %p32, %s33, %s34
    %p38 = pneg %p32
    %p39 = scmp.eq.s32.totalorder %s9, 1
    %p40 = por %p38, %p39
    %p41 = scmp.ne.s32.totalorder %s33, %s36
    %p42 = scmp.eq.s32.totalorder %s9, 0
    %p43 = por %p41, %p42
    %p44 = scmp.ne.s32.totalorder %s33, %s36
    %p45 = scmp.eq.s32.totalorder %s14, 1
    %p46 = por %p44, %p45
    %p47 = scmp.ne.s32.totalorder %s36, %s37
    %p48 = scmp.eq.s32.totalorder %s14, 0
    %p49 = por %p47, %p48
    %p50 = scmp.ne.s32.totalorder %s36, %s37
    %p51 = scmp.eq.s32.totalorder %s15, 1
    %p52 = por %p50, %p51
    %p54 = scmp.ne.s32.totalorder %s37, %s53
    %p55 = scmp.eq.s32.totalorder %s15, 0
    %p56 = por %p54, %p55
    %s57 = ssub.s32 %s17, %s24
    %p58 = scmp.eq.s32.totalorder %s57, 0
    %s60 = sadd.s32 %s59, 1
    %s61 = scalar_select %p58, %s59, %s60
    %p64 = pneg %p58
    %p65 = scmp.eq.s32.totalorder %s9, 1
    %p66 = por %p64, %p65
    %p67 = scmp.ne.s32.totalorder %s59, %s62
    %p68 = scmp.eq.s32.totalorder %s9, 0
    %p69 = por %p67, %p68
    %p70 = scmp.ne.s32.totalorder %s59, %s62
    %p71 = scmp.eq.s32.totalorder %s14, 1
    %p72 = por %p70, %p71
    %p73 = scmp.ne.s32.totalorder %s62, %s63
    %p74 = scmp.eq.s32.totalorder %s14, 0
    %p75 = por %p73, %p74
    %p76 = scmp.ne.s32.totalorder %s62, %s63
    %p77 = scmp.eq.s32.totalorder %s15, 1
    %p78 = por %p76, %p77
    %p80 = scmp.ne.s32.totalorder %s63, %s79
    %p81 = scmp.eq.s32.totalorder %s15, 0
    %p82 = por %p80, %p81
    %s84 = sadd.s32 %s83, 1
    %p87 = scmp.eq.s32.totalorder %s9, 1
    %p88 = scmp.ne.s32.totalorder %s83, %s85
    %p89 = scmp.eq.s32.totalorder %s9, 0
    %p90 = por %p88, %p89
    %p91 = scmp.ne.s32.totalorder %s83, %s85
    %p92 = scmp.eq.s32.totalorder %s14, 1
    %p93 = por %p91, %p92
    %p94 = scmp.ne.s32.totalorder %s85, %s86
    %p95 = scmp.eq.s32.totalorder %s14, 0
    %p96 = por %p94, %p95
    %p97 = scmp.ne.s32.totalorder %s85, %s86
    %p98 = scmp.eq.s32.totalorder %s15, 1
    %p99 = por %p97, %p98
    %p101 = scmp.ne.s32.totalorder %s86, %s100
    %p102 = scmp.eq.s32.totalorder %s15, 0
    %p103 = por %p101, %p102
    %s104 = ssub.s32 %s16, %s28
    %p105 = scmp.eq.s32.totalorder %s104, 0
    %s107 = sadd.s32 %s106, 1
    %s108 = scalar_select %p105, %s106, %s107
    %p111 = pneg %p105
    %p112 = scmp.eq.s32.totalorder %s9, 1
    %p113 = por %p111, %p112
    %p114 = scmp.ne.s32.totalorder %s106, %s109
    %p115 = scmp.eq.s32.totalorder %s9, 0
    %p116 = por %p114, %p115
    %p117 = scmp.ne.s32.totalorder %s106, %s109
    %p118 = scmp.eq.s32.totalorder %s14, 1
    %p119 = por %p117, %p118
    %p120 = scmp.ne.s32.totalorder %s109, %s110
    %p121 = scmp.eq.s32.totalorder %s14, 0
    %p122 = por %p120, %p121
    %p123 = scmp.ne.s32.totalorder %s109, %s110
    %p124 = scmp.eq.s32.totalorder %s15, 1
    %p125 = por %p123, %p124
    %p127 = scmp.ne.s32.totalorder %s110, %s126
    %p128 = scmp.eq.s32.totalorder %s15, 0
    %p129 = por %p127, %p128
    %p130 = scmp.le.s32.totalorder 1, %s9
    %p131 = scmp.lt.s32.totalorder %s9, 3
    %p132 = pnand %p130, %p131
    %p133 = pneg %p132
    // Predicated region
    $region9: #{_lambda_.10} parent=5 // pred_check
      _
    $region10: #{_lambda_.10} parent=5 // pred_check_branch
      %135 = sbr.rel (%p132) target = $region12
    $region11: #{_lambda_.10} parent=5 // pred_region
      %s136 = ssub.s32 %s9, 1
      // Predicated region
      $region13: #{_lambda_.10} parent=11 // pred_check
        %p137 = pneg %p75
      $region14: #{_lambda_.10} parent=11 // pred_check_branch
        %139 = sbr.rel (%p137) target = $region16
      $region15: #{_lambda_.10} parent=11 // pred_region
        %s140 = smul.u32 32, %s19
        %p141 = scmp.lt.s32.totalorder %s140, 31
        %s142 = scalar_select %p141, %s140, 31
        %s143 = smul.addr %s142, 4
        %s144 = smul.addr %s143, 4
        %s145 = scalar_lea.vmem %s1, %s144
        %s146 = smul.u32 32, %s19
      $region16: #{_lambda_.10} parent=11 // pred_fallthru
        _
      // Predicated region
      $region17: #{_lambda_.10} parent=11 // pred_check
        %p147 = pneg %p96
      $region18: #{_lambda_.10} parent=11 // pred_check_branch
        %149 = sbr.rel (%p147) target = $region20
      $region19: #{_lambda_.10} parent=11 // pred_region
        _
      $region20: #{_lambda_.10} parent=11 // pred_fallthru
        _
    $region12: #{_lambda_.10} parent=5 // pred_fallthru
      _
    %p150 = scmp.lt.s32.totalorder %s9, 2
    // Predicated region
    $region21: #{_lambda_.10} parent=5 // pred_check
      %p151 = pneg %p150
    $region22: #{_lambda_.10} parent=5 // pred_check_branch
      %153 = sbr.rel (%p151) target = $region24
    $region23: #{_lambda_.10} parent=5 // pred_region
      // Predicated region
      $region25: #{_lambda_.10} parent=23 // pred_check
        %p154 = pneg %p43
      $region26: #{_lambda_.10} parent=23 // pred_check_branch
        %156 = sbr.rel (%p154) target = $region28
      $region27: #{_lambda_.10} parent=23 // pred_region
        %s157 = smul.u32 2, %s16
        %s158 = smul.u32 2, %s17
        %p159 = scmp.lt.s32.totalorder %s157, 3
        %s160 = scalar_select %p159, %s157, 3
        %p161 = scmp.lt.s32.totalorder %s158, 1
        %s162 = scalar_select %p161, %s158, 1
        %s163 = smul.addr %s160, 2
        %s164 = sadd.s32 %s162, %s163
        %s165 = smul.addr %s164, 4
        %s166 = scalar_lea.vmem %s0, %s165
        %s167 = smul.u32 2, %s16
        %s168 = smul.u32 2, %s17
      $region28: #{_lambda_.10} parent=23 // pred_fallthru
        _
    $region24: #{_lambda_.10} parent=5 // pred_fallthru
      _
    %p169 = scmp.le.s32.totalorder 1, %s9
    %p170 = scmp.lt.s32.totalorder %s9, 3
    %p171 = pnand %p169, %p170
    %p172 = pneg %p171
    // Predicated region
    $region29: #{_lambda_.10} parent=5 // pred_check
      _
    $region30: #{_lambda_.10} parent=5 // pred_check_branch
      %174 = sbr.rel (%p171) target = $region32
    $region31: #{_lambda_.10} parent=5 // pred_region
      %s175 = ssub.s32 %s9, 1
      %s176 = smul.u32 2, %s18
      %s177 = smul.u32 2, %s19
      %p178 = scmp.lt.s32.totalorder %s176, 3
      %s179 = scalar_select %p178, %s176, 3
      %p180 = scmp.lt.s32.totalorder %s177, 1
      %s181 = scalar_select %p180, %s177, 1
      %s182 = smul.addr %s179, 2
      %s183 = sadd.s32 %s181, %s182
      %s184 = smul.addr %s183, 4
      %s185 = scalar_lea.vmem %s0, %s184
      %p186 = pneg %p49
      %p187 = pneg %p46
      %s188 = smul.u32 32, %s19
      %p189 = scmp.lt.s32.totalorder %s188, 31
      %s190 = scalar_select %p189, %s188, 31
      %s191 = smul.addr %s190, 4
      %s192 = smul.addr %s191, 4
      %s193 = scalar_lea.vmem %s1, %s192
      %p194 = pneg %p75
      %p195 = pneg %p72
      %p196 = pneg %p96
      %p197 = pneg %p93
      %p198 = pneg %p122
      %p199 = pneg %p119
      %s200 = smul.u32 2, %s18
      %p201 = scmp.lt.s32.totalorder %s200, 3
      %s202 = scalar_select %p201, %s200, 3
      %s203 = smul.addr %s202, 4
      %s204 = smul.addr %s203, 4
      %s205 = scalar_lea.vmem %s3, %s204
      %s206 = smul.u32 2, %s18
      %s207 = smul.u32 2, %s19
      %p208 = scmp.lt.s32.totalorder %s206, 3
      %s209 = scalar_select %p208, %s206, 3
      %p210 = scmp.lt.s32.totalorder %s207, 1
      %s211 = scalar_select %p210, %s207, 1
      %s212 = smul.addr %s209, 2
      %s213 = sadd.s32 %s211, %s212
      %s214 = smul.addr %s213, 4
      %s215 = scalar_lea.vmem %s0, %s214
      %s216 = smul.u32 2, %s18
      %s217 = smul.u32 2, %s19
      %s218 = smul.u32 32, %s19
      %p219 = scmp.lt.s32.totalorder %s218, 31
      %s220 = scalar_select %p219, %s218, 31
      %s221 = smul.addr %s220, 4
      %s222 = smul.addr %s221, 4
      %s223 = scalar_lea.vmem %s1, %s222
      %s224 = smul.u32 32, %s19
      %s225 = smul.u32 2, %s18
      %p226 = scmp.lt.s32.totalorder %s225, 3
      %s227 = scalar_select %p226, %s225, 3
      %s228 = smul.addr %s227, 4
      %s229 = smul.addr %s228, 4
      %s230 = scalar_lea.vmem %s3, %s229
      %s231 = smul.u32 2, %s18
      %p232 = scmp.eq.s32.totalorder %s19, 0
      // Predicated region
      $region33: #{_lambda_.10} parent=31 // pred_check
        %p233 = pneg %p232
      $region34: #{_lambda_.10} parent=31 // pred_check_branch
        %235 = sbr.rel (%p233) target = $region36
      $region35: #{_lambda_.10} parent=31 // pred_region
        %v236 = vld [vmem:[%s2] sm:$0xf]
        %v238 = vperm.slane %v236, 0
        %v239 = vperm.slane %v236, 1
        %v240 = vperm.slane %v236, 2
        %v241 = vperm.slane %v236, 3
        %246 = vst [vmem:[#allocation2] sm:$0xff] %v238
        %247 = vst [vmem:[#allocation2 + $0x8] sm:$0xff] %v239
        %248 = vst [vmem:[#allocation2 + $0x10] sm:$0xff] %v240
        %249 = vst [vmem:[#allocation2 + $0x18] sm:$0xff] %v241
        %250 = vst [vmem:[#allocation2 + $0x20] sm:$0xff] %v238
        %251 = vst [vmem:[#allocation2 + $0x28] sm:$0xff] %v239
        %252 = vst [vmem:[#allocation2 + $0x30] sm:$0xff] %v240
        %253 = vst [vmem:[#allocation2 + $0x38] sm:$0xff] %v241
      $region36: #{_lambda_.10} parent=31 // pred_fallthru
        _
      %v254 = vld [vmem:[#allocation2] sm:$0xff]
      %v255 = vld [vmem:[#allocation2 + $0x8] sm:$0xff]
      %v256 = vld [vmem:[#allocation2 + $0x10] sm:$0xff]
      %v257 = vld [vmem:[#allocation2 + $0x18] sm:$0xff]
      %v258 = vld [vmem:[#allocation2 + $0x20] sm:$0xff]
      %v259 = vld [vmem:[#allocation2 + $0x28] sm:$0xff]
      %v260 = vld [vmem:[#allocation2 + $0x30] sm:$0xff]
      %v261 = vld [vmem:[#allocation2 + $0x38] sm:$0xff]
      %v262 = vld [vmem:[%s215] sm:$0xff]
      %v263 = vld [vmem:[%s215 + $0x8] sm:$0xff]
      %v264 = vld [vmem:[%s223] sm:$0xff]
      %v265 = vld [vmem:[%s223 + $0x8] sm:$0xff]
      %v266 = vld [vmem:[%s223 + $0x10] sm:$0xff]
      %v267 = vld [vmem:[%s223 + $0x18] sm:$0xff]
      %v268 = vld [vmem:[%s223 + $0x20] sm:$0xff]
      %v269 = vld [vmem:[%s223 + $0x28] sm:$0xff]
      %v270 = vld [vmem:[%s223 + $0x30] sm:$0xff]
      %v271 = vld [vmem:[%s223 + $0x38] sm:$0xff]
      %v272 = vld [vmem:[%s223 + $0x40] sm:$0xff]
      %v273 = vld [vmem:[%s223 + $0x48] sm:$0xff]
      %v274 = vld [vmem:[%s223 + $0x50] sm:$0xff]
      %v275 = vld [vmem:[%s223 + $0x58] sm:$0xff]
      %v276 = vld [vmem:[%s223 + $0x60] sm:$0xff]
      %v277 = vld [vmem:[%s223 + $0x68] sm:$0xff]
      %v278 = vld [vmem:[%s223 + $0x70] sm:$0xff]
      %v279 = vld [vmem:[%s223 + $0x78] sm:$0xff]
      %v280 = vld [vmem:[%s223 + $0x80] sm:$0xff]
      %v281 = vld [vmem:[%s223 + $0x88] sm:$0xff]
      %v282 = vld [vmem:[%s223 + $0x90] sm:$0xff]
      %v283 = vld [vmem:[%s223 + $0x98] sm:$0xff]
      %v284 = vld [vmem:[%s223 + $0xa0] sm:$0xff]
      %v285 = vld [vmem:[%s223 + $0xa8] sm:$0xff]
      %v286 = vld [vmem:[%s223 + $0xb0] sm:$0xff]
      %v287 = vld [vmem:[%s223 + $0xb8] sm:$0xff]
      %v288 = vld [vmem:[%s223 + $0xc0] sm:$0xff]
      %v289 = vld [vmem:[%s223 + $0xc8] sm:$0xff]
      %v290 = vld [vmem:[%s223 + $0xd0] sm:$0xff]
      %v291 = vld [vmem:[%s223 + $0xd8] sm:$0xff]
      %v292 = vld [vmem:[%s223 + $0xe0] sm:$0xff]
      %v293 = vld [vmem:[%s223 + $0xe8] sm:$0xff]
      %v294 = vld [vmem:[%s223 + $0xf0] sm:$0xff]
      %v295 = vld [vmem:[%s223 + $0xf8] sm:$0xff]
      %v296 = vld [vmem:[%s223 + $0x100] sm:$0xff]
      %v297 = vld [vmem:[%s223 + $0x108] sm:$0xff]
      %v298 = vld [vmem:[%s223 + $0x110] sm:$0xff]
      %v299 = vld [vmem:[%s223 + $0x118] sm:$0xff]
      %v300 = vld [vmem:[%s223 + $0x120] sm:$0xff]
      %v301 = vld [vmem:[%s223 + $0x128] sm:$0xff]
      %v302 = vld [vmem:[%s223 + $0x130] sm:$0xff]
      %v303 = vld [vmem:[%s223 + $0x138] sm:$0xff]
      %v304 = vld [vmem:[%s223 + $0x140] sm:$0xff]
      %v305 = vld [vmem:[%s223 + $0x148] sm:$0xff]
      %v306 = vld [vmem:[%s223 + $0x150] sm:$0xff]
      %v307 = vld [vmem:[%s223 + $0x158] sm:$0xff]
      %v308 = vld [vmem:[%s223 + $0x160] sm:$0xff]
      %v309 = vld [vmem:[%s223 + $0x168] sm:$0xff]
      %v310 = vld [vmem:[%s223 + $0x170] sm:$0xff]
      %v311 = vld [vmem:[%s223 + $0x178] sm:$0xff]
      %v312 = vld [vmem:[%s223 + $0x180] sm:$0xff]
      %v313 = vld [vmem:[%s223 + $0x188] sm:$0xff]
      %v314 = vld [vmem:[%s223 + $0x190] sm:$0xff]
      %v315 = vld [vmem:[%s223 + $0x198] sm:$0xff]
      %v316 = vld [vmem:[%s223 + $0x1a0] sm:$0xff]
      %v317 = vld [vmem:[%s223 + $0x1a8] sm:$0xff]
      %v318 = vld [vmem:[%s223 + $0x1b0] sm:$0xff]
      %v319 = vld [vmem:[%s223 + $0x1b8] sm:$0xff]
      %v320 = vld [vmem:[%s223 + $0x1c0] sm:$0xff]
      %v321 = vld [vmem:[%s223 + $0x1c8] sm:$0xff]
      %v322 = vld [vmem:[%s223 + $0x1d0] sm:$0xff]
      %v323 = vld [vmem:[%s223 + $0x1d8] sm:$0xff]
      %v324 = vld [vmem:[%s223 + $0x1e0] sm:$0xff]
      %v325 = vld [vmem:[%s223 + $0x1e8] sm:$0xff]
      %v326 = vld [vmem:[%s223 + $0x1f0] sm:$0xff]
      %v327 = vld [vmem:[%s223 + $0x1f8] sm:$0xff]
      %v330 = vunpack.c.l.b16 %v262
      %v331 = vunpack.c.h.b16 %v262
      %v332 = vunpack.c.l.b16 %v263
      %v333 = vunpack.c.h.b16 %v263
      %v334 = vpack.c.b16 %v332, %v330
      %v335 = vpack.c.b16 %v333, %v331
      %v402 = vunpack.c.l.b16 %v264
      %v403 = vunpack.c.h.b16 %v264
      %v404 = vunpack.c.l.b16 %v265
      %v405 = vunpack.c.h.b16 %v265
      %v406 = vunpack.c.l.b16 %v266
      %v407 = vunpack.c.h.b16 %v266
      %v408 = vunpack.c.l.b16 %v267
      %v409 = vunpack.c.h.b16 %v267
      %v410 = vunpack.c.l.b16 %v268
      %v411 = vunpack.c.h.b16 %v268
      %v412 = vunpack.c.l.b16 %v269
      %v413 = vunpack.c.h.b16 %v269
      %v414 = vunpack.c.l.b16 %v270
      %v415 = vunpack.c.h.b16 %v270
      %v416 = vunpack.c.l.b16 %v271
      %v417 = vunpack.c.h.b16 %v271
      %v418 = vunpack.c.l.b16 %v272
      %v419 = vunpack.c.h.b16 %v272
      %v420 = vunpack.c.l.b16 %v273
      %v421 = vunpack.c.h.b16 %v273
      %v422 = vunpack.c.l.b16 %v274
      %v423 = vunpack.c.h.b16 %v274
      %v424 = vunpack.c.l.b16 %v275
      %v425 = vunpack.c.h.b16 %v275
      %v426 = vunpack.c.l.b16 %v276
      %v427 = vunpack.c.h.b16 %v276
      %v428 = vunpack.c.l.b16 %v277
      %v429 = vunpack.c.h.b16 %v277
      %v430 = vunpack.c.l.b16 %v278
      %v431 = vunpack.c.h.b16 %v278
      %v432 = vunpack.c.l.b16 %v279
      %v433 = vunpack.c.h.b16 %v279
      %v434 = vunpack.c.l.b16 %v280
      %v435 = vunpack.c.h.b16 %v280
      %v436 = vunpack.c.l.b16 %v281
      %v437 = vunpack.c.h.b16 %v281
      %v438 = vunpack.c.l.b16 %v282
      %v439 = vunpack.c.h.b16 %v282
      %v440 = vunpack.c.l.b16 %v283
      %v441 = vunpack.c.h.b16 %v283
      %v442 = vunpack.c.l.b16 %v284
      %v443 = vunpack.c.h.b16 %v284
      %v444 = vunpack.c.l.b16 %v285
      %v445 = vunpack.c.h.b16 %v285
      %v446 = vunpack.c.l.b16 %v286
      %v447 = vunpack.c.h.b16 %v286
      %v448 = vunpack.c.l.b16 %v287
      %v449 = vunpack.c.h.b16 %v287
      %v450 = vunpack.c.l.b16 %v288
      %v451 = vunpack.c.h.b16 %v288
      %v452 = vunpack.c.l.b16 %v289
      %v453 = vunpack.c.h.b16 %v289
      %v454 = vunpack.c.l.b16 %v290
      %v455 = vunpack.c.h.b16 %v290
      %v456 = vunpack.c.l.b16 %v291
      %v457 = vunpack.c.h.b16 %v291
      %v458 = vunpack.c.l.b16 %v292
      %v459 = vunpack.c.h.b16 %v292
      %v460 = vunpack.c.l.b16 %v293
      %v461 = vunpack.c.h.b16 %v293
      %v462 = vunpack.c.l.b16 %v294
      %v463 = vunpack.c.h.b16 %v294
      %v464 = vunpack.c.l.b16 %v295
      %v465 = vunpack.c.h.b16 %v295
      %v466 = vunpack.c.l.b16 %v296
      %v467 = vunpack.c.h.b16 %v296
      %v468 = vunpack.c.l.b16 %v297
      %v469 = vunpack.c.h.b16 %v297
      %v470 = vunpack.c.l.b16 %v298
      %v471 = vunpack.c.h.b16 %v298
      %v472 = vunpack.c.l.b16 %v299
      %v473 = vunpack.c.h.b16 %v299
      %v474 = vunpack.c.l.b16 %v300
      %v475 = vunpack.c.h.b16 %v300
      %v476 = vunpack.c.l.b16 %v301
      %v477 = vunpack.c.h.b16 %v301
      %v478 = vunpack.c.l.b16 %v302
      %v479 = vunpack.c.h.b16 %v302
      %v480 = vunpack.c.l.b16 %v303
      %v481 = vunpack.c.h.b16 %v303
      %v482 = vunpack.c.l.b16 %v304
      %v483 = vunpack.c.h.b16 %v304
      %v484 = vunpack.c.l.b16 %v305
      %v485 = vunpack.c.h.b16 %v305
      %v486 = vunpack.c.l.b16 %v306
      %v487 = vunpack.c.h.b16 %v306
      %v488 = vunpack.c.l.b16 %v307
      %v489 = vunpack.c.h.b16 %v307
      %v490 = vunpack.c.l.b16 %v308
      %v491 = vunpack.c.h.b16 %v308
      %v492 = vunpack.c.l.b16 %v309
      %v493 = vunpack.c.h.b16 %v309
      %v494 = vunpack.c.l.b16 %v310
      %v495 = vunpack.c.h.b16 %v310
      %v496 = vunpack.c.l.b16 %v311
      %v497 = vunpack.c.h.b16 %v311
      %v498 = vunpack.c.l.b16 %v312
      %v499 = vunpack.c.h.b16 %v312
      %v500 = vunpack.c.l.b16 %v313
      %v501 = vunpack.c.h.b16 %v313
      %v502 = vunpack.c.l.b16 %v314
      %v503 = vunpack.c.h.b16 %v314
      %v504 = vunpack.c.l.b16 %v315
      %v505 = vunpack.c.h.b16 %v315
      %v506 = vunpack.c.l.b16 %v316
      %v507 = vunpack.c.h.b16 %v316
      %v508 = vunpack.c.l.b16 %v317
      %v509 = vunpack.c.h.b16 %v317
      %v510 = vunpack.c.l.b16 %v318
      %v511 = vunpack.c.h.b16 %v318
      %v512 = vunpack.c.l.b16 %v319
      %v513 = vunpack.c.h.b16 %v319
      %v514 = vunpack.c.l.b16 %v320
      %v515 = vunpack.c.h.b16 %v320
      %v516 = vunpack.c.l.b16 %v321
      %v517 = vunpack.c.h.b16 %v321
      %v518 = vunpack.c.l.b16 %v322
      %v519 = vunpack.c.h.b16 %v322
      %v520 = vunpack.c.l.b16 %v323
      %v521 = vunpack.c.h.b16 %v323
      %v522 = vunpack.c.l.b16 %v324
      %v523 = vunpack.c.h.b16 %v324
      %v524 = vunpack.c.l.b16 %v325
      %v525 = vunpack.c.h.b16 %v325
      %v526 = vunpack.c.l.b16 %v326
      %v527 = vunpack.c.h.b16 %v326
      %v528 = vunpack.c.l.b16 %v327
      %v529 = vunpack.c.h.b16 %v327
      %v530 = vpack.c.b16 %v406, %v402
      %v531 = vpack.c.b16 %v407, %v403
      %v532 = vpack.c.b16 %v408, %v404
      %v533 = vpack.c.b16 %v409, %v405
      %v534 = vpack.c.b16 %v414, %v410
      %v535 = vpack.c.b16 %v415, %v411
      %v536 = vpack.c.b16 %v416, %v412
      %v537 = vpack.c.b16 %v417, %v413
      %v538 = vpack.c.b16 %v422, %v418
      %v539 = vpack.c.b16 %v423, %v419
      %v540 = vpack.c.b16 %v424, %v420
      %v541 = vpack.c.b16 %v425, %v421
      %v542 = vpack.c.b16 %v430, %v426
      %v543 = vpack.c.b16 %v431, %v427
      %v544 = vpack.c.b16 %v432, %v428
      %v545 = vpack.c.b16 %v433, %v429
      %v546 = vpack.c.b16 %v438, %v434
      %v547 = vpack.c.b16 %v439, %v435
      %v548 = vpack.c.b16 %v440, %v436
      %v549 = vpack.c.b16 %v441, %v437
      %v550 = vpack.c.b16 %v446, %v442
      %v551 = vpack.c.b16 %v447, %v443
      %v552 = vpack.c.b16 %v448, %v444
      %v553 = vpack.c.b16 %v449, %v445
      %v554 = vpack.c.b16 %v454, %v450
      %v555 = vpack.c.b16 %v455, %v451
      %v556 = vpack.c.b16 %v456, %v452
      %v557 = vpack.c.b16 %v457, %v453
      %v558 = vpack.c.b16 %v462, %v458
      %v559 = vpack.c.b16 %v463, %v459
      %v560 = vpack.c.b16 %v464, %v460
      %v561 = vpack.c.b16 %v465, %v461
      %v562 = vpack.c.b16 %v470, %v466
      %v563 = vpack.c.b16 %v471, %v467
      %v564 = vpack.c.b16 %v472, %v468
      %v565 = vpack.c.b16 %v473, %v469
      %v566 = vpack.c.b16 %v478, %v474
      %v567 = vpack.c.b16 %v479, %v475
      %v568 = vpack.c.b16 %v480, %v476
      %v569 = vpack.c.b16 %v481, %v477
      %v570 = vpack.c.b16 %v486, %v482
      %v571 = vpack.c.b16 %v487, %v483
      %v572 = vpack.c.b16 %v488, %v484
      %v573 = vpack.c.b16 %v489, %v485
      %v574 = vpack.c.b16 %v494, %v490
      %v575 = vpack.c.b16 %v495, %v491
      %v576 = vpack.c.b16 %v496, %v492
      %v577 = vpack.c.b16 %v497, %v493
      %v578 = vpack.c.b16 %v502, %v498
      %v579 = vpack.c.b16 %v503, %v499
      %v580 = vpack.c.b16 %v504, %v500
      %v581 = vpack.c.b16 %v505, %v501
      %v582 = vpack.c.b16 %v510, %v506
      %v583 = vpack.c.b16 %v511, %v507
      %v584 = vpack.c.b16 %v512, %v508
      %v585 = vpack.c.b16 %v513, %v509
      %v586 = vpack.c.b16 %v518, %v514
      %v587 = vpack.c.b16 %v519, %v515
      %v588 = vpack.c.b16 %v520, %v516
      %v589 = vpack.c.b16 %v521, %v517
      %v590 = vpack.c.b16 %v526, %v522
      %v591 = vpack.c.b16 %v527, %v523
      %v592 = vpack.c.b16 %v528, %v524
      %v593 = vpack.c.b16 %v529, %v525
      %658 = vmatpush.bf16.msra.mxu0 %v558
      %659 = vmatpush.bf16.msra.mxu0 %v554
      %660 = vmatpush.bf16.msra.mxu0 %v550
      %661 = vmatpush.bf16.msra.mxu0 %v546
      %662 = vmatpush.bf16.msra.mxu0 %v542
      %663 = vmatpush.bf16.msra.mxu0 %v538
      %664 = vmatpush.bf16.msra.mxu0 %v534
      %665 = vmatpush.bf16.msra.mxu0 %v530
      %666 = vmatmul.bf16.gmra.mxu0 %v334
      %v667 = vpop.f32.mrf.mxu0
      %v668 = vadd.f32 0.0, %v667
      %v669 = vpop.f32.mrf.mxu0
      %v670 = vadd.f32 0.0, %v669
      %671 = vdwg.mxu0
      %672 = vmatpush.bf16.msra.mxu0 %v590
      %673 = vmatpush.bf16.msra.mxu0 %v586
      %674 = vmatpush.bf16.msra.mxu0 %v582
      %675 = vmatpush.bf16.msra.mxu0 %v578
      %676 = vmatpush.bf16.msra.mxu0 %v574
      %677 = vmatpush.bf16.msra.mxu0 %v570
      %678 = vmatpush.bf16.msra.mxu0 %v566
      %679 = vmatpush.bf16.msra.mxu0 %v562
      %680 = vmatmul.bf16.gmra.mxu0 %v335
      %v681 = vpop.f32.mrf.mxu0
      %v682 = vadd.f32 %v668, %v681
      %v683 = vpop.f32.mrf.mxu0
      %v684 = vadd.f32 %v670, %v683
      %685 = vdwg.mxu0
      %686 = vmatpush.bf16.msra.mxu0 %v559
      %687 = vmatpush.bf16.msra.mxu0 %v555
      %688 = vmatpush.bf16.msra.mxu0 %v551
      %689 = vmatpush.bf16.msra.mxu0 %v547
      %690 = vmatpush.bf16.msra.mxu0 %v543
      %691 = vmatpush.bf16.msra.mxu0 %v539
      %692 = vmatpush.bf16.msra.mxu0 %v535
      %693 = vmatpush.bf16.msra.mxu0 %v531
      %694 = vmatmul.bf16.gmra.mxu0 %v334
      %v695 = vpop.f32.mrf.mxu0
      %v696 = vadd.f32 0.0, %v695
      %v697 = vpop.f32.mrf.mxu0
      %v698 = vadd.f32 0.0, %v697
      %699 = vdwg.mxu0
      %700 = vmatpush.bf16.msra.mxu0 %v591
      %701 = vmatpush.bf16.msra.mxu0 %v587
      %702 = vmatpush.bf16.msra.mxu0 %v583
      %703 = vmatpush.bf16.msra.mxu0 %v579
      %704 = vmatpush.bf16.msra.mxu0 %v575
      %705 = vmatpush.bf16.msra.mxu0 %v571
      %706 = vmatpush.bf16.msra.mxu0 %v567
      %707 = vmatpush.bf16.msra.mxu0 %v563
      %708 = vmatmul.bf16.gmra.mxu0 %v335
      %v709 = vpop.f32.mrf.mxu0
      %v710 = vadd.f32 %v696, %v709
      %v711 = vpop.f32.mrf.mxu0
      %v712 = vadd.f32 %v698, %v711
      %713 = vdwg.mxu0
      %714 = vmatpush.bf16.msra.mxu0 %v560
      %715 = vmatpush.bf16.msra.mxu0 %v556
      %716 = vmatpush.bf16.msra.mxu0 %v552
      %717 = vmatpush.bf16.msra.mxu0 %v548
      %718 = vmatpush.bf16.msra.mxu0 %v544
      %719 = vmatpush.bf16.msra.mxu0 %v540
      %720 = vmatpush.bf16.msra.mxu0 %v536
      %721 = vmatpush.bf16.msra.mxu0 %v532
      %722 = vmatmul.bf16.gmra.mxu0 %v334
      %v723 = vpop.f32.mrf.mxu0
      %v724 = vadd.f32 0.0, %v723
      %v725 = vpop.f32.mrf.mxu0
      %v726 = vadd.f32 0.0, %v725
      %727 = vdwg.mxu0
      %728 = vmatpush.bf16.msra.mxu0 %v592
      %729 = vmatpush.bf16.msra.mxu0 %v588
      %730 = vmatpush.bf16.msra.mxu0 %v584
      %731 = vmatpush.bf16.msra.mxu0 %v580
      %732 = vmatpush.bf16.msra.mxu0 %v576
      %733 = vmatpush.bf16.msra.mxu0 %v572
      %734 = vmatpush.bf16.msra.mxu0 %v568
      %735 = vmatpush.bf16.msra.mxu0 %v564
      %736 = vmatmul.bf16.gmra.mxu0 %v335
      %v737 = vpop.f32.mrf.mxu0
      %v738 = vadd.f32 %v724, %v737
      %v739 = vpop.f32.mrf.mxu0
      %v740 = vadd.f32 %v726, %v739
      %741 = vdwg.mxu0
      %742 = vmatpush.bf16.msra.mxu0 %v561
      %743 = vmatpush.bf16.msra.mxu0 %v557
      %744 = vmatpush.bf16.msra.mxu0 %v553
      %745 = vmatpush.bf16.msra.mxu0 %v549
      %746 = vmatpush.bf16.msra.mxu0 %v545
      %747 = vmatpush.bf16.msra.mxu0 %v541
      %748 = vmatpush.bf16.msra.mxu0 %v537
      %749 = vmatpush.bf16.msra.mxu0 %v533
      %750 = vmatmul.bf16.gmra.mxu0 %v334
      %v751 = vpop.f32.mrf.mxu0
      %v752 = vadd.f32 0.0, %v751
      %v753 = vpop.f32.mrf.mxu0
      %v754 = vadd.f32 0.0, %v753
      %755 = vdwg.mxu0
      %756 = vmatpush.bf16.msra.mxu0 %v593
      %757 = vmatpush.bf16.msra.mxu0 %v589
      %758 = vmatpush.bf16.msra.mxu0 %v585
      %759 = vmatpush.bf16.msra.mxu0 %v581
      %760 = vmatpush.bf16.msra.mxu0 %v577
      %761 = vmatpush.bf16.msra.mxu0 %v573
      %762 = vmatpush.bf16.msra.mxu0 %v569
      %763 = vmatpush.bf16.msra.mxu0 %v565
      %764 = vmatmul.bf16.gmra.mxu0 %v335
      %v765 = vpop.f32.mrf.mxu0
      %v766 = vadd.f32 %v752, %v765
      %v767 = vpop.f32.mrf.mxu0
      %v768 = vadd.f32 %v754, %v767
      %769 = vdwg.mxu0
      %v770 = vadd.f32 %v254, %v682
      %v771 = vadd.f32 %v255, %v710
      %v772 = vadd.f32 %v256, %v738
      %v773 = vadd.f32 %v257, %v766
      %v774 = vadd.f32 %v258, %v684
      %v775 = vadd.f32 %v259, %v712
      %v776 = vadd.f32 %v260, %v740
      %v777 = vadd.f32 %v261, %v768
      %778 = vst [vmem:[#allocation2] sm:$0xff] %v770
      %779 = vst [vmem:[#allocation2 + $0x8] sm:$0xff] %v771
      %780 = vst [vmem:[#allocation2 + $0x10] sm:$0xff] %v772
      %781 = vst [vmem:[#allocation2 + $0x18] sm:$0xff] %v773
      %782 = vst [vmem:[#allocation2 + $0x20] sm:$0xff] %v774
      %783 = vst [vmem:[#allocation2 + $0x28] sm:$0xff] %v775
      %784 = vst [vmem:[#allocation2 + $0x30] sm:$0xff] %v776
      %785 = vst [vmem:[#allocation2 + $0x38] sm:$0xff] %v777
      // Predicated region
      $region37: #{_lambda_.10} parent=31 // pred_check
        %p786 = pneg %p232
      $region38: #{_lambda_.10} parent=31 // pred_check_branch
        %788 = sbr.rel (%p786) target = $region40
      $region39: #{_lambda_.10} parent=31 // pred_region
        %v789 = vld [vmem:[#allocation2] sm:$0xff]
        %v790 = vld [vmem:[#allocation2 + $0x8] sm:$0xff]
        %v791 = vld [vmem:[#allocation2 + $0x10] sm:$0xff]
        %v792 = vld [vmem:[#allocation2 + $0x18] sm:$0xff]
        %v793 = vld [vmem:[#allocation2 + $0x20] sm:$0xff]
        %v794 = vld [vmem:[#allocation2 + $0x28] sm:$0xff]
        %v795 = vld [vmem:[#allocation2 + $0x30] sm:$0xff]
        %v796 = vld [vmem:[#allocation2 + $0x38] sm:$0xff]
        %v797 = vpack.c.bf16 %v790, %v789
        %v798 = vpack.c.bf16 %v792, %v791
        %v799 = vpack.c.bf16 %v794, %v793
        %v800 = vpack.c.bf16 %v796, %v795
        %801 = vst [vmem:[%s230] sm:$0xff] %v797
        %802 = vst [vmem:[%s230 + $0x8] sm:$0xff] %v798
        %803 = vst [vmem:[%s230 + $0x10] sm:$0xff] %v799
        %804 = vst [vmem:[%s230 + $0x18] sm:$0xff] %v800
      $region40: #{_lambda_.10} parent=31 // pred_fallthru
        _
      %s805 = smul.u32 2, %s18
      %p806 = scmp.lt.s32.totalorder %s805, 3
      %s807 = scalar_select %p806, %s805, 3
      %s808 = smul.addr %s807, 4
      %s809 = smul.addr %s808, 4
      %s810 = scalar_lea.vmem %s3, %s809
      // Predicated region
      $region41: #{_lambda_.10} parent=31 // pred_check
        %p811 = pneg %p119
      $region42: #{_lambda_.10} parent=31 // pred_check_branch
        %813 = sbr.rel (%p811) target = $region44
      $region43: #{_lambda_.10} parent=31 // pred_region
        %s814 = smul.u32 2, %s18
      $region44: #{_lambda_.10} parent=31 // pred_fallthru
        _
    $region32: #{_lambda_.10} parent=5 // pred_fallthru
      _
    %p815 = scmp.le.s32.totalorder 2, %s9
    // Predicated region
    $region45: #{_lambda_.10} parent=5 // pred_check
      %p816 = pneg %p815
    $region46: #{_lambda_.10} parent=5 // pred_check_branch
      %818 = sbr.rel (%p816) target = $region48
    $region47: #{_lambda_.10} parent=5 // pred_region
      %s819 = ssub.s32 %s9, 2
      // Predicated region
      $region49: #{_lambda_.10} parent=47 // pred_check
        %p820 = pneg %p125
      $region50: #{_lambda_.10} parent=47 // pred_check_branch
        %822 = sbr.rel (%p820) target = $region52
      $region51: #{_lambda_.10} parent=47 // pred_region
        %s823 = smul.u32 2, %s20
        %p824 = scmp.lt.s32.totalorder %s823, 3
        %s825 = scalar_select %p824, %s823, 3
        %s826 = smul.addr %s825, 4
        %s827 = smul.addr %s826, 4
        %s828 = scalar_lea.vmem %s3, %s827
      $region52: #{_lambda_.10} parent=47 // pred_fallthru
        _
    $region48: #{_lambda_.10} parent=5 // pred_fallthru
      _
  $region6: #{_lambda_.10} parent=0 // loop_footer
    %s13 = sadd.s32 1, %s9
  $region7: #{_lambda_.10} parent=0 // loop_footer_branch
    %8 = sbr.rel target = $region3
  $region8: #{_lambda_.10} parent=0 // loop_exit
    _

// kernel: _lambda_.11
$region0: #{_lambda_.11}
  #allocation0 [shape = 'u32[]', space=smem, size = 0x4, offset = 0x4, fixed_abs, tag = 'smem constant byte address 0x4 - core index']
  #allocation1 [shape = 'u32[72,128]{1,0:T(1,128)}', space=vmem, size = 0x9000, scoped, tag = 'internal scratch']
  #allocation2 [shape = 'f32[8,1024]{1,0:T(8,128)}', space=vmem, size = 0x8000, scoped, tag = 'scratch operand']
  %s0 = inlined_call_operand.vmem [shape: bf16[8,512], index: 0, kind: input, shape index: {}]
  %s1 = inlined_call_operand.hbm [shape: bf16[512,1024], index: 1, kind: input, shape index: {}]
  %s2 = inlined_call_operand.vmem [shape: f32[1,1024], index: 2, kind: input, shape index: {}]
  %s3 = inlined_call_operand.vmem [shape: bf16[8,1024], index: 3, kind: output, shape index: {}]
  %s4 = sld [smem:[#allocation0]]
  $region34: #{_lambda_.11} parent=0
    _
  %s6 = ssub.s32 1, %s4
  %s7 = scalar_select 0, %s6, %s4
  $region1: #{_lambda_.11} parent=0
    #allocation3 [shape = 'u8[1048576]{0}', space=vmem, size = 0x100000, scoped, tag = 'input window, operand 1, single buffered']
    #allocation4 [shape = 's32[1]{0}', space=sflag, size = 0x4, scoped, tag = 'scoped memory for _lambda_.11']
    %8 = vsyncpa [#allocation4], 0
    // Predicated region
    $region2: #{_lambda_.11} parent=1 // pred_check
      _
    $region3: #{_lambda_.11} parent=1 // pred_check_branch
      %10 = sbr.rel (0) target = $region5
    $region4: #{_lambda_.11} parent=1 // pred_region
      _
    $region5: #{_lambda_.11} parent=1 // pred_fallthru
      _
    // Predicated region
    $region6: #{_lambda_.11} parent=1 // pred_check
      _
    $region7: #{_lambda_.11} parent=1 // pred_check_branch
      %12 = sbr.rel (0) target = $region9
    $region8: #{_lambda_.11} parent=1 // pred_region
      %14 = vsyncadd [#allocation4], 0
      %s15 = sshll.u32 %s1, 4
      %s16 = int_to_ptr.hbm [resolvable:$true] %s15
      %s17 = sshll.u32 [#allocation3], 4
      %s18 = int_to_ptr.vmem [resolvable:$true] %s17
      %23 = dma.hbm_to_vmem [thread:$0]  %s16, 32768, %s18, [#allocation4], 512, 512, 32
    $region9: #{_lambda_.11} parent=1 // pred_fallthru
      _
    // Predicated region
    $region10: #{_lambda_.11} parent=1 // pred_check
      _
    $region11: #{_lambda_.11} parent=1 // pred_check_branch
      %25 = sbr.rel (0) target = $region13
    $region12: #{_lambda_.11} parent=1 // pred_region
      _
    $region13: #{_lambda_.11} parent=1 // pred_fallthru
      _
    // Predicated region
    $region14: #{_lambda_.11} parent=1 // pred_check
      _
    $region15: #{_lambda_.11} parent=1 // pred_check_branch
      %27 = sbr.rel (0) target = $region17
    $region16: #{_lambda_.11} parent=1 // pred_region
      %29 = dma.done [#allocation4], 32768
    $region17: #{_lambda_.11} parent=1 // pred_fallthru
      _
    %p30 = scmp.eq.s32.totalorder 0, 0
    // Predicated region
    $region18: #{_lambda_.11} parent=1 // pred_check
      %p31 = pneg %p30
    $region19: #{_lambda_.11} parent=1 // pred_check_branch
      %33 = sbr.rel (%p31) target = $region21
    $region20: #{_lambda_.11} parent=1 // pred_region
      %v34 = vld [vmem:[%s2] sm:$0xff]
      %v36 = vperm.slane %v34, 0
      %v37 = vperm.slane %v34, 1
      %v38 = vperm.slane %v34, 2
      %v39 = vperm.slane %v34, 3
      %v40 = vperm.slane %v34, 4
      %v41 = vperm.slane %v34, 5
      %v42 = vperm.slane %v34, 6
      %v43 = vperm.slane %v34, 7
      %52 = vst [vmem:[#allocation2] sm:$0xff] %v36
      %53 = vst [vmem:[#allocation2 + $0x8] sm:$0xff] %v37
      %54 = vst [vmem:[#allocation2 + $0x10] sm:$0xff] %v38
      %55 = vst [vmem:[#allocation2 + $0x18] sm:$0xff] %v39
      %56 = vst [vmem:[#allocation2 + $0x20] sm:$0xff] %v40
      %57 = vst [vmem:[#allocation2 + $0x28] sm:$0xff] %v41
      %58 = vst [vmem:[#allocation2 + $0x30] sm:$0xff] %v42
      %59 = vst [vmem:[#allocation2 + $0x38] sm:$0xff] %v43
    $region21: #{_lambda_.11} parent=1 // pred_fallthru
      _
    %v60 = vld [vmem:[#allocation2] sm:$0xff]
    %v61 = vld [vmem:[#allocation2 + $0x8] sm:$0xff]
    %v62 = vld [vmem:[#allocation2 + $0x10] sm:$0xff]
    %v63 = vld [vmem:[#allocation2 + $0x18] sm:$0xff]
    %v64 = vld [vmem:[#allocation2 + $0x20] sm:$0xff]
    %v65 = vld [vmem:[#allocation2 + $0x28] sm:$0xff]
    %v66 = vld [vmem:[#allocation2 + $0x30] sm:$0xff]
    %v67 = vld [vmem:[#allocation2 + $0x38] sm:$0xff]
    %v68 = vld [vmem:[%s0] sm:$0xff]
    %v69 = vld [vmem:[%s0 + $0x8] sm:$0xff]
    %v70 = vld [vmem:[#allocation3] sm:$0xff]
    %v71 = vld [vmem:[#allocation3 + $0x8] sm:$0xff]
    %v72 = vld [vmem:[#allocation3 + $0x10] sm:$0xff]
    %v73 = vld [vmem:[#allocation3 + $0x18] sm:$0xff]
    %v74 = vld [vmem:[#allocation3 + $0x20] sm:$0xff]
    %v75 = vld [vmem:[#allocation3 + $0x28] sm:$0xff]
    %v76 = vld [vmem:[#allocation3 + $0x30] sm:$0xff]
    %v77 = vld [vmem:[#allocation3 + $0x38] sm:$0xff]
    %v78 = vld [vmem:[#allocation3 + $0x40] sm:$0xff]
    %v79 = vld [vmem:[#allocation3 + $0x48] sm:$0xff]
    %v80 = vld [vmem:[#allocation3 + $0x50] sm:$0xff]
    %v81 = vld [vmem:[#allocation3 + $0x58] sm:$0xff]
    %v82 = vld [vmem:[#allocation3 + $0x60] sm:$0xff]
    %v83 = vld [vmem:[#allocation3 + $0x68] sm:$0xff]
    %v84 = vld [vmem:[#allocation3 + $0x70] sm:$0xff]
    %v85 = vld [vmem:[#allocation3 + $0x78] sm:$0xff]
    %v86 = vld [vmem:[#allocation3 + $0x80] sm:$0xff]
    %v87 = vld [vmem:[#allocation3 + $0x88] sm:$0xff]
    %v88 = vld [vmem:[#allocation3 + $0x90] sm:$0xff]
    %v89 = vld [vmem:[#allocation3 + $0x98] sm:$0xff]
    %v90 = vld [vmem:[#allocation3 + $0xa0] sm:$0xff]
    %v91 = vld [vmem:[#allocation3 + $0xa8] sm:$0xff]
    %v92 = vld [vmem:[#allocation3 + $0xb0] sm:$0xff]
    %v93 = vld [vmem:[#allocation3 + $0xb8] sm:$0xff]
    %v94 = vld [vmem:[#allocation3 + $0xc0] sm:$0xff]
    %v95 = vld [vmem:[#allocation3 + $0xc8] sm:$0xff]
    %v96 = vld [vmem:[#allocation3 + $0xd0] sm:$0xff]
    %v97 = vld [vmem:[#allocation3 + $0xd8] sm:$0xff]
    %v98 = vld [vmem:[#allocation3 + $0xe0] sm:$0xff]
    %v99 = vld [vmem:[#allocation3 + $0xe8] sm:$0xff]
    %v100 = vld [vmem:[#allocation3 + $0xf0] sm:$0xff]
    %v101 = vld [vmem:[#allocation3 + $0xf8] sm:$0xff]
    %v102 = vld [vmem:[#allocation3 + $0x100] sm:$0xff]
    %v103 = vld [vmem:[#allocation3 + $0x108] sm:$0xff]
    %v104 = vld [vmem:[#allocation3 + $0x110] sm:$0xff]
    %v105 = vld [vmem:[#allocation3 + $0x118] sm:$0xff]
    %v106 = vld [vmem:[#allocation3 + $0x120] sm:$0xff]
    %v107 = vld [vmem:[#allocation3 + $0x128] sm:$0xff]
    %v108 = vld [vmem:[#allocation3 + $0x130] sm:$0xff]
    %v109 = vld [vmem:[#allocation3 + $0x138] sm:$0xff]
    %v110 = vld [vmem:[#allocation3 + $0x140] sm:$0xff]
    %v111 = vld [vmem:[#allocation3 + $0x148] sm:$0xff]
    %v112 = vld [vmem:[#allocation3 + $0x150] sm:$0xff]
    %v113 = vld [vmem:[#allocation3 + $0x158] sm:$0xff]
    %v114 = vld [vmem:[#allocation3 + $0x160] sm:$0xff]
    %v115 = vld [vmem:[#allocation3 + $0x168] sm:$0xff]
    %v116 = vld [vmem:[#allocation3 + $0x170] sm:$0xff]
    %v117 = vld [vmem:[#allocation3 + $0x178] sm:$0xff]
    %v118 = vld [vmem:[#allocation3 + $0x180] sm:$0xff]
    %v119 = vld [vmem:[#allocation3 + $0x188] sm:$0xff]
    %v120 = vld [vmem:[#allocation3 + $0x190] sm:$0xff]
    %v121 = vld [vmem:[#allocation3 + $0x198] sm:$0xff]
    %v122 = vld [vmem:[#allocation3 + $0x1a0] sm:$0xff]
    %v123 = vld [vmem:[#allocation3 + $0x1a8] sm:$0xff]
    %v124 = vld [vmem:[#allocation3 + $0x1b0] sm:$0xff]
    %v125 = vld [vmem:[#allocation3 + $0x1b8] sm:$0xff]
    %v126 = vld [vmem:[#allocation3 + $0x1c0] sm:$0xff]
    %v127 = vld [vmem:[#allocation3 + $0x1c8] sm:$0xff]
    %v128 = vld [vmem:[#allocation3 + $0x1d0] sm:$0xff]
    %v129 = vld [vmem:[#allocation3 + $0x1d8] sm:$0xff]
    %v130 = vld [vmem:[#allocation3 + $0x1e0] sm:$0xff]
    %v131 = vld [vmem:[#allocation3 + $0x1e8] sm:$0xff]
    %v132 = vld [vmem:[#allocation3 + $0x1f0] sm:$0xff]
    %v133 = vld [vmem:[#allocation3 + $0x1f8] sm:$0xff]
    %v134 = vld [vmem:[#allocation3 + $0x200] sm:$0xff]
    %v135 = vld [vmem:[#allocation3 + $0x208] sm:$0xff]
    %v136 = vld [vmem:[#allocation3 + $0x210] sm:$0xff]
    %v137 = vld [vmem:[#allocation3 + $0x218] sm:$0xff]
    %v138 = vld [vmem:[#allocation3 + $0x220] sm:$0xff]
    %v139 = vld [vmem:[#allocation3 + $0x228] sm:$0xff]
    %v140 = vld [vmem:[#allocation3 + $0x230] sm:$0xff]
    %v141 = vld [vmem:[#allocation3 + $0x238] sm:$0xff]
    %v142 = vld [vmem:[#allocation3 + $0x240] sm:$0xff]
    %v143 = vld [vmem:[#allocation3 + $0x248] sm:$0xff]
    %v144 = vld [vmem:[#allocation3 + $0x250] sm:$0xff]
    %v145 = vld [vmem:[#allocation3 + $0x258] sm:$0xff]
    %v146 = vld [vmem:[#allocation3 + $0x260] sm:$0xff]
    %v147 = vld [vmem:[#allocation3 + $0x268] sm:$0xff]
    %v148 = vld [vmem:[#allocation3 + $0x270] sm:$0xff]
    %v149 = vld [vmem:[#allocation3 + $0x278] sm:$0xff]
    %v150 = vld [vmem:[#allocation3 + $0x280] sm:$0xff]
    %v151 = vld [vmem:[#allocation3 + $0x288] sm:$0xff]
    %v152 = vld [vmem:[#allocation3 + $0x290] sm:$0xff]
    %v153 = vld [vmem:[#allocation3 + $0x298] sm:$0xff]
    %v154 = vld [vmem:[#allocation3 + $0x2a0] sm:$0xff]
    %v155 = vld [vmem:[#allocation3 + $0x2a8] sm:$0xff]
    %v156 = vld [vmem:[#allocation3 + $0x2b0] sm:$0xff]
    %v157 = vld [vmem:[#allocation3 + $0x2b8] sm:$0xff]
    %v158 = vld [vmem:[#allocation3 + $0x2c0] sm:$0xff]
    %v159 = vld [vmem:[#allocation3 + $0x2c8] sm:$0xff]
    %v160 = vld [vmem:[#allocation3 + $0x2d0] sm:$0xff]
    %v161 = vld [vmem:[#allocation3 + $0x2d8] sm:$0xff]
    %v162 = vld [vmem:[#allocation3 + $0x2e0] sm:$0xff]
    %v163 = vld [vmem:[#allocation3 + $0x2e8] sm:$0xff]
    %v164 = vld [vmem:[#allocation3 + $0x2f0] sm:$0xff]
    %v165 = vld [vmem:[#allocation3 + $0x2f8] sm:$0xff]
    %v166 = vld [vmem:[#allocation3 + $0x300] sm:$0xff]
    %v167 = vld [vmem:[#allocation3 + $0x308] sm:$0xff]
    %v168 = vld [vmem:[#allocation3 + $0x310] sm:$0xff]
    %v169 = vld [vmem:[#allocation3 + $0x318] sm:$0xff]
    %v170 = vld [vmem:[#allocation3 + $0x320] sm:$0xff]
    %v171 = vld [vmem:[#allocation3 + $0x328] sm:$0xff]
    %v172 = vld [vmem:[#allocation3 + $0x330] sm:$0xff]
    %v173 = vld [vmem:[#allocation3 + $0x338] sm:$0xff]
    %v174 = vld [vmem:[#allocation3 + $0x340] sm:$0xff]
    %v175 = vld [vmem:[#allocation3 + $0x348] sm:$0xff]
    %v176 = vld [vmem:[#allocation3 + $0x350] sm:$0xff]
    %v177 = vld [vmem:[#allocation3 + $0x358] sm:$0xff]
    %v178 = vld [vmem:[#allocation3 + $0x360] sm:$0xff]
    %v179 = vld [vmem:[#allocation3 + $0x368] sm:$0xff]
    %v180 = vld [vmem:[#allocation3 + $0x370] sm:$0xff]
    %v181 = vld [vmem:[#allocation3 + $0x378] sm:$0xff]
    %v182 = vld [vmem:[#allocation3 + $0x380] sm:$0xff]
    %v183 = vld [vmem:[#allocation3 + $0x388] sm:$0xff]
    %v184 = vld [vmem:[#allocation3 + $0x390] sm:$0xff]
    %v185 = vld [vmem:[#allocation3 + $0x398] sm:$0xff]
    %v186 = vld [vmem:[#allocation3 + $0x3a0] sm:$0xff]
    %v187 = vld [vmem:[#allocation3 + $0x3a8] sm:$0xff]
    %v188 = vld [vmem:[#allocation3 + $0x3b0] sm:$0xff]
    %v189 = vld [vmem:[#allocation3 + $0x3b8] sm:$0xff]
    %v190 = vld [vmem:[#allocation3 + $0x3c0] sm:$0xff]
    %v191 = vld [vmem:[#allocation3 + $0x3c8] sm:$0xff]
    %v192 = vld [vmem:[#allocation3 + $0x3d0] sm:$0xff]
    %v193 = vld [vmem:[#allocation3 + $0x3d8] sm:$0xff]
    %v194 = vld [vmem:[#allocation3 + $0x3e0] sm:$0xff]
    %v195 = vld [vmem:[#allocation3 + $0x3e8] sm:$0xff]
    %v196 = vld [vmem:[#allocation3 + $0x3f0] sm:$0xff]
    %v197 = vld [vmem:[#allocation3 + $0x3f8] sm:$0xff]
    %v198 = vld [vmem:[#allocation3 + $0x400] sm:$0xff]
    %v199 = vld [vmem:[#allocation3 + $0x408] sm:$0xff]
    %v200 = vld [vmem:[#allocation3 + $0x410] sm:$0xff]
    %v201 = vld [vmem:[#allocation3 + $0x418] sm:$0xff]
    %v202 = vld [vmem:[#allocation3 + $0x420] sm:$0xff]
    %v203 = vld [vmem:[#allocation3 + $0x428] sm:$0xff]
    %v204 = vld [vmem:[#allocation3 + $0x430] sm:$0xff]
    %v205 = vld [vmem:[#allocation3 + $0x438] sm:$0xff]
    %v206 = vld [vmem:[#allocation3 + $0x440] sm:$0xff]
    %v207 = vld [vmem:[#allocation3 + $0x448] sm:$0xff]
    %v208 = vld [vmem:[#allocation3 + $0x450] sm:$0xff]
    %v209 = vld [vmem:[#allocation3 + $0x458] sm:$0xff]
    %v210 = vld [vmem:[#allocation3 + $0x460] sm:$0xff]
    %v211 = vld [vmem:[#allocation3 + $0x468] sm:$0xff]
    %v212 = vld [vmem:[#allocation3 + $0x470] sm:$0xff]
    %v213 = vld [vmem:[#allocation3 + $0x478] sm:$0xff]
    %v214 = vld [vmem:[#allocation3 + $0x480] sm:$0xff]
    %v215 = vld [vmem:[#allocation3 + $0x488] sm:$0xff]
    %v216 = vld [vmem:[#allocation3 + $0x490] sm:$0xff]
    %v217 = vld [vmem:[#allocation3 + $0x498] sm:$0xff]
    %v218 = vld [vmem:[#allocation3 + $0x4a0] sm:$0xff]
    %v219 = vld [vmem:[#allocation3 + $0x4a8] sm:$0xff]
    %v220 = vld [vmem:[#allocation3 + $0x4b0] sm:$0xff]
    %v221 = vld [vmem:[#allocation3 + $0x4b8] sm:$0xff]
    %v222 = vld [vmem:[#allocation3 + $0x4c0] sm:$0xff]
    %v223 = vld [vmem:[#allocation3 + $0x4c8] sm:$0xff]
    %v224 = vld [vmem:[#allocation3 + $0x4d0] sm:$0xff]
    %v225 = vld [vmem:[#allocation3 + $0x4d8] sm:$0xff]
    %v226 = vld [vmem:[#allocation3 + $0x4e0] sm:$0xff]
    %v227 = vld [vmem:[#allocation3 + $0x4e8] sm:$0xff]
    %v228 = vld [vmem:[#allocation3 + $0x4f0] sm:$0xff]
    %v229 = vld [vmem:[#allocation3 + $0x4f8] sm:$0xff]
    %v230 = vld [vmem:[#allocation3 + $0x500] sm:$0xff]
    %v231 = vld [vmem:[#allocation3 + $0x508] sm:$0xff]
    %v232 = vld [vmem:[#allocation3 + $0x510] sm:$0xff]
    %v233 = vld [vmem:[#allocation3 + $0x518] sm:$0xff]
    %v234 = vld [vmem:[#allocation3 + $0x520] sm:$0xff]
    %v235 = vld [vmem:[#allocation3 + $0x528] sm:$0xff]
    %v236 = vld [vmem:[#allocation3 + $0x530] sm:$0xff]
    %v237 = vld [vmem:[#allocation3 + $0x538] sm:$0xff]
    %v238 = vld [vmem:[#allocation3 + $0x540] sm:$0xff]
    %v239 = vld [vmem:[#allocation3 + $0x548] sm:$0xff]
    %v240 = vld [vmem:[#allocation3 + $0x550] sm:$0xff]
    %v241 = vld [vmem:[#allocation3 + $0x558] sm:$0xff]
    %v242 = vld [vmem:[#allocation3 + $0x560] sm:$0xff]
    %v243 = vld [vmem:[#allocation3 + $0x568] sm:$0xff]
    %v244 = vld [vmem:[#allocation3 + $0x570] sm:$0xff]
    %v245 = vld [vmem:[#allocation3 + $0x578] sm:$0xff]
    %v246 = vld [vmem:[#allocation3 + $0x580] sm:$0xff]
    %v247 = vld [vmem:[#allocation3 + $0x588] sm:$0xff]
    %v248 = vld [vmem:[#allocation3 + $0x590] sm:$0xff]
    %v249 = vld [vmem:[#allocation3 + $0x598] sm:$0xff]
    %v250 = vld [vmem:[#allocation3 + $0x5a0] sm:$0xff]
    %v251 = vld [vmem:[#allocation3 + $0x5a8] sm:$0xff]
    %v252 = vld [vmem:[#allocation3 + $0x5b0] sm:$0xff]
    %v253 = vld [vmem:[#allocation3 + $0x5b8] sm:$0xff]
    %v254 = vld [vmem:[#allocation3 + $0x5c0] sm:$0xff]
    %v255 = vld [vmem:[#allocation3 + $0x5c8] sm:$0xff]
    %v256 = vld [vmem:[#allocation3 + $0x5d0] sm:$0xff]
    %v257 = vld [vmem:[#allocation3 + $0x5d8] sm:$0xff]
    %v258 = vld [vmem:[#allocation3 + $0x5e0] sm:$0xff]
    %v259 = vld [vmem:[#allocation3 + $0x5e8] sm:$0xff]
    %v260 = vld [vmem:[#allocation3 + $0x5f0] sm:$0xff]
    %v261 = vld [vmem:[#allocation3 + $0x5f8] sm:$0xff]
    %v262 = vld [vmem:[#allocation3 + $0x600] sm:$0xff]
    %v263 = vld [vmem:[#allocation3 + $0x608] sm:$0xff]
    %v264 = vld [vmem:[#allocation3 + $0x610] sm:$0xff]
    %v265 = vld [vmem:[#allocation3 + $0x618] sm:$0xff]
    %v266 = vld [vmem:[#allocation3 + $0x620] sm:$0xff]
    %v267 = vld [vmem:[#allocation3 + $0x628] sm:$0xff]
    %v268 = vld [vmem:[#allocation3 + $0x630] sm:$0xff]
    %v269 = vld [vmem:[#allocation3 + $0x638] sm:$0xff]
    %v270 = vld [vmem:[#allocation3 + $0x640] sm:$0xff]
    %v271 = vld [vmem:[#allocation3 + $0x648] sm:$0xff]
    %v272 = vld [vmem:[#allocation3 + $0x650] sm:$0xff]
    %v273 = vld [vmem:[#allocation3 + $0x658] sm:$0xff]
    %v274 = vld [vmem:[#allocation3 + $0x660] sm:$0xff]
    %v275 = vld [vmem:[#allocation3 + $0x668] sm:$0xff]
    %v276 = vld [vmem:[#allocation3 + $0x670] sm:$0xff]
    %v277 = vld [vmem:[#allocation3 + $0x678] sm:$0xff]
    %v278 = vld [vmem:[#allocation3 + $0x680] sm:$0xff]
    %v279 = vld [vmem:[#allocation3 + $0x688] sm:$0xff]
    %v280 = vld [vmem:[#allocation3 + $0x690] sm:$0xff]
    %v281 = vld [vmem:[#allocation3 + $0x698] sm:$0xff]
    %v282 = vld [vmem:[#allocation3 + $0x6a0] sm:$0xff]
    %v283 = vld [vmem:[#allocation3 + $0x6a8] sm:$0xff]
    %v284 = vld [vmem:[#allocation3 + $0x6b0] sm:$0xff]
    %v285 = vld [vmem:[#allocation3 + $0x6b8] sm:$0xff]
    %v286 = vld [vmem:[#allocation3 + $0x6c0] sm:$0xff]
    %v287 = vld [vmem:[#allocation3 + $0x6c8] sm:$0xff]
    %v288 = vld [vmem:[#allocation3 + $0x6d0] sm:$0xff]
    %v289 = vld [vmem:[#allocation3 + $0x6d8] sm:$0xff]
    %v290 = vld [vmem:[#allocation3 + $0x6e0] sm:$0xff]
    %v291 = vld [vmem:[#allocation3 + $0x6e8] sm:$0xff]
    %v292 = vld [vmem:[#allocation3 + $0x6f0] sm:$0xff]
    %v293 = vld [vmem:[#allocation3 + $0x6f8] sm:$0xff]
    %v294 = vld [vmem:[#allocation3 + $0x700] sm:$0xff]
    %v295 = vld [vmem:[#allocation3 + $0x708] sm:$0xff]
    %v296 = vld [vmem:[#allocation3 + $0x710] sm:$0xff]
    %v297 = vld [vmem:[#allocation3 + $0x718] sm:$0xff]
    %v298 = vld [vmem:[#allocation3 + $0x720] sm:$0xff]
    %v299 = vld [vmem:[#allocation3 + $0x728] sm:$0xff]
    %v300 = vld [vmem:[#allocation3 + $0x730] sm:$0xff]
    %v301 = vld [vmem:[#allocation3 + $0x738] sm:$0xff]
    %v302 = vld [vmem:[#allocation3 + $0x740] sm:$0xff]
    %v303 = vld [vmem:[#allocation3 + $0x748] sm:$0xff]
    %v304 = vld [vmem:[#allocation3 + $0x750] sm:$0xff]
    %v305 = vld [vmem:[#allocation3 + $0x758] sm:$0xff]
    %v306 = vld [vmem:[#allocation3 + $0x760] sm:$0xff]
    %v307 = vld [vmem:[#allocation3 + $0x768] sm:$0xff]
    %v308 = vld [vmem:[#allocation3 + $0x770] sm:$0xff]
    %v309 = vld [vmem:[#allocation3 + $0x778] sm:$0xff]
    %v310 = vld [vmem:[#allocation3 + $0x780] sm:$0xff]
    %v311 = vld [vmem:[#allocation3 + $0x788] sm:$0xff]
    %v312 = vld [vmem:[#allocation3 + $0x790] sm:$0xff]
    %v313 = vld [vmem:[#allocation3 + $0x798] sm:$0xff]
    %v314 = vld [vmem:[#allocation3 + $0x7a0] sm:$0xff]
    %v315 = vld [vmem:[#allocation3 + $0x7a8] sm:$0xff]
    %v316 = vld [vmem:[#allocation3 + $0x7b0] sm:$0xff]
    %v317 = vld [vmem:[#allocation3 + $0x7b8] sm:$0xff]
    %v318 = vld [vmem:[#allocation3 + $0x7c0] sm:$0xff]
    %v319 = vld [vmem:[#allocation3 + $0x7c8] sm:$0xff]
    %v320 = vld [vmem:[#allocation3 + $0x7d0] sm:$0xff]
    %v321 = vld [vmem:[#allocation3 + $0x7d8] sm:$0xff]
    %v322 = vld [vmem:[#allocation3 + $0x7e0] sm:$0xff]
    %v323 = vld [vmem:[#allocation3 + $0x7e8] sm:$0xff]
    %v324 = vld [vmem:[#allocation3 + $0x7f0] sm:$0xff]
    %v325 = vld [vmem:[#allocation3 + $0x7f8] sm:$0xff]
    %v328 = vunpack.c.l.b16 %v68
    %v329 = vunpack.c.h.b16 %v68
    %v330 = vunpack.c.l.b16 %v69
    %v331 = vunpack.c.h.b16 %v69
    %v332 = vpack.c.b16 %v328, %v328
    %v333 = vpack.c.b16 %v329, %v329
    %v334 = vpack.c.b16 %v330, %v330
    %v335 = vpack.c.b16 %v331, %v331
    %v596 = vunpack.c.l.b16 %v70
    %v597 = vunpack.c.h.b16 %v70
    %v598 = vunpack.c.l.b16 %v71
    %v599 = vunpack.c.h.b16 %v71
    %v600 = vunpack.c.l.b16 %v72
    %v601 = vunpack.c.h.b16 %v72
    %v602 = vunpack.c.l.b16 %v73
    %v603 = vunpack.c.h.b16 %v73
    %v604 = vunpack.c.l.b16 %v74
    %v605 = vunpack.c.h.b16 %v74
    %v606 = vunpack.c.l.b16 %v75
    %v607 = vunpack.c.h.b16 %v75
    %v608 = vunpack.c.l.b16 %v76
    %v609 = vunpack.c.h.b16 %v76
    %v610 = vunpack.c.l.b16 %v77
    %v611 = vunpack.c.h.b16 %v77
    %v612 = vunpack.c.l.b16 %v78
    %v613 = vunpack.c.h.b16 %v78
    %v614 = vunpack.c.l.b16 %v79
    %v615 = vunpack.c.h.b16 %v79
    %v616 = vunpack.c.l.b16 %v80
    %v617 = vunpack.c.h.b16 %v80
    %v618 = vunpack.c.l.b16 %v81
    %v619 = vunpack.c.h.b16 %v81
    %v620 = vunpack.c.l.b16 %v82
    %v621 = vunpack.c.h.b16 %v82
    %v622 = vunpack.c.l.b16 %v83
    %v623 = vunpack.c.h.b16 %v83
    %v624 = vunpack.c.l.b16 %v84
    %v625 = vunpack.c.h.b16 %v84
    %v626 = vunpack.c.l.b16 %v85
    %v627 = vunpack.c.h.b16 %v85
    %v628 = vunpack.c.l.b16 %v86
    %v629 = vunpack.c.h.b16 %v86
    %v630 = vunpack.c.l.b16 %v87
    %v631 = vunpack.c.h.b16 %v87
    %v632 = vunpack.c.l.b16 %v88
    %v633 = vunpack.c.h.b16 %v88
    %v634 = vunpack.c.l.b16 %v89
    %v635 = vunpack.c.h.b16 %v89
    %v636 = vunpack.c.l.b16 %v90
    %v637 = vunpack.c.h.b16 %v90
    %v638 = vunpack.c.l.b16 %v91
    %v639 = vunpack.c.h.b16 %v91
    %v640 = vunpack.c.l.b16 %v92
    %v641 = vunpack.c.h.b16 %v92
    %v642 = vunpack.c.l.b16 %v93
    %v643 = vunpack.c.h.b16 %v93
    %v644 = vunpack.c.l.b16 %v94
    %v645 = vunpack.c.h.b16 %v94
    %v646 = vunpack.c.l.b16 %v95
    %v647 = vunpack.c.h.b16 %v95
    %v648 = vunpack.c.l.b16 %v96
    %v649 = vunpack.c.h.b16 %v96
    %v650 = vunpack.c.l.b16 %v97
    %v651 = vunpack.c.h.b16 %v97
    %v652 = vunpack.c.l.b16 %v98
    %v653 = vunpack.c.h.b16 %v98
    %v654 = vunpack.c.l.b16 %v99
    %v655 = vunpack.c.h.b16 %v99
    %v656 = vunpack.c.l.b16 %v100
    %v657 = vunpack.c.h.b16 %v100
    %v658 = vunpack.c.l.b16 %v101
    %v659 = vunpack.c.h.b16 %v101
    %v660 = vunpack.c.l.b16 %v102
    %v661 = vunpack.c.h.b16 %v102
    %v662 = vunpack.c.l.b16 %v103
    %v663 = vunpack.c.h.b16 %v103
    %v664 = vunpack.c.l.b16 %v104
    %v665 = vunpack.c.h.b16 %v104
    %v666 = vunpack.c.l.b16 %v105
    %v667 = vunpack.c.h.b16 %v105
    %v668 = vunpack.c.l.b16 %v106
    %v669 = vunpack.c.h.b16 %v106
    %v670 = vunpack.c.l.b16 %v107
    %v671 = vunpack.c.h.b16 %v107
    %v672 = vunpack.c.l.b16 %v108
    %v673 = vunpack.c.h.b16 %v108
    %v674 = vunpack.c.l.b16 %v109
    %v675 = vunpack.c.h.b16 %v109
    %v676 = vunpack.c.l.b16 %v110
    %v677 = vunpack.c.h.b16 %v110
    %v678 = vunpack.c.l.b16 %v111
    %v679 = vunpack.c.h.b16 %v111
    %v680 = vunpack.c.l.b16 %v112
    %v681 = vunpack.c.h.b16 %v112
    %v682 = vunpack.c.l.b16 %v113
    %v683 = vunpack.c.h.b16 %v113
    %v684 = vunpack.c.l.b16 %v114
    %v685 = vunpack.c.h.b16 %v114
    %v686 = vunpack.c.l.b16 %v115
    %v687 = vunpack.c.h.b16 %v115
    %v688 = vunpack.c.l.b16 %v116
    %v689 = vunpack.c.h.b16 %v116
    %v690 = vunpack.c.l.b16 %v117
    %v691 = vunpack.c.h.b16 %v117
    %v692 = vunpack.c.l.b16 %v118
    %v693 = vunpack.c.h.b16 %v118
    %v694 = vunpack.c.l.b16 %v119
    %v695 = vunpack.c.h.b16 %v119
    %v696 = vunpack.c.l.b16 %v120
    %v697 = vunpack.c.h.b16 %v120
    %v698 = vunpack.c.l.b16 %v121
    %v699 = vunpack.c.h.b16 %v121
    %v700 = vunpack.c.l.b16 %v122
    %v701 = vunpack.c.h.b16 %v122
    %v702 = vunpack.c.l.b16 %v123
    %v703 = vunpack.c.h.b16 %v123
    %v704 = vunpack.c.l.b16 %v124
    %v705 = vunpack.c.h.b16 %v124
    %v706 = vunpack.c.l.b16 %v125
    %v707 = vunpack.c.h.b16 %v125
    %v708 = vunpack.c.l.b16 %v126
    %v709 = vunpack.c.h.b16 %v126
    %v710 = vunpack.c.l.b16 %v127
    %v711 = vunpack.c.h.b16 %v127
    %v712 = vunpack.c.l.b16 %v128
    %v713 = vunpack.c.h.b16 %v128
    %v714 = vunpack.c.l.b16 %v129
    %v715 = vunpack.c.h.b16 %v129
    %v716 = vunpack.c.l.b16 %v130
    %v717 = vunpack.c.h.b16 %v130
    %v718 = vunpack.c.l.b16 %v131
    %v719 = vunpack.c.h.b16 %v131
    %v720 = vunpack.c.l.b16 %v132
    %v721 = vunpack.c.h.b16 %v132
    %v722 = vunpack.c.l.b16 %v133
    %v723 = vunpack.c.h.b16 %v133
    %v724 = vunpack.c.l.b16 %v134
    %v725 = vunpack.c.h.b16 %v134
    %v726 = vunpack.c.l.b16 %v135
    %v727 = vunpack.c.h.b16 %v135
    %v728 = vunpack.c.l.b16 %v136
    %v729 = vunpack.c.h.b16 %v136
    %v730 = vunpack.c.l.b16 %v137
    %v731 = vunpack.c.h.b16 %v137
    %v732 = vunpack.c.l.b16 %v138
    %v733 = vunpack.c.h.b16 %v138
    %v734 = vunpack.c.l.b16 %v139
    %v735 = vunpack.c.h.b16 %v139
    %v736 = vunpack.c.l.b16 %v140
    %v737 = vunpack.c.h.b16 %v140
    %v738 = vunpack.c.l.b16 %v141
    %v739 = vunpack.c.h.b16 %v141
    %v740 = vunpack.c.l.b16 %v142
    %v741 = vunpack.c.h.b16 %v142
    %v742 = vunpack.c.l.b16 %v143
    %v743 = vunpack.c.h.b16 %v143
    %v744 = vunpack.c.l.b16 %v144
    %v745 = vunpack.c.h.b16 %v144
    %v746 = vunpack.c.l.b16 %v145
    %v747 = vunpack.c.h.b16 %v145
    %v748 = vunpack.c.l.b16 %v146
    %v749 = vunpack.c.h.b16 %v146
    %v750 = vunpack.c.l.b16 %v147
    %v751 = vunpack.c.h.b16 %v147
    %v752 = vunpack.c.l.b16 %v148
    %v753 = vunpack.c.h.b16 %v148
    %v754 = vunpack.c.l.b16 %v149
    %v755 = vunpack.c.h.b16 %v149
    %v756 = vunpack.c.l.b16 %v150
    %v757 = vunpack.c.h.b16 %v150
    %v758 = vunpack.c.l.b16 %v151
    %v759 = vunpack.c.h.b16 %v151
    %v760 = vunpack.c.l.b16 %v152
    %v761 = vunpack.c.h.b16 %v152
    %v762 = vunpack.c.l.b16 %v153
    %v763 = vunpack.c.h.b16 %v153
    %v764 = vunpack.c.l.b16 %v154
    %v765 = vunpack.c.h.b16 %v154
    %v766 = vunpack.c.l.b16 %v155
    %v767 = vunpack.c.h.b16 %v155
    %v768 = vunpack.c.l.b16 %v156
    %v769 = vunpack.c.h.b16 %v156
    %v770 = vunpack.c.l.b16 %v157
    %v771 = vunpack.c.h.b16 %v157
    %v772 = vunpack.c.l.b16 %v158
    %v773 = vunpack.c.h.b16 %v158
    %v774 = vunpack.c.l.b16 %v159
    %v775 = vunpack.c.h.b16 %v159
    %v776 = vunpack.c.l.b16 %v160
    %v777 = vunpack.c.h.b16 %v160
    %v778 = vunpack.c.l.b16 %v161
    %v779 = vunpack.c.h.b16 %v161
    %v780 = vunpack.c.l.b16 %v162
    %v781 = vunpack.c.h.b16 %v162
    %v782 = vunpack.c.l.b16 %v163
    %v783 = vunpack.c.h.b16 %v163
    %v784 = vunpack.c.l.b16 %v164
    %v785 = vunpack.c.h.b16 %v164
    %v786 = vunpack.c.l.b16 %v165
    %v787 = vunpack.c.h.b16 %v165
    %v788 = vunpack.c.l.b16 %v166
    %v789 = vunpack.c.h.b16 %v166
    %v790 = vunpack.c.l.b16 %v167
    %v791 = vunpack.c.h.b16 %v167
    %v792 = vunpack.c.l.b16 %v168
    %v793 = vunpack.c.h.b16 %v168
    %v794 = vunpack.c.l.b16 %v169
    %v795 = vunpack.c.h.b16 %v169
    %v796 = vunpack.c.l.b16 %v170
    %v797 = vunpack.c.h.b16 %v170
    %v798 = vunpack.c.l.b16 %v171
    %v799 = vunpack.c.h.b16 %v171
    %v800 = vunpack.c.l.b16 %v172
    %v801 = vunpack.c.h.b16 %v172
    %v802 = vunpack.c.l.b16 %v173
    %v803 = vunpack.c.h.b16 %v173
    %v804 = vunpack.c.l.b16 %v174
    %v805 = vunpack.c.h.b16 %v174
    %v806 = vunpack.c.l.b16 %v175
    %v807 = vunpack.c.h.b16 %v175
    %v808 = vunpack.c.l.b16 %v176
    %v809 = vunpack.c.h.b16 %v176
    %v810 = vunpack.c.l.b16 %v177
    %v811 = vunpack.c.h.b16 %v177
    %v812 = vunpack.c.l.b16 %v178
    %v813 = vunpack.c.h.b16 %v178
    %v814 = vunpack.c.l.b16 %v179
    %v815 = vunpack.c.h.b16 %v179
    %v816 = vunpack.c.l.b16 %v180
    %v817 = vunpack.c.h.b16 %v180
    %v818 = vunpack.c.l.b16 %v181
    %v819 = vunpack.c.h.b16 %v181
    %v820 = vunpack.c.l.b16 %v182
    %v821 = vunpack.c.h.b16 %v182
    %v822 = vunpack.c.l.b16 %v183
    %v823 = vunpack.c.h.b16 %v183
    %v824 = vunpack.c.l.b16 %v184
    %v825 = vunpack.c.h.b16 %v184
    %v826 = vunpack.c.l.b16 %v185
    %v827 = vunpack.c.h.b16 %v185
    %v828 = vunpack.c.l.b16 %v186
    %v829 = vunpack.c.h.b16 %v186
    %v830 = vunpack.c.l.b16 %v187
    %v831 = vunpack.c.h.b16 %v187
    %v832 = vunpack.c.l.b16 %v188
    %v833 = vunpack.c.h.b16 %v188
    %v834 = vunpack.c.l.b16 %v189
    %v835 = vunpack.c.h.b16 %v189
    %v836 = vunpack.c.l.b16 %v190
    %v837 = vunpack.c.h.b16 %v190
    %v838 = vunpack.c.l.b16 %v191
    %v839 = vunpack.c.h.b16 %v191
    %v840 = vunpack.c.l.b16 %v192
    %v841 = vunpack.c.h.b16 %v192
    %v842 = vunpack.c.l.b16 %v193
    %v843 = vunpack.c.h.b16 %v193
    %v844 = vunpack.c.l.b16 %v194
    %v845 = vunpack.c.h.b16 %v194
    %v846 = vunpack.c.l.b16 %v195
    %v847 = vunpack.c.h.b16 %v195
    %v848 = vunpack.c.l.b16 %v196
    %v849 = vunpack.c.h.b16 %v196
    %v850 = vunpack.c.l.b16 %v197
    %v851 = vunpack.c.h.b16 %v197
    %v852 = vunpack.c.l.b16 %v198
    %v853 = vunpack.c.h.b16 %v198
    %v854 = vunpack.c.l.b16 %v199
    %v855 = vunpack.c.h.b16 %v199
    %v856 = vunpack.c.l.b16 %v200
    %v857 = vunpack.c.h.b16 %v200
    %v858 = vunpack.c.l.b16 %v201
    %v859 = vunpack.c.h.b16 %v201
    %v860 = vunpack.c.l.b16 %v202
    %v861 = vunpack.c.h.b16 %v202
    %v862 = vunpack.c.l.b16 %v203
    %v863 = vunpack.c.h.b16 %v203
    %v864 = vunpack.c.l.b16 %v204
    %v865 = vunpack.c.h.b16 %v204
    %v866 = vunpack.c.l.b16 %v205
    %v867 = vunpack.c.h.b16 %v205
    %v868 = vunpack.c.l.b16 %v206
    %v869 = vunpack.c.h.b16 %v206
    %v870 = vunpack.c.l.b16 %v207
    %v871 = vunpack.c.h.b16 %v207
    %v872 = vunpack.c.l.b16 %v208
    %v873 = vunpack.c.h.b16 %v208
    %v874 = vunpack.c.l.b16 %v209
    %v875 = vunpack.c.h.b16 %v209
    %v876 = vunpack.c.l.b16 %v210
    %v877 = vunpack.c.h.b16 %v210
    %v878 = vunpack.c.l.b16 %v211
    %v879 = vunpack.c.h.b16 %v211
    %v880 = vunpack.c.l.b16 %v212
    %v881 = vunpack.c.h.b16 %v212
    %v882 = vunpack.c.l.b16 %v213
    %v883 = vunpack.c.h.b16 %v213
    %v884 = vunpack.c.l.b16 %v214
    %v885 = vunpack.c.h.b16 %v214
    %v886 = vunpack.c.l.b16 %v215
    %v887 = vunpack.c.h.b16 %v215
    %v888 = vunpack.c.l.b16 %v216
    %v889 = vunpack.c.h.b16 %v216
    %v890 = vunpack.c.l.b16 %v217
    %v891 = vunpack.c.h.b16 %v217
    %v892 = vunpack.c.l.b16 %v218
    %v893 = vunpack.c.h.b16 %v218
    %v894 = vunpack.c.l.b16 %v219
    %v895 = vunpack.c.h.b16 %v219
    %v896 = vunpack.c.l.b16 %v220
    %v897 = vunpack.c.h.b16 %v220
    %v898 = vunpack.c.l.b16 %v221
    %v899 = vunpack.c.h.b16 %v221
    %v900 = vunpack.c.l.b16 %v222
    %v901 = vunpack.c.h.b16 %v222
    %v902 = vunpack.c.l.b16 %v223
    %v903 = vunpack.c.h.b16 %v223
    %v904 = vunpack.c.l.b16 %v224
    %v905 = vunpack.c.h.b16 %v224
    %v906 = vunpack.c.l.b16 %v225
    %v907 = vunpack.c.h.b16 %v225
    %v908 = vunpack.c.l.b16 %v226
    %v909 = vunpack.c.h.b16 %v226
    %v910 = vunpack.c.l.b16 %v227
    %v911 = vunpack.c.h.b16 %v227
    %v912 = vunpack.c.l.b16 %v228
    %v913 = vunpack.c.h.b16 %v228
    %v914 = vunpack.c.l.b16 %v229
    %v915 = vunpack.c.h.b16 %v229
    %v916 = vunpack.c.l.b16 %v230
    %v917 = vunpack.c.h.b16 %v230
    %v918 = vunpack.c.l.b16 %v231
    %v919 = vunpack.c.h.b16 %v231
    %v920 = vunpack.c.l.b16 %v232
    %v921 = vunpack.c.h.b16 %v232
    %v922 = vunpack.c.l.b16 %v233
    %v923 = vunpack.c.h.b16 %v233
    %v924 = vunpack.c.l.b16 %v234
    %v925 = vunpack.c.h.b16 %v234
    %v926 = vunpack.c.l.b16 %v235
    %v927 = vunpack.c.h.b16 %v235
    %v928 = vunpack.c.l.b16 %v236
    %v929 = vunpack.c.h.b16 %v236
    %v930 = vunpack.c.l.b16 %v237
    %v931 = vunpack.c.h.b16 %v237
    %v932 = vunpack.c.l.b16 %v238
    %v933 = vunpack.c.h.b16 %v238
    %v934 = vunpack.c.l.b16 %v239
    %v935 = vunpack.c.h.b16 %v239
    %v936 = vunpack.c.l.b16 %v240
    %v937 = vunpack.c.h.b16 %v240
    %v938 = vunpack.c.l.b16 %v241
    %v939 = vunpack.c.h.b16 %v241
    %v940 = vunpack.c.l.b16 %v242
    %v941 = vunpack.c.h.b16 %v242
    %v942 = vunpack.c.l.b16 %v243
    %v943 = vunpack.c.h.b16 %v243
    %v944 = vunpack.c.l.b16 %v244
    %v945 = vunpack.c.h.b16 %v244
    %v946 = vunpack.c.l.b16 %v245
    %v947 = vunpack.c.h.b16 %v245
    %v948 = vunpack.c.l.b16 %v246
    %v949 = vunpack.c.h.b16 %v246
    %v950 = vunpack.c.l.b16 %v247
    %v951 = vunpack.c.h.b16 %v247
    %v952 = vunpack.c.l.b16 %v248
    %v953 = vunpack.c.h.b16 %v248
    %v954 = vunpack.c.l.b16 %v249
    %v955 = vunpack.c.h.b16 %v249
    %v956 = vunpack.c.l.b16 %v250
    %v957 = vunpack.c.h.b16 %v250
    %v958 = vunpack.c.l.b16 %v251
    %v959 = vunpack.c.h.b16 %v251
    %v960 = vunpack.c.l.b16 %v252
    %v961 = vunpack.c.h.b16 %v252
    %v962 = vunpack.c.l.b16 %v253
    %v963 = vunpack.c.h.b16 %v253
    %v964 = vunpack.c.l.b16 %v254
    %v965 = vunpack.c.h.b16 %v254
    %v966 = vunpack.c.l.b16 %v255
    %v967 = vunpack.c.h.b16 %v255
    %v968 = vunpack.c.l.b16 %v256
    %v969 = vunpack.c.h.b16 %v256
    %v970 = vunpack.c.l.b16 %v257
    %v971 = vunpack.c.h.b16 %v257
    %v972 = vunpack.c.l.b16 %v258
    %v973 = vunpack.c.h.b16 %v258
    %v974 = vunpack.c.l.b16 %v259
    %v975 = vunpack.c.h.b16 %v259
    %v976 = vunpack.c.l.b16 %v260
    %v977 = vunpack.c.h.b16 %v260
    %v978 = vunpack.c.l.b16 %v261
    %v979 = vunpack.c.h.b16 %v261
    %v980 = vunpack.c.l.b16 %v262
    %v981 = vunpack.c.h.b16 %v262
    %v982 = vunpack.c.l.b16 %v263
    %v983 = vunpack.c.h.b16 %v263
    %v984 = vunpack.c.l.b16 %v264
    %v985 = vunpack.c.h.b16 %v264
    %v986 = vunpack.c.l.b16 %v265
    %v987 = vunpack.c.h.b16 %v265
    %v988 = vunpack.c.l.b16 %v266
    %v989 = vunpack.c.h.b16 %v266
    %v990 = vunpack.c.l.b16 %v267
    %v991 = vunpack.c.h.b16 %v267
    %v992 = vunpack.c.l.b16 %v268
    %v993 = vunpack.c.h.b16 %v268
    %v994 = vunpack.c.l.b16 %v269
    %v995 = vunpack.c.h.b16 %v269
    %v996 = vunpack.c.l.b16 %v270
    %v997 = vunpack.c.h.b16 %v270
    %v998 = vunpack.c.l.b16 %v271
    %v999 = vunpack.c.h.b16 %v271
    %v1000 = vunpack.c.l.b16 %v272
    %v1001 = vunpack.c.h.b16 %v272
    %v1002 = vunpack.c.l.b16 %v273
    %v1003 = vunpack.c.h.b16 %v273
    %v1004 = vunpack.c.l.b16 %v274
    %v1005 = vunpack.c.h.b16 %v274
    %v1006 = vunpack.c.l.b16 %v275
    %v1007 = vunpack.c.h.b16 %v275
    %v1008 = vunpack.c.l.b16 %v276
    %v1009 = vunpack.c.h.b16 %v276
    %v1010 = vunpack.c.l.b16 %v277
    %v1011 = vunpack.c.h.b16 %v277
    %v1012 = vunpack.c.l.b16 %v278
    %v1013 = vunpack.c.h.b16 %v278
    %v1014 = vunpack.c.l.b16 %v279
    %v1015 = vunpack.c.h.b16 %v279
    %v1016 = vunpack.c.l.b16 %v280
    %v1017 = vunpack.c.h.b16 %v280
    %v1018 = vunpack.c.l.b16 %v281
    %v1019 = vunpack.c.h.b16 %v281
    %v1020 = vunpack.c.l.b16 %v282
    %v1021 = vunpack.c.h.b16 %v282
    %v1022 = vunpack.c.l.b16 %v283
    %v1023 = vunpack.c.h.b16 %v283
    %v1024 = vunpack.c.l.b16 %v284
    %v1025 = vunpack.c.h.b16 %v284
    %v1026 = vunpack.c.l.b16 %v285
    %v1027 = vunpack.c.h.b16 %v285
    %v1028 = vunpack.c.l.b16 %v286
    %v1029 = vunpack.c.h.b16 %v286
    %v1030 = vunpack.c.l.b16 %v287
    %v1031 = vunpack.c.h.b16 %v287
    %v1032 = vunpack.c.l.b16 %v288
    %v1033 = vunpack.c.h.b16 %v288
    %v1034 = vunpack.c.l.b16 %v289
    %v1035 = vunpack.c.h.b16 %v289
    %v1036 = vunpack.c.l.b16 %v290
    %v1037 = vunpack.c.h.b16 %v290
    %v1038 = vunpack.c.l.b16 %v291
    %v1039 = vunpack.c.h.b16 %v291
    %v1040 = vunpack.c.l.b16 %v292
    %v1041 = vunpack.c.h.b16 %v292
    %v1042 = vunpack.c.l.b16 %v293
    %v1043 = vunpack.c.h.b16 %v293
    %v1044 = vunpack.c.l.b16 %v294
    %v1045 = vunpack.c.h.b16 %v294
    %v1046 = vunpack.c.l.b16 %v295
    %v1047 = vunpack.c.h.b16 %v295
    %v1048 = vunpack.c.l.b16 %v296
    %v1049 = vunpack.c.h.b16 %v296
    %v1050 = vunpack.c.l.b16 %v297
    %v1051 = vunpack.c.h.b16 %v297
    %v1052 = vunpack.c.l.b16 %v298
    %v1053 = vunpack.c.h.b16 %v298
    %v1054 = vunpack.c.l.b16 %v299
    %v1055 = vunpack.c.h.b16 %v299
    %v1056 = vunpack.c.l.b16 %v300
    %v1057 = vunpack.c.h.b16 %v300
    %v1058 = vunpack.c.l.b16 %v301
    %v1059 = vunpack.c.h.b16 %v301
    %v1060 = vunpack.c.l.b16 %v302
    %v1061 = vunpack.c.h.b16 %v302
    %v1062 = vunpack.c.l.b16 %v303
    %v1063 = vunpack.c.h.b16 %v303
    %v1064 = vunpack.c.l.b16 %v304
    %v1065 = vunpack.c.h.b16 %v304
    %v1066 = vunpack.c.l.b16 %v305
    %v1067 = vunpack.c.h.b16 %v305
    %v1068 = vunpack.c.l.b16 %v306
    %v1069 = vunpack.c.h.b16 %v306
    %v1070 = vunpack.c.l.b16 %v307
    %v1071 = vunpack.c.h.b16 %v307
    %v1072 = vunpack.c.l.b16 %v308
    %v1073 = vunpack.c.h.b16 %v308
    %v1074 = vunpack.c.l.b16 %v309
    %v1075 = vunpack.c.h.b16 %v309
    %v1076 = vunpack.c.l.b16 %v310
    %v1077 = vunpack.c.h.b16 %v310
    %v1078 = vunpack.c.l.b16 %v311
    %v1079 = vunpack.c.h.b16 %v311
    %v1080 = vunpack.c.l.b16 %v312
    %v1081 = vunpack.c.h.b16 %v312
    %v1082 = vunpack.c.l.b16 %v313
    %v1083 = vunpack.c.h.b16 %v313
    %v1084 = vunpack.c.l.b16 %v314
    %v1085 = vunpack.c.h.b16 %v314
    %v1086 = vunpack.c.l.b16 %v315
    %v1087 = vunpack.c.h.b16 %v315
    %v1088 = vunpack.c.l.b16 %v316
    %v1089 = vunpack.c.h.b16 %v316
    %v1090 = vunpack.c.l.b16 %v317
    %v1091 = vunpack.c.h.b16 %v317
    %v1092 = vunpack.c.l.b16 %v318
    %v1093 = vunpack.c.h.b16 %v318
    %v1094 = vunpack.c.l.b16 %v319
    %v1095 = vunpack.c.h.b16 %v319
    %v1096 = vunpack.c.l.b16 %v320
    %v1097 = vunpack.c.h.b16 %v320
    %v1098 = vunpack.c.l.b16 %v321
    %v1099 = vunpack.c.h.b16 %v321
    %v1100 = vunpack.c.l.b16 %v322
    %v1101 = vunpack.c.h.b16 %v322
    %v1102 = vunpack.c.l.b16 %v323
    %v1103 = vunpack.c.h.b16 %v323
    %v1104 = vunpack.c.l.b16 %v324
    %v1105 = vunpack.c.h.b16 %v324
    %v1106 = vunpack.c.l.b16 %v325
    %v1107 = vunpack.c.h.b16 %v325
    %v1108 = vpack.c.b16 %v604, %v596
    %v1109 = vpack.c.b16 %v605, %v597
    %v1110 = vpack.c.b16 %v606, %v598
    %v1111 = vpack.c.b16 %v607, %v599
    %v1112 = vpack.c.b16 %v608, %v600
    %v1113 = vpack.c.b16 %v609, %v601
    %v1114 = vpack.c.b16 %v610, %v602
    %v1115 = vpack.c.b16 %v611, %v603
    %v1116 = vpack.c.b16 %v620, %v612
    %v1117 = vpack.c.b16 %v621, %v613
    %v1118 = vpack.c.b16 %v622, %v614
    %v1119 = vpack.c.b16 %v623, %v615
    %v1120 = vpack.c.b16 %v624, %v616
    %v1121 = vpack.c.b16 %v625, %v617
    %v1122 = vpack.c.b16 %v626, %v618
    %v1123 = vpack.c.b16 %v627, %v619
    %v1124 = vpack.c.b16 %v636, %v628
    %v1125 = vpack.c.b16 %v637, %v629
    %v1126 = vpack.c.b16 %v638, %v630
    %v1127 = vpack.c.b16 %v639, %v631
    %v1128 = vpack.c.b16 %v640, %v632
    %v1129 = vpack.c.b16 %v641, %v633
    %v1130 = vpack.c.b16 %v642, %v634
    %v1131 = vpack.c.b16 %v643, %v635
    %v1132 = vpack.c.b16 %v652, %v644
    %v1133 = vpack.c.b16 %v653, %v645
    %v1134 = vpack.c.b16 %v654, %v646
    %v1135 = vpack.c.b16 %v655, %v647
    %v1136 = vpack.c.b16 %v656, %v648
    %v1137 = vpack.c.b16 %v657, %v649
    %v1138 = vpack.c.b16 %v658, %v650
    %v1139 = vpack.c.b16 %v659, %v651
    %v1140 = vpack.c.b16 %v668, %v660
    %v1141 = vpack.c.b16 %v669, %v661
    %v1142 = vpack.c.b16 %v670, %v662
    %v1143 = vpack.c.b16 %v671, %v663
    %v1144 = vpack.c.b16 %v672, %v664
    %v1145 = vpack.c.b16 %v673, %v665
    %v1146 = vpack.c.b16 %v674, %v666
    %v1147 = vpack.c.b16 %v675, %v667
    %v1148 = vpack.c.b16 %v684, %v676
    %v1149 = vpack.c.b16 %v685, %v677
    %v1150 = vpack.c.b16 %v686, %v678
    %v1151 = vpack.c.b16 %v687, %v679
    %v1152 = vpack.c.b16 %v688, %v680
    %v1153 = vpack.c.b16 %v689, %v681
    %v1154 = vpack.c.b16 %v690, %v682
    %v1155 = vpack.c.b16 %v691, %v683
    %v1156 = vpack.c.b16 %v700, %v692
    %v1157 = vpack.c.b16 %v701, %v693
    %v1158 = vpack.c.b16 %v702, %v694
    %v1159 = vpack.c.b16 %v703, %v695
    %v1160 = vpack.c.b16 %v704, %v696
    %v1161 = vpack.c.b16 %v705, %v697
    %v1162 = vpack.c.b16 %v706, %v698
    %v1163 = vpack.c.b16 %v707, %v699
    %v1164 = vpack.c.b16 %v716, %v708
    %v1165 = vpack.c.b16 %v717, %v709
    %v1166 = vpack.c.b16 %v718, %v710
    %v1167 = vpack.c.b16 %v719, %v711
    %v1168 = vpack.c.b16 %v720, %v712
    %v1169 = vpack.c.b16 %v721, %v713
    %v1170 = vpack.c.b16 %v722, %v714
    %v1171 = vpack.c.b16 %v723, %v715
    %v1172 = vpack.c.b16 %v732, %v724
    %v1173 = vpack.c.b16 %v733, %v725
    %v1174 = vpack.c.b16 %v734, %v726
    %v1175 = vpack.c.b16 %v735, %v727
    %v1176 = vpack.c.b16 %v736, %v728
    %v1177 = vpack.c.b16 %v737, %v729
    %v1178 = vpack.c.b16 %v738, %v730
    %v1179 = vpack.c.b16 %v739, %v731
    %v1180 = vpack.c.b16 %v748, %v740
    %v1181 = vpack.c.b16 %v749, %v741
    %v1182 = vpack.c.b16 %v750, %v742
    %v1183 = vpack.c.b16 %v751, %v743
    %v1184 = vpack.c.b16 %v752, %v744
    %v1185 = vpack.c.b16 %v753, %v745
    %v1186 = vpack.c.b16 %v754, %v746
    %v1187 = vpack.c.b16 %v755, %v747
    %v1188 = vpack.c.b16 %v764, %v756
    %v1189 = vpack.c.b16 %v765, %v757
    %v1190 = vpack.c.b16 %v766, %v758
    %v1191 = vpack.c.b16 %v767, %v759
    %v1192 = vpack.c.b16 %v768, %v760
    %v1193 = vpack.c.b16 %v769, %v761
    %v1194 = vpack.c.b16 %v770, %v762
    %v1195 = vpack.c.b16 %v771, %v763
    %v1196 = vpack.c.b16 %v780, %v772
    %v1197 = vpack.c.b16 %v781, %v773
    %v1198 = vpack.c.b16 %v782, %v774
    %v1199 = vpack.c.b16 %v783, %v775
    %v1200 = vpack.c.b16 %v784, %v776
    %v1201 = vpack.c.b16 %v785, %v777
    %v1202 = vpack.c.b16 %v786, %v778
    %v1203 = vpack.c.b16 %v787, %v779
    %v1204 = vpack.c.b16 %v796, %v788
    %v1205 = vpack.c.b16 %v797, %v789
    %v1206 = vpack.c.b16 %v798, %v790
    %v1207 = vpack.c.b16 %v799, %v791
    %v1208 = vpack.c.b16 %v800, %v792
    %v1209 = vpack.c.b16 %v801, %v793
    %v1210 = vpack.c.b16 %v802, %v794
    %v1211 = vpack.c.b16 %v803, %v795
    %v1212 = vpack.c.b16 %v812, %v804
    %v1213 = vpack.c.b16 %v813, %v805
    %v1214 = vpack.c.b16 %v814, %v806
    %v1215 = vpack.c.b16 %v815, %v807
    %v1216 = vpack.c.b16 %v816, %v808
    %v1217 = vpack.c.b16 %v817, %v809
    %v1218 = vpack.c.b16 %v818, %v810
    %v1219 = vpack.c.b16 %v819, %v811
    %v1220 = vpack.c.b16 %v828, %v820
    %v1221 = vpack.c.b16 %v829, %v821
    %v1222 = vpack.c.b16 %v830, %v822
    %v1223 = vpack.c.b16 %v831, %v823
    %v1224 = vpack.c.b16 %v832, %v824
    %v1225 = vpack.c.b16 %v833, %v825
    %v1226 = vpack.c.b16 %v834, %v826
    %v1227 = vpack.c.b16 %v835, %v827
    %v1228 = vpack.c.b16 %v844, %v836
    %v1229 = vpack.c.b16 %v845, %v837
    %v1230 = vpack.c.b16 %v846, %v838
    %v1231 = vpack.c.b16 %v847, %v839
    %v1232 = vpack.c.b16 %v848, %v840
    %v1233 = vpack.c.b16 %v849, %v841
    %v1234 = vpack.c.b16 %v850, %v842
    %v1235 = vpack.c.b16 %v851, %v843
    %v1236 = vpack.c.b16 %v860, %v852
    %v1237 = vpack.c.b16 %v861, %v853
    %v1238 = vpack.c.b16 %v862, %v854
    %v1239 = vpack.c.b16 %v863, %v855
    %v1240 = vpack.c.b16 %v864, %v856
    %v1241 = vpack.c.b16 %v865, %v857
    %v1242 = vpack.c.b16 %v866, %v858
    %v1243 = vpack.c.b16 %v867, %v859
    %v1244 = vpack.c.b16 %v876, %v868
    %v1245 = vpack.c.b16 %v877, %v869
    %v1246 = vpack.c.b16 %v878, %v870
    %v1247 = vpack.c.b16 %v879, %v871
    %v1248 = vpack.c.b16 %v880, %v872
    %v1249 = vpack.c.b16 %v881, %v873
    %v1250 = vpack.c.b16 %v882, %v874
    %v1251 = vpack.c.b16 %v883, %v875
    %v1252 = vpack.c.b16 %v892, %v884
    %v1253 = vpack.c.b16 %v893, %v885
    %v1254 = vpack.c.b16 %v894, %v886
    %v1255 = vpack.c.b16 %v895, %v887
    %v1256 = vpack.c.b16 %v896, %v888
    %v1257 = vpack.c.b16 %v897, %v889
    %v1258 = vpack.c.b16 %v898, %v890
    %v1259 = vpack.c.b16 %v899, %v891
    %v1260 = vpack.c.b16 %v908, %v900
    %v1261 = vpack.c.b16 %v909, %v901
    %v1262 = vpack.c.b16 %v910, %v902
    %v1263 = vpack.c.b16 %v911, %v903
    %v1264 = vpack.c.b16 %v912, %v904
    %v1265 = vpack.c.b16 %v913, %v905
    %v1266 = vpack.c.b16 %v914, %v906
    %v1267 = vpack.c.b16 %v915, %v907
    %v1268 = vpack.c.b16 %v924, %v916
    %v1269 = vpack.c.b16 %v925, %v917
    %v1270 = vpack.c.b16 %v926, %v918
    %v1271 = vpack.c.b16 %v927, %v919
    %v1272 = vpack.c.b16 %v928, %v920
    %v1273 = vpack.c.b16 %v929, %v921
    %v1274 = vpack.c.b16 %v930, %v922
    %v1275 = vpack.c.b16 %v931, %v923
    %v1276 = vpack.c.b16 %v940, %v932
    %v1277 = vpack.c.b16 %v941, %v933
    %v1278 = vpack.c.b16 %v942, %v934
    %v1279 = vpack.c.b16 %v943, %v935
    %v1280 = vpack.c.b16 %v944, %v936
    %v1281 = vpack.c.b16 %v945, %v937
    %v1282 = vpack.c.b16 %v946, %v938
    %v1283 = vpack.c.b16 %v947, %v939
    %v1284 = vpack.c.b16 %v956, %v948
    %v1285 = vpack.c.b16 %v957, %v949
    %v1286 = vpack.c.b16 %v958, %v950
    %v1287 = vpack.c.b16 %v959, %v951
    %v1288 = vpack.c.b16 %v960, %v952
    %v1289 = vpack.c.b16 %v961, %v953
    %v1290 = vpack.c.b16 %v962, %v954
    %v1291 = vpack.c.b16 %v963, %v955
    %v1292 = vpack.c.b16 %v972, %v964
    %v1293 = vpack.c.b16 %v973, %v965
    %v1294 = vpack.c.b16 %v974, %v966
    %v1295 = vpack.c.b16 %v975, %v967
    %v1296 = vpack.c.b16 %v976, %v968
    %v1297 = vpack.c.b16 %v977, %v969
    %v1298 = vpack.c.b16 %v978, %v970
    %v1299 = vpack.c.b16 %v979, %v971
    %v1300 = vpack.c.b16 %v988, %v980
    %v1301 = vpack.c.b16 %v989, %v981
    %v1302 = vpack.c.b16 %v990, %v982
    %v1303 = vpack.c.b16 %v991, %v983
    %v1304 = vpack.c.b16 %v992, %v984
    %v1305 = vpack.c.b16 %v993, %v985
    %v1306 = vpack.c.b16 %v994, %v986
    %v1307 = vpack.c.b16 %v995, %v987
    %v1308 = vpack.c.b16 %v1004, %v996
    %v1309 = vpack.c.b16 %v1005, %v997
    %v1310 = vpack.c.b16 %v1006, %v998
    %v1311 = vpack.c.b16 %v1007, %v999
    %v1312 = vpack.c.b16 %v1008, %v1000
    %v1313 = vpack.c.b16 %v1009, %v1001
    %v1314 = vpack.c.b16 %v1010, %v1002
    %v1315 = vpack.c.b16 %v1011, %v1003
    %v1316 = vpack.c.b16 %v1020, %v1012
    %v1317 = vpack.c.b16 %v1021, %v1013
    %v1318 = vpack.c.b16 %v1022, %v1014
    %v1319 = vpack.c.b16 %v1023, %v1015
    %v1320 = vpack.c.b16 %v1024, %v1016
    %v1321 = vpack.c.b16 %v1025, %v1017
    %v1322 = vpack.c.b16 %v1026, %v1018
    %v1323 = vpack.c.b16 %v1027, %v1019
    %v1324 = vpack.c.b16 %v1036, %v1028
    %v1325 = vpack.c.b16 %v1037, %v1029
    %v1326 = vpack.c.b16 %v1038, %v1030
    %v1327 = vpack.c.b16 %v1039, %v1031
    %v1328 = vpack.c.b16 %v1040, %v1032
    %v1329 = vpack.c.b16 %v1041, %v1033
    %v1330 = vpack.c.b16 %v1042, %v1034
    %v1331 = vpack.c.b16 %v1043, %v1035
    %v1332 = vpack.c.b16 %v1052, %v1044
    %v1333 = vpack.c.b16 %v1053, %v1045
    %v1334 = vpack.c.b16 %v1054, %v1046
    %v1335 = vpack.c.b16 %v1055, %v1047
    %v1336 = vpack.c.b16 %v1056, %v1048
    %v1337 = vpack.c.b16 %v1057, %v1049
    %v1338 = vpack.c.b16 %v1058, %v1050
    %v1339 = vpack.c.b16 %v1059, %v1051
    %v1340 = vpack.c.b16 %v1068, %v1060
    %v1341 = vpack.c.b16 %v1069, %v1061
    %v1342 = vpack.c.b16 %v1070, %v1062
    %v1343 = vpack.c.b16 %v1071, %v1063
    %v1344 = vpack.c.b16 %v1072, %v1064
    %v1345 = vpack.c.b16 %v1073, %v1065
    %v1346 = vpack.c.b16 %v1074, %v1066
    %v1347 = vpack.c.b16 %v1075, %v1067
    %v1348 = vpack.c.b16 %v1084, %v1076
    %v1349 = vpack.c.b16 %v1085, %v1077
    %v1350 = vpack.c.b16 %v1086, %v1078
    %v1351 = vpack.c.b16 %v1087, %v1079
    %v1352 = vpack.c.b16 %v1088, %v1080
    %v1353 = vpack.c.b16 %v1089, %v1081
    %v1354 = vpack.c.b16 %v1090, %v1082
    %v1355 = vpack.c.b16 %v1091, %v1083
    %v1356 = vpack.c.b16 %v1100, %v1092
    %v1357 = vpack.c.b16 %v1101, %v1093
    %v1358 = vpack.c.b16 %v1102, %v1094
    %v1359 = vpack.c.b16 %v1103, %v1095
    %v1360 = vpack.c.b16 %v1104, %v1096
    %v1361 = vpack.c.b16 %v1105, %v1097
    %v1362 = vpack.c.b16 %v1106, %v1098
    %v1363 = vpack.c.b16 %v1107, %v1099
    %1620 = vmatpush.bf16.msra.mxu0 %v1164
    %1621 = vmatpush.bf16.msra.mxu0 %v1156
    %1622 = vmatpush.bf16.msra.mxu0 %v1148
    %1623 = vmatpush.bf16.msra.mxu0 %v1140
    %1624 = vmatpush.bf16.msra.mxu0 %v1132
    %1625 = vmatpush.bf16.msra.mxu0 %v1124
    %1626 = vmatpush.bf16.msra.mxu0 %v1116
    %1627 = vmatpush.bf16.msra.mxu0 %v1108
    %1628 = vmatmul.bf16.gmra.mxu0 %v332
    %v1629 = vpop.f32.mrf.mxu0
    %v1630 = vadd.f32 0.0, %v1629
    %v1631 = vpop.f32.mrf.mxu0
    %1632 = vdwg.mxu0
    %1633 = vmatpush.bf16.msra.mxu0 %v1228
    %1634 = vmatpush.bf16.msra.mxu0 %v1220
    %1635 = vmatpush.bf16.msra.mxu0 %v1212
    %1636 = vmatpush.bf16.msra.mxu0 %v1204
    %1637 = vmatpush.bf16.msra.mxu0 %v1196
    %1638 = vmatpush.bf16.msra.mxu0 %v1188
    %1639 = vmatpush.bf16.msra.mxu0 %v1180
    %1640 = vmatpush.bf16.msra.mxu0 %v1172
    %1641 = vmatmul.bf16.gmra.mxu0 %v333
    %v1642 = vpop.f32.mrf.mxu0
    %v1643 = vadd.f32 %v1630, %v1642
    %v1644 = vpop.f32.mrf.mxu0
    %1645 = vdwg.mxu0
    %1646 = vmatpush.bf16.msra.mxu0 %v1292
    %1647 = vmatpush.bf16.msra.mxu0 %v1284
    %1648 = vmatpush.bf16.msra.mxu0 %v1276
    %1649 = vmatpush.bf16.msra.mxu0 %v1268
    %1650 = vmatpush.bf16.msra.mxu0 %v1260
    %1651 = vmatpush.bf16.msra.mxu0 %v1252
    %1652 = vmatpush.bf16.msra.mxu0 %v1244
    %1653 = vmatpush.bf16.msra.mxu0 %v1236
    %1654 = vmatmul.bf16.gmra.mxu0 %v334
    %v1655 = vpop.f32.mrf.mxu0
    %v1656 = vadd.f32 %v1643, %v1655
    %v1657 = vpop.f32.mrf.mxu0
    %1658 = vdwg.mxu0
    %1659 = vmatpush.bf16.msra.mxu0 %v1356
    %1660 = vmatpush.bf16.msra.mxu0 %v1348
    %1661 = vmatpush.bf16.msra.mxu0 %v1340
    %1662 = vmatpush.bf16.msra.mxu0 %v1332
    %1663 = vmatpush.bf16.msra.mxu0 %v1324
    %1664 = vmatpush.bf16.msra.mxu0 %v1316
    %1665 = vmatpush.bf16.msra.mxu0 %v1308
    %1666 = vmatpush.bf16.msra.mxu0 %v1300
    %1667 = vmatmul.bf16.gmra.mxu0 %v335
    %v1668 = vpop.f32.mrf.mxu0
    %v1669 = vadd.f32 %v1656, %v1668
    %v1670 = vpop.f32.mrf.mxu0
    %1671 = vdwg.mxu0
    %1672 = vmatpush.bf16.msra.mxu0 %v1165
    %1673 = vmatpush.bf16.msra.mxu0 %v1157
    %1674 = vmatpush.bf16.msra.mxu0 %v1149
    %1675 = vmatpush.bf16.msra.mxu0 %v1141
    %1676 = vmatpush.bf16.msra.mxu0 %v1133
    %1677 = vmatpush.bf16.msra.mxu0 %v1125
    %1678 = vmatpush.bf16.msra.mxu0 %v1117
    %1679 = vmatpush.bf16.msra.mxu0 %v1109
    %1680 = vmatmul.bf16.gmra.mxu0 %v332
    %v1681 = vpop.f32.mrf.mxu0
    %v1682 = vadd.f32 0.0, %v1681
    %v1683 = vpop.f32.mrf.mxu0
    %1684 = vdwg.mxu0
    %1685 = vmatpush.bf16.msra.mxu0 %v1229
    %1686 = vmatpush.bf16.msra.mxu0 %v1221
    %1687 = vmatpush.bf16.msra.mxu0 %v1213
    %1688 = vmatpush.bf16.msra.mxu0 %v1205
    %1689 = vmatpush.bf16.msra.mxu0 %v1197
    %1690 = vmatpush.bf16.msra.mxu0 %v1189
    %1691 = vmatpush.bf16.msra.mxu0 %v1181
    %1692 = vmatpush.bf16.msra.mxu0 %v1173
    %1693 = vmatmul.bf16.gmra.mxu0 %v333
    %v1694 = vpop.f32.mrf.mxu0
    %v1695 = vadd.f32 %v1682, %v1694
    %v1696 = vpop.f32.mrf.mxu0
    %1697 = vdwg.mxu0
    %1698 = vmatpush.bf16.msra.mxu0 %v1293
    %1699 = vmatpush.bf16.msra.mxu0 %v1285
    %1700 = vmatpush.bf16.msra.mxu0 %v1277
    %1701 = vmatpush.bf16.msra.mxu0 %v1269
    %1702 = vmatpush.bf16.msra.mxu0 %v1261
    %1703 = vmatpush.bf16.msra.mxu0 %v1253
    %1704 = vmatpush.bf16.msra.mxu0 %v1245
    %1705 = vmatpush.bf16.msra.mxu0 %v1237
    %1706 = vmatmul.bf16.gmra.mxu0 %v334
    %v1707 = vpop.f32.mrf.mxu0
    %v1708 = vadd.f32 %v1695, %v1707
    %v1709 = vpop.f32.mrf.mxu0
    %1710 = vdwg.mxu0
    %1711 = vmatpush.bf16.msra.mxu0 %v1357
    %1712 = vmatpush.bf16.msra.mxu0 %v1349
    %1713 = vmatpush.bf16.msra.mxu0 %v1341
    %1714 = vmatpush.bf16.msra.mxu0 %v1333
    %1715 = vmatpush.bf16.msra.mxu0 %v1325
    %1716 = vmatpush.bf16.msra.mxu0 %v1317
    %1717 = vmatpush.bf16.msra.mxu0 %v1309
    %1718 = vmatpush.bf16.msra.mxu0 %v1301
    %1719 = vmatmul.bf16.gmra.mxu0 %v335
    %v1720 = vpop.f32.mrf.mxu0
    %v1721 = vadd.f32 %v1708, %v1720
    %v1722 = vpop.f32.mrf.mxu0
    %1723 = vdwg.mxu0
    %1724 = vmatpush.bf16.msra.mxu0 %v1166
    %1725 = vmatpush.bf16.msra.mxu0 %v1158
    %1726 = vmatpush.bf16.msra.mxu0 %v1150
    %1727 = vmatpush.bf16.msra.mxu0 %v1142
    %1728 = vmatpush.bf16.msra.mxu0 %v1134
    %1729 = vmatpush.bf16.msra.mxu0 %v1126
    %1730 = vmatpush.bf16.msra.mxu0 %v1118
    %1731 = vmatpush.bf16.msra.mxu0 %v1110
    %1732 = vmatmul.bf16.gmra.mxu0 %v332
    %v1733 = vpop.f32.mrf.mxu0
    %v1734 = vadd.f32 0.0, %v1733
    %v1735 = vpop.f32.mrf.mxu0
    %1736 = vdwg.mxu0
    %1737 = vmatpush.bf16.msra.mxu0 %v1230
    %1738 = vmatpush.bf16.msra.mxu0 %v1222
    %1739 = vmatpush.bf16.msra.mxu0 %v1214
    %1740 = vmatpush.bf16.msra.mxu0 %v1206
    %1741 = vmatpush.bf16.msra.mxu0 %v1198
    %1742 = vmatpush.bf16.msra.mxu0 %v1190
    %1743 = vmatpush.bf16.msra.mxu0 %v1182
    %1744 = vmatpush.bf16.msra.mxu0 %v1174
    %1745 = vmatmul.bf16.gmra.mxu0 %v333
    %v1746 = vpop.f32.mrf.mxu0
    %v1747 = vadd.f32 %v1734, %v1746
    %v1748 = vpop.f32.mrf.mxu0
    %1749 = vdwg.mxu0
    %1750 = vmatpush.bf16.msra.mxu0 %v1294
    %1751 = vmatpush.bf16.msra.mxu0 %v1286
    %1752 = vmatpush.bf16.msra.mxu0 %v1278
    %1753 = vmatpush.bf16.msra.mxu0 %v1270
    %1754 = vmatpush.bf16.msra.mxu0 %v1262
    %1755 = vmatpush.bf16.msra.mxu0 %v1254
    %1756 = vmatpush.bf16.msra.mxu0 %v1246
    %1757 = vmatpush.bf16.msra.mxu0 %v1238
    %1758 = vmatmul.bf16.gmra.mxu0 %v334
    %v1759 = vpop.f32.mrf.mxu0
    %v1760 = vadd.f32 %v1747, %v1759
    %v1761 = vpop.f32.mrf.mxu0
    %1762 = vdwg.mxu0
    %1763 = vmatpush.bf16.msra.mxu0 %v1358
    %1764 = vmatpush.bf16.msra.mxu0 %v1350
    %1765 = vmatpush.bf16.msra.mxu0 %v1342
    %1766 = vmatpush.bf16.msra.mxu0 %v1334
    %1767 = vmatpush.bf16.msra.mxu0 %v1326
    %1768 = vmatpush.bf16.msra.mxu0 %v1318
    %1769 = vmatpush.bf16.msra.mxu0 %v1310
    %1770 = vmatpush.bf16.msra.mxu0 %v1302
    %1771 = vmatmul.bf16.gmra.mxu0 %v335
    %v1772 = vpop.f32.mrf.mxu0
    %v1773 = vadd.f32 %v1760, %v1772
    %v1774 = vpop.f32.mrf.mxu0
    %1775 = vdwg.mxu0
    %1776 = vmatpush.bf16.msra.mxu0 %v1167
    %1777 = vmatpush.bf16.msra.mxu0 %v1159
    %1778 = vmatpush.bf16.msra.mxu0 %v1151
    %1779 = vmatpush.bf16.msra.mxu0 %v1143
    %1780 = vmatpush.bf16.msra.mxu0 %v1135
    %1781 = vmatpush.bf16.msra.mxu0 %v1127
    %1782 = vmatpush.bf16.msra.mxu0 %v1119
    %1783 = vmatpush.bf16.msra.mxu0 %v1111
    %1784 = vmatmul.bf16.gmra.mxu0 %v332
    %v1785 = vpop.f32.mrf.mxu0
    %v1786 = vadd.f32 0.0, %v1785
    %v1787 = vpop.f32.mrf.mxu0
    %1788 = vdwg.mxu0
    %1789 = vmatpush.bf16.msra.mxu0 %v1231
    %1790 = vmatpush.bf16.msra.mxu0 %v1223
    %1791 = vmatpush.bf16.msra.mxu0 %v1215
    %1792 = vmatpush.bf16.msra.mxu0 %v1207
    %1793 = vmatpush.bf16.msra.mxu0 %v1199
    %1794 = vmatpush.bf16.msra.mxu0 %v1191
    %1795 = vmatpush.bf16.msra.mxu0 %v1183
    %1796 = vmatpush.bf16.msra.mxu0 %v1175
    %1797 = vmatmul.bf16.gmra.mxu0 %v333
    %v1798 = vpop.f32.mrf.mxu0
    %v1799 = vadd.f32 %v1786, %v1798
    %v1800 = vpop.f32.mrf.mxu0
    %1801 = vdwg.mxu0
    %1802 = vmatpush.bf16.msra.mxu0 %v1295
    %1803 = vmatpush.bf16.msra.mxu0 %v1287
    %1804 = vmatpush.bf16.msra.mxu0 %v1279
    %1805 = vmatpush.bf16.msra.mxu0 %v1271
    %1806 = vmatpush.bf16.msra.mxu0 %v1263
    %1807 = vmatpush.bf16.msra.mxu0 %v1255
    %1808 = vmatpush.bf16.msra.mxu0 %v1247
    %1809 = vmatpush.bf16.msra.mxu0 %v1239
    %1810 = vmatmul.bf16.gmra.mxu0 %v334
    %v1811 = vpop.f32.mrf.mxu0
    %v1812 = vadd.f32 %v1799, %v1811
    %v1813 = vpop.f32.mrf.mxu0
    %1814 = vdwg.mxu0
    %1815 = vmatpush.bf16.msra.mxu0 %v1359
    %1816 = vmatpush.bf16.msra.mxu0 %v1351
    %1817 = vmatpush.bf16.msra.mxu0 %v1343
    %1818 = vmatpush.bf16.msra.mxu0 %v1335
    %1819 = vmatpush.bf16.msra.mxu0 %v1327
    %1820 = vmatpush.bf16.msra.mxu0 %v1319
    %1821 = vmatpush.bf16.msra.mxu0 %v1311
    %1822 = vmatpush.bf16.msra.mxu0 %v1303
    %1823 = vmatmul.bf16.gmra.mxu0 %v335
    %v1824 = vpop.f32.mrf.mxu0
    %v1825 = vadd.f32 %v1812, %v1824
    %v1826 = vpop.f32.mrf.mxu0
    %1827 = vdwg.mxu0
    %1828 = vmatpush.bf16.msra.mxu0 %v1168
    %1829 = vmatpush.bf16.msra.mxu0 %v1160
    %1830 = vmatpush.bf16.msra.mxu0 %v1152
    %1831 = vmatpush.bf16.msra.mxu0 %v1144
    %1832 = vmatpush.bf16.msra.mxu0 %v1136
    %1833 = vmatpush.bf16.msra.mxu0 %v1128
    %1834 = vmatpush.bf16.msra.mxu0 %v1120
    %1835 = vmatpush.bf16.msra.mxu0 %v1112
    %1836 = vmatmul.bf16.gmra.mxu0 %v332
    %v1837 = vpop.f32.mrf.mxu0
    %v1838 = vadd.f32 0.0, %v1837
    %v1839 = vpop.f32.mrf.mxu0
    %1840 = vdwg.mxu0
    %1841 = vmatpush.bf16.msra.mxu0 %v1232
    %1842 = vmatpush.bf16.msra.mxu0 %v1224
    %1843 = vmatpush.bf16.msra.mxu0 %v1216
    %1844 = vmatpush.bf16.msra.mxu0 %v1208
    %1845 = vmatpush.bf16.msra.mxu0 %v1200
    %1846 = vmatpush.bf16.msra.mxu0 %v1192
    %1847 = vmatpush.bf16.msra.mxu0 %v1184
    %1848 = vmatpush.bf16.msra.mxu0 %v1176
    %1849 = vmatmul.bf16.gmra.mxu0 %v333
    %v1850 = vpop.f32.mrf.mxu0
    %v1851 = vadd.f32 %v1838, %v1850
    %v1852 = vpop.f32.mrf.mxu0
    %1853 = vdwg.mxu0
    %1854 = vmatpush.bf16.msra.mxu0 %v1296
    %1855 = vmatpush.bf16.msra.mxu0 %v1288
    %1856 = vmatpush.bf16.msra.mxu0 %v1280
    %1857 = vmatpush.bf16.msra.mxu0 %v1272
    %1858 = vmatpush.bf16.msra.mxu0 %v1264
    %1859 = vmatpush.bf16.msra.mxu0 %v1256
    %1860 = vmatpush.bf16.msra.mxu0 %v1248
    %1861 = vmatpush.bf16.msra.mxu0 %v1240
    %1862 = vmatmul.bf16.gmra.mxu0 %v334
    %v1863 = vpop.f32.mrf.mxu0
    %v1864 = vadd.f32 %v1851, %v1863
    %v1865 = vpop.f32.mrf.mxu0
    %1866 = vdwg.mxu0
    %1867 = vmatpush.bf16.msra.mxu0 %v1360
    %1868 = vmatpush.bf16.msra.mxu0 %v1352
    %1869 = vmatpush.bf16.msra.mxu0 %v1344
    %1870 = vmatpush.bf16.msra.mxu0 %v1336
    %1871 = vmatpush.bf16.msra.mxu0 %v1328
    %1872 = vmatpush.bf16.msra.mxu0 %v1320
    %1873 = vmatpush.bf16.msra.mxu0 %v1312
    %1874 = vmatpush.bf16.msra.mxu0 %v1304
    %1875 = vmatmul.bf16.gmra.mxu0 %v335
    %v1876 = vpop.f32.mrf.mxu0
    %v1877 = vadd.f32 %v1864, %v1876
    %v1878 = vpop.f32.mrf.mxu0
    %1879 = vdwg.mxu0
    %1880 = vmatpush.bf16.msra.mxu0 %v1169
    %1881 = vmatpush.bf16.msra.mxu0 %v1161
    %1882 = vmatpush.bf16.msra.mxu0 %v1153
    %1883 = vmatpush.bf16.msra.mxu0 %v1145
    %1884 = vmatpush.bf16.msra.mxu0 %v1137
    %1885 = vmatpush.bf16.msra.mxu0 %v1129
    %1886 = vmatpush.bf16.msra.mxu0 %v1121
    %1887 = vmatpush.bf16.msra.mxu0 %v1113
    %1888 = vmatmul.bf16.gmra.mxu0 %v332
    %v1889 = vpop.f32.mrf.mxu0
    %v1890 = vadd.f32 0.0, %v1889
    %v1891 = vpop.f32.mrf.mxu0
    %1892 = vdwg.mxu0
    %1893 = vmatpush.bf16.msra.mxu0 %v1233
    %1894 = vmatpush.bf16.msra.mxu0 %v1225
    %1895 = vmatpush.bf16.msra.mxu0 %v1217
    %1896 = vmatpush.bf16.msra.mxu0 %v1209
    %1897 = vmatpush.bf16.msra.mxu0 %v1201
    %1898 = vmatpush.bf16.msra.mxu0 %v1193
    %1899 = vmatpush.bf16.msra.mxu0 %v1185
    %1900 = vmatpush.bf16.msra.mxu0 %v1177
    %1901 = vmatmul.bf16.gmra.mxu0 %v333
    %v1902 = vpop.f32.mrf.mxu0
    %v1903 = vadd.f32 %v1890, %v1902
    %v1904 = vpop.f32.mrf.mxu0
    %1905 = vdwg.mxu0
    %1906 = vmatpush.bf16.msra.mxu0 %v1297
    %1907 = vmatpush.bf16.msra.mxu0 %v1289
    %1908 = vmatpush.bf16.msra.mxu0 %v1281
    %1909 = vmatpush.bf16.msra.mxu0 %v1273
    %1910 = vmatpush.bf16.msra.mxu0 %v1265
    %1911 = vmatpush.bf16.msra.mxu0 %v1257
    %1912 = vmatpush.bf16.msra.mxu0 %v1249
    %1913 = vmatpush.bf16.msra.mxu0 %v1241
    %1914 = vmatmul.bf16.gmra.mxu0 %v334
    %v1915 = vpop.f32.mrf.mxu0
    %v1916 = vadd.f32 %v1903, %v1915
    %v1917 = vpop.f32.mrf.mxu0
    %1918 = vdwg.mxu0
    %1919 = vmatpush.bf16.msra.mxu0 %v1361
    %1920 = vmatpush.bf16.msra.mxu0 %v1353
    %1921 = vmatpush.bf16.msra.mxu0 %v1345
    %1922 = vmatpush.bf16.msra.mxu0 %v1337
    %1923 = vmatpush.bf16.msra.mxu0 %v1329
    %1924 = vmatpush.bf16.msra.mxu0 %v1321
    %1925 = vmatpush.bf16.msra.mxu0 %v1313
    %1926 = vmatpush.bf16.msra.mxu0 %v1305
    %1927 = vmatmul.bf16.gmra.mxu0 %v335
    %v1928 = vpop.f32.mrf.mxu0
    %v1929 = vadd.f32 %v1916, %v1928
    %v1930 = vpop.f32.mrf.mxu0
    %1931 = vdwg.mxu0
    %1932 = vmatpush.bf16.msra.mxu0 %v1170
    %1933 = vmatpush.bf16.msra.mxu0 %v1162
    %1934 = vmatpush.bf16.msra.mxu0 %v1154
    %1935 = vmatpush.bf16.msra.mxu0 %v1146
    %1936 = vmatpush.bf16.msra.mxu0 %v1138
    %1937 = vmatpush.bf16.msra.mxu0 %v1130
    %1938 = vmatpush.bf16.msra.mxu0 %v1122
    %1939 = vmatpush.bf16.msra.mxu0 %v1114
    %1940 = vmatmul.bf16.gmra.mxu0 %v332
    %v1941 = vpop.f32.mrf.mxu0
    %v1942 = vadd.f32 0.0, %v1941
    %v1943 = vpop.f32.mrf.mxu0
    %1944 = vdwg.mxu0
    %1945 = vmatpush.bf16.msra.mxu0 %v1234
    %1946 = vmatpush.bf16.msra.mxu0 %v1226
    %1947 = vmatpush.bf16.msra.mxu0 %v1218
    %1948 = vmatpush.bf16.msra.mxu0 %v1210
    %1949 = vmatpush.bf16.msra.mxu0 %v1202
    %1950 = vmatpush.bf16.msra.mxu0 %v1194
    %1951 = vmatpush.bf16.msra.mxu0 %v1186
    %1952 = vmatpush.bf16.msra.mxu0 %v1178
    %1953 = vmatmul.bf16.gmra.mxu0 %v333
    %v1954 = vpop.f32.mrf.mxu0
    %v1955 = vadd.f32 %v1942, %v1954
    %v1956 = vpop.f32.mrf.mxu0
    %1957 = vdwg.mxu0
    %1958 = vmatpush.bf16.msra.mxu0 %v1298
    %1959 = vmatpush.bf16.msra.mxu0 %v1290
    %1960 = vmatpush.bf16.msra.mxu0 %v1282
    %1961 = vmatpush.bf16.msra.mxu0 %v1274
    %1962 = vmatpush.bf16.msra.mxu0 %v1266
    %1963 = vmatpush.bf16.msra.mxu0 %v1258
    %1964 = vmatpush.bf16.msra.mxu0 %v1250
    %1965 = vmatpush.bf16.msra.mxu0 %v1242
    %1966 = vmatmul.bf16.gmra.mxu0 %v334
    %v1967 = vpop.f32.mrf.mxu0
    %v1968 = vadd.f32 %v1955, %v1967
    %v1969 = vpop.f32.mrf.mxu0
    %1970 = vdwg.mxu0
    %1971 = vmatpush.bf16.msra.mxu0 %v1362
    %1972 = vmatpush.bf16.msra.mxu0 %v1354
    %1973 = vmatpush.bf16.msra.mxu0 %v1346
    %1974 = vmatpush.bf16.msra.mxu0 %v1338
    %1975 = vmatpush.bf16.msra.mxu0 %v1330
    %1976 = vmatpush.bf16.msra.mxu0 %v1322
    %1977 = vmatpush.bf16.msra.mxu0 %v1314
    %1978 = vmatpush.bf16.msra.mxu0 %v1306
    %1979 = vmatmul.bf16.gmra.mxu0 %v335
    %v1980 = vpop.f32.mrf.mxu0
    %v1981 = vadd.f32 %v1968, %v1980
    %v1982 = vpop.f32.mrf.mxu0
    %1983 = vdwg.mxu0
    %1984 = vmatpush.bf16.msra.mxu0 %v1171
    %1985 = vmatpush.bf16.msra.mxu0 %v1163
    %1986 = vmatpush.bf16.msra.mxu0 %v1155
    %1987 = vmatpush.bf16.msra.mxu0 %v1147
    %1988 = vmatpush.bf16.msra.mxu0 %v1139
    %1989 = vmatpush.bf16.msra.mxu0 %v1131
    %1990 = vmatpush.bf16.msra.mxu0 %v1123
    %1991 = vmatpush.bf16.msra.mxu0 %v1115
    %1992 = vmatmul.bf16.gmra.mxu0 %v332
    %v1993 = vpop.f32.mrf.mxu0
    %v1994 = vadd.f32 0.0, %v1993
    %v1995 = vpop.f32.mrf.mxu0
    %1996 = vdwg.mxu0
    %1997 = vmatpush.bf16.msra.mxu0 %v1235
    %1998 = vmatpush.bf16.msra.mxu0 %v1227
    %1999 = vmatpush.bf16.msra.mxu0 %v1219
    %2000 = vmatpush.bf16.msra.mxu0 %v1211
    %2001 = vmatpush.bf16.msra.mxu0 %v1203
    %2002 = vmatpush.bf16.msra.mxu0 %v1195
    %2003 = vmatpush.bf16.msra.mxu0 %v1187
    %2004 = vmatpush.bf16.msra.mxu0 %v1179
    %2005 = vmatmul.bf16.gmra.mxu0 %v333
    %v2006 = vpop.f32.mrf.mxu0
    %v2007 = vadd.f32 %v1994, %v2006
    %v2008 = vpop.f32.mrf.mxu0
    %2009 = vdwg.mxu0
    %2010 = vmatpush.bf16.msra.mxu0 %v1299
    %2011 = vmatpush.bf16.msra.mxu0 %v1291
    %2012 = vmatpush.bf16.msra.mxu0 %v1283
    %2013 = vmatpush.bf16.msra.mxu0 %v1275
    %2014 = vmatpush.bf16.msra.mxu0 %v1267
    %2015 = vmatpush.bf16.msra.mxu0 %v1259
    %2016 = vmatpush.bf16.msra.mxu0 %v1251
    %2017 = vmatpush.bf16.msra.mxu0 %v1243
    %2018 = vmatmul.bf16.gmra.mxu0 %v334
    %v2019 = vpop.f32.mrf.mxu0
    %v2020 = vadd.f32 %v2007, %v2019
    %v2021 = vpop.f32.mrf.mxu0
    %2022 = vdwg.mxu0
    %2023 = vmatpush.bf16.msra.mxu0 %v1363
    %2024 = vmatpush.bf16.msra.mxu0 %v1355
    %2025 = vmatpush.bf16.msra.mxu0 %v1347
    %2026 = vmatpush.bf16.msra.mxu0 %v1339
    %2027 = vmatpush.bf16.msra.mxu0 %v1331
    %2028 = vmatpush.bf16.msra.mxu0 %v1323
    %2029 = vmatpush.bf16.msra.mxu0 %v1315
    %2030 = vmatpush.bf16.msra.mxu0 %v1307
    %2031 = vmatmul.bf16.gmra.mxu0 %v335
    %v2032 = vpop.f32.mrf.mxu0
    %v2033 = vadd.f32 %v2020, %v2032
    %v2034 = vpop.f32.mrf.mxu0
    %2035 = vdwg.mxu0
    %v2036 = vadd.f32 %v60, %v1669
    %v2037 = vadd.f32 %v61, %v1721
    %v2038 = vadd.f32 %v62, %v1773
    %v2039 = vadd.f32 %v63, %v1825
    %v2040 = vadd.f32 %v64, %v1877
    %v2041 = vadd.f32 %v65, %v1929
    %v2042 = vadd.f32 %v66, %v1981
    %v2043 = vadd.f32 %v67, %v2033
    %2044 = vst [vmem:[#allocation2] sm:$0xff] %v2036
    %2045 = vst [vmem:[#allocation2 + $0x8] sm:$0xff] %v2037
    %2046 = vst [vmem:[#allocation2 + $0x10] sm:$0xff] %v2038
    %2047 = vst [vmem:[#allocation2 + $0x18] sm:$0xff] %v2039
    %2048 = vst [vmem:[#allocation2 + $0x20] sm:$0xff] %v2040
    %2049 = vst [vmem:[#allocation2 + $0x28] sm:$0xff] %v2041
    %2050 = vst [vmem:[#allocation2 + $0x30] sm:$0xff] %v2042
    %2051 = vst [vmem:[#allocation2 + $0x38] sm:$0xff] %v2043
    // Predicated region
    $region22: #{_lambda_.11} parent=1 // pred_check
      %p2052 = pneg %p30
    $region23: #{_lambda_.11} parent=1 // pred_check_branch
      %2054 = sbr.rel (%p2052) target = $region25
    $region24: #{_lambda_.11} parent=1 // pred_region
      %v2055 = vld [vmem:[#allocation2] sm:$0xff]
      %v2056 = vld [vmem:[#allocation2 + $0x8] sm:$0xff]
      %v2057 = vld [vmem:[#allocation2 + $0x10] sm:$0xff]
      %v2058 = vld [vmem:[#allocation2 + $0x18] sm:$0xff]
      %v2059 = vld [vmem:[#allocation2 + $0x20] sm:$0xff]
      %v2060 = vld [vmem:[#allocation2 + $0x28] sm:$0xff]
      %v2061 = vld [vmem:[#allocation2 + $0x30] sm:$0xff]
      %v2062 = vld [vmem:[#allocation2 + $0x38] sm:$0xff]
      %v2063 = vpack.c.bf16 %v2056, %v2055
      %v2064 = vpack.c.bf16 %v2058, %v2057
      %v2065 = vpack.c.bf16 %v2060, %v2059
      %v2066 = vpack.c.bf16 %v2062, %v2061
      %2067 = vst [vmem:[%s3] sm:$0xff] %v2063
      %2068 = vst [vmem:[%s3 + $0x8] sm:$0xff] %v2064
      %2069 = vst [vmem:[%s3 + $0x10] sm:$0xff] %v2065
      %2070 = vst [vmem:[%s3 + $0x18] sm:$0xff] %v2066
    $region25: #{_lambda_.11} parent=1 // pred_fallthru
      _
    // Predicated region
    $region26: #{_lambda_.11} parent=1 // pred_check
      _
    $region27: #{_lambda_.11} parent=1 // pred_check_branch
      %2072 = sbr.rel (0) target = $region29
    $region28: #{_lambda_.11} parent=1 // pred_region
      _
    $region29: #{_lambda_.11} parent=1 // pred_fallthru
      _
    // Predicated region
    $region30: #{_lambda_.11} parent=1 // pred_check
      _
    $region31: #{_lambda_.11} parent=1 // pred_check_branch
      %2074 = sbr.rel (0) target = $region33
    $region32: #{_lambda_.11} parent=1 // pred_region
      _
    $region33: #{_lambda_.11} parent=1 // pred_fallthru
      _
    %2075 = vsyncpa [#allocation4], 1

// kernel: _lambda_.13
$region0: #{_lambda_.13}
  #allocation0 [shape = 'u32[]', space=smem, size = 0x4, offset = 0x4, fixed_abs, tag = 'smem constant byte address 0x4 - core index']
  #allocation1 [shape = 'u32[72,128]{1,0:T(1,128)}', space=vmem, size = 0x9000, scoped, tag = 'internal scratch']
  #allocation2 [shape = 'f32[16,8]{1,0:T(8,128)}', space=vmem, size = 0x2000, scoped, tag = 'scratch operand']
  %s0 = inlined_call_operand.vmem [shape: bf16[32,512], index: 0, kind: input, shape index: {}]
  %s1 = inlined_call_operand.vmem [shape: bf16[512,8], index: 1, kind: input, shape index: {}]
  %s2 = inlined_call_operand.vmem [shape: f32[1,8], index: 2, kind: input, shape index: {}]
  %s3 = inlined_call_operand.vmem [shape: bf16[4,4,8], index: 3, kind: input, shape index: {}]
  %s4 = inlined_call_operand.vmem [shape: bf16[32,8], index: 4, kind: output, shape index: {}]
  %s5 = sld [smem:[#allocation0]]
  $region57: #{_lambda_.13} parent=0
    _
  %s7 = ssub.s32 1, %s5
  %s8 = scalar_select 0, %s7, %s5
  loop: start=0, step=1, limit=4
  $region2: #{_lambda_.13} parent=0 // loop_pre_header
    _
  $region3: #{_lambda_.13} parent=0 // loop_header
    %s10 = sphi 0, %s14
    %p11 = scmp.ge.s32.totalorder %s10, 4
    %s17 = sphi 0, %s29
    %s18 = sphi 0, %s25
    %s19 = sphi 0, %s17
    %s20 = sphi 0, %s18
    %s21 = sphi 0, %s19
    %s22 = sphi 0, %s20
    %s34 = sphi 0, %s36
    %s37 = sphi 0, %s34
    %s38 = sphi 0, %s37
    %s54 = sphi 0, %s38
    %s60 = sphi 0, %s62
    %s63 = sphi 0, %s60
    %s64 = sphi 0, %s63
    %s80 = sphi 0, %s64
    %s84 = sphi 0, %s84
    %s86 = sphi 0, %s84
    %s87 = sphi 0, %s86
    %s101 = sphi 0, %s87
    %s107 = sphi 0, %s109
    %s110 = sphi 0, %s107
    %s111 = sphi 0, %s110
    %s127 = sphi 0, %s111
    %s133 = sphi 0, %s135
    %s136 = sphi 0, %s133
    %s137 = sphi 0, %s136
    %s153 = sphi 0, %s137
  $region4: #{_lambda_.13} parent=0 // loop_header_branch
    %13 = sbr.rel (%p11) target = $region8
  $region5: #{_lambda_.13} parent=0 // loop_body
    %s15 = ssub.s32 %s10, 1
    %s16 = ssub.s32 %s10, 2
    %s23 = sadd.s32 1, %s18
    %p24 = scmp.ge.s32.totalorder %s23, 1
    %s25 = scalar_select %p24, 0, %s23
    %s26 = sadd.s32 1, %s17
    %s27 = scalar_select %p24, %s26, %s17
    %p28 = scmp.ge.s32.totalorder %s27, 2
    %s29 = scalar_select %p28, 0, %s27
    %s30 = ssub.s32 %s17, %s29
    %s31 = ssub.s32 %s18, %s25
    %s32 = sor.u32 %s30, %s31
    %p33 = scmp.eq.s32.totalorder %s32, 0
    %s35 = sadd.s32 %s34, 1
    %s36 = scalar_select %p33, %s34, %s35
    %p39 = pneg %p33
    %p40 = scmp.eq.s32.totalorder %s10, 1
    %p41 = por %p39, %p40
    %p42 = scmp.ne.s32.totalorder %s34, %s37
    %p43 = scmp.eq.s32.totalorder %s10, 0
    %p44 = por %p42, %p43
    %p45 = scmp.ne.s32.totalorder %s34, %s37
    %p46 = scmp.eq.s32.totalorder %s15, 1
    %p47 = por %p45, %p46
    %p48 = scmp.ne.s32.totalorder %s37, %s38
    %p49 = scmp.eq.s32.totalorder %s15, 0
    %p50 = por %p48, %p49
    %p51 = scmp.ne.s32.totalorder %s37, %s38
    %p52 = scmp.eq.s32.totalorder %s16, 1
    %p53 = por %p51, %p52
    %p55 = scmp.ne.s32.totalorder %s38, %s54
    %p56 = scmp.eq.s32.totalorder %s16, 0
    %p57 = por %p55, %p56
    %s58 = ssub.s32 %s18, %s25
    %p59 = scmp.eq.s32.totalorder %s58, 0
    %s61 = sadd.s32 %s60, 1
    %s62 = scalar_select %p59, %s60, %s61
    %p65 = pneg %p59
    %p66 = scmp.eq.s32.totalorder %s10, 1
    %p67 = por %p65, %p66
    %p68 = scmp.ne.s32.totalorder %s60, %s63
    %p69 = scmp.eq.s32.totalorder %s10, 0
    %p70 = por %p68, %p69
    %p71 = scmp.ne.s32.totalorder %s60, %s63
    %p72 = scmp.eq.s32.totalorder %s15, 1
    %p73 = por %p71, %p72
    %p74 = scmp.ne.s32.totalorder %s63, %s64
    %p75 = scmp.eq.s32.totalorder %s15, 0
    %p76 = por %p74, %p75
    %p77 = scmp.ne.s32.totalorder %s63, %s64
    %p78 = scmp.eq.s32.totalorder %s16, 1
    %p79 = por %p77, %p78
    %p81 = scmp.ne.s32.totalorder %s64, %s80
    %p82 = scmp.eq.s32.totalorder %s16, 0
    %p83 = por %p81, %p82
    %s85 = sadd.s32 %s84, 1
    %p88 = scmp.eq.s32.totalorder %s10, 1
    %p89 = scmp.ne.s32.totalorder %s84, %s86
    %p90 = scmp.eq.s32.totalorder %s10, 0
    %p91 = por %p89, %p90
    %p92 = scmp.ne.s32.totalorder %s84, %s86
    %p93 = scmp.eq.s32.totalorder %s15, 1
    %p94 = por %p92, %p93
    %p95 = scmp.ne.s32.totalorder %s86, %s87
    %p96 = scmp.eq.s32.totalorder %s15, 0
    %p97 = por %p95, %p96
    %p98 = scmp.ne.s32.totalorder %s86, %s87
    %p99 = scmp.eq.s32.totalorder %s16, 1
    %p100 = por %p98, %p99
    %p102 = scmp.ne.s32.totalorder %s87, %s101
    %p103 = scmp.eq.s32.totalorder %s16, 0
    %p104 = por %p102, %p103
    %s105 = ssub.s32 %s17, %s29
    %p106 = scmp.eq.s32.totalorder %s105, 0
    %s108 = sadd.s32 %s107, 1
    %s109 = scalar_select %p106, %s107, %s108
    %p112 = pneg %p106
    %p113 = scmp.eq.s32.totalorder %s10, 1
    %p114 = por %p112, %p113
    %p115 = scmp.ne.s32.totalorder %s107, %s110
    %p116 = scmp.eq.s32.totalorder %s10, 0
    %p117 = por %p115, %p116
    %p118 = scmp.ne.s32.totalorder %s107, %s110
    %p119 = scmp.eq.s32.totalorder %s15, 1
    %p120 = por %p118, %p119
    %p121 = scmp.ne.s32.totalorder %s110, %s111
    %p122 = scmp.eq.s32.totalorder %s15, 0
    %p123 = por %p121, %p122
    %p124 = scmp.ne.s32.totalorder %s110, %s111
    %p125 = scmp.eq.s32.totalorder %s16, 1
    %p126 = por %p124, %p125
    %p128 = scmp.ne.s32.totalorder %s111, %s127
    %p129 = scmp.eq.s32.totalorder %s16, 0
    %p130 = por %p128, %p129
    %s131 = ssub.s32 %s17, %s29
    %p132 = scmp.eq.s32.totalorder %s131, 0
    %s134 = sadd.s32 %s133, 1
    %s135 = scalar_select %p132, %s133, %s134
    %p138 = pneg %p132
    %p139 = scmp.eq.s32.totalorder %s10, 1
    %p140 = por %p138, %p139
    %p141 = scmp.ne.s32.totalorder %s133, %s136
    %p142 = scmp.eq.s32.totalorder %s10, 0
    %p143 = por %p141, %p142
    %p144 = scmp.ne.s32.totalorder %s133, %s136
    %p145 = scmp.eq.s32.totalorder %s15, 1
    %p146 = por %p144, %p145
    %p147 = scmp.ne.s32.totalorder %s136, %s137
    %p148 = scmp.eq.s32.totalorder %s15, 0
    %p149 = por %p147, %p148
    %p150 = scmp.ne.s32.totalorder %s136, %s137
    %p151 = scmp.eq.s32.totalorder %s16, 1
    %p152 = por %p150, %p151
    %p154 = scmp.ne.s32.totalorder %s137, %s153
    %p155 = scmp.eq.s32.totalorder %s16, 0
    %p156 = por %p154, %p155
    %p157 = scmp.le.s32.totalorder 1, %s10
    %p158 = scmp.lt.s32.totalorder %s10, 3
    %p159 = pnand %p157, %p158
    %p160 = pneg %p159
    // Predicated region
    $region9: #{_lambda_.13} parent=5 // pred_check
      _
    $region10: #{_lambda_.13} parent=5 // pred_check_branch
      %162 = sbr.rel (%p159) target = $region12
    $region11: #{_lambda_.13} parent=5 // pred_region
      %s163 = ssub.s32 %s10, 1
      // Predicated region
      $region13: #{_lambda_.13} parent=11 // pred_check
        %p164 = pneg %p76
      $region14: #{_lambda_.13} parent=11 // pred_check_branch
        %166 = sbr.rel (%p164) target = $region16
      $region15: #{_lambda_.13} parent=11 // pred_region
        %s167 = smul.u32 64, %s20
        %p168 = scmp.lt.s32.totalorder %s167, 63
        %s169 = scalar_select %p168, %s167, 63
        %s170 = smul.addr %s169, 4
        %s171 = scalar_lea.vmem %s1, %s170
        %s172 = smul.u32 64, %s20
      $region16: #{_lambda_.13} parent=11 // pred_fallthru
        _
      // Predicated region
      $region17: #{_lambda_.13} parent=11 // pred_check
        %p173 = pneg %p97
      $region18: #{_lambda_.13} parent=11 // pred_check_branch
        %175 = sbr.rel (%p173) target = $region20
      $region19: #{_lambda_.13} parent=11 // pred_region
        _
      $region20: #{_lambda_.13} parent=11 // pred_fallthru
        _
    $region12: #{_lambda_.13} parent=5 // pred_fallthru
      _
    %p176 = scmp.lt.s32.totalorder %s10, 2
    // Predicated region
    $region21: #{_lambda_.13} parent=5 // pred_check
      %p177 = pneg %p176
    $region22: #{_lambda_.13} parent=5 // pred_check_branch
      %179 = sbr.rel (%p177) target = $region24
    $region23: #{_lambda_.13} parent=5 // pred_region
      // Predicated region
      $region25: #{_lambda_.13} parent=23 // pred_check
        %p180 = pneg %p44
      $region26: #{_lambda_.13} parent=23 // pred_check_branch
        %182 = sbr.rel (%p180) target = $region28
      $region27: #{_lambda_.13} parent=23 // pred_region
        %s183 = smul.u32 2, %s17
        %s184 = smul.u32 4, %s18
        %p185 = scmp.lt.s32.totalorder %s183, 3
        %s186 = scalar_select %p185, %s183, 3
        %p187 = scmp.lt.s32.totalorder %s184, 3
        %s188 = scalar_select %p187, %s184, 3
        %s189 = smul.addr %s186, 4
        %s190 = sadd.s32 %s188, %s189
        %s191 = smul.addr %s190, 4
        %s192 = scalar_lea.vmem %s0, %s191
        %s193 = smul.u32 2, %s17
        %s194 = smul.u32 4, %s18
      $region28: #{_lambda_.13} parent=23 // pred_fallthru
        _
      // Predicated region
      $region29: #{_lambda_.13} parent=23 // pred_check
        %p195 = pneg %p117
      $region30: #{_lambda_.13} parent=23 // pred_check_branch
        %197 = sbr.rel (%p195) target = $region32
      $region31: #{_lambda_.13} parent=23 // pred_region
        %s198 = smul.u32 2, %s17
        %p199 = scmp.lt.s32.totalorder %s198, 3
        %s200 = scalar_select %p199, %s198, 3
        %s201 = smul.addr %s200, 2
        %s202 = scalar_lea.vmem %s3, %s201
        %s203 = smul.u32 2, %s17
      $region32: #{_lambda_.13} parent=23 // pred_fallthru
        _
    $region24: #{_lambda_.13} parent=5 // pred_fallthru
      _
    %p204 = scmp.le.s32.totalorder 1, %s10
    %p205 = scmp.lt.s32.totalorder %s10, 3
    %p206 = pnand %p204, %p205
    %p207 = pneg %p206
    // Predicated region
    $region33: #{_lambda_.13} parent=5 // pred_check
      _
    $region34: #{_lambda_.13} parent=5 // pred_check_branch
      %209 = sbr.rel (%p206) target = $region36
    $region35: #{_lambda_.13} parent=5 // pred_region
      %s210 = ssub.s32 %s10, 1
      %s211 = smul.u32 2, %s19
      %s212 = smul.u32 4, %s20
      %p213 = scmp.lt.s32.totalorder %s211, 3
      %s214 = scalar_select %p213, %s211, 3
      %p215 = scmp.lt.s32.totalorder %s212, 3
      %s216 = scalar_select %p215, %s212, 3
      %s217 = smul.addr %s214, 4
      %s218 = sadd.s32 %s216, %s217
      %s219 = smul.addr %s218, 4
      %s220 = scalar_lea.vmem %s0, %s219
      %p221 = pneg %p50
      %p222 = pneg %p47
      %s223 = smul.u32 64, %s20
      %p224 = scmp.lt.s32.totalorder %s223, 63
      %s225 = scalar_select %p224, %s223, 63
      %s226 = smul.addr %s225, 4
      %s227 = scalar_lea.vmem %s1, %s226
      %p228 = pneg %p76
      %p229 = pneg %p73
      %p230 = pneg %p97
      %p231 = pneg %p94
      %s232 = smul.u32 2, %s19
      %p233 = scmp.lt.s32.totalorder %s232, 3
      %s234 = scalar_select %p233, %s232, 3
      %s235 = smul.addr %s234, 2
      %s236 = scalar_lea.vmem %s3, %s235
      %p237 = pneg %p123
      %p238 = pneg %p120
      %p239 = pneg %p149
      %p240 = pneg %p146
      %s241 = smul.u32 2, %s19
      %p242 = scmp.lt.s32.totalorder %s241, 3
      %s243 = scalar_select %p242, %s241, 3
      %s244 = smul.addr %s243, 4
      %s245 = scalar_lea.vmem %s4, %s244
      %s246 = smul.u32 2, %s19
      %s247 = smul.u32 4, %s20
      %p248 = scmp.lt.s32.totalorder %s246, 3
      %s249 = scalar_select %p248, %s246, 3
      %p250 = scmp.lt.s32.totalorder %s247, 3
      %s251 = scalar_select %p250, %s247, 3
      %s252 = smul.addr %s249, 4
      %s253 = sadd.s32 %s251, %s252
      %s254 = smul.addr %s253, 4
      %s255 = scalar_lea.vmem %s0, %s254
      %s256 = smul.u32 2, %s19
      %s257 = smul.u32 4, %s20
      %s258 = smul.u32 64, %s20
      %p259 = scmp.lt.s32.totalorder %s258, 63
      %s260 = scalar_select %p259, %s258, 63
      %s261 = smul.addr %s260, 4
      %s262 = scalar_lea.vmem %s1, %s261
      %s263 = smul.u32 64, %s20
      %s264 = smul.u32 2, %s19
      %p265 = scmp.lt.s32.totalorder %s264, 3
      %s266 = scalar_select %p265, %s264, 3
      %s267 = smul.addr %s266, 2
      %s268 = scalar_lea.vmem %s3, %s267
      %s269 = smul.u32 2, %s19
      %s270 = smul.u32 2, %s19
      %p271 = scmp.lt.s32.totalorder %s270, 3
      %s272 = scalar_select %p271, %s270, 3
      %s273 = smul.addr %s272, 4
      %s274 = scalar_lea.vmem %s4, %s273
      %s275 = smul.u32 2, %s19
      %p276 = scmp.eq.s32.totalorder %s20, 0
      // Predicated region
      $region37: #{_lambda_.13} parent=35 // pred_check
        %p277 = pneg %p276
      $region38: #{_lambda_.13} parent=35 // pred_check_branch
        %279 = sbr.rel (%p277) target = $region40
      $region39: #{_lambda_.13} parent=35 // pred_region
        %v280 = vld [vmem:[%s2] sm:$0x1]
        %v281 = vld [vmem:[%s268] sm:$0x3]
        %v282 = vunpack.c.l.bf16 %v281
        %v284 = vperm.slane %v280, 0
        %v286 = vadd.f32 %v282, %v284
        %vm287 = vcmask 60416
        %288 = vst.msk [vmem:[#allocation2] sm:$0xf] %vm287, %v286
        %v289 = vld [vmem:[%s268] sm:$0x3]
        %v290 = vunpack.c.l.bf16 %v289
        %v291 = vadd.f32 %v290, %v284
        %292 = vst.msk [vmem:[#allocation2 + $0x4] sm:$0xf] %vm287, %v291
        %s293 = scalar_lea.vmem %s268, 2
        %v294 = vld [vmem:[%s293] sm:$0x3]
        %v295 = vunpack.c.l.bf16 %v294
        %v296 = vadd.f32 %v295, %v284
        %297 = vst.msk [vmem:[#allocation2 + $0x8] sm:$0xf] %vm287, %v296
        %v298 = vld [vmem:[%s293] sm:$0x3]
        %v299 = vunpack.c.l.bf16 %v298
        %v300 = vadd.f32 %v299, %v284
        %301 = vst.msk [vmem:[#allocation2 + $0xc] sm:$0xf] %vm287, %v300
      $region40: #{_lambda_.13} parent=35 // pred_fallthru
        _
      %v302 = vld [vmem:[#allocation2] sm:$0xff]
      %v303 = vld [vmem:[#allocation2 + $0x8] sm:$0xff]
      %v304 = vld [vmem:[%s255] sm:$0xff]
      %v305 = vld [vmem:[%s255 + $0x8] sm:$0xff]
      %v306 = vld [vmem:[%s255 + $0x10] sm:$0xff]
      %v307 = vld [vmem:[%s255 + $0x18] sm:$0xff]
      %v308 = vld [vmem:[%s262] sm:$0xf]
      %v309 = vld [vmem:[%s262 + $0x4] sm:$0xf]
      %v310 = vld [vmem:[%s262 + $0x8] sm:$0xf]
      %v311 = vld [vmem:[%s262 + $0xc] sm:$0xf]
      %v312 = vld [vmem:[%s262 + $0x10] sm:$0xf]
      %v313 = vld [vmem:[%s262 + $0x14] sm:$0xf]
      %v314 = vld [vmem:[%s262 + $0x18] sm:$0xf]
      %v315 = vld [vmem:[%s262 + $0x1c] sm:$0xf]
      %v316 = vld [vmem:[%s262 + $0x20] sm:$0xf]
      %v317 = vld [vmem:[%s262 + $0x24] sm:$0xf]
      %v318 = vld [vmem:[%s262 + $0x28] sm:$0xf]
      %v319 = vld [vmem:[%s262 + $0x2c] sm:$0xf]
      %v320 = vld [vmem:[%s262 + $0x30] sm:$0xf]
      %v321 = vld [vmem:[%s262 + $0x34] sm:$0xf]
      %v322 = vld [vmem:[%s262 + $0x38] sm:$0xf]
      %v323 = vld [vmem:[%s262 + $0x3c] sm:$0xf]
      %v324 = vld [vmem:[%s262 + $0x40] sm:$0xf]
      %v325 = vld [vmem:[%s262 + $0x44] sm:$0xf]
      %v326 = vld [vmem:[%s262 + $0x48] sm:$0xf]
      %v327 = vld [vmem:[%s262 + $0x4c] sm:$0xf]
      %v328 = vld [vmem:[%s262 + $0x50] sm:$0xf]
      %v329 = vld [vmem:[%s262 + $0x54] sm:$0xf]
      %v330 = vld [vmem:[%s262 + $0x58] sm:$0xf]
      %v331 = vld [vmem:[%s262 + $0x5c] sm:$0xf]
      %v332 = vld [vmem:[%s262 + $0x60] sm:$0xf]
      %v333 = vld [vmem:[%s262 + $0x64] sm:$0xf]
      %v334 = vld [vmem:[%s262 + $0x68] sm:$0xf]
      %v335 = vld [vmem:[%s262 + $0x6c] sm:$0xf]
      %v336 = vld [vmem:[%s262 + $0x70] sm:$0xf]
      %v337 = vld [vmem:[%s262 + $0x74] sm:$0xf]
      %v338 = vld [vmem:[%s262 + $0x78] sm:$0xf]
      %v339 = vld [vmem:[%s262 + $0x7c] sm:$0xf]
      %v340 = vld [vmem:[%s262 + $0x80] sm:$0xf]
      %v341 = vld [vmem:[%s262 + $0x84] sm:$0xf]
      %v342 = vld [vmem:[%s262 + $0x88] sm:$0xf]
      %v343 = vld [vmem:[%s262 + $0x8c] sm:$0xf]
      %v344 = vld [vmem:[%s262 + $0x90] sm:$0xf]
      %v345 = vld [vmem:[%s262 + $0x94] sm:$0xf]
      %v346 = vld [vmem:[%s262 + $0x98] sm:$0xf]
      %v347 = vld [vmem:[%s262 + $0x9c] sm:$0xf]
      %v348 = vld [vmem:[%s262 + $0xa0] sm:$0xf]
      %v349 = vld [vmem:[%s262 + $0xa4] sm:$0xf]
      %v350 = vld [vmem:[%s262 + $0xa8] sm:$0xf]
      %v351 = vld [vmem:[%s262 + $0xac] sm:$0xf]
      %v352 = vld [vmem:[%s262 + $0xb0] sm:$0xf]
      %v353 = vld [vmem:[%s262 + $0xb4] sm:$0xf]
      %v354 = vld [vmem:[%s262 + $0xb8] sm:$0xf]
      %v355 = vld [vmem:[%s262 + $0xbc] sm:$0xf]
      %v356 = vld [vmem:[%s262 + $0xc0] sm:$0xf]
      %v357 = vld [vmem:[%s262 + $0xc4] sm:$0xf]
      %v358 = vld [vmem:[%s262 + $0xc8] sm:$0xf]
      %v359 = vld [vmem:[%s262 + $0xcc] sm:$0xf]
      %v360 = vld [vmem:[%s262 + $0xd0] sm:$0xf]
      %v361 = vld [vmem:[%s262 + $0xd4] sm:$0xf]
      %v362 = vld [vmem:[%s262 + $0xd8] sm:$0xf]
      %v363 = vld [vmem:[%s262 + $0xdc] sm:$0xf]
      %v364 = vld [vmem:[%s262 + $0xe0] sm:$0xf]
      %v365 = vld [vmem:[%s262 + $0xe4] sm:$0xf]
      %v366 = vld [vmem:[%s262 + $0xe8] sm:$0xf]
      %v367 = vld [vmem:[%s262 + $0xec] sm:$0xf]
      %v368 = vld [vmem:[%s262 + $0xf0] sm:$0xf]
      %v369 = vld [vmem:[%s262 + $0xf4] sm:$0xf]
      %v370 = vld [vmem:[%s262 + $0xf8] sm:$0xf]
      %v371 = vld [vmem:[%s262 + $0xfc] sm:$0xf]
      %v376 = vunpack.c.l.b16 %v304
      %v377 = vunpack.c.h.b16 %v304
      %v378 = vunpack.c.l.b16 %v305
      %v379 = vunpack.c.h.b16 %v305
      %v380 = vunpack.c.l.b16 %v306
      %v381 = vunpack.c.h.b16 %v306
      %v382 = vunpack.c.l.b16 %v307
      %v383 = vunpack.c.h.b16 %v307
      %v384 = vpack.c.b16 %v380, %v376
      %v385 = vpack.c.b16 %v381, %v377
      %v386 = vpack.c.b16 %v382, %v378
      %v387 = vpack.c.b16 %v383, %v379
      %v456 = vunpack.c.l.b16 %v308
      %v457 = vunpack.c.l.b16 %v309
      %v458 = vunpack.c.l.b16 %v310
      %v459 = vunpack.c.l.b16 %v311
      %v460 = vunpack.c.l.b16 %v312
      %v461 = vunpack.c.l.b16 %v313
      %v462 = vunpack.c.l.b16 %v314
      %v463 = vunpack.c.l.b16 %v315
      %v464 = vunpack.c.l.b16 %v316
      %v465 = vunpack.c.l.b16 %v317
      %v466 = vunpack.c.l.b16 %v318
      %v467 = vunpack.c.l.b16 %v319
      %v468 = vunpack.c.l.b16 %v320
      %v469 = vunpack.c.l.b16 %v321
      %v470 = vunpack.c.l.b16 %v322
      %v471 = vunpack.c.l.b16 %v323
      %v472 = vunpack.c.l.b16 %v324
      %v473 = vunpack.c.l.b16 %v325
      %v474 = vunpack.c.l.b16 %v326
      %v475 = vunpack.c.l.b16 %v327
      %v476 = vunpack.c.l.b16 %v328
      %v477 = vunpack.c.l.b16 %v329
      %v478 = vunpack.c.l.b16 %v330
      %v479 = vunpack.c.l.b16 %v331
      %v480 = vunpack.c.l.b16 %v332
      %v481 = vunpack.c.l.b16 %v333
      %v482 = vunpack.c.l.b16 %v334
      %v483 = vunpack.c.l.b16 %v335
      %v484 = vunpack.c.l.b16 %v336
      %v485 = vunpack.c.l.b16 %v337
      %v486 = vunpack.c.l.b16 %v338
      %v487 = vunpack.c.l.b16 %v339
      %v488 = vunpack.c.l.b16 %v340
      %v489 = vunpack.c.l.b16 %v341
      %v490 = vunpack.c.l.b16 %v342
      %v491 = vunpack.c.l.b16 %v343
      %v492 = vunpack.c.l.b16 %v344
      %v493 = vunpack.c.l.b16 %v345
      %v494 = vunpack.c.l.b16 %v346
      %v495 = vunpack.c.l.b16 %v347
      %v496 = vunpack.c.l.b16 %v348
      %v497 = vunpack.c.l.b16 %v349
      %v498 = vunpack.c.l.b16 %v350
      %v499 = vunpack.c.l.b16 %v351
      %v500 = vunpack.c.l.b16 %v352
      %v501 = vunpack.c.l.b16 %v353
      %v502 = vunpack.c.l.b16 %v354
      %v503 = vunpack.c.l.b16 %v355
      %v504 = vunpack.c.l.b16 %v356
      %v505 = vunpack.c.l.b16 %v357
      %v506 = vunpack.c.l.b16 %v358
      %v507 = vunpack.c.l.b16 %v359
      %v508 = vunpack.c.l.b16 %v360
      %v509 = vunpack.c.l.b16 %v361
      %v510 = vunpack.c.l.b16 %v362
      %v511 = vunpack.c.l.b16 %v363
      %v512 = vunpack.c.l.b16 %v364
      %v513 = vunpack.c.l.b16 %v365
      %v514 = vunpack.c.l.b16 %v366
      %v515 = vunpack.c.l.b16 %v367
      %v516 = vunpack.c.l.b16 %v368
      %v517 = vunpack.c.l.b16 %v369
      %v518 = vunpack.c.l.b16 %v370
      %v519 = vunpack.c.l.b16 %v371
      %v520 = vpack.c.b16 %v457, %v456
      %v521 = vpack.c.b16 %v459, %v458
      %v522 = vpack.c.b16 %v461, %v460
      %v523 = vpack.c.b16 %v463, %v462
      %v524 = vpack.c.b16 %v465, %v464
      %v525 = vpack.c.b16 %v467, %v466
      %v526 = vpack.c.b16 %v469, %v468
      %v527 = vpack.c.b16 %v471, %v470
      %v528 = vpack.c.b16 %v473, %v472
      %v529 = vpack.c.b16 %v475, %v474
      %v530 = vpack.c.b16 %v477, %v476
      %v531 = vpack.c.b16 %v479, %v478
      %v532 = vpack.c.b16 %v481, %v480
      %v533 = vpack.c.b16 %v483, %v482
      %v534 = vpack.c.b16 %v485, %v484
      %v535 = vpack.c.b16 %v487, %v486
      %v536 = vpack.c.b16 %v489, %v488
      %v537 = vpack.c.b16 %v491, %v490
      %v538 = vpack.c.b16 %v493, %v492
      %v539 = vpack.c.b16 %v495, %v494
      %v540 = vpack.c.b16 %v497, %v496
      %v541 = vpack.c.b16 %v499, %v498
      %v542 = vpack.c.b16 %v501, %v500
      %v543 = vpack.c.b16 %v503, %v502
      %v544 = vpack.c.b16 %v505, %v504
      %v545 = vpack.c.b16 %v507, %v506
      %v546 = vpack.c.b16 %v509, %v508
      %v547 = vpack.c.b16 %v511, %v510
      %v548 = vpack.c.b16 %v513, %v512
      %v549 = vpack.c.b16 %v515, %v514
      %v550 = vpack.c.b16 %v517, %v516
      %v551 = vpack.c.b16 %v519, %v518
      %584 = vmatpush.bf16.msra.mxu0 %v527
      %585 = vmatpush.bf16.msra.mxu0 %v526
      %586 = vmatpush.bf16.msra.mxu0 %v525
      %587 = vmatpush.bf16.msra.mxu0 %v524
      %588 = vmatpush.bf16.msra.mxu0 %v523
      %589 = vmatpush.bf16.msra.mxu0 %v522
      %590 = vmatpush.bf16.msra.mxu0 %v521
      %591 = vmatpush.bf16.msra.mxu0 %v520
      %592 = vmatmul.bf16.gmra.mxu0 %v384
      %v593 = vpop.f32.mrf.mxu0
      %v594 = vadd.f32 0.0, %v593
      %v595 = vpop.f32.mrf.mxu0
      %v596 = vadd.f32 0.0, %v595
      %597 = vdwg.mxu0
      %598 = vmatpush.bf16.msra.mxu0 %v535
      %599 = vmatpush.bf16.msra.mxu0 %v534
      %600 = vmatpush.bf16.msra.mxu0 %v533
      %601 = vmatpush.bf16.msra.mxu0 %v532
      %602 = vmatpush.bf16.msra.mxu0 %v531
      %603 = vmatpush.bf16.msra.mxu0 %v530
      %604 = vmatpush.bf16.msra.mxu0 %v529
      %605 = vmatpush.bf16.msra.mxu0 %v528
      %606 = vmatmul.bf16.gmra.mxu0 %v385
      %v607 = vpop.f32.mrf.mxu0
      %v608 = vadd.f32 %v594, %v607
      %v609 = vpop.f32.mrf.mxu0
      %v610 = vadd.f32 %v596, %v609
      %611 = vdwg.mxu0
      %612 = vmatpush.bf16.msra.mxu0 %v543
      %613 = vmatpush.bf16.msra.mxu0 %v542
      %614 = vmatpush.bf16.msra.mxu0 %v541
      %615 = vmatpush.bf16.msra.mxu0 %v540
      %616 = vmatpush.bf16.msra.mxu0 %v539
      %617 = vmatpush.bf16.msra.mxu0 %v538
      %618 = vmatpush.bf16.msra.mxu0 %v537
      %619 = vmatpush.bf16.msra.mxu0 %v536
      %620 = vmatmul.bf16.gmra.mxu0 %v386
      %v621 = vpop.f32.mrf.mxu0
      %v622 = vadd.f32 %v608, %v621
      %v623 = vpop.f32.mrf.mxu0
      %v624 = vadd.f32 %v610, %v623
      %625 = vdwg.mxu0
      %626 = vmatpush.bf16.msra.mxu0 %v551
      %627 = vmatpush.bf16.msra.mxu0 %v550
      %628 = vmatpush.bf16.msra.mxu0 %v549
      %629 = vmatpush.bf16.msra.mxu0 %v548
      %630 = vmatpush.bf16.msra.mxu0 %v547
      %631 = vmatpush.bf16.msra.mxu0 %v546
      %632 = vmatpush.bf16.msra.mxu0 %v545
      %633 = vmatpush.bf16.msra.mxu0 %v544
      %634 = vmatmul.bf16.gmra.mxu0 %v387
      %v635 = vpop.f32.mrf.mxu0
      %v636 = vadd.f32 %v622, %v635
      %v637 = vpop.f32.mrf.mxu0
      %v638 = vadd.f32 %v624, %v637
      %639 = vdwg.mxu0
      %v640 = vadd.f32 %v302, %v636
      %v641 = vadd.f32 %v303, %v638
      %vm642 = vcmask 64512
      %643 = vst.msk [vmem:[#allocation2] sm:$0xff] %vm642, %v640
      %644 = vst.msk [vmem:[#allocation2 + $0x8] sm:$0xff] %vm642, %v641
      // Predicated region
      $region41: #{_lambda_.13} parent=35 // pred_check
        %p645 = pneg %p276
      $region42: #{_lambda_.13} parent=35 // pred_check_branch
        %647 = sbr.rel (%p645) target = $region44
      $region43: #{_lambda_.13} parent=35 // pred_region
        %v648 = vld [vmem:[#allocation2] sm:$0xff]
        %v649 = vld [vmem:[#allocation2 + $0x8] sm:$0xff]
        %v650 = vpack.c.bf16 %v648, %v648
        %v651 = vpack.c.bf16 %v649, %v649
        %vm652 = vcmask 60416
        %653 = vst.msk [vmem:[%s274] sm:$0xf] %vm652, %v650
        %654 = vst.msk [vmem:[%s274 + $0x4] sm:$0xf] %vm652, %v651
      $region44: #{_lambda_.13} parent=35 // pred_fallthru
        _
      %s655 = smul.u32 2, %s19
      %p656 = scmp.lt.s32.totalorder %s655, 3
      %s657 = scalar_select %p656, %s655, 3
      %s658 = smul.addr %s657, 4
      %s659 = scalar_lea.vmem %s4, %s658
      // Predicated region
      $region45: #{_lambda_.13} parent=35 // pred_check
        %p660 = pneg %p146
      $region46: #{_lambda_.13} parent=35 // pred_check_branch
        %662 = sbr.rel (%p660) target = $region48
      $region47: #{_lambda_.13} parent=35 // pred_region
        %s663 = smul.u32 2, %s19
      $region48: #{_lambda_.13} parent=35 // pred_fallthru
        _
    $region36: #{_lambda_.13} parent=5 // pred_fallthru
      _
    %p664 = scmp.le.s32.totalorder 2, %s10
    // Predicated region
    $region49: #{_lambda_.13} parent=5 // pred_check
      %p665 = pneg %p664
    $region50: #{_lambda_.13} parent=5 // pred_check_branch
      %667 = sbr.rel (%p665) target = $region52
    $region51: #{_lambda_.13} parent=5 // pred_region
      %s668 = ssub.s32 %s10, 2
      // Predicated region
      $region53: #{_lambda_.13} parent=51 // pred_check
        %p669 = pneg %p152
      $region54: #{_lambda_.13} parent=51 // pred_check_branch
        %671 = sbr.rel (%p669) target = $region56
      $region55: #{_lambda_.13} parent=51 // pred_region
        %s672 = smul.u32 2, %s21
        %p673 = scmp.lt.s32.totalorder %s672, 3
        %s674 = scalar_select %p673, %s672, 3
        %s675 = smul.addr %s674, 4
        %s676 = scalar_lea.vmem %s4, %s675
      $region56: #{_lambda_.13} parent=51 // pred_fallthru
        _
    $region52: #{_lambda_.13} parent=5 // pred_fallthru
      _
  $region6: #{_lambda_.13} parent=0 // loop_footer
    %s14 = sadd.s32 1, %s10
  $region7: #{_lambda_.13} parent=0 // loop_footer_branch
    %9 = sbr.rel target = $region3
  $region8: #{_lambda_.13} parent=0 // loop_exit
    _

// kernel: _lambda_.14
$region0: #{_lambda_.14}
  #allocation0 [shape = 'u32[]', space=smem, size = 0x4, offset = 0x4, fixed_abs, tag = 'smem constant byte address 0x4 - core index']
  #allocation1 [shape = 'u32[72,128]{1,0:T(1,128)}', space=vmem, size = 0x9000, scoped, tag = 'internal scratch']
  #allocation2 [shape = 'f32[64,8]{1,0:T(8,128)}', space=vmem, size = 0x8000, scoped, tag = 'scratch operand']
  %s0 = inlined_call_operand.vmem [shape: bf16[128,256], index: 0, kind: input, shape index: {}]
  %s1 = inlined_call_operand.vmem [shape: bf16[256,8], index: 1, kind: input, shape index: {}]
  %s2 = inlined_call_operand.vmem [shape: f32[1,8], index: 2, kind: input, shape index: {}]
  %s3 = inlined_call_operand.vmem [shape: bf16[8,8,8], index: 3, kind: input, shape index: {}]
  %s4 = inlined_call_operand.vmem [shape: bf16[128,8], index: 4, kind: output, shape index: {}]
  %s5 = sld [smem:[#allocation0]]
  $region57: #{_lambda_.14} parent=0
    _
  %s7 = ssub.s32 1, %s5
  %s8 = scalar_select 0, %s7, %s5
  loop: start=0, step=1, limit=4
  $region2: #{_lambda_.14} parent=0 // loop_pre_header
    _
  $region3: #{_lambda_.14} parent=0 // loop_header
    %s10 = sphi 0, %s14
    %p11 = scmp.ge.s32.totalorder %s10, 4
    %s17 = sphi 0, %s29
    %s18 = sphi 0, %s25
    %s19 = sphi 0, %s17
    %s20 = sphi 0, %s18
    %s21 = sphi 0, %s19
    %s22 = sphi 0, %s20
    %s34 = sphi 0, %s36
    %s37 = sphi 0, %s34
    %s38 = sphi 0, %s37
    %s54 = sphi 0, %s38
    %s60 = sphi 0, %s62
    %s63 = sphi 0, %s60
    %s64 = sphi 0, %s63
    %s80 = sphi 0, %s64
    %s84 = sphi 0, %s84
    %s86 = sphi 0, %s84
    %s87 = sphi 0, %s86
    %s101 = sphi 0, %s87
    %s107 = sphi 0, %s109
    %s110 = sphi 0, %s107
    %s111 = sphi 0, %s110
    %s127 = sphi 0, %s111
    %s133 = sphi 0, %s135
    %s136 = sphi 0, %s133
    %s137 = sphi 0, %s136
    %s153 = sphi 0, %s137
  $region4: #{_lambda_.14} parent=0 // loop_header_branch
    %13 = sbr.rel (%p11) target = $region8
  $region5: #{_lambda_.14} parent=0 // loop_body
    %s15 = ssub.s32 %s10, 1
    %s16 = ssub.s32 %s10, 2
    %s23 = sadd.s32 1, %s18
    %p24 = scmp.ge.s32.totalorder %s23, 1
    %s25 = scalar_select %p24, 0, %s23
    %s26 = sadd.s32 1, %s17
    %s27 = scalar_select %p24, %s26, %s17
    %p28 = scmp.ge.s32.totalorder %s27, 2
    %s29 = scalar_select %p28, 0, %s27
    %s30 = ssub.s32 %s17, %s29
    %s31 = ssub.s32 %s18, %s25
    %s32 = sor.u32 %s30, %s31
    %p33 = scmp.eq.s32.totalorder %s32, 0
    %s35 = sadd.s32 %s34, 1
    %s36 = scalar_select %p33, %s34, %s35
    %p39 = pneg %p33
    %p40 = scmp.eq.s32.totalorder %s10, 1
    %p41 = por %p39, %p40
    %p42 = scmp.ne.s32.totalorder %s34, %s37
    %p43 = scmp.eq.s32.totalorder %s10, 0
    %p44 = por %p42, %p43
    %p45 = scmp.ne.s32.totalorder %s34, %s37
    %p46 = scmp.eq.s32.totalorder %s15, 1
    %p47 = por %p45, %p46
    %p48 = scmp.ne.s32.totalorder %s37, %s38
    %p49 = scmp.eq.s32.totalorder %s15, 0
    %p50 = por %p48, %p49
    %p51 = scmp.ne.s32.totalorder %s37, %s38
    %p52 = scmp.eq.s32.totalorder %s16, 1
    %p53 = por %p51, %p52
    %p55 = scmp.ne.s32.totalorder %s38, %s54
    %p56 = scmp.eq.s32.totalorder %s16, 0
    %p57 = por %p55, %p56
    %s58 = ssub.s32 %s18, %s25
    %p59 = scmp.eq.s32.totalorder %s58, 0
    %s61 = sadd.s32 %s60, 1
    %s62 = scalar_select %p59, %s60, %s61
    %p65 = pneg %p59
    %p66 = scmp.eq.s32.totalorder %s10, 1
    %p67 = por %p65, %p66
    %p68 = scmp.ne.s32.totalorder %s60, %s63
    %p69 = scmp.eq.s32.totalorder %s10, 0
    %p70 = por %p68, %p69
    %p71 = scmp.ne.s32.totalorder %s60, %s63
    %p72 = scmp.eq.s32.totalorder %s15, 1
    %p73 = por %p71, %p72
    %p74 = scmp.ne.s32.totalorder %s63, %s64
    %p75 = scmp.eq.s32.totalorder %s15, 0
    %p76 = por %p74, %p75
    %p77 = scmp.ne.s32.totalorder %s63, %s64
    %p78 = scmp.eq.s32.totalorder %s16, 1
    %p79 = por %p77, %p78
    %p81 = scmp.ne.s32.totalorder %s64, %s80
    %p82 = scmp.eq.s32.totalorder %s16, 0
    %p83 = por %p81, %p82
    %s85 = sadd.s32 %s84, 1
    %p88 = scmp.eq.s32.totalorder %s10, 1
    %p89 = scmp.ne.s32.totalorder %s84, %s86
    %p90 = scmp.eq.s32.totalorder %s10, 0
    %p91 = por %p89, %p90
    %p92 = scmp.ne.s32.totalorder %s84, %s86
    %p93 = scmp.eq.s32.totalorder %s15, 1
    %p94 = por %p92, %p93
    %p95 = scmp.ne.s32.totalorder %s86, %s87
    %p96 = scmp.eq.s32.totalorder %s15, 0
    %p97 = por %p95, %p96
    %p98 = scmp.ne.s32.totalorder %s86, %s87
    %p99 = scmp.eq.s32.totalorder %s16, 1
    %p100 = por %p98, %p99
    %p102 = scmp.ne.s32.totalorder %s87, %s101
    %p103 = scmp.eq.s32.totalorder %s16, 0
    %p104 = por %p102, %p103
    %s105 = ssub.s32 %s17, %s29
    %p106 = scmp.eq.s32.totalorder %s105, 0
    %s108 = sadd.s32 %s107, 1
    %s109 = scalar_select %p106, %s107, %s108
    %p112 = pneg %p106
    %p113 = scmp.eq.s32.totalorder %s10, 1
    %p114 = por %p112, %p113
    %p115 = scmp.ne.s32.totalorder %s107, %s110
    %p116 = scmp.eq.s32.totalorder %s10, 0
    %p117 = por %p115, %p116
    %p118 = scmp.ne.s32.totalorder %s107, %s110
    %p119 = scmp.eq.s32.totalorder %s15, 1
    %p120 = por %p118, %p119
    %p121 = scmp.ne.s32.totalorder %s110, %s111
    %p122 = scmp.eq.s32.totalorder %s15, 0
    %p123 = por %p121, %p122
    %p124 = scmp.ne.s32.totalorder %s110, %s111
    %p125 = scmp.eq.s32.totalorder %s16, 1
    %p126 = por %p124, %p125
    %p128 = scmp.ne.s32.totalorder %s111, %s127
    %p129 = scmp.eq.s32.totalorder %s16, 0
    %p130 = por %p128, %p129
    %s131 = ssub.s32 %s17, %s29
    %p132 = scmp.eq.s32.totalorder %s131, 0
    %s134 = sadd.s32 %s133, 1
    %s135 = scalar_select %p132, %s133, %s134
    %p138 = pneg %p132
    %p139 = scmp.eq.s32.totalorder %s10, 1
    %p140 = por %p138, %p139
    %p141 = scmp.ne.s32.totalorder %s133, %s136
    %p142 = scmp.eq.s32.totalorder %s10, 0
    %p143 = por %p141, %p142
    %p144 = scmp.ne.s32.totalorder %s133, %s136
    %p145 = scmp.eq.s32.totalorder %s15, 1
    %p146 = por %p144, %p145
    %p147 = scmp.ne.s32.totalorder %s136, %s137
    %p148 = scmp.eq.s32.totalorder %s15, 0
    %p149 = por %p147, %p148
    %p150 = scmp.ne.s32.totalorder %s136, %s137
    %p151 = scmp.eq.s32.totalorder %s16, 1
    %p152 = por %p150, %p151
    %p154 = scmp.ne.s32.totalorder %s137, %s153
    %p155 = scmp.eq.s32.totalorder %s16, 0
    %p156 = por %p154, %p155
    %p157 = scmp.le.s32.totalorder 1, %s10
    %p158 = scmp.lt.s32.totalorder %s10, 3
    %p159 = pnand %p157, %p158
    %p160 = pneg %p159
    // Predicated region
    $region9: #{_lambda_.14} parent=5 // pred_check
      _
    $region10: #{_lambda_.14} parent=5 // pred_check_branch
      %162 = sbr.rel (%p159) target = $region12
    $region11: #{_lambda_.14} parent=5 // pred_region
      %s163 = ssub.s32 %s10, 1
      // Predicated region
      $region13: #{_lambda_.14} parent=11 // pred_check
        %p164 = pneg %p76
      $region14: #{_lambda_.14} parent=11 // pred_check_branch
        %166 = sbr.rel (%p164) target = $region16
      $region15: #{_lambda_.14} parent=11 // pred_region
        %s167 = smul.u32 32, %s20
        %p168 = scmp.lt.s32.totalorder %s167, 31
        %s169 = scalar_select %p168, %s167, 31
        %s170 = smul.addr %s169, 4
        %s171 = scalar_lea.vmem %s1, %s170
        %s172 = smul.u32 32, %s20
      $region16: #{_lambda_.14} parent=11 // pred_fallthru
        _
      // Predicated region
      $region17: #{_lambda_.14} parent=11 // pred_check
        %p173 = pneg %p97
      $region18: #{_lambda_.14} parent=11 // pred_check_branch
        %175 = sbr.rel (%p173) target = $region20
      $region19: #{_lambda_.14} parent=11 // pred_region
        _
      $region20: #{_lambda_.14} parent=11 // pred_fallthru
        _
    $region12: #{_lambda_.14} parent=5 // pred_fallthru
      _
    %p176 = scmp.lt.s32.totalorder %s10, 2
    // Predicated region
    $region21: #{_lambda_.14} parent=5 // pred_check
      %p177 = pneg %p176
    $region22: #{_lambda_.14} parent=5 // pred_check_branch
      %179 = sbr.rel (%p177) target = $region24
    $region23: #{_lambda_.14} parent=5 // pred_region
      // Predicated region
      $region25: #{_lambda_.14} parent=23 // pred_check
        %p180 = pneg %p44
      $region26: #{_lambda_.14} parent=23 // pred_check_branch
        %182 = sbr.rel (%p180) target = $region28
      $region27: #{_lambda_.14} parent=23 // pred_region
        %s183 = smul.u32 8, %s17
        %s184 = smul.u32 2, %s18
        %p185 = scmp.lt.s32.totalorder %s183, 15
        %s186 = scalar_select %p185, %s183, 15
        %p187 = scmp.lt.s32.totalorder %s184, 1
        %s188 = scalar_select %p187, %s184, 1
        %s189 = smul.addr %s186, 2
        %s190 = sadd.s32 %s188, %s189
        %s191 = smul.addr %s190, 4
        %s192 = scalar_lea.vmem %s0, %s191
        %s193 = smul.u32 8, %s17
        %s194 = smul.u32 2, %s18
      $region28: #{_lambda_.14} parent=23 // pred_fallthru
        _
      // Predicated region
      $region29: #{_lambda_.14} parent=23 // pred_check
        %p195 = pneg %p117
      $region30: #{_lambda_.14} parent=23 // pred_check_branch
        %197 = sbr.rel (%p195) target = $region32
      $region31: #{_lambda_.14} parent=23 // pred_region
        %s198 = smul.u32 4, %s17
        %p199 = scmp.lt.s32.totalorder %s198, 7
        %s200 = scalar_select %p199, %s198, 7
        %s201 = smul.addr %s200, 4
        %s202 = scalar_lea.vmem %s3, %s201
        %s203 = smul.u32 4, %s17
      $region32: #{_lambda_.14} parent=23 // pred_fallthru
        _
    $region24: #{_lambda_.14} parent=5 // pred_fallthru
      _
    %p204 = scmp.le.s32.totalorder 1, %s10
    %p205 = scmp.lt.s32.totalorder %s10, 3
    %p206 = pnand %p204, %p205
    %p207 = pneg %p206
    // Predicated region
    $region33: #{_lambda_.14} parent=5 // pred_check
      _
    $region34: #{_lambda_.14} parent=5 // pred_check_branch
      %209 = sbr.rel (%p206) target = $region36
    $region35: #{_lambda_.14} parent=5 // pred_region
      %s210 = ssub.s32 %s10, 1
      %s211 = smul.u32 8, %s19
      %s212 = smul.u32 2, %s20
      %p213 = scmp.lt.s32.totalorder %s211, 15
      %s214 = scalar_select %p213, %s211, 15
      %p215 = scmp.lt.s32.totalorder %s212, 1
      %s216 = scalar_select %p215, %s212, 1
      %s217 = smul.addr %s214, 2
      %s218 = sadd.s32 %s216, %s217
      %s219 = smul.addr %s218, 4
      %s220 = scalar_lea.vmem %s0, %s219
      %p221 = pneg %p50
      %p222 = pneg %p47
      %s223 = smul.u32 32, %s20
      %p224 = scmp.lt.s32.totalorder %s223, 31
      %s225 = scalar_select %p224, %s223, 31
      %s226 = smul.addr %s225, 4
      %s227 = scalar_lea.vmem %s1, %s226
      %p228 = pneg %p76
      %p229 = pneg %p73
      %p230 = pneg %p97
      %p231 = pneg %p94
      %s232 = smul.u32 4, %s19
      %p233 = scmp.lt.s32.totalorder %s232, 7
      %s234 = scalar_select %p233, %s232, 7
      %s235 = smul.addr %s234, 4
      %s236 = scalar_lea.vmem %s3, %s235
      %p237 = pneg %p123
      %p238 = pneg %p120
      %p239 = pneg %p149
      %p240 = pneg %p146
      %s241 = smul.u32 8, %s19
      %p242 = scmp.lt.s32.totalorder %s241, 15
      %s243 = scalar_select %p242, %s241, 15
      %s244 = smul.addr %s243, 4
      %s245 = scalar_lea.vmem %s4, %s244
      %s246 = smul.u32 8, %s19
      %s247 = smul.u32 2, %s20
      %p248 = scmp.lt.s32.totalorder %s246, 15
      %s249 = scalar_select %p248, %s246, 15
      %p250 = scmp.lt.s32.totalorder %s247, 1
      %s251 = scalar_select %p250, %s247, 1
      %s252 = smul.addr %s249, 2
      %s253 = sadd.s32 %s251, %s252
      %s254 = smul.addr %s253, 4
      %s255 = scalar_lea.vmem %s0, %s254
      %s256 = smul.u32 8, %s19
      %s257 = smul.u32 2, %s20
      %s258 = smul.u32 32, %s20
      %p259 = scmp.lt.s32.totalorder %s258, 31
      %s260 = scalar_select %p259, %s258, 31
      %s261 = smul.addr %s260, 4
      %s262 = scalar_lea.vmem %s1, %s261
      %s263 = smul.u32 32, %s20
      %s264 = smul.u32 4, %s19
      %p265 = scmp.lt.s32.totalorder %s264, 7
      %s266 = scalar_select %p265, %s264, 7
      %s267 = smul.addr %s266, 4
      %s268 = scalar_lea.vmem %s3, %s267
      %s269 = smul.u32 4, %s19
      %s270 = smul.u32 8, %s19
      %p271 = scmp.lt.s32.totalorder %s270, 15
      %s272 = scalar_select %p271, %s270, 15
      %s273 = smul.addr %s272, 4
      %s274 = scalar_lea.vmem %s4, %s273
      %s275 = smul.u32 8, %s19
      %p276 = scmp.eq.s32.totalorder %s20, 0
      // Predicated region
      $region37: #{_lambda_.14} parent=35 // pred_check
        %p277 = pneg %p276
      $region38: #{_lambda_.14} parent=35 // pred_check_branch
        %279 = sbr.rel (%p277) target = $region40
      $region39: #{_lambda_.14} parent=35 // pred_region
        %v280 = vld [vmem:[%s2] sm:$0x1]
        %v281 = vld [vmem:[%s268] sm:$0xf]
        %v282 = vunpack.c.l.bf16 %v281
        %v284 = vperm.slane %v280, 0
        %v286 = vadd.f32 %v282, %v284
        %vm287 = vcmask 64512
        %288 = vst.msk [vmem:[#allocation2] sm:$0xff] %vm287, %v286
        %v289 = vld [vmem:[%s268] sm:$0xf]
        %v290 = vunpack.c.l.bf16 %v289
        %v291 = vadd.f32 %v290, %v284
        %292 = vst.msk [vmem:[#allocation2 + $0x8] sm:$0xff] %vm287, %v291
        %s293 = scalar_lea.vmem %s268, 4
        %v294 = vld [vmem:[%s293] sm:$0xf]
        %v295 = vunpack.c.l.bf16 %v294
        %v296 = vadd.f32 %v295, %v284
        %297 = vst.msk [vmem:[#allocation2 + $0x10] sm:$0xff] %vm287, %v296
        %v298 = vld [vmem:[%s293] sm:$0xf]
        %v299 = vunpack.c.l.bf16 %v298
        %v300 = vadd.f32 %v299, %v284
        %301 = vst.msk [vmem:[#allocation2 + $0x18] sm:$0xff] %vm287, %v300
        %s302 = scalar_lea.vmem %s268, 8
        %v303 = vld [vmem:[%s302] sm:$0xf]
        %v304 = vunpack.c.l.bf16 %v303
        %v305 = vadd.f32 %v304, %v284
        %306 = vst.msk [vmem:[#allocation2 + $0x20] sm:$0xff] %vm287, %v305
        %v307 = vld [vmem:[%s302] sm:$0xf]
        %v308 = vunpack.c.l.bf16 %v307
        %v309 = vadd.f32 %v308, %v284
        %310 = vst.msk [vmem:[#allocation2 + $0x28] sm:$0xff] %vm287, %v309
        %s311 = scalar_lea.vmem %s268, 12
        %v312 = vld [vmem:[%s311] sm:$0xf]
        %v313 = vunpack.c.l.bf16 %v312
        %v314 = vadd.f32 %v313, %v284
        %315 = vst.msk [vmem:[#allocation2 + $0x30] sm:$0xff] %vm287, %v314
        %v316 = vld [vmem:[%s311] sm:$0xf]
        %v317 = vunpack.c.l.bf16 %v316
        %v318 = vadd.f32 %v317, %v284
        %319 = vst.msk [vmem:[#allocation2 + $0x38] sm:$0xff] %vm287, %v318
      $region40: #{_lambda_.14} parent=35 // pred_fallthru
        _
      %v320 = vld [vmem:[#allocation2] sm:$0xff]
      %v321 = vld [vmem:[#allocation2 + $0x8] sm:$0xff]
      %v322 = vld [vmem:[#allocation2 + $0x10] sm:$0xff]
      %v323 = vld [vmem:[#allocation2 + $0x18] sm:$0xff]
      %v324 = vld [vmem:[#allocation2 + $0x20] sm:$0xff]
      %v325 = vld [vmem:[#allocation2 + $0x28] sm:$0xff]
      %v326 = vld [vmem:[#allocation2 + $0x30] sm:$0xff]
      %v327 = vld [vmem:[#allocation2 + $0x38] sm:$0xff]
      %v328 = vld [vmem:[%s255] sm:$0xff]
      %v329 = vld [vmem:[%s255 + $0x8] sm:$0xff]
      %v330 = vld [vmem:[%s255 + $0x10] sm:$0xff]
      %v331 = vld [vmem:[%s255 + $0x18] sm:$0xff]
      %v332 = vld [vmem:[%s255 + $0x20] sm:$0xff]
      %v333 = vld [vmem:[%s255 + $0x28] sm:$0xff]
      %v334 = vld [vmem:[%s255 + $0x30] sm:$0xff]
      %v335 = vld [vmem:[%s255 + $0x38] sm:$0xff]
      %v336 = vld [vmem:[%s262] sm:$0xf]
      %v337 = vld [vmem:[%s262 + $0x4] sm:$0xf]
      %v338 = vld [vmem:[%s262 + $0x8] sm:$0xf]
      %v339 = vld [vmem:[%s262 + $0xc] sm:$0xf]
      %v340 = vld [vmem:[%s262 + $0x10] sm:$0xf]
      %v341 = vld [vmem:[%s262 + $0x14] sm:$0xf]
      %v342 = vld [vmem:[%s262 + $0x18] sm:$0xf]
      %v343 = vld [vmem:[%s262 + $0x1c] sm:$0xf]
      %v344 = vld [vmem:[%s262 + $0x20] sm:$0xf]
      %v345 = vld [vmem:[%s262 + $0x24] sm:$0xf]
      %v346 = vld [vmem:[%s262 + $0x28] sm:$0xf]
      %v347 = vld [vmem:[%s262 + $0x2c] sm:$0xf]
      %v348 = vld [vmem:[%s262 + $0x30] sm:$0xf]
      %v349 = vld [vmem:[%s262 + $0x34] sm:$0xf]
      %v350 = vld [vmem:[%s262 + $0x38] sm:$0xf]
      %v351 = vld [vmem:[%s262 + $0x3c] sm:$0xf]
      %v352 = vld [vmem:[%s262 + $0x40] sm:$0xf]
      %v353 = vld [vmem:[%s262 + $0x44] sm:$0xf]
      %v354 = vld [vmem:[%s262 + $0x48] sm:$0xf]
      %v355 = vld [vmem:[%s262 + $0x4c] sm:$0xf]
      %v356 = vld [vmem:[%s262 + $0x50] sm:$0xf]
      %v357 = vld [vmem:[%s262 + $0x54] sm:$0xf]
      %v358 = vld [vmem:[%s262 + $0x58] sm:$0xf]
      %v359 = vld [vmem:[%s262 + $0x5c] sm:$0xf]
      %v360 = vld [vmem:[%s262 + $0x60] sm:$0xf]
      %v361 = vld [vmem:[%s262 + $0x64] sm:$0xf]
      %v362 = vld [vmem:[%s262 + $0x68] sm:$0xf]
      %v363 = vld [vmem:[%s262 + $0x6c] sm:$0xf]
      %v364 = vld [vmem:[%s262 + $0x70] sm:$0xf]
      %v365 = vld [vmem:[%s262 + $0x74] sm:$0xf]
      %v366 = vld [vmem:[%s262 + $0x78] sm:$0xf]
      %v367 = vld [vmem:[%s262 + $0x7c] sm:$0xf]
      %v376 = vunpack.c.l.b16 %v328
      %v377 = vunpack.c.h.b16 %v328
      %v378 = vunpack.c.l.b16 %v329
      %v379 = vunpack.c.h.b16 %v329
      %v380 = vunpack.c.l.b16 %v330
      %v381 = vunpack.c.h.b16 %v330
      %v382 = vunpack.c.l.b16 %v331
      %v383 = vunpack.c.h.b16 %v331
      %v384 = vunpack.c.l.b16 %v332
      %v385 = vunpack.c.h.b16 %v332
      %v386 = vunpack.c.l.b16 %v333
      %v387 = vunpack.c.h.b16 %v333
      %v388 = vunpack.c.l.b16 %v334
      %v389 = vunpack.c.h.b16 %v334
      %v390 = vunpack.c.l.b16 %v335
      %v391 = vunpack.c.h.b16 %v335
      %v392 = vpack.c.b16 %v378, %v376
      %v393 = vpack.c.b16 %v379, %v377
      %v394 = vpack.c.b16 %v382, %v380
      %v395 = vpack.c.b16 %v383, %v381
      %v396 = vpack.c.b16 %v386, %v384
      %v397 = vpack.c.b16 %v387, %v385
      %v398 = vpack.c.b16 %v390, %v388
      %v399 = vpack.c.b16 %v391, %v389
      %v440 = vunpack.c.l.b16 %v336
      %v441 = vunpack.c.l.b16 %v337
      %v442 = vunpack.c.l.b16 %v338
      %v443 = vunpack.c.l.b16 %v339
      %v444 = vunpack.c.l.b16 %v340
      %v445 = vunpack.c.l.b16 %v341
      %v446 = vunpack.c.l.b16 %v342
      %v447 = vunpack.c.l.b16 %v343
      %v448 = vunpack.c.l.b16 %v344
      %v449 = vunpack.c.l.b16 %v345
      %v450 = vunpack.c.l.b16 %v346
      %v451 = vunpack.c.l.b16 %v347
      %v452 = vunpack.c.l.b16 %v348
      %v453 = vunpack.c.l.b16 %v349
      %v454 = vunpack.c.l.b16 %v350
      %v455 = vunpack.c.l.b16 %v351
      %v456 = vunpack.c.l.b16 %v352
      %v457 = vunpack.c.l.b16 %v353
      %v458 = vunpack.c.l.b16 %v354
      %v459 = vunpack.c.l.b16 %v355
      %v460 = vunpack.c.l.b16 %v356
      %v461 = vunpack.c.l.b16 %v357
      %v462 = vunpack.c.l.b16 %v358
      %v463 = vunpack.c.l.b16 %v359
      %v464 = vunpack.c.l.b16 %v360
      %v465 = vunpack.c.l.b16 %v361
      %v466 = vunpack.c.l.b16 %v362
      %v467 = vunpack.c.l.b16 %v363
      %v468 = vunpack.c.l.b16 %v364
      %v469 = vunpack.c.l.b16 %v365
      %v470 = vunpack.c.l.b16 %v366
      %v471 = vunpack.c.l.b16 %v367
      %v472 = vpack.c.b16 %v441, %v440
      %v473 = vpack.c.b16 %v443, %v442
      %v474 = vpack.c.b16 %v445, %v444
      %v475 = vpack.c.b16 %v447, %v446
      %v476 = vpack.c.b16 %v449, %v448
      %v477 = vpack.c.b16 %v451, %v450
      %v478 = vpack.c.b16 %v453, %v452
      %v479 = vpack.c.b16 %v455, %v454
      %v480 = vpack.c.b16 %v457, %v456
      %v481 = vpack.c.b16 %v459, %v458
      %v482 = vpack.c.b16 %v461, %v460
      %v483 = vpack.c.b16 %v463, %v462
      %v484 = vpack.c.b16 %v465, %v464
      %v485 = vpack.c.b16 %v467, %v466
      %v486 = vpack.c.b16 %v469, %v468
      %v487 = vpack.c.b16 %v471, %v470
      %504 = vmatpush.bf16.msra.mxu0 %v479
      %505 = vmatpush.bf16.msra.mxu0 %v478
      %506 = vmatpush.bf16.msra.mxu0 %v477
      %507 = vmatpush.bf16.msra.mxu0 %v476
      %508 = vmatpush.bf16.msra.mxu0 %v475
      %509 = vmatpush.bf16.msra.mxu0 %v474
      %510 = vmatpush.bf16.msra.mxu0 %v473
      %511 = vmatpush.bf16.msra.mxu0 %v472
      %512 = vmatmul.bf16.gmra.mxu0 %v392
      %v513 = vpop.f32.mrf.mxu0
      %v514 = vadd.f32 0.0, %v513
      %v515 = vpop.f32.mrf.mxu0
      %v516 = vadd.f32 0.0, %v515
      %517 = vmatmul.bf16.gmra.mxu0 %v394
      %v518 = vpop.f32.mrf.mxu0
      %v519 = vadd.f32 0.0, %v518
      %v520 = vpop.f32.mrf.mxu0
      %v521 = vadd.f32 0.0, %v520
      %522 = vmatmul.bf16.gmra.mxu0 %v396
      %v523 = vpop.f32.mrf.mxu0
      %v524 = vadd.f32 0.0, %v523
      %v525 = vpop.f32.mrf.mxu0
      %v526 = vadd.f32 0.0, %v525
      %527 = vmatmul.bf16.gmra.mxu0 %v398
      %v528 = vpop.f32.mrf.mxu0
      %v529 = vadd.f32 0.0, %v528
      %v530 = vpop.f32.mrf.mxu0
      %v531 = vadd.f32 0.0, %v530
      %532 = vdwg.mxu0
      %533 = vmatpush.bf16.msra.mxu0 %v487
      %534 = vmatpush.bf16.msra.mxu0 %v486
      %535 = vmatpush.bf16.msra.mxu0 %v485
      %536 = vmatpush.bf16.msra.mxu0 %v484
      %537 = vmatpush.bf16.msra.mxu0 %v483
      %538 = vmatpush.bf16.msra.mxu0 %v482
      %539 = vmatpush.bf16.msra.mxu0 %v481
      %540 = vmatpush.bf16.msra.mxu0 %v480
      %541 = vmatmul.bf16.gmra.mxu0 %v393
      %v542 = vpop.f32.mrf.mxu0
      %v543 = vadd.f32 %v514, %v542
      %v544 = vpop.f32.mrf.mxu0
      %v545 = vadd.f32 %v516, %v544
      %546 = vmatmul.bf16.gmra.mxu0 %v395
      %v547 = vpop.f32.mrf.mxu0
      %v548 = vadd.f32 %v519, %v547
      %v549 = vpop.f32.mrf.mxu0
      %v550 = vadd.f32 %v521, %v549
      %551 = vmatmul.bf16.gmra.mxu0 %v397
      %v552 = vpop.f32.mrf.mxu0
      %v553 = vadd.f32 %v524, %v552
      %v554 = vpop.f32.mrf.mxu0
      %v555 = vadd.f32 %v526, %v554
      %556 = vmatmul.bf16.gmra.mxu0 %v399
      %v557 = vpop.f32.mrf.mxu0
      %v558 = vadd.f32 %v529, %v557
      %v559 = vpop.f32.mrf.mxu0
      %v560 = vadd.f32 %v531, %v559
      %561 = vdwg.mxu0
      %v562 = vadd.f32 %v320, %v543
      %v563 = vadd.f32 %v321, %v545
      %v564 = vadd.f32 %v322, %v548
      %v565 = vadd.f32 %v323, %v550
      %v566 = vadd.f32 %v324, %v553
      %v567 = vadd.f32 %v325, %v555
      %v568 = vadd.f32 %v326, %v558
      %v569 = vadd.f32 %v327, %v560
      %vm570 = vcmask 64512
      %571 = vst.msk [vmem:[#allocation2] sm:$0xff] %vm570, %v562
      %572 = vst.msk [vmem:[#allocation2 + $0x8] sm:$0xff] %vm570, %v563
      %573 = vst.msk [vmem:[#allocation2 + $0x10] sm:$0xff] %vm570, %v564
      %574 = vst.msk [vmem:[#allocation2 + $0x18] sm:$0xff] %vm570, %v565
      %575 = vst.msk [vmem:[#allocation2 + $0x20] sm:$0xff] %vm570, %v566
      %576 = vst.msk [vmem:[#allocation2 + $0x28] sm:$0xff] %vm570, %v567
      %577 = vst.msk [vmem:[#allocation2 + $0x30] sm:$0xff] %vm570, %v568
      %578 = vst.msk [vmem:[#allocation2 + $0x38] sm:$0xff] %vm570, %v569
      // Predicated region
      $region41: #{_lambda_.14} parent=35 // pred_check
        %p579 = pneg %p276
      $region42: #{_lambda_.14} parent=35 // pred_check_branch
        %581 = sbr.rel (%p579) target = $region44
      $region43: #{_lambda_.14} parent=35 // pred_region
        %v582 = vld [vmem:[#allocation2] sm:$0xff]
        %v583 = vld [vmem:[#allocation2 + $0x8] sm:$0xff]
        %v584 = vld [vmem:[#allocation2 + $0x10] sm:$0xff]
        %v585 = vld [vmem:[#allocation2 + $0x18] sm:$0xff]
        %v586 = vld [vmem:[#allocation2 + $0x20] sm:$0xff]
        %v587 = vld [vmem:[#allocation2 + $0x28] sm:$0xff]
        %v588 = vld [vmem:[#allocation2 + $0x30] sm:$0xff]
        %v589 = vld [vmem:[#allocation2 + $0x38] sm:$0xff]
        %v590 = vpack.c.bf16 %v582, %v582
        %v591 = vpack.c.bf16 %v583, %v583
        %v592 = vpack.c.bf16 %v584, %v584
        %v593 = vpack.c.bf16 %v585, %v585
        %v594 = vpack.c.bf16 %v586, %v586
        %v595 = vpack.c.bf16 %v587, %v587
        %v596 = vpack.c.bf16 %v588, %v588
        %v597 = vpack.c.bf16 %v589, %v589
        %vm598 = vcmask 60416
        %599 = vst.msk [vmem:[%s274] sm:$0xf] %vm598, %v590
        %600 = vst.msk [vmem:[%s274 + $0x4] sm:$0xf] %vm598, %v591
        %601 = vst.msk [vmem:[%s274 + $0x8] sm:$0xf] %vm598, %v592
        %602 = vst.msk [vmem:[%s274 + $0xc] sm:$0xf] %vm598, %v593
        %603 = vst.msk [vmem:[%s274 + $0x10] sm:$0xf] %vm598, %v594
        %604 = vst.msk [vmem:[%s274 + $0x14] sm:$0xf] %vm598, %v595
        %605 = vst.msk [vmem:[%s274 + $0x18] sm:$0xf] %vm598, %v596
        %606 = vst.msk [vmem:[%s274 + $0x1c] sm:$0xf] %vm598, %v597
      $region44: #{_lambda_.14} parent=35 // pred_fallthru
        _
      %s607 = smul.u32 8, %s19
      %p608 = scmp.lt.s32.totalorder %s607, 15
      %s609 = scalar_select %p608, %s607, 15
      %s610 = smul.addr %s609, 4
      %s611 = scalar_lea.vmem %s4, %s610
      // Predicated region
      $region45: #{_lambda_.14} parent=35 // pred_check
        %p612 = pneg %p146
      $region46: #{_lambda_.14} parent=35 // pred_check_branch
        %614 = sbr.rel (%p612) target = $region48
      $region47: #{_lambda_.14} parent=35 // pred_region
        %s615 = smul.u32 8, %s19
      $region48: #{_lambda_.14} parent=35 // pred_fallthru
        _
    $region36: #{_lambda_.14} parent=5 // pred_fallthru
      _
    %p616 = scmp.le.s32.totalorder 2, %s10
    // Predicated region
    $region49: #{_lambda_.14} parent=5 // pred_check
      %p617 = pneg %p616
    $region50: #{_lambda_.14} parent=5 // pred_check_branch
      %619 = sbr.rel (%p617) target = $region52
    $region51: #{_lambda_.14} parent=5 // pred_region
      %s620 = ssub.s32 %s10, 2
      // Predicated region
      $region53: #{_lambda_.14} parent=51 // pred_check
        %p621 = pneg %p152
      $region54: #{_lambda_.14} parent=51 // pred_check_branch
        %623 = sbr.rel (%p621) target = $region56
      $region55: #{_lambda_.14} parent=51 // pred_region
        %s624 = smul.u32 8, %s21
        %p625 = scmp.lt.s32.totalorder %s624, 15
        %s626 = scalar_select %p625, %s624, 15
        %s627 = smul.addr %s626, 4
        %s628 = scalar_lea.vmem %s4, %s627
      $region56: #{_lambda_.14} parent=51 // pred_fallthru
        _
    $region52: #{_lambda_.14} parent=5 // pred_fallthru
      _
  $region6: #{_lambda_.14} parent=0 // loop_footer
    %s14 = sadd.s32 1, %s10
  $region7: #{_lambda_.14} parent=0 // loop_footer_branch
    %9 = sbr.rel target = $region3
  $region8: #{_lambda_.14} parent=0 // loop_exit
    _

// kernel: _lambda_.16
$region0: #{_lambda_.16}
  #allocation0 [shape = 'u32[]', space=smem, size = 0x4, offset = 0x4, fixed_abs, tag = 'smem constant byte address 0x4 - core index']
  #allocation1 [shape = 'u32[72,128]{1,0:T(1,128)}', space=vmem, size = 0x9000, scoped, tag = 'internal scratch']
  #allocation2 [shape = 'f32[32,8]{1,0:T(8,128)}', space=vmem, size = 0x4000, scoped, tag = 'scratch operand']
  %s0 = inlined_call_operand.vmem [shape: bf16[2,56,8], index: 0, kind: input, shape index: {}]
  %s1 = inlined_call_operand.vmem [shape: bf16[9,8,8], index: 1, kind: input, shape index: {}]
  %s2 = inlined_call_operand.vmem [shape: f32[1,8], index: 2, kind: input, shape index: {}]
  %s3 = inlined_call_operand.vmem [shape: f32[2,32,8], index: 3, kind: output, shape index: {}]
  %s4 = sld [smem:[#allocation0]]
  $region45: #{_lambda_.16} parent=0
    _
  %s6 = ssub.s32 1, %s4
  %s7 = scalar_select 0, %s6, %s4
  loop: start=0, step=1, limit=4
  $region2: #{_lambda_.16} parent=0 // loop_pre_header
    _
  $region3: #{_lambda_.16} parent=0 // loop_header
    %s9 = sphi 0, %s13
    %p10 = scmp.ge.s32.totalorder %s9, 4
    %s19 = sphi 0, %s21
    %s22 = sphi 0, %s19
    %s23 = sphi 0, %s22
    %s39 = sphi 0, %s23
    %s43 = sphi 0, %s43
    %s45 = sphi 0, %s43
    %s46 = sphi 0, %s45
    %s60 = sphi 0, %s46
    %s64 = sphi 0, %s64
    %s66 = sphi 0, %s64
    %s67 = sphi 0, %s66
    %s81 = sphi 0, %s67
    %s87 = sphi 0, %s89
    %s90 = sphi 0, %s87
    %s91 = sphi 0, %s90
    %s107 = sphi 0, %s91
  $region4: #{_lambda_.16} parent=0 // loop_header_branch
    %12 = sbr.rel (%p10) target = $region8
  $region5: #{_lambda_.16} parent=0 // loop_body
    %s14 = ssub.s32 %s9, 1
    %s15 = ssub.s32 %s9, 2
    %s16 = sadd.s32 %s9, 1
    %s17 = ssub.s32 %s9, %s16
    %p18 = scmp.eq.s32.totalorder %s17, 0
    %s20 = sadd.s32 %s19, 1
    %s21 = scalar_select %p18, %s19, %s20
    %p24 = pneg %p18
    %p25 = scmp.eq.s32.totalorder %s9, 1
    %p26 = por %p24, %p25
    %p27 = scmp.ne.s32.totalorder %s19, %s22
    %p28 = scmp.eq.s32.totalorder %s9, 0
    %p29 = por %p27, %p28
    %p30 = scmp.ne.s32.totalorder %s19, %s22
    %p31 = scmp.eq.s32.totalorder %s14, 1
    %p32 = por %p30, %p31
    %p33 = scmp.ne.s32.totalorder %s22, %s23
    %p34 = scmp.eq.s32.totalorder %s14, 0
    %p35 = por %p33, %p34
    %p36 = scmp.ne.s32.totalorder %s22, %s23
    %p37 = scmp.eq.s32.totalorder %s15, 1
    %p38 = por %p36, %p37
    %p40 = scmp.ne.s32.totalorder %s23, %s39
    %p41 = scmp.eq.s32.totalorder %s15, 0
    %p42 = por %p40, %p41
    %s44 = sadd.s32 %s43, 1
    %p47 = scmp.eq.s32.totalorder %s9, 1
    %p48 = scmp.ne.s32.totalorder %s43, %s45
    %p49 = scmp.eq.s32.totalorder %s9, 0
    %p50 = por %p48, %p49
    %p51 = scmp.ne.s32.totalorder %s43, %s45
    %p52 = scmp.eq.s32.totalorder %s14, 1
    %p53 = por %p51, %p52
    %p54 = scmp.ne.s32.totalorder %s45, %s46
    %p55 = scmp.eq.s32.totalorder %s14, 0
    %p56 = por %p54, %p55
    %p57 = scmp.ne.s32.totalorder %s45, %s46
    %p58 = scmp.eq.s32.totalorder %s15, 1
    %p59 = por %p57, %p58
    %p61 = scmp.ne.s32.totalorder %s46, %s60
    %p62 = scmp.eq.s32.totalorder %s15, 0
    %p63 = por %p61, %p62
    %s65 = sadd.s32 %s64, 1
    %p68 = scmp.eq.s32.totalorder %s9, 1
    %p69 = scmp.ne.s32.totalorder %s64, %s66
    %p70 = scmp.eq.s32.totalorder %s9, 0
    %p71 = por %p69, %p70
    %p72 = scmp.ne.s32.totalorder %s64, %s66
    %p73 = scmp.eq.s32.totalorder %s14, 1
    %p74 = por %p72, %p73
    %p75 = scmp.ne.s32.totalorder %s66, %s67
    %p76 = scmp.eq.s32.totalorder %s14, 0
    %p77 = por %p75, %p76
    %p78 = scmp.ne.s32.totalorder %s66, %s67
    %p79 = scmp.eq.s32.totalorder %s15, 1
    %p80 = por %p78, %p79
    %p82 = scmp.ne.s32.totalorder %s67, %s81
    %p83 = scmp.eq.s32.totalorder %s15, 0
    %p84 = por %p82, %p83
    %s85 = ssub.s32 %s9, %s16
    %p86 = scmp.eq.s32.totalorder %s85, 0
    %s88 = sadd.s32 %s87, 1
    %s89 = scalar_select %p86, %s87, %s88
    %p92 = pneg %p86
    %p93 = scmp.eq.s32.totalorder %s9, 1
    %p94 = por %p92, %p93
    %p95 = scmp.ne.s32.totalorder %s87, %s90
    %p96 = scmp.eq.s32.totalorder %s9, 0
    %p97 = por %p95, %p96
    %p98 = scmp.ne.s32.totalorder %s87, %s90
    %p99 = scmp.eq.s32.totalorder %s14, 1
    %p100 = por %p98, %p99
    %p101 = scmp.ne.s32.totalorder %s90, %s91
    %p102 = scmp.eq.s32.totalorder %s14, 0
    %p103 = por %p101, %p102
    %p104 = scmp.ne.s32.totalorder %s90, %s91
    %p105 = scmp.eq.s32.totalorder %s15, 1
    %p106 = por %p104, %p105
    %p108 = scmp.ne.s32.totalorder %s91, %s107
    %p109 = scmp.eq.s32.totalorder %s15, 0
    %p110 = por %p108, %p109
    %p111 = scmp.le.s32.totalorder 1, %s9
    %p112 = scmp.lt.s32.totalorder %s9, 3
    %p113 = pnand %p111, %p112
    %p114 = pneg %p113
    // Predicated region
    $region9: #{_lambda_.16} parent=5 // pred_check
      _
    $region10: #{_lambda_.16} parent=5 // pred_check_branch
      %116 = sbr.rel (%p113) target = $region12
    $region11: #{_lambda_.16} parent=5 // pred_region
      %s117 = ssub.s32 %s9, 1
      // Predicated region
      $region13: #{_lambda_.16} parent=11 // pred_check
        %p118 = pneg %p56
      $region14: #{_lambda_.16} parent=11 // pred_check_branch
        %120 = sbr.rel (%p118) target = $region16
      $region15: #{_lambda_.16} parent=11 // pred_region
        _
      $region16: #{_lambda_.16} parent=11 // pred_fallthru
        _
      // Predicated region
      $region17: #{_lambda_.16} parent=11 // pred_check
        %p121 = pneg %p77
      $region18: #{_lambda_.16} parent=11 // pred_check_branch
        %123 = sbr.rel (%p121) target = $region20
      $region19: #{_lambda_.16} parent=11 // pred_region
        _
      $region20: #{_lambda_.16} parent=11 // pred_fallthru
        _
    $region12: #{_lambda_.16} parent=5 // pred_fallthru
      _
    %p124 = scmp.lt.s32.totalorder %s9, 2
    // Predicated region
    $region21: #{_lambda_.16} parent=5 // pred_check
      %p125 = pneg %p124
    $region22: #{_lambda_.16} parent=5 // pred_check_branch
      %127 = sbr.rel (%p125) target = $region24
    $region23: #{_lambda_.16} parent=5 // pred_region
      // Predicated region
      $region25: #{_lambda_.16} parent=23 // pred_check
        %p128 = pneg %p29
      $region26: #{_lambda_.16} parent=23 // pred_check_branch
        %130 = sbr.rel (%p128) target = $region28
      $region27: #{_lambda_.16} parent=23 // pred_region
        %p131 = scmp.lt.s32.totalorder %s9, 1
        %s132 = scalar_select %p131, %s9, 1
        %s133 = smul.addr %s132, 7
        %s134 = smul.addr %s133, 4
        %s135 = scalar_lea.vmem %s0, %s134
      $region28: #{_lambda_.16} parent=23 // pred_fallthru
        _
    $region24: #{_lambda_.16} parent=5 // pred_fallthru
      _
    %p136 = scmp.le.s32.totalorder 1, %s9
    %p137 = scmp.lt.s32.totalorder %s9, 3
    %p138 = pnand %p136, %p137
    %p139 = pneg %p138
    // Predicated region
    $region29: #{_lambda_.16} parent=5 // pred_check
      _
    $region30: #{_lambda_.16} parent=5 // pred_check_branch
      %141 = sbr.rel (%p138) target = $region32
    $region31: #{_lambda_.16} parent=5 // pred_region
      %s142 = ssub.s32 %s9, 1
      %p143 = scmp.lt.s32.totalorder %s14, 1
      %s144 = scalar_select %p143, %s14, 1
      %s145 = smul.addr %s144, 7
      %s146 = smul.addr %s145, 4
      %s147 = scalar_lea.vmem %s0, %s146
      %p148 = pneg %p35
      %p149 = pneg %p32
      %p150 = pneg %p56
      %p151 = pneg %p53
      %p152 = pneg %p77
      %p153 = pneg %p74
      %p154 = pneg %p103
      %p155 = pneg %p100
      %p156 = scmp.lt.s32.totalorder %s14, 1
      %s157 = scalar_select %p156, %s14, 1
      %s158 = smul.addr %s157, 4
      %s159 = smul.addr %s158, 8
      %s160 = scalar_lea.vmem %s3, %s159
      %p161 = scmp.lt.s32.totalorder %s14, 1
      %s162 = scalar_select %p161, %s14, 1
      %s163 = smul.addr %s162, 7
      %s164 = smul.addr %s163, 4
      %s165 = scalar_lea.vmem %s0, %s164
      %p166 = scmp.lt.s32.totalorder %s14, 1
      %s167 = scalar_select %p166, %s14, 1
      %s168 = smul.addr %s167, 4
      %s169 = smul.addr %s168, 8
      %s170 = scalar_lea.vmem %s3, %s169
      %v172 = vld [vmem:[%s165] sm:$0xf]
      %v173 = vld [vmem:[%s165 + $0x4] sm:$0xf]
      %v174 = vld [vmem:[%s165 + $0x8] sm:$0xf]
      %v175 = vld [vmem:[%s165 + $0xc] sm:$0xf]
      %v176 = vld [vmem:[%s165 + $0x10] sm:$0xf]
      %v177 = vld [vmem:[%s165 + $0x14] sm:$0xf]
      %v178 = vld [vmem:[%s165 + $0x18] sm:$0xf]
      %v179 = vld [vmem:[%s2] sm:$0x1]
      %v181 = vperm.slane %v179, 0
      %vm183 = vcmask 64512
      %184 = vst.msk [vmem:[#allocation2] sm:$0xff] %vm183, %v181
      %185 = vst.msk [vmem:[#allocation2 + $0x8] sm:$0xff] %vm183, %v181
      %186 = vst.msk [vmem:[#allocation2 + $0x10] sm:$0xff] %vm183, %v181
      %187 = vst.msk [vmem:[#allocation2 + $0x18] sm:$0xff] %vm183, %v181
      %v188 = vld [vmem:[#allocation2] sm:$0xff]
      %v189 = vld [vmem:[#allocation2 + $0x8] sm:$0xff]
      %v190 = vld [vmem:[#allocation2 + $0x10] sm:$0xff]
      %v191 = vld [vmem:[#allocation2 + $0x18] sm:$0xff]
      %v192 = vld [vmem:[%s1] sm:$0xf]
      %v197 = vunpack.c.l.b16 %v172
      %v198 = vunpack.c.l.b16 %v173
      %v199 = vunpack.c.l.b16 %v174
      %v200 = vunpack.c.l.b16 %v175
      %v201 = vpack.c.b16 %v198, %v197
      %v202 = vpack.c.b16 %v200, %v199
      %v204 = vsel %vm183, %v201, 0
      %v207 = vsel %vm183, %v202, 0
      %vm209 = vcmask 1043456
      %v211 = vsel %vm209, %v192, 0
      %213 = vmatpush.bf16.msra.mxu0 0
      %214 = vmatpush.bf16.msra.mxu0 0
      %215 = vmatpush.bf16.msra.mxu0 0
      %216 = vmatpush.bf16.msra.mxu0 0
      %217 = vmatpush.bf16.msra.mxu0 0
      %218 = vmatpush.bf16.msra.mxu0 0
      %219 = vmatpush.bf16.msra.mxu0 0
      %220 = vmatpush.bf16.msra.mxu0 %v211
      %221 = vmatmul.bf16.gmra.mxu0 %v204
      %v222 = vpop.f32.mrf.mxu0
      %v223 = vadd.f32 0.0, %v222
      %v224 = vpop.f32.mrf.mxu0
      %v225 = vadd.f32 0.0, %v224
      %226 = vmatmul.bf16.gmra.mxu0 %v207
      %v227 = vpop.f32.mrf.mxu0
      %v228 = vadd.f32 0.0, %v227
      %v229 = vpop.f32.mrf.mxu0
      %v230 = vadd.f32 0.0, %v229
      %231 = vdwg.mxu0
      %v232 = vadd.f32 %v188, %v223
      %v233 = vadd.f32 %v189, %v225
      %v234 = vadd.f32 %v190, %v228
      %v235 = vadd.f32 %v191, %v230
      %236 = vst.msk [vmem:[#allocation2] sm:$0xff] %vm183, %v232
      %237 = vst.msk [vmem:[#allocation2 + $0x8] sm:$0xff] %vm183, %v233
      %238 = vst.msk [vmem:[#allocation2 + $0x10] sm:$0xff] %vm183, %v234
      %239 = vst.msk [vmem:[#allocation2 + $0x18] sm:$0xff] %vm183, %v235
      %v240 = vld [vmem:[#allocation2] sm:$0xff]
      %v241 = vld [vmem:[#allocation2 + $0x8] sm:$0xff]
      %v242 = vld [vmem:[#allocation2 + $0x10] sm:$0xff]
      %v243 = vld [vmem:[#allocation2 + $0x18] sm:$0xff]
      %s244 = scalar_lea.vmem %s1, 4
      %v245 = vld [vmem:[%s244] sm:$0xf]
      %v247 = vunpack.c.l.b16 %v176
      %v248 = vpack.c.b16 %v247, %v247
      %vm249 = vsmask.f32 7424
      %v250 = vshrl.u32 %v201, 16
      %v252 = vshll.u32 %v201, 16
      %v254 = vrot.slane %v252, 1
      %v255 = vor.u32 %v250, %v254
      %v256 = vshll.u32 %v202, 16
      %v258 = vrot.slane %v256, 1
      %v259 = vsel %vm249, %v255, %v258
      %v260 = vshrl.u32 %v202, 16
      %v262 = vor.u32 %v260, %v258
      %v264 = vshll.u32 %v248, 16
      %v266 = vrot.slane %v264, 1
      %v267 = vsel %vm249, %v262, %v266
      %v269 = vsel %vm183, %v259, 0
      %v272 = vsel %vm183, %v267, 0
      %v275 = vsel %vm209, %v245, 0
      %277 = vmatpush.bf16.msra.mxu0 0
      %278 = vmatpush.bf16.msra.mxu0 0
      %279 = vmatpush.bf16.msra.mxu0 0
      %280 = vmatpush.bf16.msra.mxu0 0
      %281 = vmatpush.bf16.msra.mxu0 0
      %282 = vmatpush.bf16.msra.mxu0 0
      %283 = vmatpush.bf16.msra.mxu0 0
      %284 = vmatpush.bf16.msra.mxu0 %v275
      %285 = vmatmul.bf16.gmra.mxu0 %v269
      %v286 = vpop.f32.mrf.mxu0
      %v287 = vadd.f32 0.0, %v286
      %v288 = vpop.f32.mrf.mxu0
      %v289 = vadd.f32 0.0, %v288
      %290 = vmatmul.bf16.gmra.mxu0 %v272
      %v291 = vpop.f32.mrf.mxu0
      %v292 = vadd.f32 0.0, %v291
      %v293 = vpop.f32.mrf.mxu0
      %v294 = vadd.f32 0.0, %v293
      %295 = vdwg.mxu0
      %v296 = vadd.f32 %v240, %v287
      %v297 = vadd.f32 %v241, %v289
      %v298 = vadd.f32 %v242, %v292
      %v299 = vadd.f32 %v243, %v294
      %300 = vst.msk [vmem:[#allocation2] sm:$0xff] %vm183, %v296
      %301 = vst.msk [vmem:[#allocation2 + $0x8] sm:$0xff] %vm183, %v297
      %302 = vst.msk [vmem:[#allocation2 + $0x10] sm:$0xff] %vm183, %v298
      %303 = vst.msk [vmem:[#allocation2 + $0x18] sm:$0xff] %vm183, %v299
      %v304 = vld [vmem:[#allocation2] sm:$0xff]
      %v305 = vld [vmem:[#allocation2 + $0x8] sm:$0xff]
      %v306 = vld [vmem:[#allocation2 + $0x10] sm:$0xff]
      %v307 = vld [vmem:[#allocation2 + $0x18] sm:$0xff]
      %s308 = scalar_lea.vmem %s1, 8
      %v309 = vld [vmem:[%s308] sm:$0xf]
      %vm310 = vcmask 1046528
      %v311 = vrot.slane %v201, 1
      %v312 = vrot.slane %v202, 1
      %v313 = vsel %vm310, %v311, %v312
      %v314 = vrot.slane %v248, 1
      %v315 = vsel %vm310, %v312, %v314
      %v317 = vsel %vm183, %v313, 0
      %v320 = vsel %vm183, %v315, 0
      %v323 = vsel %vm209, %v309, 0
      %325 = vmatpush.bf16.msra.mxu0 0
      %326 = vmatpush.bf16.msra.mxu0 0
      %327 = vmatpush.bf16.msra.mxu0 0
      %328 = vmatpush.bf16.msra.mxu0 0
      %329 = vmatpush.bf16.msra.mxu0 0
      %330 = vmatpush.bf16.msra.mxu0 0
      %331 = vmatpush.bf16.msra.mxu0 0
      %332 = vmatpush.bf16.msra.mxu0 %v323
      %333 = vmatmul.bf16.gmra.mxu0 %v317
      %v334 = vpop.f32.mrf.mxu0
      %v335 = vadd.f32 0.0, %v334
      %v336 = vpop.f32.mrf.mxu0
      %v337 = vadd.f32 0.0, %v336
      %338 = vmatmul.bf16.gmra.mxu0 %v320
      %v339 = vpop.f32.mrf.mxu0
      %v340 = vadd.f32 0.0, %v339
      %v341 = vpop.f32.mrf.mxu0
      %v342 = vadd.f32 0.0, %v341
      %343 = vdwg.mxu0
      %v344 = vadd.f32 %v304, %v335
      %v345 = vadd.f32 %v305, %v337
      %v346 = vadd.f32 %v306, %v340
      %v347 = vadd.f32 %v307, %v342
      %348 = vst.msk [vmem:[#allocation2] sm:$0xff] %vm183, %v344
      %349 = vst.msk [vmem:[#allocation2 + $0x8] sm:$0xff] %vm183, %v345
      %350 = vst.msk [vmem:[#allocation2 + $0x10] sm:$0xff] %vm183, %v346
      %351 = vst.msk [vmem:[#allocation2 + $0x18] sm:$0xff] %vm183, %v347
      %v352 = vld [vmem:[#allocation2] sm:$0xff]
      %v353 = vld [vmem:[#allocation2 + $0x8] sm:$0xff]
      %v354 = vld [vmem:[#allocation2 + $0x10] sm:$0xff]
      %v355 = vld [vmem:[#allocation2 + $0x18] sm:$0xff]
      %s356 = scalar_lea.vmem %s1, 12
      %v357 = vld [vmem:[%s356] sm:$0xf]
      %v358 = vpack.c.b16 %v199, %v198
      %v359 = vpack.c.b16 %v247, %v200
      %v361 = vsel %vm183, %v358, 0
      %v364 = vsel %vm183, %v359, 0
      %v367 = vsel %vm209, %v357, 0
      %369 = vmatpush.bf16.msra.mxu0 0
      %370 = vmatpush.bf16.msra.mxu0 0
      %371 = vmatpush.bf16.msra.mxu0 0
      %372 = vmatpush.bf16.msra.mxu0 0
      %373 = vmatpush.bf16.msra.mxu0 0
      %374 = vmatpush.bf16.msra.mxu0 0
      %375 = vmatpush.bf16.msra.mxu0 0
      %376 = vmatpush.bf16.msra.mxu0 %v367
      %377 = vmatmul.bf16.gmra.mxu0 %v361
      %v378 = vpop.f32.mrf.mxu0
      %v379 = vadd.f32 0.0, %v378
      %v380 = vpop.f32.mrf.mxu0
      %v381 = vadd.f32 0.0, %v380
      %382 = vmatmul.bf16.gmra.mxu0 %v364
      %v383 = vpop.f32.mrf.mxu0
      %v384 = vadd.f32 0.0, %v383
      %v385 = vpop.f32.mrf.mxu0
      %v386 = vadd.f32 0.0, %v385
      %387 = vdwg.mxu0
      %v388 = vadd.f32 %v352, %v379
      %v389 = vadd.f32 %v353, %v381
      %v390 = vadd.f32 %v354, %v384
      %v391 = vadd.f32 %v355, %v386
      %392 = vst.msk [vmem:[#allocation2] sm:$0xff] %vm183, %v388
      %393 = vst.msk [vmem:[#allocation2 + $0x8] sm:$0xff] %vm183, %v389
      %394 = vst.msk [vmem:[#allocation2 + $0x10] sm:$0xff] %vm183, %v390
      %395 = vst.msk [vmem:[#allocation2 + $0x18] sm:$0xff] %vm183, %v391
      %v396 = vld [vmem:[#allocation2] sm:$0xff]
      %v397 = vld [vmem:[#allocation2 + $0x8] sm:$0xff]
      %v398 = vld [vmem:[#allocation2 + $0x10] sm:$0xff]
      %v399 = vld [vmem:[#allocation2 + $0x18] sm:$0xff]
      %s400 = scalar_lea.vmem %s1, 16
      %v401 = vld [vmem:[%s400] sm:$0xf]
      %v403 = vunpack.c.l.b16 %v177
      %v404 = vpack.c.b16 %v403, %v403
      %v405 = vshrl.u32 %v358, 16
      %v407 = vshll.u32 %v358, 16
      %v409 = vrot.slane %v407, 1
      %v410 = vor.u32 %v405, %v409
      %v411 = vshll.u32 %v359, 16
      %v413 = vrot.slane %v411, 1
      %v414 = vsel %vm249, %v410, %v413
      %v415 = vshrl.u32 %v359, 16
      %v417 = vor.u32 %v415, %v413
      %v419 = vshll.u32 %v404, 16
      %v421 = vrot.slane %v419, 1
      %v422 = vsel %vm249, %v417, %v421
      %v424 = vsel %vm183, %v414, 0
      %v427 = vsel %vm183, %v422, 0
      %v430 = vsel %vm209, %v401, 0
      %432 = vmatpush.bf16.msra.mxu0 0
      %433 = vmatpush.bf16.msra.mxu0 0
      %434 = vmatpush.bf16.msra.mxu0 0
      %435 = vmatpush.bf16.msra.mxu0 0
      %436 = vmatpush.bf16.msra.mxu0 0
      %437 = vmatpush.bf16.msra.mxu0 0
      %438 = vmatpush.bf16.msra.mxu0 0
      %439 = vmatpush.bf16.msra.mxu0 %v430
      %440 = vmatmul.bf16.gmra.mxu0 %v424
      %v441 = vpop.f32.mrf.mxu0
      %v442 = vadd.f32 0.0, %v441
      %v443 = vpop.f32.mrf.mxu0
      %v444 = vadd.f32 0.0, %v443
      %445 = vmatmul.bf16.gmra.mxu0 %v427
      %v446 = vpop.f32.mrf.mxu0
      %v447 = vadd.f32 0.0, %v446
      %v448 = vpop.f32.mrf.mxu0
      %v449 = vadd.f32 0.0, %v448
      %450 = vdwg.mxu0
      %v451 = vadd.f32 %v396, %v442
      %v452 = vadd.f32 %v397, %v444
      %v453 = vadd.f32 %v398, %v447
      %v454 = vadd.f32 %v399, %v449
      %455 = vst.msk [vmem:[#allocation2] sm:$0xff] %vm183, %v451
      %456 = vst.msk [vmem:[#allocation2 + $0x8] sm:$0xff] %vm183, %v452
      %457 = vst.msk [vmem:[#allocation2 + $0x10] sm:$0xff] %vm183, %v453
      %458 = vst.msk [vmem:[#allocation2 + $0x18] sm:$0xff] %vm183, %v454
      %v459 = vld [vmem:[#allocation2] sm:$0xff]
      %v460 = vld [vmem:[#allocation2 + $0x8] sm:$0xff]
      %v461 = vld [vmem:[#allocation2 + $0x10] sm:$0xff]
      %v462 = vld [vmem:[#allocation2 + $0x18] sm:$0xff]
      %s463 = scalar_lea.vmem %s1, 20
      %v464 = vld [vmem:[%s463] sm:$0xf]
      %v465 = vrot.slane %v358, 1
      %v466 = vrot.slane %v359, 1
      %v467 = vsel %vm310, %v465, %v466
      %v468 = vrot.slane %v404, 1
      %v469 = vsel %vm310, %v466, %v468
      %v471 = vsel %vm183, %v467, 0
      %v474 = vsel %vm183, %v469, 0
      %v477 = vsel %vm209, %v464, 0
      %479 = vmatpush.bf16.msra.mxu0 0
      %480 = vmatpush.bf16.msra.mxu0 0
      %481 = vmatpush.bf16.msra.mxu0 0
      %482 = vmatpush.bf16.msra.mxu0 0
      %483 = vmatpush.bf16.msra.mxu0 0
      %484 = vmatpush.bf16.msra.mxu0 0
      %485 = vmatpush.bf16.msra.mxu0 0
      %486 = vmatpush.bf16.msra.mxu0 %v477
      %487 = vmatmul.bf16.gmra.mxu0 %v471
      %v488 = vpop.f32.mrf.mxu0
      %v489 = vadd.f32 0.0, %v488
      %v490 = vpop.f32.mrf.mxu0
      %v491 = vadd.f32 0.0, %v490
      %492 = vmatmul.bf16.gmra.mxu0 %v474
      %v493 = vpop.f32.mrf.mxu0
      %v494 = vadd.f32 0.0, %v493
      %v495 = vpop.f32.mrf.mxu0
      %v496 = vadd.f32 0.0, %v495
      %497 = vdwg.mxu0
      %v498 = vadd.f32 %v459, %v489
      %v499 = vadd.f32 %v460, %v491
      %v500 = vadd.f32 %v461, %v494
      %v501 = vadd.f32 %v462, %v496
      %502 = vst.msk [vmem:[#allocation2] sm:$0xff] %vm183, %v498
      %503 = vst.msk [vmem:[#allocation2 + $0x8] sm:$0xff] %vm183, %v499
      %504 = vst.msk [vmem:[#allocation2 + $0x10] sm:$0xff] %vm183, %v500
      %505 = vst.msk [vmem:[#allocation2 + $0x18] sm:$0xff] %vm183, %v501
      %v506 = vld [vmem:[#allocation2] sm:$0xff]
      %v507 = vld [vmem:[#allocation2 + $0x8] sm:$0xff]
      %v508 = vld [vmem:[#allocation2 + $0x10] sm:$0xff]
      %v509 = vld [vmem:[#allocation2 + $0x18] sm:$0xff]
      %s510 = scalar_lea.vmem %s1, 24
      %v511 = vld [vmem:[%s510] sm:$0xf]
      %v512 = vpack.c.b16 %v403, %v247
      %v514 = vsel %vm183, %v512, 0
      %v517 = vsel %vm209, %v511, 0
      %519 = vmatpush.bf16.msra.mxu0 0
      %520 = vmatpush.bf16.msra.mxu0 0
      %521 = vmatpush.bf16.msra.mxu0 0
      %522 = vmatpush.bf16.msra.mxu0 0
      %523 = vmatpush.bf16.msra.mxu0 0
      %524 = vmatpush.bf16.msra.mxu0 0
      %525 = vmatpush.bf16.msra.mxu0 0
      %526 = vmatpush.bf16.msra.mxu0 %v517
      %527 = vmatmul.bf16.gmra.mxu0 %v207
      %v528 = vpop.f32.mrf.mxu0
      %v529 = vadd.f32 0.0, %v528
      %v530 = vpop.f32.mrf.mxu0
      %v531 = vadd.f32 0.0, %v530
      %532 = vmatmul.bf16.gmra.mxu0 %v514
      %v533 = vpop.f32.mrf.mxu0
      %v534 = vadd.f32 0.0, %v533
      %v535 = vpop.f32.mrf.mxu0
      %v536 = vadd.f32 0.0, %v535
      %537 = vdwg.mxu0
      %v538 = vadd.f32 %v506, %v529
      %v539 = vadd.f32 %v507, %v531
      %v540 = vadd.f32 %v508, %v534
      %v541 = vadd.f32 %v509, %v536
      %542 = vst.msk [vmem:[#allocation2] sm:$0xff] %vm183, %v538
      %543 = vst.msk [vmem:[#allocation2 + $0x8] sm:$0xff] %vm183, %v539
      %544 = vst.msk [vmem:[#allocation2 + $0x10] sm:$0xff] %vm183, %v540
      %545 = vst.msk [vmem:[#allocation2 + $0x18] sm:$0xff] %vm183, %v541
      %v546 = vld [vmem:[#allocation2] sm:$0xff]
      %v547 = vld [vmem:[#allocation2 + $0x8] sm:$0xff]
      %v548 = vld [vmem:[#allocation2 + $0x10] sm:$0xff]
      %v549 = vld [vmem:[#allocation2 + $0x18] sm:$0xff]
      %s550 = scalar_lea.vmem %s1, 28
      %v551 = vld [vmem:[%s550] sm:$0xf]
      %v553 = vunpack.c.l.b16 %v178
      %v554 = vpack.c.b16 %v553, %v553
      %v555 = vshll.u32 %v512, 16
      %v557 = vrot.slane %v555, 1
      %v558 = vsel %vm249, %v262, %v557
      %v559 = vshrl.u32 %v512, 16
      %v561 = vor.u32 %v559, %v557
      %v563 = vshll.u32 %v554, 16
      %v565 = vrot.slane %v563, 1
      %v566 = vsel %vm249, %v561, %v565
      %v568 = vsel %vm183, %v558, 0
      %v571 = vsel %vm183, %v566, 0
      %v574 = vsel %vm209, %v551, 0
      %576 = vmatpush.bf16.msra.mxu0 0
      %577 = vmatpush.bf16.msra.mxu0 0
      %578 = vmatpush.bf16.msra.mxu0 0
      %579 = vmatpush.bf16.msra.mxu0 0
      %580 = vmatpush.bf16.msra.mxu0 0
      %581 = vmatpush.bf16.msra.mxu0 0
      %582 = vmatpush.bf16.msra.mxu0 0
      %583 = vmatpush.bf16.msra.mxu0 %v574
      %584 = vmatmul.bf16.gmra.mxu0 %v568
      %v585 = vpop.f32.mrf.mxu0
      %v586 = vadd.f32 0.0, %v585
      %v587 = vpop.f32.mrf.mxu0
      %v588 = vadd.f32 0.0, %v587
      %589 = vmatmul.bf16.gmra.mxu0 %v571
      %v590 = vpop.f32.mrf.mxu0
      %v591 = vadd.f32 0.0, %v590
      %v592 = vpop.f32.mrf.mxu0
      %v593 = vadd.f32 0.0, %v592
      %594 = vdwg.mxu0
      %v595 = vadd.f32 %v546, %v586
      %v596 = vadd.f32 %v547, %v588
      %v597 = vadd.f32 %v548, %v591
      %v598 = vadd.f32 %v549, %v593
      %599 = vst.msk [vmem:[#allocation2] sm:$0xff] %vm183, %v595
      %600 = vst.msk [vmem:[#allocation2 + $0x8] sm:$0xff] %vm183, %v596
      %601 = vst.msk [vmem:[#allocation2 + $0x10] sm:$0xff] %vm183, %v597
      %602 = vst.msk [vmem:[#allocation2 + $0x18] sm:$0xff] %vm183, %v598
      %v603 = vld [vmem:[#allocation2] sm:$0xff]
      %v604 = vld [vmem:[#allocation2 + $0x8] sm:$0xff]
      %v605 = vld [vmem:[#allocation2 + $0x10] sm:$0xff]
      %v606 = vld [vmem:[#allocation2 + $0x18] sm:$0xff]
      %s607 = scalar_lea.vmem %s1, 32
      %v608 = vld [vmem:[%s607] sm:$0xf]
      %v609 = vrot.slane %v512, 1
      %v610 = vsel %vm310, %v312, %v609
      %v611 = vrot.slane %v554, 1
      %v612 = vsel %vm310, %v609, %v611
      %v614 = vsel %vm183, %v610, 0
      %v617 = vsel %vm183, %v612, 0
      %v620 = vsel %vm209, %v608, 0
      %622 = vmatpush.bf16.msra.mxu0 0
      %623 = vmatpush.bf16.msra.mxu0 0
      %624 = vmatpush.bf16.msra.mxu0 0
      %625 = vmatpush.bf16.msra.mxu0 0
      %626 = vmatpush.bf16.msra.mxu0 0
      %627 = vmatpush.bf16.msra.mxu0 0
      %628 = vmatpush.bf16.msra.mxu0 0
      %629 = vmatpush.bf16.msra.mxu0 %v620
      %630 = vmatmul.bf16.gmra.mxu0 %v614
      %v631 = vpop.f32.mrf.mxu0
      %v632 = vadd.f32 0.0, %v631
      %v633 = vpop.f32.mrf.mxu0
      %v634 = vadd.f32 0.0, %v633
      %635 = vmatmul.bf16.gmra.mxu0 %v617
      %v636 = vpop.f32.mrf.mxu0
      %v637 = vadd.f32 0.0, %v636
      %v638 = vpop.f32.mrf.mxu0
      %v639 = vadd.f32 0.0, %v638
      %640 = vdwg.mxu0
      %v641 = vadd.f32 %v603, %v632
      %v642 = vadd.f32 %v604, %v634
      %v643 = vadd.f32 %v605, %v637
      %v644 = vadd.f32 %v606, %v639
      %645 = vst.msk [vmem:[#allocation2] sm:$0xff] %vm183, %v641
      %646 = vst.msk [vmem:[#allocation2 + $0x8] sm:$0xff] %vm183, %v642
      %647 = vst.msk [vmem:[#allocation2 + $0x10] sm:$0xff] %vm183, %v643
      %648 = vst.msk [vmem:[#allocation2 + $0x18] sm:$0xff] %vm183, %v644
      %v649 = vld [vmem:[#allocation2] sm:$0xff]
      %v650 = vld [vmem:[#allocation2 + $0x8] sm:$0xff]
      %v651 = vld [vmem:[#allocation2 + $0x10] sm:$0xff]
      %v652 = vld [vmem:[#allocation2 + $0x18] sm:$0xff]
      %653 = vst.msk [vmem:[%s170] sm:$0xff] %vm183, %v649
      %654 = vst.msk [vmem:[%s170 + $0x8] sm:$0xff] %vm183, %v650
      %655 = vst.msk [vmem:[%s170 + $0x10] sm:$0xff] %vm183, %v651
      %656 = vst.msk [vmem:[%s170 + $0x18] sm:$0xff] %vm183, %v652
      %p657 = scmp.lt.s32.totalorder %s14, 1
      %s658 = scalar_select %p657, %s14, 1
      %s659 = smul.addr %s658, 4
      %s660 = smul.addr %s659, 8
      %s661 = scalar_lea.vmem %s3, %s660
      // Predicated region
      $region33: #{_lambda_.16} parent=31 // pred_check
        %p662 = pneg %p100
      $region34: #{_lambda_.16} parent=31 // pred_check_branch
        %664 = sbr.rel (%p662) target = $region36
      $region35: #{_lambda_.16} parent=31 // pred_region
        _
      $region36: #{_lambda_.16} parent=31 // pred_fallthru
        _
    $region32: #{_lambda_.16} parent=5 // pred_fallthru
      _
    %p665 = scmp.le.s32.totalorder 2, %s9
    // Predicated region
    $region37: #{_lambda_.16} parent=5 // pred_check
      %p666 = pneg %p665
    $region38: #{_lambda_.16} parent=5 // pred_check_branch
      %668 = sbr.rel (%p666) target = $region40
    $region39: #{_lambda_.16} parent=5 // pred_region
      %s669 = ssub.s32 %s9, 2
      // Predicated region
      $region41: #{_lambda_.16} parent=39 // pred_check
        %p670 = pneg %p106
      $region42: #{_lambda_.16} parent=39 // pred_check_branch
        %672 = sbr.rel (%p670) target = $region44
      $region43: #{_lambda_.16} parent=39 // pred_region
        %p673 = scmp.lt.s32.totalorder %s15, 1
        %s674 = scalar_select %p673, %s15, 1
        %s675 = smul.addr %s674, 4
        %s676 = smul.addr %s675, 8
        %s677 = scalar_lea.vmem %s3, %s676
      $region44: #{_lambda_.16} parent=39 // pred_fallthru
        _
    $region40: #{_lambda_.16} parent=5 // pred_fallthru
      _
  $region6: #{_lambda_.16} parent=0 // loop_footer
    %s13 = sadd.s32 1, %s9
  $region7: #{_lambda_.16} parent=0 // loop_footer_branch
    %8 = sbr.rel target = $region3
  $region8: #{_lambda_.16} parent=0 // loop_exit
    _

// kernel: _lambda_.17
$region0: #{_lambda_.17}
  #allocation0 [shape = 'u32[]', space=smem, size = 0x4, offset = 0x4, fixed_abs, tag = 'smem constant byte address 0x4 - core index']
  #allocation1 [shape = 'u32[72,128]{1,0:T(1,128)}', space=vmem, size = 0x9000, scoped, tag = 'internal scratch']
  #allocation2 [shape = 'f32[128,8]{1,0:T(8,128)}', space=vmem, size = 0x10000, scoped, tag = 'scratch operand']
  %s0 = inlined_call_operand.vmem [shape: bf16[2,168,8], index: 0, kind: input, shape index: {}]
  %s1 = inlined_call_operand.vmem [shape: bf16[9,8,8], index: 1, kind: input, shape index: {}]
  %s2 = inlined_call_operand.vmem [shape: f32[1,8], index: 2, kind: input, shape index: {}]
  %s3 = inlined_call_operand.vmem [shape: f32[2,128,8], index: 3, kind: output, shape index: {}]
  %s4 = sld [smem:[#allocation0]]
  $region45: #{_lambda_.17} parent=0
    _
  %s6 = ssub.s32 1, %s4
  %s7 = scalar_select 0, %s6, %s4
  loop: start=0, step=1, limit=4
  $region2: #{_lambda_.17} parent=0 // loop_pre_header
    _
  $region3: #{_lambda_.17} parent=0 // loop_header
    %s9 = sphi 0, %s13
    %p10 = scmp.ge.s32.totalorder %s9, 4
    %s19 = sphi 0, %s21
    %s22 = sphi 0, %s19
    %s23 = sphi 0, %s22
    %s39 = sphi 0, %s23
    %s43 = sphi 0, %s43
    %s45 = sphi 0, %s43
    %s46 = sphi 0, %s45
    %s60 = sphi 0, %s46
    %s64 = sphi 0, %s64
    %s66 = sphi 0, %s64
    %s67 = sphi 0, %s66
    %s81 = sphi 0, %s67
    %s87 = sphi 0, %s89
    %s90 = sphi 0, %s87
    %s91 = sphi 0, %s90
    %s107 = sphi 0, %s91
  $region4: #{_lambda_.17} parent=0 // loop_header_branch
    %12 = sbr.rel (%p10) target = $region8
  $region5: #{_lambda_.17} parent=0 // loop_body
    %s14 = ssub.s32 %s9, 1
    %s15 = ssub.s32 %s9, 2
    %s16 = sadd.s32 %s9, 1
    %s17 = ssub.s32 %s9, %s16
    %p18 = scmp.eq.s32.totalorder %s17, 0
    %s20 = sadd.s32 %s19, 1
    %s21 = scalar_select %p18, %s19, %s20
    %p24 = pneg %p18
    %p25 = scmp.eq.s32.totalorder %s9, 1
    %p26 = por %p24, %p25
    %p27 = scmp.ne.s32.totalorder %s19, %s22
    %p28 = scmp.eq.s32.totalorder %s9, 0
    %p29 = por %p27, %p28
    %p30 = scmp.ne.s32.totalorder %s19, %s22
    %p31 = scmp.eq.s32.totalorder %s14, 1
    %p32 = por %p30, %p31
    %p33 = scmp.ne.s32.totalorder %s22, %s23
    %p34 = scmp.eq.s32.totalorder %s14, 0
    %p35 = por %p33, %p34
    %p36 = scmp.ne.s32.totalorder %s22, %s23
    %p37 = scmp.eq.s32.totalorder %s15, 1
    %p38 = por %p36, %p37
    %p40 = scmp.ne.s32.totalorder %s23, %s39
    %p41 = scmp.eq.s32.totalorder %s15, 0
    %p42 = por %p40, %p41
    %s44 = sadd.s32 %s43, 1
    %p47 = scmp.eq.s32.totalorder %s9, 1
    %p48 = scmp.ne.s32.totalorder %s43, %s45
    %p49 = scmp.eq.s32.totalorder %s9, 0
    %p50 = por %p48, %p49
    %p51 = scmp.ne.s32.totalorder %s43, %s45
    %p52 = scmp.eq.s32.totalorder %s14, 1
    %p53 = por %p51, %p52
    %p54 = scmp.ne.s32.totalorder %s45, %s46
    %p55 = scmp.eq.s32.totalorder %s14, 0
    %p56 = por %p54, %p55
    %p57 = scmp.ne.s32.totalorder %s45, %s46
    %p58 = scmp.eq.s32.totalorder %s15, 1
    %p59 = por %p57, %p58
    %p61 = scmp.ne.s32.totalorder %s46, %s60
    %p62 = scmp.eq.s32.totalorder %s15, 0
    %p63 = por %p61, %p62
    %s65 = sadd.s32 %s64, 1
    %p68 = scmp.eq.s32.totalorder %s9, 1
    %p69 = scmp.ne.s32.totalorder %s64, %s66
    %p70 = scmp.eq.s32.totalorder %s9, 0
    %p71 = por %p69, %p70
    %p72 = scmp.ne.s32.totalorder %s64, %s66
    %p73 = scmp.eq.s32.totalorder %s14, 1
    %p74 = por %p72, %p73
    %p75 = scmp.ne.s32.totalorder %s66, %s67
    %p76 = scmp.eq.s32.totalorder %s14, 0
    %p77 = por %p75, %p76
    %p78 = scmp.ne.s32.totalorder %s66, %s67
    %p79 = scmp.eq.s32.totalorder %s15, 1
    %p80 = por %p78, %p79
    %p82 = scmp.ne.s32.totalorder %s67, %s81
    %p83 = scmp.eq.s32.totalorder %s15, 0
    %p84 = por %p82, %p83
    %s85 = ssub.s32 %s9, %s16
    %p86 = scmp.eq.s32.totalorder %s85, 0
    %s88 = sadd.s32 %s87, 1
    %s89 = scalar_select %p86, %s87, %s88
    %p92 = pneg %p86
    %p93 = scmp.eq.s32.totalorder %s9, 1
    %p94 = por %p92, %p93
    %p95 = scmp.ne.s32.totalorder %s87, %s90
    %p96 = scmp.eq.s32.totalorder %s9, 0
    %p97 = por %p95, %p96
    %p98 = scmp.ne.s32.totalorder %s87, %s90
    %p99 = scmp.eq.s32.totalorder %s14, 1
    %p100 = por %p98, %p99
    %p101 = scmp.ne.s32.totalorder %s90, %s91
    %p102 = scmp.eq.s32.totalorder %s14, 0
    %p103 = por %p101, %p102
    %p104 = scmp.ne.s32.totalorder %s90, %s91
    %p105 = scmp.eq.s32.totalorder %s15, 1
    %p106 = por %p104, %p105
    %p108 = scmp.ne.s32.totalorder %s91, %s107
    %p109 = scmp.eq.s32.totalorder %s15, 0
    %p110 = por %p108, %p109
    %p111 = scmp.le.s32.totalorder 1, %s9
    %p112 = scmp.lt.s32.totalorder %s9, 3
    %p113 = pnand %p111, %p112
    %p114 = pneg %p113
    // Predicated region
    $region9: #{_lambda_.17} parent=5 // pred_check
      _
    $region10: #{_lambda_.17} parent=5 // pred_check_branch
      %116 = sbr.rel (%p113) target = $region12
    $region11: #{_lambda_.17} parent=5 // pred_region
      %s117 = ssub.s32 %s9, 1
      // Predicated region
      $region13: #{_lambda_.17} parent=11 // pred_check
        %p118 = pneg %p56
      $region14: #{_lambda_.17} parent=11 // pred_check_branch
        %120 = sbr.rel (%p118) target = $region16
      $region15: #{_lambda_.17} parent=11 // pred_region
        _
      $region16: #{_lambda_.17} parent=11 // pred_fallthru
        _
      // Predicated region
      $region17: #{_lambda_.17} parent=11 // pred_check
        %p121 = pneg %p77
      $region18: #{_lambda_.17} parent=11 // pred_check_branch
        %123 = sbr.rel (%p121) target = $region20
      $region19: #{_lambda_.17} parent=11 // pred_region
        _
      $region20: #{_lambda_.17} parent=11 // pred_fallthru
        _
    $region12: #{_lambda_.17} parent=5 // pred_fallthru
      _
    %p124 = scmp.lt.s32.totalorder %s9, 2
    // Predicated region
    $region21: #{_lambda_.17} parent=5 // pred_check
      %p125 = pneg %p124
    $region22: #{_lambda_.17} parent=5 // pred_check_branch
      %127 = sbr.rel (%p125) target = $region24
    $region23: #{_lambda_.17} parent=5 // pred_region
      // Predicated region
      $region25: #{_lambda_.17} parent=23 // pred_check
        %p128 = pneg %p29
      $region26: #{_lambda_.17} parent=23 // pred_check_branch
        %130 = sbr.rel (%p128) target = $region28
      $region27: #{_lambda_.17} parent=23 // pred_region
        %p131 = scmp.lt.s32.totalorder %s9, 1
        %s132 = scalar_select %p131, %s9, 1
        %s133 = smul.addr %s132, 21
        %s134 = smul.addr %s133, 4
        %s135 = scalar_lea.vmem %s0, %s134
      $region28: #{_lambda_.17} parent=23 // pred_fallthru
        _
    $region24: #{_lambda_.17} parent=5 // pred_fallthru
      _
    %p136 = scmp.le.s32.totalorder 1, %s9
    %p137 = scmp.lt.s32.totalorder %s9, 3
    %p138 = pnand %p136, %p137
    %p139 = pneg %p138
    // Predicated region
    $region29: #{_lambda_.17} parent=5 // pred_check
      _
    $region30: #{_lambda_.17} parent=5 // pred_check_branch
      %141 = sbr.rel (%p138) target = $region32
    $region31: #{_lambda_.17} parent=5 // pred_region
      %s142 = ssub.s32 %s9, 1
      %p143 = scmp.lt.s32.totalorder %s14, 1
      %s144 = scalar_select %p143, %s14, 1
      %s145 = smul.addr %s144, 21
      %s146 = smul.addr %s145, 4
      %s147 = scalar_lea.vmem %s0, %s146
      %p148 = pneg %p35
      %p149 = pneg %p32
      %p150 = pneg %p56
      %p151 = pneg %p53
      %p152 = pneg %p77
      %p153 = pneg %p74
      %p154 = pneg %p103
      %p155 = pneg %p100
      %p156 = scmp.lt.s32.totalorder %s14, 1
      %s157 = scalar_select %p156, %s14, 1
      %s158 = smul.addr %s157, 16
      %s159 = smul.addr %s158, 8
      %s160 = scalar_lea.vmem %s3, %s159
      %p161 = scmp.lt.s32.totalorder %s14, 1
      %s162 = scalar_select %p161, %s14, 1
      %s163 = smul.addr %s162, 21
      %s164 = smul.addr %s163, 4
      %s165 = scalar_lea.vmem %s0, %s164
      %p166 = scmp.lt.s32.totalorder %s14, 1
      %s167 = scalar_select %p166, %s14, 1
      %s168 = smul.addr %s167, 16
      %s169 = smul.addr %s168, 8
      %s170 = scalar_lea.vmem %s3, %s169
      %v172 = vld [vmem:[%s165] sm:$0xf]
      %v173 = vld [vmem:[%s165 + $0x4] sm:$0xf]
      %v174 = vld [vmem:[%s165 + $0x8] sm:$0xf]
      %v175 = vld [vmem:[%s165 + $0xc] sm:$0xf]
      %v176 = vld [vmem:[%s165 + $0x10] sm:$0xf]
      %v177 = vld [vmem:[%s165 + $0x14] sm:$0xf]
      %v178 = vld [vmem:[%s165 + $0x18] sm:$0xf]
      %v179 = vld [vmem:[%s165 + $0x1c] sm:$0xf]
      %v180 = vld [vmem:[%s165 + $0x20] sm:$0xf]
      %v181 = vld [vmem:[%s165 + $0x24] sm:$0xf]
      %v182 = vld [vmem:[%s165 + $0x28] sm:$0xf]
      %v183 = vld [vmem:[%s165 + $0x2c] sm:$0xf]
      %v184 = vld [vmem:[%s165 + $0x30] sm:$0xf]
      %v185 = vld [vmem:[%s165 + $0x34] sm:$0xf]
      %v186 = vld [vmem:[%s165 + $0x38] sm:$0xf]
      %v187 = vld [vmem:[%s165 + $0x3c] sm:$0xf]
      %v188 = vld [vmem:[%s165 + $0x40] sm:$0xf]
      %v189 = vld [vmem:[%s165 + $0x44] sm:$0xf]
      %v190 = vld [vmem:[%s165 + $0x48] sm:$0xf]
      %v191 = vld [vmem:[%s165 + $0x4c] sm:$0xf]
      %v192 = vld [vmem:[%s165 + $0x50] sm:$0xf]
      %v193 = vld [vmem:[%s2] sm:$0x1]
      %v195 = vperm.slane %v193, 0
      %vm197 = vcmask 64512
      %198 = vst.msk [vmem:[#allocation2] sm:$0xff] %vm197, %v195
      %199 = vst.msk [vmem:[#allocation2 + $0x8] sm:$0xff] %vm197, %v195
      %200 = vst.msk [vmem:[#allocation2 + $0x10] sm:$0xff] %vm197, %v195
      %201 = vst.msk [vmem:[#allocation2 + $0x18] sm:$0xff] %vm197, %v195
      %202 = vst.msk [vmem:[#allocation2 + $0x20] sm:$0xff] %vm197, %v195
      %203 = vst.msk [vmem:[#allocation2 + $0x28] sm:$0xff] %vm197, %v195
      %204 = vst.msk [vmem:[#allocation2 + $0x30] sm:$0xff] %vm197, %v195
      %205 = vst.msk [vmem:[#allocation2 + $0x38] sm:$0xff] %vm197, %v195
      %206 = vst.msk [vmem:[#allocation2 + $0x40] sm:$0xff] %vm197, %v195
      %207 = vst.msk [vmem:[#allocation2 + $0x48] sm:$0xff] %vm197, %v195
      %208 = vst.msk [vmem:[#allocation2 + $0x50] sm:$0xff] %vm197, %v195
      %209 = vst.msk [vmem:[#allocation2 + $0x58] sm:$0xff] %vm197, %v195
      %210 = vst.msk [vmem:[#allocation2 + $0x60] sm:$0xff] %vm197, %v195
      %211 = vst.msk [vmem:[#allocation2 + $0x68] sm:$0xff] %vm197, %v195
      %212 = vst.msk [vmem:[#allocation2 + $0x70] sm:$0xff] %vm197, %v195
      %213 = vst.msk [vmem:[#allocation2 + $0x78] sm:$0xff] %vm197, %v195
      %v214 = vld [vmem:[#allocation2] sm:$0xff]
      %v215 = vld [vmem:[#allocation2 + $0x8] sm:$0xff]
      %v216 = vld [vmem:[#allocation2 + $0x10] sm:$0xff]
      %v217 = vld [vmem:[#allocation2 + $0x18] sm:$0xff]
      %v218 = vld [vmem:[#allocation2 + $0x20] sm:$0xff]
      %v219 = vld [vmem:[#allocation2 + $0x28] sm:$0xff]
      %v220 = vld [vmem:[#allocation2 + $0x30] sm:$0xff]
      %v221 = vld [vmem:[#allocation2 + $0x38] sm:$0xff]
      %v222 = vld [vmem:[#allocation2 + $0x40] sm:$0xff]
      %v223 = vld [vmem:[#allocation2 + $0x48] sm:$0xff]
      %v224 = vld [vmem:[#allocation2 + $0x50] sm:$0xff]
      %v225 = vld [vmem:[#allocation2 + $0x58] sm:$0xff]
      %v226 = vld [vmem:[#allocation2 + $0x60] sm:$0xff]
      %v227 = vld [vmem:[#allocation2 + $0x68] sm:$0xff]
      %v228 = vld [vmem:[#allocation2 + $0x70] sm:$0xff]
      %v229 = vld [vmem:[#allocation2 + $0x78] sm:$0xff]
      %v230 = vld [vmem:[%s1] sm:$0xf]
      %v247 = vunpack.c.l.b16 %v172
      %v248 = vunpack.c.l.b16 %v173
      %v249 = vunpack.c.l.b16 %v174
      %v250 = vunpack.c.l.b16 %v175
      %v251 = vunpack.c.l.b16 %v176
      %v252 = vunpack.c.l.b16 %v177
      %v253 = vunpack.c.l.b16 %v178
      %v254 = vunpack.c.l.b16 %v179
      %v255 = vunpack.c.l.b16 %v180
      %v256 = vunpack.c.l.b16 %v181
      %v257 = vunpack.c.l.b16 %v182
      %v258 = vunpack.c.l.b16 %v183
      %v259 = vunpack.c.l.b16 %v184
      %v260 = vunpack.c.l.b16 %v185
      %v261 = vunpack.c.l.b16 %v186
      %v262 = vunpack.c.l.b16 %v187
      %v263 = vpack.c.b16 %v248, %v247
      %v264 = vpack.c.b16 %v250, %v249
      %v265 = vpack.c.b16 %v252, %v251
      %v266 = vpack.c.b16 %v254, %v253
      %v267 = vpack.c.b16 %v256, %v255
      %v268 = vpack.c.b16 %v258, %v257
      %v269 = vpack.c.b16 %v260, %v259
      %v270 = vpack.c.b16 %v262, %v261
      %v272 = vsel %vm197, %v263, 0
      %v275 = vsel %vm197, %v264, 0
      %v278 = vsel %vm197, %v265, 0
      %v281 = vsel %vm197, %v266, 0
      %v284 = vsel %vm197, %v267, 0
      %v287 = vsel %vm197, %v268, 0
      %v290 = vsel %vm197, %v269, 0
      %v293 = vsel %vm197, %v270, 0
      %vm295 = vcmask 1043456
      %v297 = vsel %vm295, %v230, 0
      %299 = vmatpush.bf16.msra.mxu0 0
      %300 = vmatpush.bf16.msra.mxu0 0
      %301 = vmatpush.bf16.msra.mxu0 0
      %302 = vmatpush.bf16.msra.mxu0 0
      %303 = vmatpush.bf16.msra.mxu0 0
      %304 = vmatpush.bf16.msra.mxu0 0
      %305 = vmatpush.bf16.msra.mxu0 0
      %306 = vmatpush.bf16.msra.mxu0 %v297
      %307 = vmatmul.bf16.gmra.mxu0 %v272
      %v308 = vpop.f32.mrf.mxu0
      %v309 = vadd.f32 0.0, %v308
      %v310 = vpop.f32.mrf.mxu0
      %v311 = vadd.f32 0.0, %v310
      %312 = vmatmul.bf16.gmra.mxu0 %v275
      %v313 = vpop.f32.mrf.mxu0
      %v314 = vadd.f32 0.0, %v313
      %v315 = vpop.f32.mrf.mxu0
      %v316 = vadd.f32 0.0, %v315
      %317 = vmatmul.bf16.gmra.mxu0 %v278
      %v318 = vpop.f32.mrf.mxu0
      %v319 = vadd.f32 0.0, %v318
      %v320 = vpop.f32.mrf.mxu0
      %v321 = vadd.f32 0.0, %v320
      %322 = vmatmul.bf16.gmra.mxu0 %v281
      %v323 = vpop.f32.mrf.mxu0
      %v324 = vadd.f32 0.0, %v323
      %v325 = vpop.f32.mrf.mxu0
      %v326 = vadd.f32 0.0, %v325
      %327 = vmatmul.bf16.gmra.mxu0 %v284
      %v328 = vpop.f32.mrf.mxu0
      %v329 = vadd.f32 0.0, %v328
      %v330 = vpop.f32.mrf.mxu0
      %v331 = vadd.f32 0.0, %v330
      %332 = vmatmul.bf16.gmra.mxu0 %v287
      %v333 = vpop.f32.mrf.mxu0
      %v334 = vadd.f32 0.0, %v333
      %v335 = vpop.f32.mrf.mxu0
      %v336 = vadd.f32 0.0, %v335
      %337 = vmatmul.bf16.gmra.mxu0 %v290
      %v338 = vpop.f32.mrf.mxu0
      %v339 = vadd.f32 0.0, %v338
      %v340 = vpop.f32.mrf.mxu0
      %v341 = vadd.f32 0.0, %v340
      %342 = vmatmul.bf16.gmra.mxu0 %v293
      %v343 = vpop.f32.mrf.mxu0
      %v344 = vadd.f32 0.0, %v343
      %v345 = vpop.f32.mrf.mxu0
      %v346 = vadd.f32 0.0, %v345
      %347 = vdwg.mxu0
      %v348 = vadd.f32 %v214, %v309
      %v349 = vadd.f32 %v215, %v311
      %v350 = vadd.f32 %v216, %v314
      %v351 = vadd.f32 %v217, %v316
      %v352 = vadd.f32 %v218, %v319
      %v353 = vadd.f32 %v219, %v321
      %v354 = vadd.f32 %v220, %v324
      %v355 = vadd.f32 %v221, %v326
      %v356 = vadd.f32 %v222, %v329
      %v357 = vadd.f32 %v223, %v331
      %v358 = vadd.f32 %v224, %v334
      %v359 = vadd.f32 %v225, %v336
      %v360 = vadd.f32 %v226, %v339
      %v361 = vadd.f32 %v227, %v341
      %v362 = vadd.f32 %v228, %v344
      %v363 = vadd.f32 %v229, %v346
      %364 = vst.msk [vmem:[#allocation2] sm:$0xff] %vm197, %v348
      %365 = vst.msk [vmem:[#allocation2 + $0x8] sm:$0xff] %vm197, %v349
      %366 = vst.msk [vmem:[#allocation2 + $0x10] sm:$0xff] %vm197, %v350
      %367 = vst.msk [vmem:[#allocation2 + $0x18] sm:$0xff] %vm197, %v351
      %368 = vst.msk [vmem:[#allocation2 + $0x20] sm:$0xff] %vm197, %v352
      %369 = vst.msk [vmem:[#allocation2 + $0x28] sm:$0xff] %vm197, %v353
      %370 = vst.msk [vmem:[#allocation2 + $0x30] sm:$0xff] %vm197, %v354
      %371 = vst.msk [vmem:[#allocation2 + $0x38] sm:$0xff] %vm197, %v355
      %372 = vst.msk [vmem:[#allocation2 + $0x40] sm:$0xff] %vm197, %v356
      %373 = vst.msk [vmem:[#allocation2 + $0x48] sm:$0xff] %vm197, %v357
      %374 = vst.msk [vmem:[#allocation2 + $0x50] sm:$0xff] %vm197, %v358
      %375 = vst.msk [vmem:[#allocation2 + $0x58] sm:$0xff] %vm197, %v359
      %376 = vst.msk [vmem:[#allocation2 + $0x60] sm:$0xff] %vm197, %v360
      %377 = vst.msk [vmem:[#allocation2 + $0x68] sm:$0xff] %vm197, %v361
      %378 = vst.msk [vmem:[#allocation2 + $0x70] sm:$0xff] %vm197, %v362
      %379 = vst.msk [vmem:[#allocation2 + $0x78] sm:$0xff] %vm197, %v363
      %v380 = vld [vmem:[#allocation2] sm:$0xff]
      %v381 = vld [vmem:[#allocation2 + $0x8] sm:$0xff]
      %v382 = vld [vmem:[#allocation2 + $0x10] sm:$0xff]
      %v383 = vld [vmem:[#allocation2 + $0x18] sm:$0xff]
      %v384 = vld [vmem:[#allocation2 + $0x20] sm:$0xff]
      %v385 = vld [vmem:[#allocation2 + $0x28] sm:$0xff]
      %v386 = vld [vmem:[#allocation2 + $0x30] sm:$0xff]
      %v387 = vld [vmem:[#allocation2 + $0x38] sm:$0xff]
      %v388 = vld [vmem:[#allocation2 + $0x40] sm:$0xff]
      %v389 = vld [vmem:[#allocation2 + $0x48] sm:$0xff]
      %v390 = vld [vmem:[#allocation2 + $0x50] sm:$0xff]
      %v391 = vld [vmem:[#allocation2 + $0x58] sm:$0xff]
      %v392 = vld [vmem:[#allocation2 + $0x60] sm:$0xff]
      %v393 = vld [vmem:[#allocation2 + $0x68] sm:$0xff]
      %v394 = vld [vmem:[#allocation2 + $0x70] sm:$0xff]
      %v395 = vld [vmem:[#allocation2 + $0x78] sm:$0xff]
      %s396 = scalar_lea.vmem %s1, 4
      %v397 = vld [vmem:[%s396] sm:$0xf]
      %v399 = vunpack.c.l.b16 %v188
      %v400 = vpack.c.b16 %v399, %v399
      %vm401 = vsmask.f32 7424
      %v402 = vshrl.u32 %v263, 16
      %v404 = vshll.u32 %v263, 16
      %v406 = vrot.slane %v404, 1
      %v407 = vor.u32 %v402, %v406
      %v408 = vshll.u32 %v264, 16
      %v410 = vrot.slane %v408, 1
      %v411 = vsel %vm401, %v407, %v410
      %v412 = vshrl.u32 %v264, 16
      %v414 = vor.u32 %v412, %v410
      %v415 = vshll.u32 %v265, 16
      %v417 = vrot.slane %v415, 1
      %v418 = vsel %vm401, %v414, %v417
      %v419 = vshrl.u32 %v265, 16
      %v421 = vor.u32 %v419, %v417
      %v422 = vshll.u32 %v266, 16
      %v424 = vrot.slane %v422, 1
      %v425 = vsel %vm401, %v421, %v424
      %v426 = vshrl.u32 %v266, 16
      %v428 = vor.u32 %v426, %v424
      %v429 = vshll.u32 %v267, 16
      %v431 = vrot.slane %v429, 1
      %v432 = vsel %vm401, %v428, %v431
      %v433 = vshrl.u32 %v267, 16
      %v435 = vor.u32 %v433, %v431
      %v436 = vshll.u32 %v268, 16
      %v438 = vrot.slane %v436, 1
      %v439 = vsel %vm401, %v435, %v438
      %v440 = vshrl.u32 %v268, 16
      %v442 = vor.u32 %v440, %v438
      %v443 = vshll.u32 %v269, 16
      %v445 = vrot.slane %v443, 1
      %v446 = vsel %vm401, %v442, %v445
      %v447 = vshrl.u32 %v269, 16
      %v449 = vor.u32 %v447, %v445
      %v450 = vshll.u32 %v270, 16
      %v452 = vrot.slane %v450, 1
      %v453 = vsel %vm401, %v449, %v452
      %v454 = vshrl.u32 %v270, 16
      %v456 = vor.u32 %v454, %v452
      %v458 = vshll.u32 %v400, 16
      %v460 = vrot.slane %v458, 1
      %v461 = vsel %vm401, %v456, %v460
      %v463 = vsel %vm197, %v411, 0
      %v466 = vsel %vm197, %v418, 0
      %v469 = vsel %vm197, %v425, 0
      %v472 = vsel %vm197, %v432, 0
      %v475 = vsel %vm197, %v439, 0
      %v478 = vsel %vm197, %v446, 0
      %v481 = vsel %vm197, %v453, 0
      %v484 = vsel %vm197, %v461, 0
      %v487 = vsel %vm295, %v397, 0
      %489 = vmatpush.bf16.msra.mxu0 0
      %490 = vmatpush.bf16.msra.mxu0 0
      %491 = vmatpush.bf16.msra.mxu0 0
      %492 = vmatpush.bf16.msra.mxu0 0
      %493 = vmatpush.bf16.msra.mxu0 0
      %494 = vmatpush.bf16.msra.mxu0 0
      %495 = vmatpush.bf16.msra.mxu0 0
      %496 = vmatpush.bf16.msra.mxu0 %v487
      %497 = vmatmul.bf16.gmra.mxu0 %v463
      %v498 = vpop.f32.mrf.mxu0
      %v499 = vadd.f32 0.0, %v498
      %v500 = vpop.f32.mrf.mxu0
      %v501 = vadd.f32 0.0, %v500
      %502 = vmatmul.bf16.gmra.mxu0 %v466
      %v503 = vpop.f32.mrf.mxu0
      %v504 = vadd.f32 0.0, %v503
      %v505 = vpop.f32.mrf.mxu0
      %v506 = vadd.f32 0.0, %v505
      %507 = vmatmul.bf16.gmra.mxu0 %v469
      %v508 = vpop.f32.mrf.mxu0
      %v509 = vadd.f32 0.0, %v508
      %v510 = vpop.f32.mrf.mxu0
      %v511 = vadd.f32 0.0, %v510
      %512 = vmatmul.bf16.gmra.mxu0 %v472
      %v513 = vpop.f32.mrf.mxu0
      %v514 = vadd.f32 0.0, %v513
      %v515 = vpop.f32.mrf.mxu0
      %v516 = vadd.f32 0.0, %v515
      %517 = vmatmul.bf16.gmra.mxu0 %v475
      %v518 = vpop.f32.mrf.mxu0
      %v519 = vadd.f32 0.0, %v518
      %v520 = vpop.f32.mrf.mxu0
      %v521 = vadd.f32 0.0, %v520
      %522 = vmatmul.bf16.gmra.mxu0 %v478
      %v523 = vpop.f32.mrf.mxu0
      %v524 = vadd.f32 0.0, %v523
      %v525 = vpop.f32.mrf.mxu0
      %v526 = vadd.f32 0.0, %v525
      %527 = vmatmul.bf16.gmra.mxu0 %v481
      %v528 = vpop.f32.mrf.mxu0
      %v529 = vadd.f32 0.0, %v528
      %v530 = vpop.f32.mrf.mxu0
      %v531 = vadd.f32 0.0, %v530
      %532 = vmatmul.bf16.gmra.mxu0 %v484
      %v533 = vpop.f32.mrf.mxu0
      %v534 = vadd.f32 0.0, %v533
      %v535 = vpop.f32.mrf.mxu0
      %v536 = vadd.f32 0.0, %v535
      %537 = vdwg.mxu0
      %v538 = vadd.f32 %v380, %v499
      %v539 = vadd.f32 %v381, %v501
      %v540 = vadd.f32 %v382, %v504
      %v541 = vadd.f32 %v383, %v506
      %v542 = vadd.f32 %v384, %v509
      %v543 = vadd.f32 %v385, %v511
      %v544 = vadd.f32 %v386, %v514
      %v545 = vadd.f32 %v387, %v516
      %v546 = vadd.f32 %v388, %v519
      %v547 = vadd.f32 %v389, %v521
      %v548 = vadd.f32 %v390, %v524
      %v549 = vadd.f32 %v391, %v526
      %v550 = vadd.f32 %v392, %v529
      %v551 = vadd.f32 %v393, %v531
      %v552 = vadd.f32 %v394, %v534
      %v553 = vadd.f32 %v395, %v536
      %554 = vst.msk [vmem:[#allocation2] sm:$0xff] %vm197, %v538
      %555 = vst.msk [vmem:[#allocation2 + $0x8] sm:$0xff] %vm197, %v539
      %556 = vst.msk [vmem:[#allocation2 + $0x10] sm:$0xff] %vm197, %v540
      %557 = vst.msk [vmem:[#allocation2 + $0x18] sm:$0xff] %vm197, %v541
      %558 = vst.msk [vmem:[#allocation2 + $0x20] sm:$0xff] %vm197, %v542
      %559 = vst.msk [vmem:[#allocation2 + $0x28] sm:$0xff] %vm197, %v543
      %560 = vst.msk [vmem:[#allocation2 + $0x30] sm:$0xff] %vm197, %v544
      %561 = vst.msk [vmem:[#allocation2 + $0x38] sm:$0xff] %vm197, %v545
      %562 = vst.msk [vmem:[#allocation2 + $0x40] sm:$0xff] %vm197, %v546
      %563 = vst.msk [vmem:[#allocation2 + $0x48] sm:$0xff] %vm197, %v547
      %564 = vst.msk [vmem:[#allocation2 + $0x50] sm:$0xff] %vm197, %v548
      %565 = vst.msk [vmem:[#allocation2 + $0x58] sm:$0xff] %vm197, %v549
      %566 = vst.msk [vmem:[#allocation2 + $0x60] sm:$0xff] %vm197, %v550
      %567 = vst.msk [vmem:[#allocation2 + $0x68] sm:$0xff] %vm197, %v551
      %568 = vst.msk [vmem:[#allocation2 + $0x70] sm:$0xff] %vm197, %v552
      %569 = vst.msk [vmem:[#allocation2 + $0x78] sm:$0xff] %vm197, %v553
      %v570 = vld [vmem:[#allocation2] sm:$0xff]
      %v571 = vld [vmem:[#allocation2 + $0x8] sm:$0xff]
      %v572 = vld [vmem:[#allocation2 + $0x10] sm:$0xff]
      %v573 = vld [vmem:[#allocation2 + $0x18] sm:$0xff]
      %v574 = vld [vmem:[#allocation2 + $0x20] sm:$0xff]
      %v575 = vld [vmem:[#allocation2 + $0x28] sm:$0xff]
      %v576 = vld [vmem:[#allocation2 + $0x30] sm:$0xff]
      %v577 = vld [vmem:[#allocation2 + $0x38] sm:$0xff]
      %v578 = vld [vmem:[#allocation2 + $0x40] sm:$0xff]
      %v579 = vld [vmem:[#allocation2 + $0x48] sm:$0xff]
      %v580 = vld [vmem:[#allocation2 + $0x50] sm:$0xff]
      %v581 = vld [vmem:[#allocation2 + $0x58] sm:$0xff]
      %v582 = vld [vmem:[#allocation2 + $0x60] sm:$0xff]
      %v583 = vld [vmem:[#allocation2 + $0x68] sm:$0xff]
      %v584 = vld [vmem:[#allocation2 + $0x70] sm:$0xff]
      %v585 = vld [vmem:[#allocation2 + $0x78] sm:$0xff]
      %s586 = scalar_lea.vmem %s1, 8
      %v587 = vld [vmem:[%s586] sm:$0xf]
      %vm588 = vcmask 1046528
      %v589 = vrot.slane %v263, 1
      %v590 = vrot.slane %v264, 1
      %v591 = vsel %vm588, %v589, %v590
      %v592 = vrot.slane %v265, 1
      %v593 = vsel %vm588, %v590, %v592
      %v594 = vrot.slane %v266, 1
      %v595 = vsel %vm588, %v592, %v594
      %v596 = vrot.slane %v267, 1
      %v597 = vsel %vm588, %v594, %v596
      %v598 = vrot.slane %v268, 1
      %v599 = vsel %vm588, %v596, %v598
      %v600 = vrot.slane %v269, 1
      %v601 = vsel %vm588, %v598, %v600
      %v602 = vrot.slane %v270, 1
      %v603 = vsel %vm588, %v600, %v602
      %v604 = vrot.slane %v400, 1
      %v605 = vsel %vm588, %v602, %v604
      %v607 = vsel %vm197, %v591, 0
      %v610 = vsel %vm197, %v593, 0
      %v613 = vsel %vm197, %v595, 0
      %v616 = vsel %vm197, %v597, 0
      %v619 = vsel %vm197, %v599, 0
      %v622 = vsel %vm197, %v601, 0
      %v625 = vsel %vm197, %v603, 0
      %v628 = vsel %vm197, %v605, 0
      %v631 = vsel %vm295, %v587, 0
      %633 = vmatpush.bf16.msra.mxu0 0
      %634 = vmatpush.bf16.msra.mxu0 0
      %635 = vmatpush.bf16.msra.mxu0 0
      %636 = vmatpush.bf16.msra.mxu0 0
      %637 = vmatpush.bf16.msra.mxu0 0
      %638 = vmatpush.bf16.msra.mxu0 0
      %639 = vmatpush.bf16.msra.mxu0 0
      %640 = vmatpush.bf16.msra.mxu0 %v631
      %641 = vmatmul.bf16.gmra.mxu0 %v607
      %v642 = vpop.f32.mrf.mxu0
      %v643 = vadd.f32 0.0, %v642
      %v644 = vpop.f32.mrf.mxu0
      %v645 = vadd.f32 0.0, %v644
      %646 = vmatmul.bf16.gmra.mxu0 %v610
      %v647 = vpop.f32.mrf.mxu0
      %v648 = vadd.f32 0.0, %v647
      %v649 = vpop.f32.mrf.mxu0
      %v650 = vadd.f32 0.0, %v649
      %651 = vmatmul.bf16.gmra.mxu0 %v613
      %v652 = vpop.f32.mrf.mxu0
      %v653 = vadd.f32 0.0, %v652
      %v654 = vpop.f32.mrf.mxu0
      %v655 = vadd.f32 0.0, %v654
      %656 = vmatmul.bf16.gmra.mxu0 %v616
      %v657 = vpop.f32.mrf.mxu0
      %v658 = vadd.f32 0.0, %v657
      %v659 = vpop.f32.mrf.mxu0
      %v660 = vadd.f32 0.0, %v659
      %661 = vmatmul.bf16.gmra.mxu0 %v619
      %v662 = vpop.f32.mrf.mxu0
      %v663 = vadd.f32 0.0, %v662
      %v664 = vpop.f32.mrf.mxu0
      %v665 = vadd.f32 0.0, %v664
      %666 = vmatmul.bf16.gmra.mxu0 %v622
      %v667 = vpop.f32.mrf.mxu0
      %v668 = vadd.f32 0.0, %v667
      %v669 = vpop.f32.mrf.mxu0
      %v670 = vadd.f32 0.0, %v669
      %671 = vmatmul.bf16.gmra.mxu0 %v625
      %v672 = vpop.f32.mrf.mxu0
      %v673 = vadd.f32 0.0, %v672
      %v674 = vpop.f32.mrf.mxu0
      %v675 = vadd.f32 0.0, %v674
      %676 = vmatmul.bf16.gmra.mxu0 %v628
      %v677 = vpop.f32.mrf.mxu0
      %v678 = vadd.f32 0.0, %v677
      %v679 = vpop.f32.mrf.mxu0
      %v680 = vadd.f32 0.0, %v679
      %681 = vdwg.mxu0
      %v682 = vadd.f32 %v570, %v643
      %v683 = vadd.f32 %v571, %v645
      %v684 = vadd.f32 %v572, %v648
      %v685 = vadd.f32 %v573, %v650
      %v686 = vadd.f32 %v574, %v653
      %v687 = vadd.f32 %v575, %v655
      %v688 = vadd.f32 %v576, %v658
      %v689 = vadd.f32 %v577, %v660
      %v690 = vadd.f32 %v578, %v663
      %v691 = vadd.f32 %v579, %v665
      %v692 = vadd.f32 %v580, %v668
      %v693 = vadd.f32 %v581, %v670
      %v694 = vadd.f32 %v582, %v673
      %v695 = vadd.f32 %v583, %v675
      %v696 = vadd.f32 %v584, %v678
      %v697 = vadd.f32 %v585, %v680
      %698 = vst.msk [vmem:[#allocation2] sm:$0xff] %vm197, %v682
      %699 = vst.msk [vmem:[#allocation2 + $0x8] sm:$0xff] %vm197, %v683
      %700 = vst.msk [vmem:[#allocation2 + $0x10] sm:$0xff] %vm197, %v684
      %701 = vst.msk [vmem:[#allocation2 + $0x18] sm:$0xff] %vm197, %v685
      %702 = vst.msk [vmem:[#allocation2 + $0x20] sm:$0xff] %vm197, %v686
      %703 = vst.msk [vmem:[#allocation2 + $0x28] sm:$0xff] %vm197, %v687
      %704 = vst.msk [vmem:[#allocation2 + $0x30] sm:$0xff] %vm197, %v688
      %705 = vst.msk [vmem:[#allocation2 + $0x38] sm:$0xff] %vm197, %v689
      %706 = vst.msk [vmem:[#allocation2 + $0x40] sm:$0xff] %vm197, %v690
      %707 = vst.msk [vmem:[#allocation2 + $0x48] sm:$0xff] %vm197, %v691
      %708 = vst.msk [vmem:[#allocation2 + $0x50] sm:$0xff] %vm197, %v692
      %709 = vst.msk [vmem:[#allocation2 + $0x58] sm:$0xff] %vm197, %v693
      %710 = vst.msk [vmem:[#allocation2 + $0x60] sm:$0xff] %vm197, %v694
      %711 = vst.msk [vmem:[#allocation2 + $0x68] sm:$0xff] %vm197, %v695
      %712 = vst.msk [vmem:[#allocation2 + $0x70] sm:$0xff] %vm197, %v696
      %713 = vst.msk [vmem:[#allocation2 + $0x78] sm:$0xff] %vm197, %v697
      %v714 = vld [vmem:[#allocation2] sm:$0xff]
      %v715 = vld [vmem:[#allocation2 + $0x8] sm:$0xff]
      %v716 = vld [vmem:[#allocation2 + $0x10] sm:$0xff]
      %v717 = vld [vmem:[#allocation2 + $0x18] sm:$0xff]
      %v718 = vld [vmem:[#allocation2 + $0x20] sm:$0xff]
      %v719 = vld [vmem:[#allocation2 + $0x28] sm:$0xff]
      %v720 = vld [vmem:[#allocation2 + $0x30] sm:$0xff]
      %v721 = vld [vmem:[#allocation2 + $0x38] sm:$0xff]
      %v722 = vld [vmem:[#allocation2 + $0x40] sm:$0xff]
      %v723 = vld [vmem:[#allocation2 + $0x48] sm:$0xff]
      %v724 = vld [vmem:[#allocation2 + $0x50] sm:$0xff]
      %v725 = vld [vmem:[#allocation2 + $0x58] sm:$0xff]
      %v726 = vld [vmem:[#allocation2 + $0x60] sm:$0xff]
      %v727 = vld [vmem:[#allocation2 + $0x68] sm:$0xff]
      %v728 = vld [vmem:[#allocation2 + $0x70] sm:$0xff]
      %v729 = vld [vmem:[#allocation2 + $0x78] sm:$0xff]
      %s730 = scalar_lea.vmem %s1, 12
      %v731 = vld [vmem:[%s730] sm:$0xf]
      %v733 = vunpack.c.l.b16 %v189
      %v734 = vpack.c.b16 %v733, %v399
      %v736 = vsel %vm197, %v734, 0
      %v739 = vsel %vm295, %v731, 0
      %741 = vmatpush.bf16.msra.mxu0 0
      %742 = vmatpush.bf16.msra.mxu0 0
      %743 = vmatpush.bf16.msra.mxu0 0
      %744 = vmatpush.bf16.msra.mxu0 0
      %745 = vmatpush.bf16.msra.mxu0 0
      %746 = vmatpush.bf16.msra.mxu0 0
      %747 = vmatpush.bf16.msra.mxu0 0
      %748 = vmatpush.bf16.msra.mxu0 %v739
      %749 = vmatmul.bf16.gmra.mxu0 %v275
      %v750 = vpop.f32.mrf.mxu0
      %v751 = vadd.f32 0.0, %v750
      %v752 = vpop.f32.mrf.mxu0
      %v753 = vadd.f32 0.0, %v752
      %754 = vmatmul.bf16.gmra.mxu0 %v278
      %v755 = vpop.f32.mrf.mxu0
      %v756 = vadd.f32 0.0, %v755
      %v757 = vpop.f32.mrf.mxu0
      %v758 = vadd.f32 0.0, %v757
      %759 = vmatmul.bf16.gmra.mxu0 %v281
      %v760 = vpop.f32.mrf.mxu0
      %v761 = vadd.f32 0.0, %v760
      %v762 = vpop.f32.mrf.mxu0
      %v763 = vadd.f32 0.0, %v762
      %764 = vmatmul.bf16.gmra.mxu0 %v284
      %v765 = vpop.f32.mrf.mxu0
      %v766 = vadd.f32 0.0, %v765
      %v767 = vpop.f32.mrf.mxu0
      %v768 = vadd.f32 0.0, %v767
      %769 = vmatmul.bf16.gmra.mxu0 %v287
      %v770 = vpop.f32.mrf.mxu0
      %v771 = vadd.f32 0.0, %v770
      %v772 = vpop.f32.mrf.mxu0
      %v773 = vadd.f32 0.0, %v772
      %774 = vmatmul.bf16.gmra.mxu0 %v290
      %v775 = vpop.f32.mrf.mxu0
      %v776 = vadd.f32 0.0, %v775
      %v777 = vpop.f32.mrf.mxu0
      %v778 = vadd.f32 0.0, %v777
      %779 = vmatmul.bf16.gmra.mxu0 %v293
      %v780 = vpop.f32.mrf.mxu0
      %v781 = vadd.f32 0.0, %v780
      %v782 = vpop.f32.mrf.mxu0
      %v783 = vadd.f32 0.0, %v782
      %784 = vmatmul.bf16.gmra.mxu0 %v736
      %v785 = vpop.f32.mrf.mxu0
      %v786 = vadd.f32 0.0, %v785
      %v787 = vpop.f32.mrf.mxu0
      %v788 = vadd.f32 0.0, %v787
      %789 = vdwg.mxu0
      %v790 = vadd.f32 %v714, %v751
      %v791 = vadd.f32 %v715, %v753
      %v792 = vadd.f32 %v716, %v756
      %v793 = vadd.f32 %v717, %v758
      %v794 = vadd.f32 %v718, %v761
      %v795 = vadd.f32 %v719, %v763
      %v796 = vadd.f32 %v720, %v766
      %v797 = vadd.f32 %v721, %v768
      %v798 = vadd.f32 %v722, %v771
      %v799 = vadd.f32 %v723, %v773
      %v800 = vadd.f32 %v724, %v776
      %v801 = vadd.f32 %v725, %v778
      %v802 = vadd.f32 %v726, %v781
      %v803 = vadd.f32 %v727, %v783
      %v804 = vadd.f32 %v728, %v786
      %v805 = vadd.f32 %v729, %v788
      %806 = vst.msk [vmem:[#allocation2] sm:$0xff] %vm197, %v790
      %807 = vst.msk [vmem:[#allocation2 + $0x8] sm:$0xff] %vm197, %v791
      %808 = vst.msk [vmem:[#allocation2 + $0x10] sm:$0xff] %vm197, %v792
      %809 = vst.msk [vmem:[#allocation2 + $0x18] sm:$0xff] %vm197, %v793
      %810 = vst.msk [vmem:[#allocation2 + $0x20] sm:$0xff] %vm197, %v794
      %811 = vst.msk [vmem:[#allocation2 + $0x28] sm:$0xff] %vm197, %v795
      %812 = vst.msk [vmem:[#allocation2 + $0x30] sm:$0xff] %vm197, %v796
      %813 = vst.msk [vmem:[#allocation2 + $0x38] sm:$0xff] %vm197, %v797
      %814 = vst.msk [vmem:[#allocation2 + $0x40] sm:$0xff] %vm197, %v798
      %815 = vst.msk [vmem:[#allocation2 + $0x48] sm:$0xff] %vm197, %v799
      %816 = vst.msk [vmem:[#allocation2 + $0x50] sm:$0xff] %vm197, %v800
      %817 = vst.msk [vmem:[#allocation2 + $0x58] sm:$0xff] %vm197, %v801
      %818 = vst.msk [vmem:[#allocation2 + $0x60] sm:$0xff] %vm197, %v802
      %819 = vst.msk [vmem:[#allocation2 + $0x68] sm:$0xff] %vm197, %v803
      %820 = vst.msk [vmem:[#allocation2 + $0x70] sm:$0xff] %vm197, %v804
      %821 = vst.msk [vmem:[#allocation2 + $0x78] sm:$0xff] %vm197, %v805
      %v822 = vld [vmem:[#allocation2] sm:$0xff]
      %v823 = vld [vmem:[#allocation2 + $0x8] sm:$0xff]
      %v824 = vld [vmem:[#allocation2 + $0x10] sm:$0xff]
      %v825 = vld [vmem:[#allocation2 + $0x18] sm:$0xff]
      %v826 = vld [vmem:[#allocation2 + $0x20] sm:$0xff]
      %v827 = vld [vmem:[#allocation2 + $0x28] sm:$0xff]
      %v828 = vld [vmem:[#allocation2 + $0x30] sm:$0xff]
      %v829 = vld [vmem:[#allocation2 + $0x38] sm:$0xff]
      %v830 = vld [vmem:[#allocation2 + $0x40] sm:$0xff]
      %v831 = vld [vmem:[#allocation2 + $0x48] sm:$0xff]
      %v832 = vld [vmem:[#allocation2 + $0x50] sm:$0xff]
      %v833 = vld [vmem:[#allocation2 + $0x58] sm:$0xff]
      %v834 = vld [vmem:[#allocation2 + $0x60] sm:$0xff]
      %v835 = vld [vmem:[#allocation2 + $0x68] sm:$0xff]
      %v836 = vld [vmem:[#allocation2 + $0x70] sm:$0xff]
      %v837 = vld [vmem:[#allocation2 + $0x78] sm:$0xff]
      %s838 = scalar_lea.vmem %s1, 16
      %v839 = vld [vmem:[%s838] sm:$0xf]
      %v841 = vunpack.c.l.b16 %v190
      %v842 = vpack.c.b16 %v841, %v841
      %v843 = vshll.u32 %v734, 16
      %v845 = vrot.slane %v843, 1
      %v846 = vsel %vm401, %v456, %v845
      %v847 = vshrl.u32 %v734, 16
      %v849 = vor.u32 %v847, %v845
      %v851 = vshll.u32 %v842, 16
      %v853 = vrot.slane %v851, 1
      %v854 = vsel %vm401, %v849, %v853
      %v856 = vsel %vm197, %v846, 0
      %v859 = vsel %vm197, %v854, 0
      %v862 = vsel %vm295, %v839, 0
      %864 = vmatpush.bf16.msra.mxu0 0
      %865 = vmatpush.bf16.msra.mxu0 0
      %866 = vmatpush.bf16.msra.mxu0 0
      %867 = vmatpush.bf16.msra.mxu0 0
      %868 = vmatpush.bf16.msra.mxu0 0
      %869 = vmatpush.bf16.msra.mxu0 0
      %870 = vmatpush.bf16.msra.mxu0 0
      %871 = vmatpush.bf16.msra.mxu0 %v862
      %872 = vmatmul.bf16.gmra.mxu0 %v466
      %v873 = vpop.f32.mrf.mxu0
      %v874 = vadd.f32 0.0, %v873
      %v875 = vpop.f32.mrf.mxu0
      %v876 = vadd.f32 0.0, %v875
      %877 = vmatmul.bf16.gmra.mxu0 %v469
      %v878 = vpop.f32.mrf.mxu0
      %v879 = vadd.f32 0.0, %v878
      %v880 = vpop.f32.mrf.mxu0
      %v881 = vadd.f32 0.0, %v880
      %882 = vmatmul.bf16.gmra.mxu0 %v472
      %v883 = vpop.f32.mrf.mxu0
      %v884 = vadd.f32 0.0, %v883
      %v885 = vpop.f32.mrf.mxu0
      %v886 = vadd.f32 0.0, %v885
      %887 = vmatmul.bf16.gmra.mxu0 %v475
      %v888 = vpop.f32.mrf.mxu0
      %v889 = vadd.f32 0.0, %v888
      %v890 = vpop.f32.mrf.mxu0
      %v891 = vadd.f32 0.0, %v890
      %892 = vmatmul.bf16.gmra.mxu0 %v478
      %v893 = vpop.f32.mrf.mxu0
      %v894 = vadd.f32 0.0, %v893
      %v895 = vpop.f32.mrf.mxu0
      %v896 = vadd.f32 0.0, %v895
      %897 = vmatmul.bf16.gmra.mxu0 %v481
      %v898 = vpop.f32.mrf.mxu0
      %v899 = vadd.f32 0.0, %v898
      %v900 = vpop.f32.mrf.mxu0
      %v901 = vadd.f32 0.0, %v900
      %902 = vmatmul.bf16.gmra.mxu0 %v856
      %v903 = vpop.f32.mrf.mxu0
      %v904 = vadd.f32 0.0, %v903
      %v905 = vpop.f32.mrf.mxu0
      %v906 = vadd.f32 0.0, %v905
      %907 = vmatmul.bf16.gmra.mxu0 %v859
      %v908 = vpop.f32.mrf.mxu0
      %v909 = vadd.f32 0.0, %v908
      %v910 = vpop.f32.mrf.mxu0
      %v911 = vadd.f32 0.0, %v910
      %912 = vdwg.mxu0
      %v913 = vadd.f32 %v822, %v874
      %v914 = vadd.f32 %v823, %v876
      %v915 = vadd.f32 %v824, %v879
      %v916 = vadd.f32 %v825, %v881
      %v917 = vadd.f32 %v826, %v884
      %v918 = vadd.f32 %v827, %v886
      %v919 = vadd.f32 %v828, %v889
      %v920 = vadd.f32 %v829, %v891
      %v921 = vadd.f32 %v830, %v894
      %v922 = vadd.f32 %v831, %v896
      %v923 = vadd.f32 %v832, %v899
      %v924 = vadd.f32 %v833, %v901
      %v925 = vadd.f32 %v834, %v904
      %v926 = vadd.f32 %v835, %v906
      %v927 = vadd.f32 %v836, %v909
      %v928 = vadd.f32 %v837, %v911
      %929 = vst.msk [vmem:[#allocation2] sm:$0xff] %vm197, %v913
      %930 = vst.msk [vmem:[#allocation2 + $0x8] sm:$0xff] %vm197, %v914
      %931 = vst.msk [vmem:[#allocation2 + $0x10] sm:$0xff] %vm197, %v915
      %932 = vst.msk [vmem:[#allocation2 + $0x18] sm:$0xff] %vm197, %v916
      %933 = vst.msk [vmem:[#allocation2 + $0x20] sm:$0xff] %vm197, %v917
      %934 = vst.msk [vmem:[#allocation2 + $0x28] sm:$0xff] %vm197, %v918
      %935 = vst.msk [vmem:[#allocation2 + $0x30] sm:$0xff] %vm197, %v919
      %936 = vst.msk [vmem:[#allocation2 + $0x38] sm:$0xff] %vm197, %v920
      %937 = vst.msk [vmem:[#allocation2 + $0x40] sm:$0xff] %vm197, %v921
      %938 = vst.msk [vmem:[#allocation2 + $0x48] sm:$0xff] %vm197, %v922
      %939 = vst.msk [vmem:[#allocation2 + $0x50] sm:$0xff] %vm197, %v923
      %940 = vst.msk [vmem:[#allocation2 + $0x58] sm:$0xff] %vm197, %v924
      %941 = vst.msk [vmem:[#allocation2 + $0x60] sm:$0xff] %vm197, %v925
      %942 = vst.msk [vmem:[#allocation2 + $0x68] sm:$0xff] %vm197, %v926
      %943 = vst.msk [vmem:[#allocation2 + $0x70] sm:$0xff] %vm197, %v927
      %944 = vst.msk [vmem:[#allocation2 + $0x78] sm:$0xff] %vm197, %v928
      %v945 = vld [vmem:[#allocation2] sm:$0xff]
      %v946 = vld [vmem:[#allocation2 + $0x8] sm:$0xff]
      %v947 = vld [vmem:[#allocation2 + $0x10] sm:$0xff]
      %v948 = vld [vmem:[#allocation2 + $0x18] sm:$0xff]
      %v949 = vld [vmem:[#allocation2 + $0x20] sm:$0xff]
      %v950 = vld [vmem:[#allocation2 + $0x28] sm:$0xff]
      %v951 = vld [vmem:[#allocation2 + $0x30] sm:$0xff]
      %v952 = vld [vmem:[#allocation2 + $0x38] sm:$0xff]
      %v953 = vld [vmem:[#allocation2 + $0x40] sm:$0xff]
      %v954 = vld [vmem:[#allocation2 + $0x48] sm:$0xff]
      %v955 = vld [vmem:[#allocation2 + $0x50] sm:$0xff]
      %v956 = vld [vmem:[#allocation2 + $0x58] sm:$0xff]
      %v957 = vld [vmem:[#allocation2 + $0x60] sm:$0xff]
      %v958 = vld [vmem:[#allocation2 + $0x68] sm:$0xff]
      %v959 = vld [vmem:[#allocation2 + $0x70] sm:$0xff]
      %v960 = vld [vmem:[#allocation2 + $0x78] sm:$0xff]
      %s961 = scalar_lea.vmem %s1, 20
      %v962 = vld [vmem:[%s961] sm:$0xf]
      %v963 = vrot.slane %v734, 1
      %v964 = vsel %vm588, %v602, %v963
      %v965 = vrot.slane %v842, 1
      %v966 = vsel %vm588, %v963, %v965
      %v968 = vsel %vm197, %v964, 0
      %v971 = vsel %vm197, %v966, 0
      %v974 = vsel %vm295, %v962, 0
      %976 = vmatpush.bf16.msra.mxu0 0
      %977 = vmatpush.bf16.msra.mxu0 0
      %978 = vmatpush.bf16.msra.mxu0 0
      %979 = vmatpush.bf16.msra.mxu0 0
      %980 = vmatpush.bf16.msra.mxu0 0
      %981 = vmatpush.bf16.msra.mxu0 0
      %982 = vmatpush.bf16.msra.mxu0 0
      %983 = vmatpush.bf16.msra.mxu0 %v974
      %984 = vmatmul.bf16.gmra.mxu0 %v610
      %v985 = vpop.f32.mrf.mxu0
      %v986 = vadd.f32 0.0, %v985
      %v987 = vpop.f32.mrf.mxu0
      %v988 = vadd.f32 0.0, %v987
      %989 = vmatmul.bf16.gmra.mxu0 %v613
      %v990 = vpop.f32.mrf.mxu0
      %v991 = vadd.f32 0.0, %v990
      %v992 = vpop.f32.mrf.mxu0
      %v993 = vadd.f32 0.0, %v992
      %994 = vmatmul.bf16.gmra.mxu0 %v616
      %v995 = vpop.f32.mrf.mxu0
      %v996 = vadd.f32 0.0, %v995
      %v997 = vpop.f32.mrf.mxu0
      %v998 = vadd.f32 0.0, %v997
      %999 = vmatmul.bf16.gmra.mxu0 %v619
      %v1000 = vpop.f32.mrf.mxu0
      %v1001 = vadd.f32 0.0, %v1000
      %v1002 = vpop.f32.mrf.mxu0
      %v1003 = vadd.f32 0.0, %v1002
      %1004 = vmatmul.bf16.gmra.mxu0 %v622
      %v1005 = vpop.f32.mrf.mxu0
      %v1006 = vadd.f32 0.0, %v1005
      %v1007 = vpop.f32.mrf.mxu0
      %v1008 = vadd.f32 0.0, %v1007
      %1009 = vmatmul.bf16.gmra.mxu0 %v625
      %v1010 = vpop.f32.mrf.mxu0
      %v1011 = vadd.f32 0.0, %v1010
      %v1012 = vpop.f32.mrf.mxu0
      %v1013 = vadd.f32 0.0, %v1012
      %1014 = vmatmul.bf16.gmra.mxu0 %v968
      %v1015 = vpop.f32.mrf.mxu0
      %v1016 = vadd.f32 0.0, %v1015
      %v1017 = vpop.f32.mrf.mxu0
      %v1018 = vadd.f32 0.0, %v1017
      %1019 = vmatmul.bf16.gmra.mxu0 %v971
      %v1020 = vpop.f32.mrf.mxu0
      %v1021 = vadd.f32 0.0, %v1020
      %v1022 = vpop.f32.mrf.mxu0
      %v1023 = vadd.f32 0.0, %v1022
      %1024 = vdwg.mxu0
      %v1025 = vadd.f32 %v945, %v986
      %v1026 = vadd.f32 %v946, %v988
      %v1027 = vadd.f32 %v947, %v991
      %v1028 = vadd.f32 %v948, %v993
      %v1029 = vadd.f32 %v949, %v996
      %v1030 = vadd.f32 %v950, %v998
      %v1031 = vadd.f32 %v951, %v1001
      %v1032 = vadd.f32 %v952, %v1003
      %v1033 = vadd.f32 %v953, %v1006
      %v1034 = vadd.f32 %v954, %v1008
      %v1035 = vadd.f32 %v955, %v1011
      %v1036 = vadd.f32 %v956, %v1013
      %v1037 = vadd.f32 %v957, %v1016
      %v1038 = vadd.f32 %v958, %v1018
      %v1039 = vadd.f32 %v959, %v1021
      %v1040 = vadd.f32 %v960, %v1023
      %1041 = vst.msk [vmem:[#allocation2] sm:$0xff] %vm197, %v1025
      %1042 = vst.msk [vmem:[#allocation2 + $0x8] sm:$0xff] %vm197, %v1026
      %1043 = vst.msk [vmem:[#allocation2 + $0x10] sm:$0xff] %vm197, %v1027
      %1044 = vst.msk [vmem:[#allocation2 + $0x18] sm:$0xff] %vm197, %v1028
      %1045 = vst.msk [vmem:[#allocation2 + $0x20] sm:$0xff] %vm197, %v1029
      %1046 = vst.msk [vmem:[#allocation2 + $0x28] sm:$0xff] %vm197, %v1030
      %1047 = vst.msk [vmem:[#allocation2 + $0x30] sm:$0xff] %vm197, %v1031
      %1048 = vst.msk [vmem:[#allocation2 + $0x38] sm:$0xff] %vm197, %v1032
      %1049 = vst.msk [vmem:[#allocation2 + $0x40] sm:$0xff] %vm197, %v1033
      %1050 = vst.msk [vmem:[#allocation2 + $0x48] sm:$0xff] %vm197, %v1034
      %1051 = vst.msk [vmem:[#allocation2 + $0x50] sm:$0xff] %vm197, %v1035
      %1052 = vst.msk [vmem:[#allocation2 + $0x58] sm:$0xff] %vm197, %v1036
      %1053 = vst.msk [vmem:[#allocation2 + $0x60] sm:$0xff] %vm197, %v1037
      %1054 = vst.msk [vmem:[#allocation2 + $0x68] sm:$0xff] %vm197, %v1038
      %1055 = vst.msk [vmem:[#allocation2 + $0x70] sm:$0xff] %vm197, %v1039
      %1056 = vst.msk [vmem:[#allocation2 + $0x78] sm:$0xff] %vm197, %v1040
      %v1057 = vld [vmem:[#allocation2] sm:$0xff]
      %v1058 = vld [vmem:[#allocation2 + $0x8] sm:$0xff]
      %v1059 = vld [vmem:[#allocation2 + $0x10] sm:$0xff]
      %v1060 = vld [vmem:[#allocation2 + $0x18] sm:$0xff]
      %v1061 = vld [vmem:[#allocation2 + $0x20] sm:$0xff]
      %v1062 = vld [vmem:[#allocation2 + $0x28] sm:$0xff]
      %v1063 = vld [vmem:[#allocation2 + $0x30] sm:$0xff]
      %v1064 = vld [vmem:[#allocation2 + $0x38] sm:$0xff]
      %v1065 = vld [vmem:[#allocation2 + $0x40] sm:$0xff]
      %v1066 = vld [vmem:[#allocation2 + $0x48] sm:$0xff]
      %v1067 = vld [vmem:[#allocation2 + $0x50] sm:$0xff]
      %v1068 = vld [vmem:[#allocation2 + $0x58] sm:$0xff]
      %v1069 = vld [vmem:[#allocation2 + $0x60] sm:$0xff]
      %v1070 = vld [vmem:[#allocation2 + $0x68] sm:$0xff]
      %v1071 = vld [vmem:[#allocation2 + $0x70] sm:$0xff]
      %v1072 = vld [vmem:[#allocation2 + $0x78] sm:$0xff]
      %s1073 = scalar_lea.vmem %s1, 24
      %v1074 = vld [vmem:[%s1073] sm:$0xf]
      %v1076 = vunpack.c.l.b16 %v191
      %v1077 = vpack.c.b16 %v1076, %v841
      %v1079 = vsel %vm197, %v1077, 0
      %v1082 = vsel %vm295, %v1074, 0
      %1084 = vmatpush.bf16.msra.mxu0 0
      %1085 = vmatpush.bf16.msra.mxu0 0
      %1086 = vmatpush.bf16.msra.mxu0 0
      %1087 = vmatpush.bf16.msra.mxu0 0
      %1088 = vmatpush.bf16.msra.mxu0 0
      %1089 = vmatpush.bf16.msra.mxu0 0
      %1090 = vmatpush.bf16.msra.mxu0 0
      %1091 = vmatpush.bf16.msra.mxu0 %v1082
      %1092 = vmatmul.bf16.gmra.mxu0 %v278
      %v1093 = vpop.f32.mrf.mxu0
      %v1094 = vadd.f32 0.0, %v1093
      %v1095 = vpop.f32.mrf.mxu0
      %v1096 = vadd.f32 0.0, %v1095
      %1097 = vmatmul.bf16.gmra.mxu0 %v281
      %v1098 = vpop.f32.mrf.mxu0
      %v1099 = vadd.f32 0.0, %v1098
      %v1100 = vpop.f32.mrf.mxu0
      %v1101 = vadd.f32 0.0, %v1100
      %1102 = vmatmul.bf16.gmra.mxu0 %v284
      %v1103 = vpop.f32.mrf.mxu0
      %v1104 = vadd.f32 0.0, %v1103
      %v1105 = vpop.f32.mrf.mxu0
      %v1106 = vadd.f32 0.0, %v1105
      %1107 = vmatmul.bf16.gmra.mxu0 %v287
      %v1108 = vpop.f32.mrf.mxu0
      %v1109 = vadd.f32 0.0, %v1108
      %v1110 = vpop.f32.mrf.mxu0
      %v1111 = vadd.f32 0.0, %v1110
      %1112 = vmatmul.bf16.gmra.mxu0 %v290
      %v1113 = vpop.f32.mrf.mxu0
      %v1114 = vadd.f32 0.0, %v1113
      %v1115 = vpop.f32.mrf.mxu0
      %v1116 = vadd.f32 0.0, %v1115
      %1117 = vmatmul.bf16.gmra.mxu0 %v293
      %v1118 = vpop.f32.mrf.mxu0
      %v1119 = vadd.f32 0.0, %v1118
      %v1120 = vpop.f32.mrf.mxu0
      %v1121 = vadd.f32 0.0, %v1120
      %1122 = vmatmul.bf16.gmra.mxu0 %v736
      %v1123 = vpop.f32.mrf.mxu0
      %v1124 = vadd.f32 0.0, %v1123
      %v1125 = vpop.f32.mrf.mxu0
      %v1126 = vadd.f32 0.0, %v1125
      %1127 = vmatmul.bf16.gmra.mxu0 %v1079
      %v1128 = vpop.f32.mrf.mxu0
      %v1129 = vadd.f32 0.0, %v1128
      %v1130 = vpop.f32.mrf.mxu0
      %v1131 = vadd.f32 0.0, %v1130
      %1132 = vdwg.mxu0
      %v1133 = vadd.f32 %v1057, %v1094
      %v1134 = vadd.f32 %v1058, %v1096
      %v1135 = vadd.f32 %v1059, %v1099
      %v1136 = vadd.f32 %v1060, %v1101
      %v1137 = vadd.f32 %v1061, %v1104
      %v1138 = vadd.f32 %v1062, %v1106
      %v1139 = vadd.f32 %v1063, %v1109
      %v1140 = vadd.f32 %v1064, %v1111
      %v1141 = vadd.f32 %v1065, %v1114
      %v1142 = vadd.f32 %v1066, %v1116
      %v1143 = vadd.f32 %v1067, %v1119
      %v1144 = vadd.f32 %v1068, %v1121
      %v1145 = vadd.f32 %v1069, %v1124
      %v1146 = vadd.f32 %v1070, %v1126
      %v1147 = vadd.f32 %v1071, %v1129
      %v1148 = vadd.f32 %v1072, %v1131
      %1149 = vst.msk [vmem:[#allocation2] sm:$0xff] %vm197, %v1133
      %1150 = vst.msk [vmem:[#allocation2 + $0x8] sm:$0xff] %vm197, %v1134
      %1151 = vst.msk [vmem:[#allocation2 + $0x10] sm:$0xff] %vm197, %v1135
      %1152 = vst.msk [vmem:[#allocation2 + $0x18] sm:$0xff] %vm197, %v1136
      %1153 = vst.msk [vmem:[#allocation2 + $0x20] sm:$0xff] %vm197, %v1137
      %1154 = vst.msk [vmem:[#allocation2 + $0x28] sm:$0xff] %vm197, %v1138
      %1155 = vst.msk [vmem:[#allocation2 + $0x30] sm:$0xff] %vm197, %v1139
      %1156 = vst.msk [vmem:[#allocation2 + $0x38] sm:$0xff] %vm197, %v1140
      %1157 = vst.msk [vmem:[#allocation2 + $0x40] sm:$0xff] %vm197, %v1141
      %1158 = vst.msk [vmem:[#allocation2 + $0x48] sm:$0xff] %vm197, %v1142
      %1159 = vst.msk [vmem:[#allocation2 + $0x50] sm:$0xff] %vm197, %v1143
      %1160 = vst.msk [vmem:[#allocation2 + $0x58] sm:$0xff] %vm197, %v1144
      %1161 = vst.msk [vmem:[#allocation2 + $0x60] sm:$0xff] %vm197, %v1145
      %1162 = vst.msk [vmem:[#allocation2 + $0x68] sm:$0xff] %vm197, %v1146
      %1163 = vst.msk [vmem:[#allocation2 + $0x70] sm:$0xff] %vm197, %v1147
      %1164 = vst.msk [vmem:[#allocation2 + $0x78] sm:$0xff] %vm197, %v1148
      %v1165 = vld [vmem:[#allocation2] sm:$0xff]
      %v1166 = vld [vmem:[#allocation2 + $0x8] sm:$0xff]
      %v1167 = vld [vmem:[#allocation2 + $0x10] sm:$0xff]
      %v1168 = vld [vmem:[#allocation2 + $0x18] sm:$0xff]
      %v1169 = vld [vmem:[#allocation2 + $0x20] sm:$0xff]
      %v1170 = vld [vmem:[#allocation2 + $0x28] sm:$0xff]
      %v1171 = vld [vmem:[#allocation2 + $0x30] sm:$0xff]
      %v1172 = vld [vmem:[#allocation2 + $0x38] sm:$0xff]
      %v1173 = vld [vmem:[#allocation2 + $0x40] sm:$0xff]
      %v1174 = vld [vmem:[#allocation2 + $0x48] sm:$0xff]
      %v1175 = vld [vmem:[#allocation2 + $0x50] sm:$0xff]
      %v1176 = vld [vmem:[#allocation2 + $0x58] sm:$0xff]
      %v1177 = vld [vmem:[#allocation2 + $0x60] sm:$0xff]
      %v1178 = vld [vmem:[#allocation2 + $0x68] sm:$0xff]
      %v1179 = vld [vmem:[#allocation2 + $0x70] sm:$0xff]
      %v1180 = vld [vmem:[#allocation2 + $0x78] sm:$0xff]
      %s1181 = scalar_lea.vmem %s1, 28
      %v1182 = vld [vmem:[%s1181] sm:$0xf]
      %v1184 = vunpack.c.l.b16 %v192
      %v1185 = vpack.c.b16 %v1184, %v1184
      %v1186 = vshll.u32 %v1077, 16
      %v1188 = vrot.slane %v1186, 1
      %v1189 = vsel %vm401, %v849, %v1188
      %v1190 = vshrl.u32 %v1077, 16
      %v1192 = vor.u32 %v1190, %v1188
      %v1194 = vshll.u32 %v1185, 16
      %v1196 = vrot.slane %v1194, 1
      %v1197 = vsel %vm401, %v1192, %v1196
      %v1199 = vsel %vm197, %v1189, 0
      %v1202 = vsel %vm197, %v1197, 0
      %v1205 = vsel %vm295, %v1182, 0
      %1207 = vmatpush.bf16.msra.mxu0 0
      %1208 = vmatpush.bf16.msra.mxu0 0
      %1209 = vmatpush.bf16.msra.mxu0 0
      %1210 = vmatpush.bf16.msra.mxu0 0
      %1211 = vmatpush.bf16.msra.mxu0 0
      %1212 = vmatpush.bf16.msra.mxu0 0
      %1213 = vmatpush.bf16.msra.mxu0 0
      %1214 = vmatpush.bf16.msra.mxu0 %v1205
      %1215 = vmatmul.bf16.gmra.mxu0 %v469
      %v1216 = vpop.f32.mrf.mxu0
      %v1217 = vadd.f32 0.0, %v1216
      %v1218 = vpop.f32.mrf.mxu0
      %v1219 = vadd.f32 0.0, %v1218
      %1220 = vmatmul.bf16.gmra.mxu0 %v472
      %v1221 = vpop.f32.mrf.mxu0
      %v1222 = vadd.f32 0.0, %v1221
      %v1223 = vpop.f32.mrf.mxu0
      %v1224 = vadd.f32 0.0, %v1223
      %1225 = vmatmul.bf16.gmra.mxu0 %v475
      %v1226 = vpop.f32.mrf.mxu0
      %v1227 = vadd.f32 0.0, %v1226
      %v1228 = vpop.f32.mrf.mxu0
      %v1229 = vadd.f32 0.0, %v1228
      %1230 = vmatmul.bf16.gmra.mxu0 %v478
      %v1231 = vpop.f32.mrf.mxu0
      %v1232 = vadd.f32 0.0, %v1231
      %v1233 = vpop.f32.mrf.mxu0
      %v1234 = vadd.f32 0.0, %v1233
      %1235 = vmatmul.bf16.gmra.mxu0 %v481
      %v1236 = vpop.f32.mrf.mxu0
      %v1237 = vadd.f32 0.0, %v1236
      %v1238 = vpop.f32.mrf.mxu0
      %v1239 = vadd.f32 0.0, %v1238
      %1240 = vmatmul.bf16.gmra.mxu0 %v856
      %v1241 = vpop.f32.mrf.mxu0
      %v1242 = vadd.f32 0.0, %v1241
      %v1243 = vpop.f32.mrf.mxu0
      %v1244 = vadd.f32 0.0, %v1243
      %1245 = vmatmul.bf16.gmra.mxu0 %v1199
      %v1246 = vpop.f32.mrf.mxu0
      %v1247 = vadd.f32 0.0, %v1246
      %v1248 = vpop.f32.mrf.mxu0
      %v1249 = vadd.f32 0.0, %v1248
      %1250 = vmatmul.bf16.gmra.mxu0 %v1202
      %v1251 = vpop.f32.mrf.mxu0
      %v1252 = vadd.f32 0.0, %v1251
      %v1253 = vpop.f32.mrf.mxu0
      %v1254 = vadd.f32 0.0, %v1253
      %1255 = vdwg.mxu0
      %v1256 = vadd.f32 %v1165, %v1217
      %v1257 = vadd.f32 %v1166, %v1219
      %v1258 = vadd.f32 %v1167, %v1222
      %v1259 = vadd.f32 %v1168, %v1224
      %v1260 = vadd.f32 %v1169, %v1227
      %v1261 = vadd.f32 %v1170, %v1229
      %v1262 = vadd.f32 %v1171, %v1232
      %v1263 = vadd.f32 %v1172, %v1234
      %v1264 = vadd.f32 %v1173, %v1237
      %v1265 = vadd.f32 %v1174, %v1239
      %v1266 = vadd.f32 %v1175, %v1242
      %v1267 = vadd.f32 %v1176, %v1244
      %v1268 = vadd.f32 %v1177, %v1247
      %v1269 = vadd.f32 %v1178, %v1249
      %v1270 = vadd.f32 %v1179, %v1252
      %v1271 = vadd.f32 %v1180, %v1254
      %1272 = vst.msk [vmem:[#allocation2] sm:$0xff] %vm197, %v1256
      %1273 = vst.msk [vmem:[#allocation2 + $0x8] sm:$0xff] %vm197, %v1257
      %1274 = vst.msk [vmem:[#allocation2 + $0x10] sm:$0xff] %vm197, %v1258
      %1275 = vst.msk [vmem:[#allocation2 + $0x18] sm:$0xff] %vm197, %v1259
      %1276 = vst.msk [vmem:[#allocation2 + $0x20] sm:$0xff] %vm197, %v1260
      %1277 = vst.msk [vmem:[#allocation2 + $0x28] sm:$0xff] %vm197, %v1261
      %1278 = vst.msk [vmem:[#allocation2 + $0x30] sm:$0xff] %vm197, %v1262
      %1279 = vst.msk [vmem:[#allocation2 + $0x38] sm:$0xff] %vm197, %v1263
      %1280 = vst.msk [vmem:[#allocation2 + $0x40] sm:$0xff] %vm197, %v1264
      %1281 = vst.msk [vmem:[#allocation2 + $0x48] sm:$0xff] %vm197, %v1265
      %1282 = vst.msk [vmem:[#allocation2 + $0x50] sm:$0xff] %vm197, %v1266
      %1283 = vst.msk [vmem:[#allocation2 + $0x58] sm:$0xff] %vm197, %v1267
      %1284 = vst.msk [vmem:[#allocation2 + $0x60] sm:$0xff] %vm197, %v1268
      %1285 = vst.msk [vmem:[#allocation2 + $0x68] sm:$0xff] %vm197, %v1269
      %1286 = vst.msk [vmem:[#allocation2 + $0x70] sm:$0xff] %vm197, %v1270
      %1287 = vst.msk [vmem:[#allocation2 + $0x78] sm:$0xff] %vm197, %v1271
      %v1288 = vld [vmem:[#allocation2] sm:$0xff]
      %v1289 = vld [vmem:[#allocation2 + $0x8] sm:$0xff]
      %v1290 = vld [vmem:[#allocation2 + $0x10] sm:$0xff]
      %v1291 = vld [vmem:[#allocation2 + $0x18] sm:$0xff]
      %v1292 = vld [vmem:[#allocation2 + $0x20] sm:$0xff]
      %v1293 = vld [vmem:[#allocation2 + $0x28] sm:$0xff]
      %v1294 = vld [vmem:[#allocation2 + $0x30] sm:$0xff]
      %v1295 = vld [vmem:[#allocation2 + $0x38] sm:$0xff]
      %v1296 = vld [vmem:[#allocation2 + $0x40] sm:$0xff]
      %v1297 = vld [vmem:[#allocation2 + $0x48] sm:$0xff]
      %v1298 = vld [vmem:[#allocation2 + $0x50] sm:$0xff]
      %v1299 = vld [vmem:[#allocation2 + $0x58] sm:$0xff]
      %v1300 = vld [vmem:[#allocation2 + $0x60] sm:$0xff]
      %v1301 = vld [vmem:[#allocation2 + $0x68] sm:$0xff]
      %v1302 = vld [vmem:[#allocation2 + $0x70] sm:$0xff]
      %v1303 = vld [vmem:[#allocation2 + $0x78] sm:$0xff]
      %s1304 = scalar_lea.vmem %s1, 32
      %v1305 = vld [vmem:[%s1304] sm:$0xf]
      %v1306 = vrot.slane %v1077, 1
      %v1307 = vsel %vm588, %v963, %v1306
      %v1308 = vrot.slane %v1185, 1
      %v1309 = vsel %vm588, %v1306, %v1308
      %v1311 = vsel %vm197, %v1307, 0
      %v1314 = vsel %vm197, %v1309, 0
      %v1317 = vsel %vm295, %v1305, 0
      %1319 = vmatpush.bf16.msra.mxu0 0
      %1320 = vmatpush.bf16.msra.mxu0 0
      %1321 = vmatpush.bf16.msra.mxu0 0
      %1322 = vmatpush.bf16.msra.mxu0 0
      %1323 = vmatpush.bf16.msra.mxu0 0
      %1324 = vmatpush.bf16.msra.mxu0 0
      %1325 = vmatpush.bf16.msra.mxu0 0
      %1326 = vmatpush.bf16.msra.mxu0 %v1317
      %1327 = vmatmul.bf16.gmra.mxu0 %v613
      %v1328 = vpop.f32.mrf.mxu0
      %v1329 = vadd.f32 0.0, %v1328
      %v1330 = vpop.f32.mrf.mxu0
      %v1331 = vadd.f32 0.0, %v1330
      %1332 = vmatmul.bf16.gmra.mxu0 %v616
      %v1333 = vpop.f32.mrf.mxu0
      %v1334 = vadd.f32 0.0, %v1333
      %v1335 = vpop.f32.mrf.mxu0
      %v1336 = vadd.f32 0.0, %v1335
      %1337 = vmatmul.bf16.gmra.mxu0 %v619
      %v1338 = vpop.f32.mrf.mxu0
      %v1339 = vadd.f32 0.0, %v1338
      %v1340 = vpop.f32.mrf.mxu0
      %v1341 = vadd.f32 0.0, %v1340
      %1342 = vmatmul.bf16.gmra.mxu0 %v622
      %v1343 = vpop.f32.mrf.mxu0
      %v1344 = vadd.f32 0.0, %v1343
      %v1345 = vpop.f32.mrf.mxu0
      %v1346 = vadd.f32 0.0, %v1345
      %1347 = vmatmul.bf16.gmra.mxu0 %v625
      %v1348 = vpop.f32.mrf.mxu0
      %v1349 = vadd.f32 0.0, %v1348
      %v1350 = vpop.f32.mrf.mxu0
      %v1351 = vadd.f32 0.0, %v1350
      %1352 = vmatmul.bf16.gmra.mxu0 %v968
      %v1353 = vpop.f32.mrf.mxu0
      %v1354 = vadd.f32 0.0, %v1353
      %v1355 = vpop.f32.mrf.mxu0
      %v1356 = vadd.f32 0.0, %v1355
      %1357 = vmatmul.bf16.gmra.mxu0 %v1311
      %v1358 = vpop.f32.mrf.mxu0
      %v1359 = vadd.f32 0.0, %v1358
      %v1360 = vpop.f32.mrf.mxu0
      %v1361 = vadd.f32 0.0, %v1360
      %1362 = vmatmul.bf16.gmra.mxu0 %v1314
      %v1363 = vpop.f32.mrf.mxu0
      %v1364 = vadd.f32 0.0, %v1363
      %v1365 = vpop.f32.mrf.mxu0
      %v1366 = vadd.f32 0.0, %v1365
      %1367 = vdwg.mxu0
      %v1368 = vadd.f32 %v1288, %v1329
      %v1369 = vadd.f32 %v1289, %v1331
      %v1370 = vadd.f32 %v1290, %v1334
      %v1371 = vadd.f32 %v1291, %v1336
      %v1372 = vadd.f32 %v1292, %v1339
      %v1373 = vadd.f32 %v1293, %v1341
      %v1374 = vadd.f32 %v1294, %v1344
      %v1375 = vadd.f32 %v1295, %v1346
      %v1376 = vadd.f32 %v1296, %v1349
      %v1377 = vadd.f32 %v1297, %v1351
      %v1378 = vadd.f32 %v1298, %v1354
      %v1379 = vadd.f32 %v1299, %v1356
      %v1380 = vadd.f32 %v1300, %v1359
      %v1381 = vadd.f32 %v1301, %v1361
      %v1382 = vadd.f32 %v1302, %v1364
      %v1383 = vadd.f32 %v1303, %v1366
      %1384 = vst.msk [vmem:[#allocation2] sm:$0xff] %vm197, %v1368
      %1385 = vst.msk [vmem:[#allocation2 + $0x8] sm:$0xff] %vm197, %v1369
      %1386 = vst.msk [vmem:[#allocation2 + $0x10] sm:$0xff] %vm197, %v1370
      %1387 = vst.msk [vmem:[#allocation2 + $0x18] sm:$0xff] %vm197, %v1371
      %1388 = vst.msk [vmem:[#allocation2 + $0x20] sm:$0xff] %vm197, %v1372
      %1389 = vst.msk [vmem:[#allocation2 + $0x28] sm:$0xff] %vm197, %v1373
      %1390 = vst.msk [vmem:[#allocation2 + $0x30] sm:$0xff] %vm197, %v1374
      %1391 = vst.msk [vmem:[#allocation2 + $0x38] sm:$0xff] %vm197, %v1375
      %1392 = vst.msk [vmem:[#allocation2 + $0x40] sm:$0xff] %vm197, %v1376
      %1393 = vst.msk [vmem:[#allocation2 + $0x48] sm:$0xff] %vm197, %v1377
      %1394 = vst.msk [vmem:[#allocation2 + $0x50] sm:$0xff] %vm197, %v1378
      %1395 = vst.msk [vmem:[#allocation2 + $0x58] sm:$0xff] %vm197, %v1379
      %1396 = vst.msk [vmem:[#allocation2 + $0x60] sm:$0xff] %vm197, %v1380
      %1397 = vst.msk [vmem:[#allocation2 + $0x68] sm:$0xff] %vm197, %v1381
      %1398 = vst.msk [vmem:[#allocation2 + $0x70] sm:$0xff] %vm197, %v1382
      %1399 = vst.msk [vmem:[#allocation2 + $0x78] sm:$0xff] %vm197, %v1383
      %v1400 = vld [vmem:[#allocation2] sm:$0xff]
      %v1401 = vld [vmem:[#allocation2 + $0x8] sm:$0xff]
      %v1402 = vld [vmem:[#allocation2 + $0x10] sm:$0xff]
      %v1403 = vld [vmem:[#allocation2 + $0x18] sm:$0xff]
      %v1404 = vld [vmem:[#allocation2 + $0x20] sm:$0xff]
      %v1405 = vld [vmem:[#allocation2 + $0x28] sm:$0xff]
      %v1406 = vld [vmem:[#allocation2 + $0x30] sm:$0xff]
      %v1407 = vld [vmem:[#allocation2 + $0x38] sm:$0xff]
      %v1408 = vld [vmem:[#allocation2 + $0x40] sm:$0xff]
      %v1409 = vld [vmem:[#allocation2 + $0x48] sm:$0xff]
      %v1410 = vld [vmem:[#allocation2 + $0x50] sm:$0xff]
      %v1411 = vld [vmem:[#allocation2 + $0x58] sm:$0xff]
      %v1412 = vld [vmem:[#allocation2 + $0x60] sm:$0xff]
      %v1413 = vld [vmem:[#allocation2 + $0x68] sm:$0xff]
      %v1414 = vld [vmem:[#allocation2 + $0x70] sm:$0xff]
      %v1415 = vld [vmem:[#allocation2 + $0x78] sm:$0xff]
      %1416 = vst.msk [vmem:[%s170] sm:$0xff] %vm197, %v1400
      %1417 = vst.msk [vmem:[%s170 + $0x8] sm:$0xff] %vm197, %v1401
      %1418 = vst.msk [vmem:[%s170 + $0x10] sm:$0xff] %vm197, %v1402
      %1419 = vst.msk [vmem:[%s170 + $0x18] sm:$0xff] %vm197, %v1403
      %1420 = vst.msk [vmem:[%s170 + $0x20] sm:$0xff] %vm197, %v1404
      %1421 = vst.msk [vmem:[%s170 + $0x28] sm:$0xff] %vm197, %v1405
      %1422 = vst.msk [vmem:[%s170 + $0x30] sm:$0xff] %vm197, %v1406
      %1423 = vst.msk [vmem:[%s170 + $0x38] sm:$0xff] %vm197, %v1407
      %1424 = vst.msk [vmem:[%s170 + $0x40] sm:$0xff] %vm197, %v1408
      %1425 = vst.msk [vmem:[%s170 + $0x48] sm:$0xff] %vm197, %v1409
      %1426 = vst.msk [vmem:[%s170 + $0x50] sm:$0xff] %vm197, %v1410
      %1427 = vst.msk [vmem:[%s170 + $0x58] sm:$0xff] %vm197, %v1411
      %1428 = vst.msk [vmem:[%s170 + $0x60] sm:$0xff] %vm197, %v1412
      %1429 = vst.msk [vmem:[%s170 + $0x68] sm:$0xff] %vm197, %v1413
      %1430 = vst.msk [vmem:[%s170 + $0x70] sm:$0xff] %vm197, %v1414
      %1431 = vst.msk [vmem:[%s170 + $0x78] sm:$0xff] %vm197, %v1415
      %p1432 = scmp.lt.s32.totalorder %s14, 1
      %s1433 = scalar_select %p1432, %s14, 1
      %s1434 = smul.addr %s1433, 16
      %s1435 = smul.addr %s1434, 8
      %s1436 = scalar_lea.vmem %s3, %s1435
      // Predicated region
      $region33: #{_lambda_.17} parent=31 // pred_check
        %p1437 = pneg %p100
      $region34: #{_lambda_.17} parent=31 // pred_check_branch
        %1439 = sbr.rel (%p1437) target = $region36
      $region35: #{_lambda_.17} parent=31 // pred_region
        _
      $region36: #{_lambda_.17} parent=31 // pred_fallthru
        _
    $region32: #{_lambda_.17} parent=5 // pred_fallthru
      _
    %p1440 = scmp.le.s32.totalorder 2, %s9
    // Predicated region
    $region37: #{_lambda_.17} parent=5 // pred_check
      %p1441 = pneg %p1440
    $region38: #{_lambda_.17} parent=5 // pred_check_branch
      %1443 = sbr.rel (%p1441) target = $region40
    $region39: #{_lambda_.17} parent=5 // pred_region
      %s1444 = ssub.s32 %s9, 2
      // Predicated region
      $region41: #{_lambda_.17} parent=39 // pred_check
        %p1445 = pneg %p106
      $region42: #{_lambda_.17} parent=39 // pred_check_branch
        %1447 = sbr.rel (%p1445) target = $region44
      $region43: #{_lambda_.17} parent=39 // pred_region
        %p1448 = scmp.lt.s32.totalorder %s15, 1
        %s1449 = scalar_select %p1448, %s15, 1
        %s1450 = smul.addr %s1449, 16
        %s1451 = smul.addr %s1450, 8
        %s1452 = scalar_lea.vmem %s3, %s1451
      $region44: #{_lambda_.17} parent=39 // pred_fallthru
        _
    $region40: #{_lambda_.17} parent=5 // pred_fallthru
      _
  $region6: #{_lambda_.17} parent=0 // loop_footer
    %s13 = sadd.s32 1, %s9
  $region7: #{_lambda_.17} parent=0 // loop_footer_branch
    %8 = sbr.rel target = $region3
  $region8: #{_lambda_.17} parent=0 // loop_exit
    _

// kernel: _lambda_.15
$region0: #{_lambda_.15}
  #allocation0 [shape = 'u32[]', space=smem, size = 0x4, offset = 0x4, fixed_abs, tag = 'smem constant byte address 0x4 - core index']
  #allocation1 [shape = 'u32[72,128]{1,0:T(1,128)}', space=vmem, size = 0x9000, scoped, tag = 'internal scratch']
  #allocation2 [shape = 'f32[16,8]{1,0:T(8,128)}', space=vmem, size = 0x2000, scoped, tag = 'scratch operand']
  %s0 = inlined_call_operand.vmem [shape: bf16[2,40,8], index: 0, kind: input, shape index: {}]
  %s1 = inlined_call_operand.vmem [shape: bf16[9,8,8], index: 1, kind: input, shape index: {}]
  %s2 = inlined_call_operand.vmem [shape: f32[1,8], index: 2, kind: input, shape index: {}]
  %s3 = inlined_call_operand.vmem [shape: f32[2,16,8], index: 3, kind: output, shape index: {}]
  %s4 = sld [smem:[#allocation0]]
  $region45: #{_lambda_.15} parent=0
    _
  %s6 = ssub.s32 1, %s4
  %s7 = scalar_select 0, %s6, %s4
  loop: start=0, step=1, limit=4
  $region2: #{_lambda_.15} parent=0 // loop_pre_header
    _
  $region3: #{_lambda_.15} parent=0 // loop_header
    %s9 = sphi 0, %s13
    %p10 = scmp.ge.s32.totalorder %s9, 4
    %s19 = sphi 0, %s21
    %s22 = sphi 0, %s19
    %s23 = sphi 0, %s22
    %s39 = sphi 0, %s23
    %s43 = sphi 0, %s43
    %s45 = sphi 0, %s43
    %s46 = sphi 0, %s45
    %s60 = sphi 0, %s46
    %s64 = sphi 0, %s64
    %s66 = sphi 0, %s64
    %s67 = sphi 0, %s66
    %s81 = sphi 0, %s67
    %s87 = sphi 0, %s89
    %s90 = sphi 0, %s87
    %s91 = sphi 0, %s90
    %s107 = sphi 0, %s91
  $region4: #{_lambda_.15} parent=0 // loop_header_branch
    %12 = sbr.rel (%p10) target = $region8
  $region5: #{_lambda_.15} parent=0 // loop_body
    %s14 = ssub.s32 %s9, 1
    %s15 = ssub.s32 %s9, 2
    %s16 = sadd.s32 %s9, 1
    %s17 = ssub.s32 %s9, %s16
    %p18 = scmp.eq.s32.totalorder %s17, 0
    %s20 = sadd.s32 %s19, 1
    %s21 = scalar_select %p18, %s19, %s20
    %p24 = pneg %p18
    %p25 = scmp.eq.s32.totalorder %s9, 1
    %p26 = por %p24, %p25
    %p27 = scmp.ne.s32.totalorder %s19, %s22
    %p28 = scmp.eq.s32.totalorder %s9, 0
    %p29 = por %p27, %p28
    %p30 = scmp.ne.s32.totalorder %s19, %s22
    %p31 = scmp.eq.s32.totalorder %s14, 1
    %p32 = por %p30, %p31
    %p33 = scmp.ne.s32.totalorder %s22, %s23
    %p34 = scmp.eq.s32.totalorder %s14, 0
    %p35 = por %p33, %p34
    %p36 = scmp.ne.s32.totalorder %s22, %s23
    %p37 = scmp.eq.s32.totalorder %s15, 1
    %p38 = por %p36, %p37
    %p40 = scmp.ne.s32.totalorder %s23, %s39
    %p41 = scmp.eq.s32.totalorder %s15, 0
    %p42 = por %p40, %p41
    %s44 = sadd.s32 %s43, 1
    %p47 = scmp.eq.s32.totalorder %s9, 1
    %p48 = scmp.ne.s32.totalorder %s43, %s45
    %p49 = scmp.eq.s32.totalorder %s9, 0
    %p50 = por %p48, %p49
    %p51 = scmp.ne.s32.totalorder %s43, %s45
    %p52 = scmp.eq.s32.totalorder %s14, 1
    %p53 = por %p51, %p52
    %p54 = scmp.ne.s32.totalorder %s45, %s46
    %p55 = scmp.eq.s32.totalorder %s14, 0
    %p56 = por %p54, %p55
    %p57 = scmp.ne.s32.totalorder %s45, %s46
    %p58 = scmp.eq.s32.totalorder %s15, 1
    %p59 = por %p57, %p58
    %p61 = scmp.ne.s32.totalorder %s46, %s60
    %p62 = scmp.eq.s32.totalorder %s15, 0
    %p63 = por %p61, %p62
    %s65 = sadd.s32 %s64, 1
    %p68 = scmp.eq.s32.totalorder %s9, 1
    %p69 = scmp.ne.s32.totalorder %s64, %s66
    %p70 = scmp.eq.s32.totalorder %s9, 0
    %p71 = por %p69, %p70
    %p72 = scmp.ne.s32.totalorder %s64, %s66
    %p73 = scmp.eq.s32.totalorder %s14, 1
    %p74 = por %p72, %p73
    %p75 = scmp.ne.s32.totalorder %s66, %s67
    %p76 = scmp.eq.s32.totalorder %s14, 0
    %p77 = por %p75, %p76
    %p78 = scmp.ne.s32.totalorder %s66, %s67
    %p79 = scmp.eq.s32.totalorder %s15, 1
    %p80 = por %p78, %p79
    %p82 = scmp.ne.s32.totalorder %s67, %s81
    %p83 = scmp.eq.s32.totalorder %s15, 0
    %p84 = por %p82, %p83
    %s85 = ssub.s32 %s9, %s16
    %p86 = scmp.eq.s32.totalorder %s85, 0
    %s88 = sadd.s32 %s87, 1
    %s89 = scalar_select %p86, %s87, %s88
    %p92 = pneg %p86
    %p93 = scmp.eq.s32.totalorder %s9, 1
    %p94 = por %p92, %p93
    %p95 = scmp.ne.s32.totalorder %s87, %s90
    %p96 = scmp.eq.s32.totalorder %s9, 0
    %p97 = por %p95, %p96
    %p98 = scmp.ne.s32.totalorder %s87, %s90
    %p99 = scmp.eq.s32.totalorder %s14, 1
    %p100 = por %p98, %p99
    %p101 = scmp.ne.s32.totalorder %s90, %s91
    %p102 = scmp.eq.s32.totalorder %s14, 0
    %p103 = por %p101, %p102
    %p104 = scmp.ne.s32.totalorder %s90, %s91
    %p105 = scmp.eq.s32.totalorder %s15, 1
    %p106 = por %p104, %p105
    %p108 = scmp.ne.s32.totalorder %s91, %s107
    %p109 = scmp.eq.s32.totalorder %s15, 0
    %p110 = por %p108, %p109
    %p111 = scmp.le.s32.totalorder 1, %s9
    %p112 = scmp.lt.s32.totalorder %s9, 3
    %p113 = pnand %p111, %p112
    %p114 = pneg %p113
    // Predicated region
    $region9: #{_lambda_.15} parent=5 // pred_check
      _
    $region10: #{_lambda_.15} parent=5 // pred_check_branch
      %116 = sbr.rel (%p113) target = $region12
    $region11: #{_lambda_.15} parent=5 // pred_region
      %s117 = ssub.s32 %s9, 1
      // Predicated region
      $region13: #{_lambda_.15} parent=11 // pred_check
        %p118 = pneg %p56
      $region14: #{_lambda_.15} parent=11 // pred_check_branch
        %120 = sbr.rel (%p118) target = $region16
      $region15: #{_lambda_.15} parent=11 // pred_region
        _
      $region16: #{_lambda_.15} parent=11 // pred_fallthru
        _
      // Predicated region
      $region17: #{_lambda_.15} parent=11 // pred_check
        %p121 = pneg %p77
      $region18: #{_lambda_.15} parent=11 // pred_check_branch
        %123 = sbr.rel (%p121) target = $region20
      $region19: #{_lambda_.15} parent=11 // pred_region
        _
      $region20: #{_lambda_.15} parent=11 // pred_fallthru
        _
    $region12: #{_lambda_.15} parent=5 // pred_fallthru
      _
    %p124 = scmp.lt.s32.totalorder %s9, 2
    // Predicated region
    $region21: #{_lambda_.15} parent=5 // pred_check
      %p125 = pneg %p124
    $region22: #{_lambda_.15} parent=5 // pred_check_branch
      %127 = sbr.rel (%p125) target = $region24
    $region23: #{_lambda_.15} parent=5 // pred_region
      // Predicated region
      $region25: #{_lambda_.15} parent=23 // pred_check
        %p128 = pneg %p29
      $region26: #{_lambda_.15} parent=23 // pred_check_branch
        %130 = sbr.rel (%p128) target = $region28
      $region27: #{_lambda_.15} parent=23 // pred_region
        %p131 = scmp.lt.s32.totalorder %s9, 1
        %s132 = scalar_select %p131, %s9, 1
        %s133 = smul.addr %s132, 5
        %s134 = smul.addr %s133, 4
        %s135 = scalar_lea.vmem %s0, %s134
      $region28: #{_lambda_.15} parent=23 // pred_fallthru
        _
    $region24: #{_lambda_.15} parent=5 // pred_fallthru
      _
    %p136 = scmp.le.s32.totalorder 1, %s9
    %p137 = scmp.lt.s32.totalorder %s9, 3
    %p138 = pnand %p136, %p137
    %p139 = pneg %p138
    // Predicated region
    $region29: #{_lambda_.15} parent=5 // pred_check
      _
    $region30: #{_lambda_.15} parent=5 // pred_check_branch
      %141 = sbr.rel (%p138) target = $region32
    $region31: #{_lambda_.15} parent=5 // pred_region
      %s142 = ssub.s32 %s9, 1
      %p143 = scmp.lt.s32.totalorder %s14, 1
      %s144 = scalar_select %p143, %s14, 1
      %s145 = smul.addr %s144, 5
      %s146 = smul.addr %s145, 4
      %s147 = scalar_lea.vmem %s0, %s146
      %p148 = pneg %p35
      %p149 = pneg %p32
      %p150 = pneg %p56
      %p151 = pneg %p53
      %p152 = pneg %p77
      %p153 = pneg %p74
      %p154 = pneg %p103
      %p155 = pneg %p100
      %p156 = scmp.lt.s32.totalorder %s14, 1
      %s157 = scalar_select %p156, %s14, 1
      %s158 = smul.addr %s157, 2
      %s159 = smul.addr %s158, 8
      %s160 = scalar_lea.vmem %s3, %s159
      %p161 = scmp.lt.s32.totalorder %s14, 1
      %s162 = scalar_select %p161, %s14, 1
      %s163 = smul.addr %s162, 5
      %s164 = smul.addr %s163, 4
      %s165 = scalar_lea.vmem %s0, %s164
      %p166 = scmp.lt.s32.totalorder %s14, 1
      %s167 = scalar_select %p166, %s14, 1
      %s168 = smul.addr %s167, 2
      %s169 = smul.addr %s168, 8
      %s170 = scalar_lea.vmem %s3, %s169
      %v172 = vld [vmem:[%s165] sm:$0xf]
      %v173 = vld [vmem:[%s165 + $0x4] sm:$0xf]
      %v174 = vld [vmem:[%s165 + $0x8] sm:$0xf]
      %v175 = vld [vmem:[%s165 + $0xc] sm:$0xf]
      %v176 = vld [vmem:[%s165 + $0x10] sm:$0xf]
      %v177 = vld [vmem:[%s2] sm:$0x1]
      %v179 = vperm.slane %v177, 0
      %vm181 = vcmask 64512
      %182 = vst.msk [vmem:[#allocation2] sm:$0xff] %vm181, %v179
      %183 = vst.msk [vmem:[#allocation2 + $0x8] sm:$0xff] %vm181, %v179
      %v184 = vld [vmem:[#allocation2] sm:$0xff]
      %v185 = vld [vmem:[#allocation2 + $0x8] sm:$0xff]
      %v186 = vld [vmem:[%s1] sm:$0xf]
      %v189 = vunpack.c.l.b16 %v172
      %v190 = vunpack.c.l.b16 %v173
      %v191 = vpack.c.b16 %v190, %v189
      %v193 = vsel %vm181, %v191, 0
      %vm195 = vcmask 1043456
      %v197 = vsel %vm195, %v186, 0
      %199 = vmatpush.bf16.msra.mxu0 0
      %200 = vmatpush.bf16.msra.mxu0 0
      %201 = vmatpush.bf16.msra.mxu0 0
      %202 = vmatpush.bf16.msra.mxu0 0
      %203 = vmatpush.bf16.msra.mxu0 0
      %204 = vmatpush.bf16.msra.mxu0 0
      %205 = vmatpush.bf16.msra.mxu0 0
      %206 = vmatpush.bf16.msra.mxu0 %v197
      %207 = vmatmul.bf16.gmra.mxu0 %v193
      %v208 = vpop.f32.mrf.mxu0
      %v209 = vadd.f32 0.0, %v208
      %v210 = vpop.f32.mrf.mxu0
      %v211 = vadd.f32 0.0, %v210
      %212 = vdwg.mxu0
      %v213 = vadd.f32 %v184, %v209
      %v214 = vadd.f32 %v185, %v211
      %215 = vst.msk [vmem:[#allocation2] sm:$0xff] %vm181, %v213
      %216 = vst.msk [vmem:[#allocation2 + $0x8] sm:$0xff] %vm181, %v214
      %v217 = vld [vmem:[#allocation2] sm:$0xff]
      %v218 = vld [vmem:[#allocation2 + $0x8] sm:$0xff]
      %s219 = scalar_lea.vmem %s1, 4
      %v220 = vld [vmem:[%s219] sm:$0xf]
      %v222 = vunpack.c.l.b16 %v174
      %v223 = vpack.c.b16 %v222, %v222
      %vm224 = vsmask.f32 7424
      %v225 = vshrl.u32 %v191, 16
      %v227 = vshll.u32 %v191, 16
      %v229 = vrot.slane %v227, 1
      %v230 = vor.u32 %v225, %v229
      %v232 = vshll.u32 %v223, 16
      %v234 = vrot.slane %v232, 1
      %v235 = vsel %vm224, %v230, %v234
      %v237 = vsel %vm181, %v235, 0
      %v240 = vsel %vm195, %v220, 0
      %242 = vmatpush.bf16.msra.mxu0 0
      %243 = vmatpush.bf16.msra.mxu0 0
      %244 = vmatpush.bf16.msra.mxu0 0
      %245 = vmatpush.bf16.msra.mxu0 0
      %246 = vmatpush.bf16.msra.mxu0 0
      %247 = vmatpush.bf16.msra.mxu0 0
      %248 = vmatpush.bf16.msra.mxu0 0
      %249 = vmatpush.bf16.msra.mxu0 %v240
      %250 = vmatmul.bf16.gmra.mxu0 %v237
      %v251 = vpop.f32.mrf.mxu0
      %v252 = vadd.f32 0.0, %v251
      %v253 = vpop.f32.mrf.mxu0
      %v254 = vadd.f32 0.0, %v253
      %255 = vdwg.mxu0
      %v256 = vadd.f32 %v217, %v252
      %v257 = vadd.f32 %v218, %v254
      %258 = vst.msk [vmem:[#allocation2] sm:$0xff] %vm181, %v256
      %259 = vst.msk [vmem:[#allocation2 + $0x8] sm:$0xff] %vm181, %v257
      %v260 = vld [vmem:[#allocation2] sm:$0xff]
      %v261 = vld [vmem:[#allocation2 + $0x8] sm:$0xff]
      %s262 = scalar_lea.vmem %s1, 8
      %v263 = vld [vmem:[%s262] sm:$0xf]
      %vm264 = vcmask 1046528
      %v265 = vrot.slane %v191, 1
      %v266 = vrot.slane %v223, 1
      %v267 = vsel %vm264, %v265, %v266
      %v269 = vsel %vm181, %v267, 0
      %v272 = vsel %vm195, %v263, 0
      %274 = vmatpush.bf16.msra.mxu0 0
      %275 = vmatpush.bf16.msra.mxu0 0
      %276 = vmatpush.bf16.msra.mxu0 0
      %277 = vmatpush.bf16.msra.mxu0 0
      %278 = vmatpush.bf16.msra.mxu0 0
      %279 = vmatpush.bf16.msra.mxu0 0
      %280 = vmatpush.bf16.msra.mxu0 0
      %281 = vmatpush.bf16.msra.mxu0 %v272
      %282 = vmatmul.bf16.gmra.mxu0 %v269
      %v283 = vpop.f32.mrf.mxu0
      %v284 = vadd.f32 0.0, %v283
      %v285 = vpop.f32.mrf.mxu0
      %v286 = vadd.f32 0.0, %v285
      %287 = vdwg.mxu0
      %v288 = vadd.f32 %v260, %v284
      %v289 = vadd.f32 %v261, %v286
      %290 = vst.msk [vmem:[#allocation2] sm:$0xff] %vm181, %v288
      %291 = vst.msk [vmem:[#allocation2 + $0x8] sm:$0xff] %vm181, %v289
      %v292 = vld [vmem:[#allocation2] sm:$0xff]
      %v293 = vld [vmem:[#allocation2 + $0x8] sm:$0xff]
      %s294 = scalar_lea.vmem %s1, 12
      %v295 = vld [vmem:[%s294] sm:$0xf]
      %v296 = vpack.c.b16 %v222, %v190
      %v298 = vsel %vm181, %v296, 0
      %v301 = vsel %vm195, %v295, 0
      %303 = vmatpush.bf16.msra.mxu0 0
      %304 = vmatpush.bf16.msra.mxu0 0
      %305 = vmatpush.bf16.msra.mxu0 0
      %306 = vmatpush.bf16.msra.mxu0 0
      %307 = vmatpush.bf16.msra.mxu0 0
      %308 = vmatpush.bf16.msra.mxu0 0
      %309 = vmatpush.bf16.msra.mxu0 0
      %310 = vmatpush.bf16.msra.mxu0 %v301
      %311 = vmatmul.bf16.gmra.mxu0 %v298
      %v312 = vpop.f32.mrf.mxu0
      %v313 = vadd.f32 0.0, %v312
      %v314 = vpop.f32.mrf.mxu0
      %v315 = vadd.f32 0.0, %v314
      %316 = vdwg.mxu0
      %v317 = vadd.f32 %v292, %v313
      %v318 = vadd.f32 %v293, %v315
      %319 = vst.msk [vmem:[#allocation2] sm:$0xff] %vm181, %v317
      %320 = vst.msk [vmem:[#allocation2 + $0x8] sm:$0xff] %vm181, %v318
      %v321 = vld [vmem:[#allocation2] sm:$0xff]
      %v322 = vld [vmem:[#allocation2 + $0x8] sm:$0xff]
      %s323 = scalar_lea.vmem %s1, 16
      %v324 = vld [vmem:[%s323] sm:$0xf]
      %v326 = vunpack.c.l.b16 %v175
      %v327 = vpack.c.b16 %v326, %v326
      %v328 = vshrl.u32 %v296, 16
      %v330 = vshll.u32 %v296, 16
      %v332 = vrot.slane %v330, 1
      %v333 = vor.u32 %v328, %v332
      %v335 = vshll.u32 %v327, 16
      %v337 = vrot.slane %v335, 1
      %v338 = vsel %vm224, %v333, %v337
      %v340 = vsel %vm181, %v338, 0
      %v343 = vsel %vm195, %v324, 0
      %345 = vmatpush.bf16.msra.mxu0 0
      %346 = vmatpush.bf16.msra.mxu0 0
      %347 = vmatpush.bf16.msra.mxu0 0
      %348 = vmatpush.bf16.msra.mxu0 0
      %349 = vmatpush.bf16.msra.mxu0 0
      %350 = vmatpush.bf16.msra.mxu0 0
      %351 = vmatpush.bf16.msra.mxu0 0
      %352 = vmatpush.bf16.msra.mxu0 %v343
      %353 = vmatmul.bf16.gmra.mxu0 %v340
      %v354 = vpop.f32.mrf.mxu0
      %v355 = vadd.f32 0.0, %v354
      %v356 = vpop.f32.mrf.mxu0
      %v357 = vadd.f32 0.0, %v356
      %358 = vdwg.mxu0
      %v359 = vadd.f32 %v321, %v355
      %v360 = vadd.f32 %v322, %v357
      %361 = vst.msk [vmem:[#allocation2] sm:$0xff] %vm181, %v359
      %362 = vst.msk [vmem:[#allocation2 + $0x8] sm:$0xff] %vm181, %v360
      %v363 = vld [vmem:[#allocation2] sm:$0xff]
      %v364 = vld [vmem:[#allocation2 + $0x8] sm:$0xff]
      %s365 = scalar_lea.vmem %s1, 20
      %v366 = vld [vmem:[%s365] sm:$0xf]
      %v367 = vrot.slane %v296, 1
      %v368 = vrot.slane %v327, 1
      %v369 = vsel %vm264, %v367, %v368
      %v371 = vsel %vm181, %v369, 0
      %v374 = vsel %vm195, %v366, 0
      %376 = vmatpush.bf16.msra.mxu0 0
      %377 = vmatpush.bf16.msra.mxu0 0
      %378 = vmatpush.bf16.msra.mxu0 0
      %379 = vmatpush.bf16.msra.mxu0 0
      %380 = vmatpush.bf16.msra.mxu0 0
      %381 = vmatpush.bf16.msra.mxu0 0
      %382 = vmatpush.bf16.msra.mxu0 0
      %383 = vmatpush.bf16.msra.mxu0 %v374
      %384 = vmatmul.bf16.gmra.mxu0 %v371
      %v385 = vpop.f32.mrf.mxu0
      %v386 = vadd.f32 0.0, %v385
      %v387 = vpop.f32.mrf.mxu0
      %v388 = vadd.f32 0.0, %v387
      %389 = vdwg.mxu0
      %v390 = vadd.f32 %v363, %v386
      %v391 = vadd.f32 %v364, %v388
      %392 = vst.msk [vmem:[#allocation2] sm:$0xff] %vm181, %v390
      %393 = vst.msk [vmem:[#allocation2 + $0x8] sm:$0xff] %vm181, %v391
      %v394 = vld [vmem:[#allocation2] sm:$0xff]
      %v395 = vld [vmem:[#allocation2 + $0x8] sm:$0xff]
      %s396 = scalar_lea.vmem %s1, 24
      %v397 = vld [vmem:[%s396] sm:$0xf]
      %v398 = vpack.c.b16 %v326, %v222
      %v400 = vsel %vm181, %v398, 0
      %v403 = vsel %vm195, %v397, 0
      %405 = vmatpush.bf16.msra.mxu0 0
      %406 = vmatpush.bf16.msra.mxu0 0
      %407 = vmatpush.bf16.msra.mxu0 0
      %408 = vmatpush.bf16.msra.mxu0 0
      %409 = vmatpush.bf16.msra.mxu0 0
      %410 = vmatpush.bf16.msra.mxu0 0
      %411 = vmatpush.bf16.msra.mxu0 0
      %412 = vmatpush.bf16.msra.mxu0 %v403
      %413 = vmatmul.bf16.gmra.mxu0 %v400
      %v414 = vpop.f32.mrf.mxu0
      %v415 = vadd.f32 0.0, %v414
      %v416 = vpop.f32.mrf.mxu0
      %v417 = vadd.f32 0.0, %v416
      %418 = vdwg.mxu0
      %v419 = vadd.f32 %v394, %v415
      %v420 = vadd.f32 %v395, %v417
      %421 = vst.msk [vmem:[#allocation2] sm:$0xff] %vm181, %v419
      %422 = vst.msk [vmem:[#allocation2 + $0x8] sm:$0xff] %vm181, %v420
      %v423 = vld [vmem:[#allocation2] sm:$0xff]
      %v424 = vld [vmem:[#allocation2 + $0x8] sm:$0xff]
      %s425 = scalar_lea.vmem %s1, 28
      %v426 = vld [vmem:[%s425] sm:$0xf]
      %v428 = vunpack.c.l.b16 %v176
      %v429 = vpack.c.b16 %v428, %v428
      %v430 = vshrl.u32 %v398, 16
      %v432 = vshll.u32 %v398, 16
      %v434 = vrot.slane %v432, 1
      %v435 = vor.u32 %v430, %v434
      %v437 = vshll.u32 %v429, 16
      %v439 = vrot.slane %v437, 1
      %v440 = vsel %vm224, %v435, %v439
      %v442 = vsel %vm181, %v440, 0
      %v445 = vsel %vm195, %v426, 0
      %447 = vmatpush.bf16.msra.mxu0 0
      %448 = vmatpush.bf16.msra.mxu0 0
      %449 = vmatpush.bf16.msra.mxu0 0
      %450 = vmatpush.bf16.msra.mxu0 0
      %451 = vmatpush.bf16.msra.mxu0 0
      %452 = vmatpush.bf16.msra.mxu0 0
      %453 = vmatpush.bf16.msra.mxu0 0
      %454 = vmatpush.bf16.msra.mxu0 %v445
      %455 = vmatmul.bf16.gmra.mxu0 %v442
      %v456 = vpop.f32.mrf.mxu0
      %v457 = vadd.f32 0.0, %v456
      %v458 = vpop.f32.mrf.mxu0
      %v459 = vadd.f32 0.0, %v458
      %460 = vdwg.mxu0
      %v461 = vadd.f32 %v423, %v457
      %v462 = vadd.f32 %v424, %v459
      %463 = vst.msk [vmem:[#allocation2] sm:$0xff] %vm181, %v461
      %464 = vst.msk [vmem:[#allocation2 + $0x8] sm:$0xff] %vm181, %v462
      %v465 = vld [vmem:[#allocation2] sm:$0xff]
      %v466 = vld [vmem:[#allocation2 + $0x8] sm:$0xff]
      %s467 = scalar_lea.vmem %s1, 32
      %v468 = vld [vmem:[%s467] sm:$0xf]
      %v469 = vrot.slane %v398, 1
      %v470 = vrot.slane %v429, 1
      %v471 = vsel %vm264, %v469, %v470
      %v473 = vsel %vm181, %v471, 0
      %v476 = vsel %vm195, %v468, 0
      %478 = vmatpush.bf16.msra.mxu0 0
      %479 = vmatpush.bf16.msra.mxu0 0
      %480 = vmatpush.bf16.msra.mxu0 0
      %481 = vmatpush.bf16.msra.mxu0 0
      %482 = vmatpush.bf16.msra.mxu0 0
      %483 = vmatpush.bf16.msra.mxu0 0
      %484 = vmatpush.bf16.msra.mxu0 0
      %485 = vmatpush.bf16.msra.mxu0 %v476
      %486 = vmatmul.bf16.gmra.mxu0 %v473
      %v487 = vpop.f32.mrf.mxu0
      %v488 = vadd.f32 0.0, %v487
      %v489 = vpop.f32.mrf.mxu0
      %v490 = vadd.f32 0.0, %v489
      %491 = vdwg.mxu0
      %v492 = vadd.f32 %v465, %v488
      %v493 = vadd.f32 %v466, %v490
      %494 = vst.msk [vmem:[#allocation2] sm:$0xff] %vm181, %v492
      %495 = vst.msk [vmem:[#allocation2 + $0x8] sm:$0xff] %vm181, %v493
      %v496 = vld [vmem:[#allocation2] sm:$0xff]
      %v497 = vld [vmem:[#allocation2 + $0x8] sm:$0xff]
      %498 = vst.msk [vmem:[%s170] sm:$0xff] %vm181, %v496
      %499 = vst.msk [vmem:[%s170 + $0x8] sm:$0xff] %vm181, %v497
      %p500 = scmp.lt.s32.totalorder %s14, 1
      %s501 = scalar_select %p500, %s14, 1
      %s502 = smul.addr %s501, 2
      %s503 = smul.addr %s502, 8
      %s504 = scalar_lea.vmem %s3, %s503
      // Predicated region
      $region33: #{_lambda_.15} parent=31 // pred_check
        %p505 = pneg %p100
      $region34: #{_lambda_.15} parent=31 // pred_check_branch
        %507 = sbr.rel (%p505) target = $region36
      $region35: #{_lambda_.15} parent=31 // pred_region
        _
      $region36: #{_lambda_.15} parent=31 // pred_fallthru
        _
    $region32: #{_lambda_.15} parent=5 // pred_fallthru
      _
    %p508 = scmp.le.s32.totalorder 2, %s9
    // Predicated region
    $region37: #{_lambda_.15} parent=5 // pred_check
      %p509 = pneg %p508
    $region38: #{_lambda_.15} parent=5 // pred_check_branch
      %511 = sbr.rel (%p509) target = $region40
    $region39: #{_lambda_.15} parent=5 // pred_region
      %s512 = ssub.s32 %s9, 2
      // Predicated region
      $region41: #{_lambda_.15} parent=39 // pred_check
        %p513 = pneg %p106
      $region42: #{_lambda_.15} parent=39 // pred_check_branch
        %515 = sbr.rel (%p513) target = $region44
      $region43: #{_lambda_.15} parent=39 // pred_region
        %p516 = scmp.lt.s32.totalorder %s15, 1
        %s517 = scalar_select %p516, %s15, 1
        %s518 = smul.addr %s517, 2
        %s519 = smul.addr %s518, 8
        %s520 = scalar_lea.vmem %s3, %s519
      $region44: #{_lambda_.15} parent=39 // pred_fallthru
        _
    $region40: #{_lambda_.15} parent=5 // pred_fallthru
      _
  $region6: #{_lambda_.15} parent=0 // loop_footer
    %s13 = sadd.s32 1, %s9
  $region7: #{_lambda_.15} parent=0 // loop_footer_branch
    %8 = sbr.rel target = $region3
  $region8: #{_lambda_.15} parent=0 // loop_exit
    _

</llo_original>
